<compile_context>
chip_gen: v6e
topology: v6e:2x2x1
jax: 0.10.0
libtpu: 0.0.40
codegen_flags: <defaults>
</compile_context>

<pallas_src>
import functools

import jax
import jax.numpy as jnp
from jax.experimental import pallas as pl
from jax.experimental.pallas import tpu as pltpu

_EPS = 1e-5          # PyTorch LayerNorm default eps
_LTC_EPS = 1e-8      # ncps LTCCell epsilon
ODE_UNFOLDS = 6      # ncps LTC default ode_unfolds
_NEG_INF = -1e30


def _layernorm(h, gamma, beta):
    mu = jnp.mean(h, axis=-1, keepdims=True)
    var = jnp.mean((h - mu) ** 2, axis=-1, keepdims=True)
    return (h - mu) * jax.lax.rsqrt(var + _EPS) * gamma + beta


def _sigmoid(z):
    # explicit tanh form (EUP path)
    return 0.5 * (jnp.tanh(0.5 * z) + 1.0)


# --------------------- Kernel A: attention + norm2 + embed_to_ltc ---------------------

def attn_embed_kernel(
    x_ref,            # (TB, S, D) f32   TB batch elements
    wqkv_t_ref,       # (D, 3D)  bf16    in_proj_weight.T, Q part pre-scaled by 1/sqrt(hd)
    bqkv_ref,         # (1, 3D)  f32     in_proj_bias, Q part pre-scaled
    wo_t_ref,         # (D, D)   bf16    out_proj.weight.T
    bo_ref,           # (1, D)   f32
    g1_ref, be1_ref,  # (1, D)   f32     norm1
    g2_ref, be2_ref,  # (1, D)   f32     norm2
    we2l_ref,         # (N, D)   bf16    embed_to_ltc1.weight (not transposed; contracted on D)
    be2l_ref,         # (N, 1)   f32
    x2_ref,           # (TB, S, D) f32   out: norm2 result (needed for the final residual)
    ut_ref,           # (TB, N, S) f32   out: LTC drive, S on lanes
    ctx_ref,          # scratch (TB*S, D) f32 -- per-head context slab for the fused out-proj
    *, nhead, head_dim,
):
    f32 = jnp.float32
    bf16 = jnp.bfloat16
    TB, S, D = x_ref.shape

    x = x_ref[...].astype(f32)
    xn = _layernorm(x, g1_ref[0], be1_ref[0])                         # (TB, S, D)
    xf = xn.reshape(TB * S, D)

    # single fused QKV projection (3D-wide output keeps the MXU N dimension full)
    qkv = jnp.dot(xf.astype(bf16), wqkv_t_ref[...],
                  preferred_element_type=f32) + bqkv_ref[0]           # (TB*S, 3D)

    # additive causal mask, built once per grid step (outside the head loop)
    row = jax.lax.broadcasted_iota(jnp.int32, (S, S), 0)
    col = jax.lax.broadcasted_iota(jnp.int32, (S, S), 1)
    neg_mask = jnp.where(col <= row, 0.0, _NEG_INF).astype(f32)       # (S, S)

    for h in range(nhead):                       # static unroll over heads
        lo = h * head_dim
        qh = qkv[:, lo:lo + head_dim].reshape(TB, S, head_dim).astype(bf16)
        kh = qkv[:, D + lo:D + lo + head_dim].reshape(TB, S, head_dim).astype(bf16)
        vh = qkv[:, 2 * D + lo:2 * D + lo + head_dim].reshape(TB, S, head_dim).astype(bf16)
        s = jnp.einsum('bqd,bkd->bqk', qh, kh,
                       preferred_element_type=f32) + neg_mask         # (TB, S, S)
        s = s - jnp.max(s, axis=-1, keepdims=True)
        p = jnp.exp(s)
        p = p * pl.reciprocal(jnp.sum(p, axis=-1, keepdims=True), approx=True)
        ctx_h = jnp.einsum('bqk,bkd->bqd', p.astype(bf16), vh,
                           preferred_element_type=f32)                # (TB, S, hd)
        # write this head's context at its lane offset -> single fused out-proj below
        ctx_ref[:, lo:lo + head_dim] = ctx_h.reshape(TB * S, head_dim)

    # ONE D-deep (TB*S, D) x (D, D) out-projection matmul instead of nhead K=hd matmuls
    attn = jnp.dot(ctx_ref[...].astype(bf16), wo_t_ref[...],
                   preferred_element_type=f32) + bo_ref[0]            # (TB*S, D)

    x1 = xf + attn                              # residual on the normed input (module spec)
    x2 = _layernorm(x1, g2_ref[0], be2_ref[0])                        # (TB*S, D)
    x2_ref[...] = x2.reshape(TB, S, D).astype(x2_ref.dtype)

    # LTC drive in (N, S) layout (S on lanes) -> lane-dense recurrence in kernel B
    x2b = x2.reshape(TB, S, D).astype(bf16)
    for b in range(TB):
        u_t = jax.lax.dot_general(we2l_ref[...], x2b[b],
                                  (((1,), (1,)), ((), ())),           # contract D (trans_b)
                                  preferred_element_type=f32) + be2l_ref[...]
        ut_ref[b] = u_t.astype(ut_ref.dtype)                          # (N, S)


# ----------------- Kernel B: serial LTC recurrence + ltc_to_ff + residual -----------------

def ltc_head_kernel(
    x2_ref,           # (TB, S, D) f32
    u_ref,            # (TB, N, S) f32   LTC drive (S on lanes)
    rec_ref,          # (4, N, N) f32    [softplus(w)*mask, erev, mu, sigma], (post, pre)
    sens_ref,         # (4, N, N) f32    sensory counterparts, (post, pre)
    vec_ref,          # (5, N, 1) f32    [softplus(gleak), vleak, cm_t, input_w, input_b]
    w2_ref,           # (N, D)   f32     output_w folded into ltc_to_ff1.weight (zero rows
                      #                  for non-motor neurons)
    b2_ref,           # (1, D)   f32     ltc_to_ff1.bias + ltc_to_ff1.weight @ output_b
    o_ref,            # (TB, S, D) f32
    state_ref,        # scratch (N, S) f32 -- LTC state carried across grid steps
    *, ode_unfolds,
):
    f32 = jnp.float32
    TB = x2_ref.shape[0]
    N, S = state_ref.shape

    @pl.when(pl.program_id(0) == 0)
    def _init_state():
        state_ref[...] = jnp.zeros_like(state_ref)

    rec = rec_ref[...]
    sens = sens_ref[...]
    vec = vec_ref[...]
    w_eff, erev, mu, sig = rec[0], rec[1], rec[2], rec[3]
    sw_eff, serev, smu, ssig = sens[0], sens[1], sens[2], sens[3]
    gleak, vleak, cm_t, in_w, in_b = vec[0], vec[1], vec[2], vec[3], vec[4]
    gleak_vleak = gleak * vleak                  # hoisted (N, 1) constants
    cm_gleak = cm_t + gleak

    # hoist the tiny per-presynaptic-neuron parameter columns out of the loops
    sens_cols = [(sw_eff[:, i:i + 1], serev[:, i:i + 1],
                  smu[:, i:i + 1], ssig[:, i:i + 1]) for i in range(N)]
    rec_cols = [(w_eff[:, i:i + 1], erev[:, i:i + 1],
                 mu[:, i:i + 1], sig[:, i:i + 1]) for i in range(N)]

    v_pre = state_ref[...]                       # (N, S)

    for t in range(TB):                          # static unroll: each t is one LTC time step
        inp = u_ref[t] * in_w + in_b             # (N, S) sensory input mapping

        # sensory synapses (computed once per cell step): unrolled 7-term presynaptic sum
        w_num_s = jnp.zeros((N, S), f32)
        w_den_s = jnp.zeros((N, S), f32)
        for i in range(N):
            sw_i, se_i, sm_i, ss_i = sens_cols[i]
            gi = sw_i * _sigmoid(ss_i * (inp[i:i + 1, :] - sm_i))      # (N, S) lane-dense
            w_num_s = w_num_s + gi * se_i
            w_den_s = w_den_s + gi

        for _ in range(ode_unfolds):             # fused fixed-step ODE solver
            w_num = w_num_s
            w_den = w_den_s
            for i in range(N):
                w_i, e_i, m_i, s_i = rec_cols[i]
                gi = w_i * _sigmoid(s_i * (v_pre[i:i + 1, :] - m_i))   # (N, S)
                w_num = w_num + gi * e_i
                w_den = w_den + gi
            v_pre = (cm_t * v_pre + gleak_vleak + w_num) / (cm_gleak + w_den + _LTC_EPS)

        # LTC output affine + ltc_to_feedforward1 folded into one (N, D) projection
        v_t = jnp.transpose(v_pre)               # (S, N); tiny (7 x S) relayout
        src2 = jnp.dot(v_t, w2_ref[...], preferred_element_type=f32) + b2_ref[0]
        o_ref[t] = (x2_ref[t] + src2).astype(o_ref.dtype)

    state_ref[...] = v_pre                       # carry state to the next grid step


# --------------------------------- host-side parameter prep --------------------------------

def _prepare_attn_params(p, nhead):
    bf16 = jnp.bfloat16
    f32 = jnp.float32
    D = p["norm1_weight"].shape[0]
    head_dim = D // nhead
    scale = 1.0 / float(head_dim) ** 0.5
    wqkv = p["in_proj_weight"]                   # (3D, D): [Wq; Wk; Wv]
    bqkv = p["in_proj_bias"]
    # fold the softmax scale into the Q projection (weight AND bias)
    wqkv = jnp.concatenate([wqkv[:D] * scale, wqkv[D:]], axis=0)
    bqkv = jnp.concatenate([bqkv[:D] * scale, bqkv[D:]], axis=0)
    return (
        wqkv.T.astype(bf16),                        # (D, 3D)
        bqkv[None, :].astype(f32),                  # (1, 3D)
        p["out_proj_weight"].T.astype(bf16),        # (D, D)
        p["out_proj_bias"][None, :].astype(f32),
        p["norm1_weight"][None, :].astype(f32),
        p["norm1_bias"][None, :].astype(f32),
        p["norm2_weight"][None, :].astype(f32),
        p["norm2_bias"][None, :].astype(f32),
        p["embed_to_ltc1_weight"].astype(bf16),     # (N, D)
        p["embed_to_ltc1_bias"][:, None].astype(f32),  # (N, 1)
    )


def _prepare_ltc_params(p, ode_unfolds):
    """Fold the ncps positivity (softplus) / sparsity masks / cm_t, transpose synapse
    matrices to (post, pre), and fold output_w/output_b + ltc_to_feedforward1 into a
    single (N, D) projection (zero rows for non-motor neurons)."""
    f32 = jnp.float32
    sp = jax.nn.softplus
    w_eff = sp(p["ltc_w"]) * p["ltc_sparsity"]                   # (pre, post)
    sw_eff = sp(p["ltc_sensory_w"]) * p["ltc_sensory_sparsity"]
    rec = jnp.stack([w_eff.T, p["ltc_erev"].T, p["ltc_mu"].T, p["ltc_sigma"].T])
    sens = jnp.stack([sw_eff.T, p["ltc_sensory_erev"].T,
                      p["ltc_sensory_mu"].T, p["ltc_sensory_sigma"].T])
    cm_t = sp(p["ltc_cm"]) * float(ode_unfolds)                  # elapsed_time = 1.0
    vec = jnp.stack([sp(p["ltc_gleak"]), p["ltc_vleak"], cm_t,
                     p["ltc_input_w"], p["ltc_input_b"]])[:, :, None]   # (5, N, 1)

    wl2f = p["ltc_to_ff1_weight"]                                # (D, M)
    out_w = p["ltc_output_w"]                                    # (M,)
    out_b = p["ltc_output_b"]                                    # (M,)
    num_neurons = p["ltc_gleak"].shape[0]
    motor = out_w.shape[0]
    w2 = jnp.zeros((num_neurons, wl2f.shape[0]), f32)
    w2 = w2.at[:motor].set((wl2f * out_w[None, :]).T)            # (M, D) into rows 0..M-1
    b2 = p["ltc_to_ff1_bias"] + wl2f @ out_b                     # (D,)
    return (rec.astype(f32), sens.astype(f32), vec.astype(f32),
            w2.astype(f32), b2[None, :].astype(f32))


def _const_spec(a):
    nd = a.ndim
    return pl.BlockSpec(a.shape, lambda i, _nd=nd: (0,) * _nd)
    # TODO(synk): once pl.Buffered(1) is confirmed stable here, single-buffer these
    # never-changing blocks to reclaim VMEM on v7x (64 MiB).


def _vmem_limit_bytes():
    # Generation-aware budget: ~75% of physical VMEM (v5e/v6e 128 MiB -> ~96 MiB,
    # v7x 64 MiB -> ~48 MiB), capped at 100 MiB; safe fallback to the scoped default.
    try:
        cap = pltpu.get_tpu_info().vmem_capacity_bytes
        return int(min(0.75 * cap, 100 * 1024 * 1024))
    except Exception:
        return 32 * 1024 * 1024


def _divisor_at_most(n, cap):
    t = max(1, min(n, cap))
    while n % t:
        t -= 1
    return t


@functools.partial(jax.jit, static_argnames=("nhead", "ode_unfolds",
                                              "attn_batch_block", "ltc_time_block"))
def gpt2_encoder_layer_with_ltc(src_sbd, params, *, nhead, ode_unfolds=ODE_UNFOLDS,
                                attn_batch_block=1, ltc_time_block=8):
    """src_sbd: (S, B, D) float32 -- the layout the PyTorch forward receives."""
    S, B, D = src_sbd.shape
    assert D % nhead == 0
    head_dim = D // nhead

    attn_flat = _prepare_attn_params(params, nhead)
    ltc_flat = _prepare_ltc_params(params, ode_unfolds)
    num_neurons = attn_flat[8].shape[0]          # embed_to_ltc1.weight (N, D)

    tba = _divisor_at_most(B, attn_batch_block)  # batch tile for the attention kernel
    tb = _divisor_at_most(B, ltc_time_block)     # LTC time steps per grid step
    vmem_limit = _vmem_limit_bytes()
    f32 = jnp.float32

    x = jnp.transpose(src_sbd, (1, 0, 2))        # (B, S, D): D on lanes

    # ---- Kernel A: all heavy MXU work, independent (parallel) across batch tiles ----
    x2, u_t = pl.pallas_call(
        functools.partial(attn_embed_kernel, nhead=nhead, head_dim=head_dim),
        out_shape=(jax.ShapeDtypeStruct((B, S, D), f32),
                   jax.ShapeDtypeStruct((B, num_neurons, S), f32)),
        grid=(B // tba,),
        in_specs=[pl.BlockSpec((tba, S, D), lambda i: (i, 0, 0))]
                 + [_const_spec(a) for a in attn_flat],
        out_specs=(pl.BlockSpec((tba, S, D), lambda i: (i, 0, 0)),
                   pl.BlockSpec((tba, num_neurons, S), lambda i: (i, 0, 0))),
        scratch_shapes=[pltpu.VMEM((tba * S, D), f32)],
        compiler_params=pltpu.CompilerParams(
            dimension_semantics=("parallel",),   # both TensorCores on v7x, any order
            vmem_limit_bytes=vmem_limit),
    )(x, *attn_flat)

    # ---- Kernel B: tiny serial LTC recurrence (its time axis is the batch axis B) ----
    out = pl.pallas_call(
        functools.partial(ltc_head_kernel, ode_unfolds=ode_unfolds),
        out_shape=jax.ShapeDtypeStruct((B, S, D), f32),
        grid=(B // tb,),
        in_specs=[pl.BlockSpec((tb, S, D), lambda i: (i, 0, 0)),
                  pl.BlockSpec((tb, num_neurons, S), lambda i: (i, 0, 0))]
                 + [_const_spec(a) for a in ltc_flat],
        out_specs=pl.BlockSpec((tb, S, D), lambda i: (i, 0, 0)),
        scratch_shapes=[pltpu.VMEM((num_neurons, S), f32)],
        compiler_params=pltpu.CompilerParams(
            dimension_semantics=("arbitrary",),  # sequential: state carried step -> step
            vmem_limit_bytes=vmem_limit),
    )(x2, u_t, *ltc_flat)

    return jnp.transpose(out, (1, 0, 2))         # back to (S, B, D)


# ----------------------------------- demo parameters -----------------------------------

def init_module_params(key, d_model, num_neurons=7, motor=3):
    """Parameters in the PyTorch module's native layout (Linear weights (out, in)).
    LTC params use the ncps LTCCell default init ranges."""
    ks = jax.random.split(key, 16)
    f32 = jnp.float32
    s = 0.02

    def u(k, shape, lo, hi):
        return jax.random.uniform(k, shape, f32, lo, hi)

    # TODO(synk): the exact AutoNCP(7, 3) wiring topology (ncps seed 22222) is not
    # reproduced -- only its structural role as {-1,0,+1} polarity / 0-1 sparsity masks.
    adj = jax.random.randint(ks[10], (num_neurons, num_neurons), -1, 2).astype(f32)
    sadj = jax.random.randint(ks[11], (num_neurons, num_neurons), -1, 2).astype(f32)
    return dict(
        in_proj_weight=s * jax.random.normal(ks[0], (3 * d_model, d_model), f32),
        in_proj_bias=s * jax.random.normal(ks[1], (3 * d_model,), f32),
        out_proj_weight=s * jax.random.normal(ks[2], (d_model, d_model), f32),
        out_proj_bias=jnp.zeros((d_model,), f32),
        norm1_weight=jnp.ones((d_model,), f32),
        norm1_bias=jnp.zeros((d_model,), f32),
        norm2_weight=jnp.ones((d_model,), f32),
        norm2_bias=jnp.zeros((d_model,), f32),
        embed_to_ltc1_weight=s * jax.random.normal(ks[3], (num_neurons, d_model), f32),
        embed_to_ltc1_bias=jnp.zeros((num_neurons,), f32),
        ltc_to_ff1_weight=s * jax.random.normal(ks[4], (d_model, motor), f32),
        ltc_to_ff1_bias=jnp.zeros((d_model,), f32),
        # ncps LTCCell parameters
        ltc_gleak=u(ks[5], (num_neurons,), 0.001, 1.0),
        ltc_vleak=u(ks[6], (num_neurons,), -0.2, 0.2),
        ltc_cm=u(ks[7], (num_neurons,), 0.4, 0.6),
        ltc_sigma=u(ks[8], (num_neurons, num_neurons), 3.0, 8.0),
        ltc_mu=u(ks[9], (num_neurons, num_neurons), 0.3, 0.8),
        ltc_w=u(ks[12], (num_neurons, num_neurons), 0.001, 1.0),
        ltc_erev=adj,
        ltc_sparsity=jnp.abs(adj),
        ltc_sensory_sigma=u(ks[13], (num_neurons, num_neurons), 3.0, 8.0),
        ltc_sensory_mu=u(ks[14], (num_neurons, num_neurons), 0.3, 0.8),
        ltc_sensory_w=u(ks[15], (num_neurons, num_neurons), 0.001, 1.0),
        ltc_sensory_erev=sadj,
        ltc_sensory_sparsity=jnp.abs(sadj),
        ltc_input_w=jnp.ones((num_neurons,), f32),
        ltc_input_b=jnp.zeros((num_neurons,), f32),
        ltc_output_w=jnp.ones((motor,), f32),
        ltc_output_b=jnp.zeros((motor,), f32),
    )


if __name__ == "__main__":
    S, B, D = 8, 2, 32          # (seq, batch, d_model) -- small demo shapes
    NHEAD = 4
    NUM_NEURONS, MOTOR = 7, 3   # AutoNCP(7 neurons, 3 motor outputs)

    key = jax.random.PRNGKey(0)
    k_src, k_par = jax.random.split(key)
    src = jax.random.normal(k_src, (S, B, D), jnp.float32)
    params = init_module_params(k_par, D, NUM_NEURONS, MOTOR)

    out = gpt2_encoder_layer_with_ltc(src, params, nhead=NHEAD)
    out = jax.block_until_ready(out)
    assert out.shape == (S, B, D)
    assert bool(jnp.all(jnp.isfinite(out)))
    print("KERNEL_OK")
</pallas_src>

<mosaic_0001>
module attributes {stable_mosaic.version = 11 : i64} {
  func.func @attn_embed_kernel(%arg0: i32, %arg1: memref<1x8x32xf32, #tpu.memory_space<vmem>>, %arg2: memref<32x96xbf16, #tpu.memory_space<vmem>>, %arg3: memref<1x96xf32, #tpu.memory_space<vmem>>, %arg4: memref<32x32xbf16, #tpu.memory_space<vmem>>, %arg5: memref<1x32xf32, #tpu.memory_space<vmem>>, %arg6: memref<1x32xf32, #tpu.memory_space<vmem>>, %arg7: memref<1x32xf32, #tpu.memory_space<vmem>>, %arg8: memref<1x32xf32, #tpu.memory_space<vmem>>, %arg9: memref<1x32xf32, #tpu.memory_space<vmem>>, %arg10: memref<7x32xbf16, #tpu.memory_space<vmem>>, %arg11: memref<7x1xf32, #tpu.memory_space<vmem>>, %arg12: memref<1x8x32xf32, #tpu.memory_space<vmem>>, %arg13: memref<1x7x8xf32, #tpu.memory_space<vmem>>, %arg14: memref<8x32xf32, #tpu.memory_space<vmem>>) attributes {dimension_semantics = [#tpu.dimension_semantics<parallel>], iteration_bounds = array<i64: 2>, scalar_prefetch = 0 : i64, scratch_operands = 1 : i64, tpu.core_type = #tpu.core_type<tc>, window_params = [{transform_indices = @transform_0, window_bounds = array<i64: 1, 8, 32>}, {pipeline_mode = #tpu.pipeline_mode<synchronous>, transform_indices = @transform_1, window_bounds = array<i64: 32, 96>}, {pipeline_mode = #tpu.pipeline_mode<synchronous>, transform_indices = @transform_2, window_bounds = array<i64: 1, 96>}, {pipeline_mode = #tpu.pipeline_mode<synchronous>, transform_indices = @transform_3, window_bounds = array<i64: 32, 32>}, {pipeline_mode = #tpu.pipeline_mode<synchronous>, transform_indices = @transform_4, window_bounds = array<i64: 1, 32>}, {pipeline_mode = #tpu.pipeline_mode<synchronous>, transform_indices = @transform_5, window_bounds = array<i64: 1, 32>}, {pipeline_mode = #tpu.pipeline_mode<synchronous>, transform_indices = @transform_6, window_bounds = array<i64: 1, 32>}, {pipeline_mode = #tpu.pipeline_mode<synchronous>, transform_indices = @transform_7, window_bounds = array<i64: 1, 32>}, {pipeline_mode = #tpu.pipeline_mode<synchronous>, transform_indices = @transform_8, window_bounds = array<i64: 1, 32>}, {pipeline_mode = #tpu.pipeline_mode<synchronous>, transform_indices = @transform_9, window_bounds = array<i64: 7, 32>}, {pipeline_mode = #tpu.pipeline_mode<synchronous>, transform_indices = @transform_10, window_bounds = array<i64: 7, 1>}, {transform_indices = @transform_11, window_bounds = array<i64: 1, 8, 32>}, {transform_indices = @transform_12, window_bounds = array<i64: 1, 7, 8>}]} {
    %c0 = arith.constant 0 : index
    %c0_0 = arith.constant 0 : index
    %c0_1 = arith.constant 0 : index
    %0 = vector.load %arg1[%c0, %c0_0, %c0_1] : memref<1x8x32xf32, #tpu.memory_space<vmem>>, vector<1x8x32xf32>
    %c0_2 = arith.constant 0 : index
    %c0_3 = arith.constant 0 : index
    %1 = vector.load %arg6[%c0_2, %c0_3] : memref<1x32xf32, #tpu.memory_space<vmem>>, vector<1x32xf32>
    %2 = vector.shape_cast %1 : vector<1x32xf32> to vector<32xf32>
    %c0_4 = arith.constant 0 : index
    %c0_5 = arith.constant 0 : index
    %3 = vector.load %arg7[%c0_4, %c0_5] : memref<1x32xf32, #tpu.memory_space<vmem>>, vector<1x32xf32>
    %4 = vector.shape_cast %3 : vector<1x32xf32> to vector<32xf32>
    %cst = arith.constant dense<0.000000e+00> : vector<1x8xf32>
    %5 = vector.multi_reduction <add>, %0, %cst [2] : vector<1x8x32xf32> to vector<1x8xf32>
    %6 = vector.shape_cast %5 : vector<1x8xf32> to vector<1x8x1xf32>
    %cst_6 = arith.constant 3.200000e+01 : f32
    %7 = vector.broadcast %cst_6 : f32 to vector<1x8x1xf32>
    %8 = arith.divf %6, %7 : vector<1x8x1xf32>
    %9 = vector.broadcast %8 : vector<1x8x1xf32> to vector<1x8x32xf32>
    %10 = arith.subf %0, %9 : vector<1x8x32xf32>
    %11 = arith.mulf %10, %10 : vector<1x8x32xf32>
    %cst_7 = arith.constant dense<0.000000e+00> : vector<1x8xf32>
    %12 = vector.multi_reduction <add>, %11, %cst_7 [2] : vector<1x8x32xf32> to vector<1x8xf32>
    %13 = vector.shape_cast %12 : vector<1x8xf32> to vector<1x8x1xf32>
    %cst_8 = arith.constant 3.200000e+01 : f32
    %14 = vector.broadcast %cst_8 : f32 to vector<1x8x1xf32>
    %15 = arith.divf %13, %14 : vector<1x8x1xf32>
    %16 = vector.broadcast %8 : vector<1x8x1xf32> to vector<1x8x32xf32>
    %17 = arith.subf %0, %16 : vector<1x8x32xf32>
    %cst_9 = arith.constant 9.99999974E-6 : f32
    %18 = vector.broadcast %cst_9 : f32 to vector<1x8x1xf32>
    %19 = arith.addf %15, %18 : vector<1x8x1xf32>
    %20 = math.rsqrt %19 : vector<1x8x1xf32>
    %21 = vector.broadcast %20 : vector<1x8x1xf32> to vector<1x8x32xf32>
    %22 = arith.mulf %17, %21 : vector<1x8x32xf32>
    %23 = vector.shape_cast %2 : vector<32xf32> to vector<1x1x32xf32>
    %24 = vector.broadcast %23 : vector<1x1x32xf32> to vector<1x8x32xf32>
    %25 = arith.mulf %22, %24 : vector<1x8x32xf32>
    %26 = vector.shape_cast %4 : vector<32xf32> to vector<1x1x32xf32>
    %27 = vector.broadcast %26 : vector<1x1x32xf32> to vector<1x8x32xf32>
    %28 = arith.addf %25, %27 : vector<1x8x32xf32>
    %29 = vector.shape_cast %28 : vector<1x8x32xf32> to vector<8x32xf32>
    %30 = arith.truncf %29 : vector<8x32xf32> to vector<8x32xbf16>
    %c0_10 = arith.constant 0 : index
    %c0_11 = arith.constant 0 : index
    %31 = vector.load %arg2[%c0_10, %c0_11] : memref<32x96xbf16, #tpu.memory_space<vmem>>, vector<32x96xbf16>
    %cst_12 = arith.constant dense<0.000000e+00> : vector<8x96xf32>
    %32 = tpu.matmul %30, %31, %cst_12 {dimension_numbers = #tpu.dot_dimension_numbers<[1], [0], [0], [1], [0, 0, 1, 1], [], []>} : vector<8x32xbf16>, vector<32x96xbf16>, vector<8x96xf32> -> vector<8x96xf32>
    %c0_13 = arith.constant 0 : index
    %c0_14 = arith.constant 0 : index
    %33 = vector.load %arg3[%c0_13, %c0_14] : memref<1x96xf32, #tpu.memory_space<vmem>>, vector<1x96xf32>
    %34 = vector.shape_cast %33 : vector<1x96xf32> to vector<96xf32>
    %35 = vector.shape_cast %34 : vector<96xf32> to vector<1x96xf32>
    %36 = vector.broadcast %35 : vector<1x96xf32> to vector<8x96xf32>
    %37 = arith.addf %32, %36 : vector<8x96xf32>
    %38 = tpu.iota {dimensions = array<i32: 0>} : vector<8x8xi32>
    %39 = tpu.iota {dimensions = array<i32: 1>} : vector<8x8xi32>
    %40 = arith.cmpi sle, %39, %38 : vector<8x8xi32>
    %cst_15 = arith.constant 0.000000e+00 : f32
    %cst_16 = arith.constant -1.000000e+30 : f32
    %41 = vector.broadcast %cst_15 : f32 to vector<8x8xf32>
    %42 = vector.broadcast %cst_16 : f32 to vector<8x8xf32>
    %43 = arith.select %40, %41, %42 : vector<8x8xi1>, vector<8x8xf32>
    %44 = vector.extract_strided_slice %37 {offsets = [0, 0], sizes = [8, 8], strides = [1, 1]} : vector<8x96xf32> to vector<8x8xf32>
    %45 = vector.shape_cast %44 : vector<8x8xf32> to vector<1x8x8xf32>
    %46 = arith.truncf %45 : vector<1x8x8xf32> to vector<1x8x8xbf16>
    %47 = vector.extract_strided_slice %37 {offsets = [0, 32], sizes = [8, 8], strides = [1, 1]} : vector<8x96xf32> to vector<8x8xf32>
    %48 = vector.shape_cast %47 : vector<8x8xf32> to vector<1x8x8xf32>
    %49 = arith.truncf %48 : vector<1x8x8xf32> to vector<1x8x8xbf16>
    %50 = vector.extract_strided_slice %37 {offsets = [0, 64], sizes = [8, 8], strides = [1, 1]} : vector<8x96xf32> to vector<8x8xf32>
    %51 = vector.shape_cast %50 : vector<8x8xf32> to vector<1x8x8xf32>
    %52 = arith.truncf %51 : vector<1x8x8xf32> to vector<1x8x8xbf16>
    "tpu.trace_start"() <{level = 10 : i32, message = "bqd,bkd->bqk"}> : () -> ()
    %cst_17 = arith.constant dense<0.000000e+00> : vector<1x8x8xf32>
    %53 = tpu.matmul %46, %49, %cst_17 {dimension_numbers = #tpu.dot_dimension_numbers<[2], [2], [1], [1], [0, 0, 0, 1, 1, 1], [0], [0]>} : vector<1x8x8xbf16>, vector<1x8x8xbf16>, vector<1x8x8xf32> -> vector<1x8x8xf32>
    "tpu.trace_stop"() : () -> ()
    %54 = vector.shape_cast %43 : vector<8x8xf32> to vector<1x8x8xf32>
    %55 = arith.addf %53, %54 : vector<1x8x8xf32>
    %cst_18 = arith.constant dense<0xFF800000> : vector<1x8xf32>
    %56 = vector.multi_reduction <maximumf>, %55, %cst_18 [2] : vector<1x8x8xf32> to vector<1x8xf32>
    %57 = vector.shape_cast %56 : vector<1x8xf32> to vector<1x8x1xf32>
    %58 = vector.broadcast %57 : vector<1x8x1xf32> to vector<1x8x8xf32>
    %59 = arith.subf %55, %58 : vector<1x8x8xf32>
    %60 = math.exp %59 : vector<1x8x8xf32>
    %cst_19 = arith.constant dense<0.000000e+00> : vector<1x8xf32>
    %61 = vector.multi_reduction <add>, %60, %cst_19 [2] : vector<1x8x8xf32> to vector<1x8xf32>
    %62 = vector.shape_cast %61 : vector<1x8xf32> to vector<1x8x1xf32>
    %63 = tpu.reciprocal %62 {approx = true} : vector<1x8x1xf32> -> vector<1x8x1xf32>
    %64 = vector.broadcast %63 : vector<1x8x1xf32> to vector<1x8x8xf32>
    %65 = arith.mulf %60, %64 : vector<1x8x8xf32>
    %66 = arith.truncf %65 : vector<1x8x8xf32> to vector<1x8x8xbf16>
    "tpu.trace_start"() <{level = 10 : i32, message = "bqk,bkd->bqd"}> : () -> ()
    %cst_20 = arith.constant dense<0.000000e+00> : vector<1x8x8xf32>
    %67 = tpu.matmul %66, %52, %cst_20 {dimension_numbers = #tpu.dot_dimension_numbers<[2], [1], [1], [2], [0, 0, 0, 1, 1, 2], [0], [0]>} : vector<1x8x8xbf16>, vector<1x8x8xbf16>, vector<1x8x8xf32> -> vector<1x8x8xf32>
    "tpu.trace_stop"() : () -> ()
    %68 = vector.shape_cast %67 : vector<1x8x8xf32> to vector<8x8xf32>
    %c0_21 = arith.constant 0 : index
    %c0_22 = arith.constant 0 : index
    %69 = vector.load %arg14[%c0_21, %c0_22] : memref<8x32xf32, #tpu.memory_space<vmem>>, vector<8x8xf32>
    tpu.vector_store %arg14[%c0_21, %c0_22], %68 {strides = array<i32>} : memref<8x32xf32, #tpu.memory_space<vmem>>, vector<8x8xf32>,
    %70 = vector.extract_strided_slice %37 {offsets = [0, 8], sizes = [8, 8], strides = [1, 1]} : vector<8x96xf32> to vector<8x8xf32>
    %71 = vector.shape_cast %70 : vector<8x8xf32> to vector<1x8x8xf32>
    %72 = arith.truncf %71 : vector<1x8x8xf32> to vector<1x8x8xbf16>
    %73 = vector.extract_strided_slice %37 {offsets = [0, 40], sizes = [8, 8], strides = [1, 1]} : vector<8x96xf32> to vector<8x8xf32>
    %74 = vector.shape_cast %73 : vector<8x8xf32> to vector<1x8x8xf32>
    %75 = arith.truncf %74 : vector<1x8x8xf32> to vector<1x8x8xbf16>
    %76 = vector.extract_strided_slice %37 {offsets = [0, 72], sizes = [8, 8], strides = [1, 1]} : vector<8x96xf32> to vector<8x8xf32>
    %77 = vector.shape_cast %76 : vector<8x8xf32> to vector<1x8x8xf32>
    %78 = arith.truncf %77 : vector<1x8x8xf32> to vector<1x8x8xbf16>
    "tpu.trace_start"() <{level = 10 : i32, message = "bqd,bkd->bqk"}> : () -> ()
    %cst_23 = arith.constant dense<0.000000e+00> : vector<1x8x8xf32>
    %79 = tpu.matmul %72, %75, %cst_23 {dimension_numbers = #tpu.dot_dimension_numbers<[2], [2], [1], [1], [0, 0, 0, 1, 1, 1], [0], [0]>} : vector<1x8x8xbf16>, vector<1x8x8xbf16>, vector<1x8x8xf32> -> vector<1x8x8xf32>
    "tpu.trace_stop"() : () -> ()
    %80 = vector.shape_cast %43 : vector<8x8xf32> to vector<1x8x8xf32>
    %81 = arith.addf %79, %80 : vector<1x8x8xf32>
    %cst_24 = arith.constant dense<0xFF800000> : vector<1x8xf32>
    %82 = vector.multi_reduction <maximumf>, %81, %cst_24 [2] : vector<1x8x8xf32> to vector<1x8xf32>
    %83 = vector.shape_cast %82 : vector<1x8xf32> to vector<1x8x1xf32>
    %84 = vector.broadcast %83 : vector<1x8x1xf32> to vector<1x8x8xf32>
    %85 = arith.subf %81, %84 : vector<1x8x8xf32>
    %86 = math.exp %85 : vector<1x8x8xf32>
    %cst_25 = arith.constant dense<0.000000e+00> : vector<1x8xf32>
    %87 = vector.multi_reduction <add>, %86, %cst_25 [2] : vector<1x8x8xf32> to vector<1x8xf32>
    %88 = vector.shape_cast %87 : vector<1x8xf32> to vector<1x8x1xf32>
    %89 = tpu.reciprocal %88 {approx = true} : vector<1x8x1xf32> -> vector<1x8x1xf32>
    %90 = vector.broadcast %89 : vector<1x8x1xf32> to vector<1x8x8xf32>
    %91 = arith.mulf %86, %90 : vector<1x8x8xf32>
    %92 = arith.truncf %91 : vector<1x8x8xf32> to vector<1x8x8xbf16>
    "tpu.trace_start"() <{level = 10 : i32, message = "bqk,bkd->bqd"}> : () -> ()
    %cst_26 = arith.constant dense<0.000000e+00> : vector<1x8x8xf32>
    %93 = tpu.matmul %92, %78, %cst_26 {dimension_numbers = #tpu.dot_dimension_numbers<[2], [1], [1], [2], [0, 0, 0, 1, 1, 2], [0], [0]>} : vector<1x8x8xbf16>, vector<1x8x8xbf16>, vector<1x8x8xf32> -> vector<1x8x8xf32>
    "tpu.trace_stop"() : () -> ()
    %94 = vector.shape_cast %93 : vector<1x8x8xf32> to vector<8x8xf32>
    %c0_27 = arith.constant 0 : index
    %c8 = arith.constant 8 : index
    %95 = vector.load %arg14[%c0_27, %c8] : memref<8x32xf32, #tpu.memory_space<vmem>>, vector<8x8xf32>
    tpu.vector_store %arg14[%c0_27, %c8], %94 {strides = array<i32>} : memref<8x32xf32, #tpu.memory_space<vmem>>, vector<8x8xf32>,
    %96 = vector.extract_strided_slice %37 {offsets = [0, 16], sizes = [8, 8], strides = [1, 1]} : vector<8x96xf32> to vector<8x8xf32>
    %97 = vector.shape_cast %96 : vector<8x8xf32> to vector<1x8x8xf32>
    %98 = arith.truncf %97 : vector<1x8x8xf32> to vector<1x8x8xbf16>
    %99 = vector.extract_strided_slice %37 {offsets = [0, 48], sizes = [8, 8], strides = [1, 1]} : vector<8x96xf32> to vector<8x8xf32>
    %100 = vector.shape_cast %99 : vector<8x8xf32> to vector<1x8x8xf32>
    %101 = arith.truncf %100 : vector<1x8x8xf32> to vector<1x8x8xbf16>
    %102 = vector.extract_strided_slice %37 {offsets = [0, 80], sizes = [8, 8], strides = [1, 1]} : vector<8x96xf32> to vector<8x8xf32>
    %103 = vector.shape_cast %102 : vector<8x8xf32> to vector<1x8x8xf32>
    %104 = arith.truncf %103 : vector<1x8x8xf32> to vector<1x8x8xbf16>
    "tpu.trace_start"() <{level = 10 : i32, message = "bqd,bkd->bqk"}> : () -> ()
    %cst_28 = arith.constant dense<0.000000e+00> : vector<1x8x8xf32>
    %105 = tpu.matmul %98, %101, %cst_28 {dimension_numbers = #tpu.dot_dimension_numbers<[2], [2], [1], [1], [0, 0, 0, 1, 1, 1], [0], [0]>} : vector<1x8x8xbf16>, vector<1x8x8xbf16>, vector<1x8x8xf32> -> vector<1x8x8xf32>
    "tpu.trace_stop"() : () -> ()
    %106 = vector.shape_cast %43 : vector<8x8xf32> to vector<1x8x8xf32>
    %107 = arith.addf %105, %106 : vector<1x8x8xf32>
    %cst_29 = arith.constant dense<0xFF800000> : vector<1x8xf32>
    %108 = vector.multi_reduction <maximumf>, %107, %cst_29 [2] : vector<1x8x8xf32> to vector<1x8xf32>
    %109 = vector.shape_cast %108 : vector<1x8xf32> to vector<1x8x1xf32>
    %110 = vector.broadcast %109 : vector<1x8x1xf32> to vector<1x8x8xf32>
    %111 = arith.subf %107, %110 : vector<1x8x8xf32>
    %112 = math.exp %111 : vector<1x8x8xf32>
    %cst_30 = arith.constant dense<0.000000e+00> : vector<1x8xf32>
    %113 = vector.multi_reduction <add>, %112, %cst_30 [2] : vector<1x8x8xf32> to vector<1x8xf32>
    %114 = vector.shape_cast %113 : vector<1x8xf32> to vector<1x8x1xf32>
    %115 = tpu.reciprocal %114 {approx = true} : vector<1x8x1xf32> -> vector<1x8x1xf32>
    %116 = vector.broadcast %115 : vector<1x8x1xf32> to vector<1x8x8xf32>
    %117 = arith.mulf %112, %116 : vector<1x8x8xf32>
    %118 = arith.truncf %117 : vector<1x8x8xf32> to vector<1x8x8xbf16>
    "tpu.trace_start"() <{level = 10 : i32, message = "bqk,bkd->bqd"}> : () -> ()
    %cst_31 = arith.constant dense<0.000000e+00> : vector<1x8x8xf32>
    %119 = tpu.matmul %118, %104, %cst_31 {dimension_numbers = #tpu.dot_dimension_numbers<[2], [1], [1], [2], [0, 0, 0, 1, 1, 2], [0], [0]>} : vector<1x8x8xbf16>, vector<1x8x8xbf16>, vector<1x8x8xf32> -> vector<1x8x8xf32>
    "tpu.trace_stop"() : () -> ()
    %120 = vector.shape_cast %119 : vector<1x8x8xf32> to vector<8x8xf32>
    %c0_32 = arith.constant 0 : index
    %c16 = arith.constant 16 : index
    %121 = vector.load %arg14[%c0_32, %c16] : memref<8x32xf32, #tpu.memory_space<vmem>>, vector<8x8xf32>
    tpu.vector_store %arg14[%c0_32, %c16], %120 {strides = array<i32>} : memref<8x32xf32, #tpu.memory_space<vmem>>, vector<8x8xf32>,
    %122 = vector.extract_strided_slice %37 {offsets = [0, 24], sizes = [8, 8], strides = [1, 1]} : vector<8x96xf32> to vector<8x8xf32>
    %123 = vector.shape_cast %122 : vector<8x8xf32> to vector<1x8x8xf32>
    %124 = arith.truncf %123 : vector<1x8x8xf32> to vector<1x8x8xbf16>
    %125 = vector.extract_strided_slice %37 {offsets = [0, 56], sizes = [8, 8], strides = [1, 1]} : vector<8x96xf32> to vector<8x8xf32>
    %126 = vector.shape_cast %125 : vector<8x8xf32> to vector<1x8x8xf32>
    %127 = arith.truncf %126 : vector<1x8x8xf32> to vector<1x8x8xbf16>
    %128 = vector.extract_strided_slice %37 {offsets = [0, 88], sizes = [8, 8], strides = [1, 1]} : vector<8x96xf32> to vector<8x8xf32>
    %129 = vector.shape_cast %128 : vector<8x8xf32> to vector<1x8x8xf32>
    %130 = arith.truncf %129 : vector<1x8x8xf32> to vector<1x8x8xbf16>
    "tpu.trace_start"() <{level = 10 : i32, message = "bqd,bkd->bqk"}> : () -> ()
    %cst_33 = arith.constant dense<0.000000e+00> : vector<1x8x8xf32>
    %131 = tpu.matmul %124, %127, %cst_33 {dimension_numbers = #tpu.dot_dimension_numbers<[2], [2], [1], [1], [0, 0, 0, 1, 1, 1], [0], [0]>} : vector<1x8x8xbf16>, vector<1x8x8xbf16>, vector<1x8x8xf32> -> vector<1x8x8xf32>
    "tpu.trace_stop"() : () -> ()
    %132 = vector.shape_cast %43 : vector<8x8xf32> to vector<1x8x8xf32>
    %133 = arith.addf %131, %132 : vector<1x8x8xf32>
    %cst_34 = arith.constant dense<0xFF800000> : vector<1x8xf32>
    %134 = vector.multi_reduction <maximumf>, %133, %cst_34 [2] : vector<1x8x8xf32> to vector<1x8xf32>
    %135 = vector.shape_cast %134 : vector<1x8xf32> to vector<1x8x1xf32>
    %136 = vector.broadcast %135 : vector<1x8x1xf32> to vector<1x8x8xf32>
    %137 = arith.subf %133, %136 : vector<1x8x8xf32>
    %138 = math.exp %137 : vector<1x8x8xf32>
    %cst_35 = arith.constant dense<0.000000e+00> : vector<1x8xf32>
    %139 = vector.multi_reduction <add>, %138, %cst_35 [2] : vector<1x8x8xf32> to vector<1x8xf32>
    %140 = vector.shape_cast %139 : vector<1x8xf32> to vector<1x8x1xf32>
    %141 = tpu.reciprocal %140 {approx = true} : vector<1x8x1xf32> -> vector<1x8x1xf32>
    %142 = vector.broadcast %141 : vector<1x8x1xf32> to vector<1x8x8xf32>
    %143 = arith.mulf %138, %142 : vector<1x8x8xf32>
    %144 = arith.truncf %143 : vector<1x8x8xf32> to vector<1x8x8xbf16>
    "tpu.trace_start"() <{level = 10 : i32, message = "bqk,bkd->bqd"}> : () -> ()
    %cst_36 = arith.constant dense<0.000000e+00> : vector<1x8x8xf32>
    %145 = tpu.matmul %144, %130, %cst_36 {dimension_numbers = #tpu.dot_dimension_numbers<[2], [1], [1], [2], [0, 0, 0, 1, 1, 2], [0], [0]>} : vector<1x8x8xbf16>, vector<1x8x8xbf16>, vector<1x8x8xf32> -> vector<1x8x8xf32>
    "tpu.trace_stop"() : () -> ()
    %146 = vector.shape_cast %145 : vector<1x8x8xf32> to vector<8x8xf32>
    %c0_37 = arith.constant 0 : index
    %c24 = arith.constant 24 : index
    %147 = vector.load %arg14[%c0_37, %c24] : memref<8x32xf32, #tpu.memory_space<vmem>>, vector<8x8xf32>
    tpu.vector_store %arg14[%c0_37, %c24], %146 {strides = array<i32>} : memref<8x32xf32, #tpu.memory_space<vmem>>, vector<8x8xf32>,
    %c0_38 = arith.constant 0 : index
    %c0_39 = arith.constant 0 : index
    %148 = vector.load %arg14[%c0_38, %c0_39] : memref<8x32xf32, #tpu.memory_space<vmem>>, vector<8x32xf32>
    %149 = arith.truncf %148 : vector<8x32xf32> to vector<8x32xbf16>
    %c0_40 = arith.constant 0 : index
    %c0_41 = arith.constant 0 : index
    %150 = vector.load %arg4[%c0_40, %c0_41] : memref<32x32xbf16, #tpu.memory_space<vmem>>, vector<32x32xbf16>
    %cst_42 = arith.constant dense<0.000000e+00> : vector<8x32xf32>
    %151 = tpu.matmul %149, %150, %cst_42 {dimension_numbers = #tpu.dot_dimension_numbers<[1], [0], [0], [1], [0, 0, 1, 1], [], []>} : vector<8x32xbf16>, vector<32x32xbf16>, vector<8x32xf32> -> vector<8x32xf32>
    %c0_43 = arith.constant 0 : index
    %c0_44 = arith.constant 0 : index
    %152 = vector.load %arg5[%c0_43, %c0_44] : memref<1x32xf32, #tpu.memory_space<vmem>>, vector<1x32xf32>
    %153 = vector.shape_cast %152 : vector<1x32xf32> to vector<32xf32>
    %154 = vector.shape_cast %153 : vector<32xf32> to vector<1x32xf32>
    %155 = vector.broadcast %154 : vector<1x32xf32> to vector<8x32xf32>
    %156 = arith.addf %151, %155 : vector<8x32xf32>
    %157 = arith.addf %29, %156 : vector<8x32xf32>
    %c0_45 = arith.constant 0 : index
    %c0_46 = arith.constant 0 : index
    %158 = vector.load %arg8[%c0_45, %c0_46] : memref<1x32xf32, #tpu.memory_space<vmem>>, vector<1x32xf32>
    %159 = vector.shape_cast %158 : vector<1x32xf32> to vector<32xf32>
    %c0_47 = arith.constant 0 : index
    %c0_48 = arith.constant 0 : index
    %160 = vector.load %arg9[%c0_47, %c0_48] : memref<1x32xf32, #tpu.memory_space<vmem>>, vector<1x32xf32>
    %161 = vector.shape_cast %160 : vector<1x32xf32> to vector<32xf32>
    %cst_49 = arith.constant dense<0.000000e+00> : vector<8xf32>
    %162 = vector.multi_reduction <add>, %157, %cst_49 [1] : vector<8x32xf32> to vector<8xf32>
    %163 = vector.shape_cast %162 : vector<8xf32> to vector<8x1xf32>
    %cst_50 = arith.constant 3.200000e+01 : f32
    %164 = vector.broadcast %cst_50 : f32 to vector<8x1xf32>
    %165 = arith.divf %163, %164 : vector<8x1xf32>
    %166 = vector.broadcast %165 : vector<8x1xf32> to vector<8x32xf32>
    %167 = arith.subf %157, %166 : vector<8x32xf32>
    %168 = arith.mulf %167, %167 : vector<8x32xf32>
    %cst_51 = arith.constant dense<0.000000e+00> : vector<8xf32>
    %169 = vector.multi_reduction <add>, %168, %cst_51 [1] : vector<8x32xf32> to vector<8xf32>
    %170 = vector.shape_cast %169 : vector<8xf32> to vector<8x1xf32>
    %cst_52 = arith.constant 3.200000e+01 : f32
    %171 = vector.broadcast %cst_52 : f32 to vector<8x1xf32>
    %172 = arith.divf %170, %171 : vector<8x1xf32>
    %173 = vector.broadcast %165 : vector<8x1xf32> to vector<8x32xf32>
    %174 = arith.subf %157, %173 : vector<8x32xf32>
    %cst_53 = arith.constant 9.99999974E-6 : f32
    %175 = vector.broadcast %cst_53 : f32 to vector<8x1xf32>
    %176 = arith.addf %172, %175 : vector<8x1xf32>
    %177 = math.rsqrt %176 : vector<8x1xf32>
    %178 = vector.broadcast %177 : vector<8x1xf32> to vector<8x32xf32>
    %179 = arith.mulf %174, %178 : vector<8x32xf32>
    %180 = vector.shape_cast %159 : vector<32xf32> to vector<1x32xf32>
    %181 = vector.broadcast %180 : vector<1x32xf32> to vector<8x32xf32>
    %182 = arith.mulf %179, %181 : vector<8x32xf32>
    %183 = vector.shape_cast %161 : vector<32xf32> to vector<1x32xf32>
    %184 = vector.broadcast %183 : vector<1x32xf32> to vector<8x32xf32>
    %185 = arith.addf %182, %184 : vector<8x32xf32>
    %186 = vector.shape_cast %185 : vector<8x32xf32> to vector<1x8x32xf32>
    %c0_54 = arith.constant 0 : index
    %c0_55 = arith.constant 0 : index
    %c0_56 = arith.constant 0 : index
    %187 = vector.load %arg12[%c0_54, %c0_55, %c0_56] : memref<1x8x32xf32, #tpu.memory_space<vmem>>, vector<1x8x32xf32>
    tpu.vector_store %arg12[%c0_54, %c0_55, %c0_56], %186 {strides = array<i32>} : memref<1x8x32xf32, #tpu.memory_space<vmem>>, vector<1x8x32xf32>,
    %188 = vector.shape_cast %185 : vector<8x32xf32> to vector<1x8x32xf32>
    %189 = arith.truncf %188 : vector<1x8x32xf32> to vector<1x8x32xbf16>
    %c0_57 = arith.constant 0 : index
    %c0_58 = arith.constant 0 : index
    %190 = vector.load %arg10[%c0_57, %c0_58] : memref<7x32xbf16, #tpu.memory_space<vmem>>, vector<7x32xbf16>
    %191 = vector.shape_cast %189 : vector<1x8x32xbf16> to vector<8x32xbf16>
    %cst_59 = arith.constant dense<0.000000e+00> : vector<7x8xf32>
    %192 = tpu.matmul %190, %191, %cst_59 {dimension_numbers = #tpu.dot_dimension_numbers<[1], [1], [0], [0], [0, 0, 1, 0], [], []>} : vector<7x32xbf16>, vector<8x32xbf16>, vector<7x8xf32> -> vector<7x8xf32>
    %c0_60 = arith.constant 0 : index
    %c0_61 = arith.constant 0 : index
    %193 = vector.load %arg11[%c0_60, %c0_61] : memref<7x1xf32, #tpu.memory_space<vmem>>, vector<7x1xf32>
    %194 = vector.broadcast %193 : vector<7x1xf32> to vector<7x8xf32>
    %195 = arith.addf %192, %194 : vector<7x8xf32>
    %c0_62 = arith.constant 0 : index
    %c0_63 = arith.constant 0 : index
    %c0_64 = arith.constant 0 : index
    %196 = vector.load %arg13[%c0_62, %c0_63, %c0_64] : memref<1x7x8xf32, #tpu.memory_space<vmem>>, vector<1x7x8xf32>
    %197 = vector.shape_cast %196 : vector<1x7x8xf32> to vector<7x8xf32>
    %198 = vector.shape_cast %195 : vector<7x8xf32> to vector<1x7x8xf32>
    tpu.vector_store %arg13[%c0_62, %c0_63, %c0_64], %198 {strides = array<i32>} : memref<1x7x8xf32, #tpu.memory_space<vmem>>, vector<1x7x8xf32>,
    return
  }
  func.func @transform_0(%arg0: i32) -> (i32, i32, i32) {
    %c0_i32 = arith.constant 0 : i32
    %c0_i32_0 = arith.constant 0 : i32
    %c0_i32_1 = arith.constant 0 : i32
    return %arg0, %c0_i32, %c0_i32_0 : i32, i32, i32
  }
  func.func @transform_1(%arg0: i32) -> (i32, i32) {
    %c0_i32 = arith.constant 0 : i32
    %c0_i32_0 = arith.constant 0 : i32
    %c0_i32_1 = arith.constant 0 : i32
    return %c0_i32, %c0_i32_0 : i32, i32
  }
  func.func @transform_2(%arg0: i32) -> (i32, i32) {
    %c0_i32 = arith.constant 0 : i32
    %c0_i32_0 = arith.constant 0 : i32
    %c0_i32_1 = arith.constant 0 : i32
    return %c0_i32, %c0_i32_0 : i32, i32
  }
  func.func @transform_3(%arg0: i32) -> (i32, i32) {
    %c0_i32 = arith.constant 0 : i32
    %c0_i32_0 = arith.constant 0 : i32
    %c0_i32_1 = arith.constant 0 : i32
    return %c0_i32, %c0_i32_0 : i32, i32
  }
  func.func @transform_4(%arg0: i32) -> (i32, i32) {
    %c0_i32 = arith.constant 0 : i32
    %c0_i32_0 = arith.constant 0 : i32
    %c0_i32_1 = arith.constant 0 : i32
    return %c0_i32, %c0_i32_0 : i32, i32
  }
  func.func @transform_5(%arg0: i32) -> (i32, i32) {
    %c0_i32 = arith.constant 0 : i32
    %c0_i32_0 = arith.constant 0 : i32
    %c0_i32_1 = arith.constant 0 : i32
    return %c0_i32, %c0_i32_0 : i32, i32
  }
  func.func @transform_6(%arg0: i32) -> (i32, i32) {
    %c0_i32 = arith.constant 0 : i32
    %c0_i32_0 = arith.constant 0 : i32
    %c0_i32_1 = arith.constant 0 : i32
    return %c0_i32, %c0_i32_0 : i32, i32
  }
  func.func @transform_7(%arg0: i32) -> (i32, i32) {
    %c0_i32 = arith.constant 0 : i32
    %c0_i32_0 = arith.constant 0 : i32
    %c0_i32_1 = arith.constant 0 : i32
    return %c0_i32, %c0_i32_0 : i32, i32
  }
  func.func @transform_8(%arg0: i32) -> (i32, i32) {
    %c0_i32 = arith.constant 0 : i32
    %c0_i32_0 = arith.constant 0 : i32
    %c0_i32_1 = arith.constant 0 : i32
    return %c0_i32, %c0_i32_0 : i32, i32
  }
  func.func @transform_9(%arg0: i32) -> (i32, i32) {
    %c0_i32 = arith.constant 0 : i32
    %c0_i32_0 = arith.constant 0 : i32
    %c0_i32_1 = arith.constant 0 : i32
    return %c0_i32, %c0_i32_0 : i32, i32
  }
  func.func @transform_10(%arg0: i32) -> (i32, i32) {
    %c0_i32 = arith.constant 0 : i32
    %c0_i32_0 = arith.constant 0 : i32
    %c0_i32_1 = arith.constant 0 : i32
    return %c0_i32, %c0_i32_0 : i32, i32
  }
  func.func @transform_11(%arg0: i32) -> (i32, i32, i32) {
    %c0_i32 = arith.constant 0 : i32
    %c0_i32_0 = arith.constant 0 : i32
    %c0_i32_1 = arith.constant 0 : i32
    return %arg0, %c0_i32, %c0_i32_0 : i32, i32, i32
  }
  func.func @transform_12(%arg0: i32) -> (i32, i32, i32) {
    %c0_i32 = arith.constant 0 : i32
    %c0_i32_0 = arith.constant 0 : i32
    %c0_i32_1 = arith.constant 0 : i32
    return %arg0, %c0_i32, %c0_i32_0 : i32, i32, i32
  }
}

module attributes {stable_mosaic.version = 11 : i64} {
  func.func @ltc_head_kernel(%arg0: i32, %arg1: memref<2x8x32xf32, #tpu.memory_space<vmem>>, %arg2: memref<2x7x8xf32, #tpu.memory_space<vmem>>, %arg3: memref<4x7x7xf32, #tpu.memory_space<vmem>>, %arg4: memref<4x7x7xf32, #tpu.memory_space<vmem>>, %arg5: memref<5x7x1xf32, #tpu.memory_space<vmem>>, %arg6: memref<7x32xf32, #tpu.memory_space<vmem>>, %arg7: memref<1x32xf32, #tpu.memory_space<vmem>>, %arg8: memref<2x8x32xf32, #tpu.memory_space<vmem>>, %arg9: memref<7x8xf32, #tpu.memory_space<vmem>>) attributes {dimension_semantics = [#tpu.dimension_semantics<arbitrary>], iteration_bounds = array<i64: 1>, scalar_prefetch = 0 : i64, scratch_operands = 1 : i64, tpu.core_type = #tpu.core_type<tc>, window_params = [{transform_indices = @transform_0, window_bounds = array<i64: 2, 8, 32>}, {transform_indices = @transform_1, window_bounds = array<i64: 2, 7, 8>}, {pipeline_mode = #tpu.pipeline_mode<synchronous>, transform_indices = @transform_2, window_bounds = array<i64: 4, 7, 7>}, {pipeline_mode = #tpu.pipeline_mode<synchronous>, transform_indices = @transform_3, window_bounds = array<i64: 4, 7, 7>}, {pipeline_mode = #tpu.pipeline_mode<synchronous>, transform_indices = @transform_4, window_bounds = array<i64: 5, 7, 1>}, {pipeline_mode = #tpu.pipeline_mode<synchronous>, transform_indices = @transform_5, window_bounds = array<i64: 7, 32>}, {pipeline_mode = #tpu.pipeline_mode<synchronous>, transform_indices = @transform_6, window_bounds = array<i64: 1, 32>}, {transform_indices = @transform_7, window_bounds = array<i64: 2, 8, 32>}]} {
    %c0_i32 = arith.constant 0 : i32
    %0 = arith.cmpi eq, %arg0, %c0_i32 : i32
    %1 = arith.extui %0 : i1 to i32
    %c0_i32_0 = arith.constant 0 : i32
    %2 = arith.cmpi ne, %1, %c0_i32_0 : i32
    scf.if %2 {
      %cst_349 = arith.constant 0.000000e+00 : f32
      %2118 = vector.broadcast %cst_349 : f32 to vector<7x8xf32>
      %c0_350 = arith.constant 0 : index
      %c0_351 = arith.constant 0 : index
      %2119 = vector.load %arg9[%c0_350, %c0_351] : memref<7x8xf32, #tpu.memory_space<vmem>>, vector<7x8xf32>
      tpu.vector_store %arg9[%c0_350, %c0_351], %2118 {strides = array<i32>} : memref<7x8xf32, #tpu.memory_space<vmem>>, vector<7x8xf32>,
    } else {
    }
    %c0 = arith.constant 0 : index
    %c0_1 = arith.constant 0 : index
    %c0_2 = arith.constant 0 : index
    %3 = vector.load %arg3[%c0, %c0_1, %c0_2] : memref<4x7x7xf32, #tpu.memory_space<vmem>>, vector<4x7x7xf32>
    %c0_3 = arith.constant 0 : index
    %c0_4 = arith.constant 0 : index
    %c0_5 = arith.constant 0 : index
    %4 = vector.load %arg4[%c0_3, %c0_4, %c0_5] : memref<4x7x7xf32, #tpu.memory_space<vmem>>, vector<4x7x7xf32>
    %c0_6 = arith.constant 0 : index
    %c0_7 = arith.constant 0 : index
    %c0_8 = arith.constant 0 : index
    %5 = vector.load %arg5[%c0_6, %c0_7, %c0_8] : memref<5x7x1xf32, #tpu.memory_space<vmem>>, vector<5x7x1xf32>
    %6 = vector.extract_strided_slice %3 {offsets = [0, 0, 0], sizes = [1, 7, 7], strides = [1, 1, 1]} : vector<4x7x7xf32> to vector<1x7x7xf32>
    %7 = vector.shape_cast %6 : vector<1x7x7xf32> to vector<7x7xf32>
    %8 = vector.extract_strided_slice %3 {offsets = [1, 0, 0], sizes = [1, 7, 7], strides = [1, 1, 1]} : vector<4x7x7xf32> to vector<1x7x7xf32>
    %9 = vector.shape_cast %8 : vector<1x7x7xf32> to vector<7x7xf32>
    %10 = vector.extract_strided_slice %3 {offsets = [2, 0, 0], sizes = [1, 7, 7], strides = [1, 1, 1]} : vector<4x7x7xf32> to vector<1x7x7xf32>
    %11 = vector.shape_cast %10 : vector<1x7x7xf32> to vector<7x7xf32>
    %12 = vector.extract_strided_slice %3 {offsets = [3, 0, 0], sizes = [1, 7, 7], strides = [1, 1, 1]} : vector<4x7x7xf32> to vector<1x7x7xf32>
    %13 = vector.shape_cast %12 : vector<1x7x7xf32> to vector<7x7xf32>
    %14 = vector.extract_strided_slice %4 {offsets = [0, 0, 0], sizes = [1, 7, 7], strides = [1, 1, 1]} : vector<4x7x7xf32> to vector<1x7x7xf32>
    %15 = vector.shape_cast %14 : vector<1x7x7xf32> to vector<7x7xf32>
    %16 = vector.extract_strided_slice %4 {offsets = [1, 0, 0], sizes = [1, 7, 7], strides = [1, 1, 1]} : vector<4x7x7xf32> to vector<1x7x7xf32>
    %17 = vector.shape_cast %16 : vector<1x7x7xf32> to vector<7x7xf32>
    %18 = vector.extract_strided_slice %4 {offsets = [2, 0, 0], sizes = [1, 7, 7], strides = [1, 1, 1]} : vector<4x7x7xf32> to vector<1x7x7xf32>
    %19 = vector.shape_cast %18 : vector<1x7x7xf32> to vector<7x7xf32>
    %20 = vector.extract_strided_slice %4 {offsets = [3, 0, 0], sizes = [1, 7, 7], strides = [1, 1, 1]} : vector<4x7x7xf32> to vector<1x7x7xf32>
    %21 = vector.shape_cast %20 : vector<1x7x7xf32> to vector<7x7xf32>
    %22 = vector.extract_strided_slice %5 {offsets = [0, 0, 0], sizes = [1, 7, 1], strides = [1, 1, 1]} : vector<5x7x1xf32> to vector<1x7x1xf32>
    %23 = vector.shape_cast %22 : vector<1x7x1xf32> to vector<7x1xf32>
    %24 = vector.extract_strided_slice %5 {offsets = [1, 0, 0], sizes = [1, 7, 1], strides = [1, 1, 1]} : vector<5x7x1xf32> to vector<1x7x1xf32>
    %25 = vector.shape_cast %24 : vector<1x7x1xf32> to vector<7x1xf32>
    %26 = vector.extract_strided_slice %5 {offsets = [2, 0, 0], sizes = [1, 7, 1], strides = [1, 1, 1]} : vector<5x7x1xf32> to vector<1x7x1xf32>
    %27 = vector.shape_cast %26 : vector<1x7x1xf32> to vector<7x1xf32>
    %28 = vector.extract_strided_slice %5 {offsets = [3, 0, 0], sizes = [1, 7, 1], strides = [1, 1, 1]} : vector<5x7x1xf32> to vector<1x7x1xf32>
    %29 = vector.shape_cast %28 : vector<1x7x1xf32> to vector<7x1xf32>
    %30 = vector.extract_strided_slice %5 {offsets = [4, 0, 0], sizes = [1, 7, 1], strides = [1, 1, 1]} : vector<5x7x1xf32> to vector<1x7x1xf32>
    %31 = vector.shape_cast %30 : vector<1x7x1xf32> to vector<7x1xf32>
    %32 = arith.mulf %23, %25 : vector<7x1xf32>
    %33 = arith.addf %27, %23 : vector<7x1xf32>
    %34 = vector.extract_strided_slice %15 {offsets = [0, 0], sizes = [7, 1], strides = [1, 1]} : vector<7x7xf32> to vector<7x1xf32>
    %35 = vector.extract_strided_slice %17 {offsets = [0, 0], sizes = [7, 1], strides = [1, 1]} : vector<7x7xf32> to vector<7x1xf32>
    %36 = vector.extract_strided_slice %19 {offsets = [0, 0], sizes = [7, 1], strides = [1, 1]} : vector<7x7xf32> to vector<7x1xf32>
    %37 = vector.extract_strided_slice %21 {offsets = [0, 0], sizes = [7, 1], strides = [1, 1]} : vector<7x7xf32> to vector<7x1xf32>
    %38 = vector.extract_strided_slice %15 {offsets = [0, 1], sizes = [7, 1], strides = [1, 1]} : vector<7x7xf32> to vector<7x1xf32>
    %39 = vector.extract_strided_slice %17 {offsets = [0, 1], sizes = [7, 1], strides = [1, 1]} : vector<7x7xf32> to vector<7x1xf32>
    %40 = vector.extract_strided_slice %19 {offsets = [0, 1], sizes = [7, 1], strides = [1, 1]} : vector<7x7xf32> to vector<7x1xf32>
    %41 = vector.extract_strided_slice %21 {offsets = [0, 1], sizes = [7, 1], strides = [1, 1]} : vector<7x7xf32> to vector<7x1xf32>
    %42 = vector.extract_strided_slice %15 {offsets = [0, 2], sizes = [7, 1], strides = [1, 1]} : vector<7x7xf32> to vector<7x1xf32>
    %43 = vector.extract_strided_slice %17 {offsets = [0, 2], sizes = [7, 1], strides = [1, 1]} : vector<7x7xf32> to vector<7x1xf32>
    %44 = vector.extract_strided_slice %19 {offsets = [0, 2], sizes = [7, 1], strides = [1, 1]} : vector<7x7xf32> to vector<7x1xf32>
    %45 = vector.extract_strided_slice %21 {offsets = [0, 2], sizes = [7, 1], strides = [1, 1]} : vector<7x7xf32> to vector<7x1xf32>
    %46 = vector.extract_strided_slice %15 {offsets = [0, 3], sizes = [7, 1], strides = [1, 1]} : vector<7x7xf32> to vector<7x1xf32>
    %47 = vector.extract_strided_slice %17 {offsets = [0, 3], sizes = [7, 1], strides = [1, 1]} : vector<7x7xf32> to vector<7x1xf32>
    %48 = vector.extract_strided_slice %19 {offsets = [0, 3], sizes = [7, 1], strides = [1, 1]} : vector<7x7xf32> to vector<7x1xf32>
    %49 = vector.extract_strided_slice %21 {offsets = [0, 3], sizes = [7, 1], strides = [1, 1]} : vector<7x7xf32> to vector<7x1xf32>
    %50 = vector.extract_strided_slice %15 {offsets = [0, 4], sizes = [7, 1], strides = [1, 1]} : vector<7x7xf32> to vector<7x1xf32>
    %51 = vector.extract_strided_slice %17 {offsets = [0, 4], sizes = [7, 1], strides = [1, 1]} : vector<7x7xf32> to vector<7x1xf32>
    %52 = vector.extract_strided_slice %19 {offsets = [0, 4], sizes = [7, 1], strides = [1, 1]} : vector<7x7xf32> to vector<7x1xf32>
    %53 = vector.extract_strided_slice %21 {offsets = [0, 4], sizes = [7, 1], strides = [1, 1]} : vector<7x7xf32> to vector<7x1xf32>
    %54 = vector.extract_strided_slice %15 {offsets = [0, 5], sizes = [7, 1], strides = [1, 1]} : vector<7x7xf32> to vector<7x1xf32>
    %55 = vector.extract_strided_slice %17 {offsets = [0, 5], sizes = [7, 1], strides = [1, 1]} : vector<7x7xf32> to vector<7x1xf32>
    %56 = vector.extract_strided_slice %19 {offsets = [0, 5], sizes = [7, 1], strides = [1, 1]} : vector<7x7xf32> to vector<7x1xf32>
    %57 = vector.extract_strided_slice %21 {offsets = [0, 5], sizes = [7, 1], strides = [1, 1]} : vector<7x7xf32> to vector<7x1xf32>
    %58 = vector.extract_strided_slice %15 {offsets = [0, 6], sizes = [7, 1], strides = [1, 1]} : vector<7x7xf32> to vector<7x1xf32>
    %59 = vector.extract_strided_slice %17 {offsets = [0, 6], sizes = [7, 1], strides = [1, 1]} : vector<7x7xf32> to vector<7x1xf32>
    %60 = vector.extract_strided_slice %19 {offsets = [0, 6], sizes = [7, 1], strides = [1, 1]} : vector<7x7xf32> to vector<7x1xf32>
    %61 = vector.extract_strided_slice %21 {offsets = [0, 6], sizes = [7, 1], strides = [1, 1]} : vector<7x7xf32> to vector<7x1xf32>
    %62 = vector.extract_strided_slice %7 {offsets = [0, 0], sizes = [7, 1], strides = [1, 1]} : vector<7x7xf32> to vector<7x1xf32>
    %63 = vector.extract_strided_slice %9 {offsets = [0, 0], sizes = [7, 1], strides = [1, 1]} : vector<7x7xf32> to vector<7x1xf32>
    %64 = vector.extract_strided_slice %11 {offsets = [0, 0], sizes = [7, 1], strides = [1, 1]} : vector<7x7xf32> to vector<7x1xf32>
    %65 = vector.extract_strided_slice %13 {offsets = [0, 0], sizes = [7, 1], strides = [1, 1]} : vector<7x7xf32> to vector<7x1xf32>
    %66 = vector.extract_strided_slice %7 {offsets = [0, 1], sizes = [7, 1], strides = [1, 1]} : vector<7x7xf32> to vector<7x1xf32>
    %67 = vector.extract_strided_slice %9 {offsets = [0, 1], sizes = [7, 1], strides = [1, 1]} : vector<7x7xf32> to vector<7x1xf32>
    %68 = vector.extract_strided_slice %11 {offsets = [0, 1], sizes = [7, 1], strides = [1, 1]} : vector<7x7xf32> to vector<7x1xf32>
    %69 = vector.extract_strided_slice %13 {offsets = [0, 1], sizes = [7, 1], strides = [1, 1]} : vector<7x7xf32> to vector<7x1xf32>
    %70 = vector.extract_strided_slice %7 {offsets = [0, 2], sizes = [7, 1], strides = [1, 1]} : vector<7x7xf32> to vector<7x1xf32>
    %71 = vector.extract_strided_slice %9 {offsets = [0, 2], sizes = [7, 1], strides = [1, 1]} : vector<7x7xf32> to vector<7x1xf32>
    %72 = vector.extract_strided_slice %11 {offsets = [0, 2], sizes = [7, 1], strides = [1, 1]} : vector<7x7xf32> to vector<7x1xf32>
    %73 = vector.extract_strided_slice %13 {offsets = [0, 2], sizes = [7, 1], strides = [1, 1]} : vector<7x7xf32> to vector<7x1xf32>
    %74 = vector.extract_strided_slice %7 {offsets = [0, 3], sizes = [7, 1], strides = [1, 1]} : vector<7x7xf32> to vector<7x1xf32>
    %75 = vector.extract_strided_slice %9 {offsets = [0, 3], sizes = [7, 1], strides = [1, 1]} : vector<7x7xf32> to vector<7x1xf32>
    %76 = vector.extract_strided_slice %11 {offsets = [0, 3], sizes = [7, 1], strides = [1, 1]} : vector<7x7xf32> to vector<7x1xf32>
    %77 = vector.extract_strided_slice %13 {offsets = [0, 3], sizes = [7, 1], strides = [1, 1]} : vector<7x7xf32> to vector<7x1xf32>
    %78 = vector.extract_strided_slice %7 {offsets = [0, 4], sizes = [7, 1], strides = [1, 1]} : vector<7x7xf32> to vector<7x1xf32>
    %79 = vector.extract_strided_slice %9 {offsets = [0, 4], sizes = [7, 1], strides = [1, 1]} : vector<7x7xf32> to vector<7x1xf32>
    %80 = vector.extract_strided_slice %11 {offsets = [0, 4], sizes = [7, 1], strides = [1, 1]} : vector<7x7xf32> to vector<7x1xf32>
    %81 = vector.extract_strided_slice %13 {offsets = [0, 4], sizes = [7, 1], strides = [1, 1]} : vector<7x7xf32> to vector<7x1xf32>
    %82 = vector.extract_strided_slice %7 {offsets = [0, 5], sizes = [7, 1], strides = [1, 1]} : vector<7x7xf32> to vector<7x1xf32>
    %83 = vector.extract_strided_slice %9 {offsets = [0, 5], sizes = [7, 1], strides = [1, 1]} : vector<7x7xf32> to vector<7x1xf32>
    %84 = vector.extract_strided_slice %11 {offsets = [0, 5], sizes = [7, 1], strides = [1, 1]} : vector<7x7xf32> to vector<7x1xf32>
    %85 = vector.extract_strided_slice %13 {offsets = [0, 5], sizes = [7, 1], strides = [1, 1]} : vector<7x7xf32> to vector<7x1xf32>
    %86 = vector.extract_strided_slice %7 {offsets = [0, 6], sizes = [7, 1], strides = [1, 1]} : vector<7x7xf32> to vector<7x1xf32>
    %87 = vector.extract_strided_slice %9 {offsets = [0, 6], sizes = [7, 1], strides = [1, 1]} : vector<7x7xf32> to vector<7x1xf32>
    %88 = vector.extract_strided_slice %11 {offsets = [0, 6], sizes = [7, 1], strides = [1, 1]} : vector<7x7xf32> to vector<7x1xf32>
    %89 = vector.extract_strided_slice %13 {offsets = [0, 6], sizes = [7, 1], strides = [1, 1]} : vector<7x7xf32> to vector<7x1xf32>
    %c0_9 = arith.constant 0 : index
    %c0_10 = arith.constant 0 : index
    %90 = vector.load %arg9[%c0_9, %c0_10] : memref<7x8xf32, #tpu.memory_space<vmem>>, vector<7x8xf32>
    %c0_11 = arith.constant 0 : index
    %c0_12 = arith.constant 0 : index
    %c0_13 = arith.constant 0 : index
    %91 = vector.load %arg2[%c0_11, %c0_12, %c0_13] : memref<2x7x8xf32, #tpu.memory_space<vmem>>, vector<1x7x8xf32>
    %92 = vector.shape_cast %91 : vector<1x7x8xf32> to vector<7x8xf32>
    %93 = vector.broadcast %29 : vector<7x1xf32> to vector<7x8xf32>
    %94 = arith.mulf %92, %93 : vector<7x8xf32>
    %95 = vector.broadcast %31 : vector<7x1xf32> to vector<7x8xf32>
    %96 = arith.addf %94, %95 : vector<7x8xf32>
    %cst = arith.constant 0.000000e+00 : f32
    %97 = vector.broadcast %cst : f32 to vector<7x8xf32>
    %cst_14 = arith.constant 0.000000e+00 : f32
    %98 = vector.broadcast %cst_14 : f32 to vector<7x8xf32>
    %99 = vector.extract_strided_slice %96 {offsets = [0, 0], sizes = [1, 8], strides = [1, 1]} : vector<7x8xf32> to vector<1x8xf32>
    %100 = vector.broadcast %99 : vector<1x8xf32> to vector<7x8xf32>
    %101 = vector.broadcast %36 : vector<7x1xf32> to vector<7x8xf32>
    %102 = arith.subf %100, %101 : vector<7x8xf32>
    %103 = vector.broadcast %37 : vector<7x1xf32> to vector<7x8xf32>
    %104 = arith.mulf %103, %102 : vector<7x8xf32>
    %cst_15 = arith.constant 5.000000e-01 : f32
    %105 = vector.broadcast %cst_15 : f32 to vector<7x8xf32>
    %106 = arith.mulf %105, %104 : vector<7x8xf32>
    %107 = math.tanh %106 : vector<7x8xf32>
    %cst_16 = arith.constant 1.000000e+00 : f32
    %108 = vector.broadcast %cst_16 : f32 to vector<7x8xf32>
    %109 = arith.addf %107, %108 : vector<7x8xf32>
    %cst_17 = arith.constant 5.000000e-01 : f32
    %110 = vector.broadcast %cst_17 : f32 to vector<7x8xf32>
    %111 = arith.mulf %110, %109 : vector<7x8xf32>
    %112 = vector.broadcast %34 : vector<7x1xf32> to vector<7x8xf32>
    %113 = arith.mulf %112, %111 : vector<7x8xf32>
    %114 = vector.broadcast %35 : vector<7x1xf32> to vector<7x8xf32>
    %115 = arith.mulf %113, %114 : vector<7x8xf32>
    %116 = arith.addf %97, %115 : vector<7x8xf32>
    %117 = arith.addf %98, %113 : vector<7x8xf32>
    %118 = vector.extract_strided_slice %96 {offsets = [1, 0], sizes = [1, 8], strides = [1, 1]} : vector<7x8xf32> to vector<1x8xf32>
    %119 = vector.broadcast %118 : vector<1x8xf32> to vector<7x8xf32>
    %120 = vector.broadcast %40 : vector<7x1xf32> to vector<7x8xf32>
    %121 = arith.subf %119, %120 : vector<7x8xf32>
    %122 = vector.broadcast %41 : vector<7x1xf32> to vector<7x8xf32>
    %123 = arith.mulf %122, %121 : vector<7x8xf32>
    %cst_18 = arith.constant 5.000000e-01 : f32
    %124 = vector.broadcast %cst_18 : f32 to vector<7x8xf32>
    %125 = arith.mulf %124, %123 : vector<7x8xf32>
    %126 = math.tanh %125 : vector<7x8xf32>
    %cst_19 = arith.constant 1.000000e+00 : f32
    %127 = vector.broadcast %cst_19 : f32 to vector<7x8xf32>
    %128 = arith.addf %126, %127 : vector<7x8xf32>
    %cst_20 = arith.constant 5.000000e-01 : f32
    %129 = vector.broadcast %cst_20 : f32 to vector<7x8xf32>
    %130 = arith.mulf %129, %128 : vector<7x8xf32>
    %131 = vector.broadcast %38 : vector<7x1xf32> to vector<7x8xf32>
    %132 = arith.mulf %131, %130 : vector<7x8xf32>
    %133 = vector.broadcast %39 : vector<7x1xf32> to vector<7x8xf32>
    %134 = arith.mulf %132, %133 : vector<7x8xf32>
    %135 = arith.addf %116, %134 : vector<7x8xf32>
    %136 = arith.addf %117, %132 : vector<7x8xf32>
    %137 = vector.extract_strided_slice %96 {offsets = [2, 0], sizes = [1, 8], strides = [1, 1]} : vector<7x8xf32> to vector<1x8xf32>
    %138 = vector.broadcast %137 : vector<1x8xf32> to vector<7x8xf32>
    %139 = vector.broadcast %44 : vector<7x1xf32> to vector<7x8xf32>
    %140 = arith.subf %138, %139 : vector<7x8xf32>
    %141 = vector.broadcast %45 : vector<7x1xf32> to vector<7x8xf32>
    %142 = arith.mulf %141, %140 : vector<7x8xf32>
    %cst_21 = arith.constant 5.000000e-01 : f32
    %143 = vector.broadcast %cst_21 : f32 to vector<7x8xf32>
    %144 = arith.mulf %143, %142 : vector<7x8xf32>
    %145 = math.tanh %144 : vector<7x8xf32>
    %cst_22 = arith.constant 1.000000e+00 : f32
    %146 = vector.broadcast %cst_22 : f32 to vector<7x8xf32>
    %147 = arith.addf %145, %146 : vector<7x8xf32>
    %cst_23 = arith.constant 5.000000e-01 : f32
    %148 = vector.broadcast %cst_23 : f32 to vector<7x8xf32>
    %149 = arith.mulf %148, %147 : vector<7x8xf32>
    %150 = vector.broadcast %42 : vector<7x1xf32> to vector<7x8xf32>
    %151 = arith.mulf %150, %149 : vector<7x8xf32>
    %152 = vector.broadcast %43 : vector<7x1xf32> to vector<7x8xf32>
    %153 = arith.mulf %151, %152 : vector<7x8xf32>
    %154 = arith.addf %135, %153 : vector<7x8xf32>
    %155 = arith.addf %136, %151 : vector<7x8xf32>
    %156 = vector.extract_strided_slice %96 {offsets = [3, 0], sizes = [1, 8], strides = [1, 1]} : vector<7x8xf32> to vector<1x8xf32>
    %157 = vector.broadcast %156 : vector<1x8xf32> to vector<7x8xf32>
    %158 = vector.broadcast %48 : vector<7x1xf32> to vector<7x8xf32>
    %159 = arith.subf %157, %158 : vector<7x8xf32>
    %160 = vector.broadcast %49 : vector<7x1xf32> to vector<7x8xf32>
    %161 = arith.mulf %160, %159 : vector<7x8xf32>
    %cst_24 = arith.constant 5.000000e-01 : f32
    %162 = vector.broadcast %cst_24 : f32 to vector<7x8xf32>
    %163 = arith.mulf %162, %161 : vector<7x8xf32>
    %164 = math.tanh %163 : vector<7x8xf32>
    %cst_25 = arith.constant 1.000000e+00 : f32
    %165 = vector.broadcast %cst_25 : f32 to vector<7x8xf32>
    %166 = arith.addf %164, %165 : vector<7x8xf32>
    %cst_26 = arith.constant 5.000000e-01 : f32
    %167 = vector.broadcast %cst_26 : f32 to vector<7x8xf32>
    %168 = arith.mulf %167, %166 : vector<7x8xf32>
    %169 = vector.broadcast %46 : vector<7x1xf32> to vector<7x8xf32>
    %170 = arith.mulf %169, %168 : vector<7x8xf32>
    %171 = vector.broadcast %47 : vector<7x1xf32> to vector<7x8xf32>
    %172 = arith.mulf %170, %171 : vector<7x8xf32>
    %173 = arith.addf %154, %172 : vector<7x8xf32>
    %174 = arith.addf %155, %170 : vector<7x8xf32>
    %175 = vector.extract_strided_slice %96 {offsets = [4, 0], sizes = [1, 8], strides = [1, 1]} : vector<7x8xf32> to vector<1x8xf32>
    %176 = vector.broadcast %175 : vector<1x8xf32> to vector<7x8xf32>
    %177 = vector.broadcast %52 : vector<7x1xf32> to vector<7x8xf32>
    %178 = arith.subf %176, %177 : vector<7x8xf32>
    %179 = vector.broadcast %53 : vector<7x1xf32> to vector<7x8xf32>
    %180 = arith.mulf %179, %178 : vector<7x8xf32>
    %cst_27 = arith.constant 5.000000e-01 : f32
    %181 = vector.broadcast %cst_27 : f32 to vector<7x8xf32>
    %182 = arith.mulf %181, %180 : vector<7x8xf32>
    %183 = math.tanh %182 : vector<7x8xf32>
    %cst_28 = arith.constant 1.000000e+00 : f32
    %184 = vector.broadcast %cst_28 : f32 to vector<7x8xf32>
    %185 = arith.addf %183, %184 : vector<7x8xf32>
    %cst_29 = arith.constant 5.000000e-01 : f32
    %186 = vector.broadcast %cst_29 : f32 to vector<7x8xf32>
    %187 = arith.mulf %186, %185 : vector<7x8xf32>
    %188 = vector.broadcast %50 : vector<7x1xf32> to vector<7x8xf32>
    %189 = arith.mulf %188, %187 : vector<7x8xf32>
    %190 = vector.broadcast %51 : vector<7x1xf32> to vector<7x8xf32>
    %191 = arith.mulf %189, %190 : vector<7x8xf32>
    %192 = arith.addf %173, %191 : vector<7x8xf32>
    %193 = arith.addf %174, %189 : vector<7x8xf32>
    %194 = vector.extract_strided_slice %96 {offsets = [5, 0], sizes = [1, 8], strides = [1, 1]} : vector<7x8xf32> to vector<1x8xf32>
    %195 = vector.broadcast %194 : vector<1x8xf32> to vector<7x8xf32>
    %196 = vector.broadcast %56 : vector<7x1xf32> to vector<7x8xf32>
    %197 = arith.subf %195, %196 : vector<7x8xf32>
    %198 = vector.broadcast %57 : vector<7x1xf32> to vector<7x8xf32>
    %199 = arith.mulf %198, %197 : vector<7x8xf32>
    %cst_30 = arith.constant 5.000000e-01 : f32
    %200 = vector.broadcast %cst_30 : f32 to vector<7x8xf32>
    %201 = arith.mulf %200, %199 : vector<7x8xf32>
    %202 = math.tanh %201 : vector<7x8xf32>
    %cst_31 = arith.constant 1.000000e+00 : f32
    %203 = vector.broadcast %cst_31 : f32 to vector<7x8xf32>
    %204 = arith.addf %202, %203 : vector<7x8xf32>
    %cst_32 = arith.constant 5.000000e-01 : f32
    %205 = vector.broadcast %cst_32 : f32 to vector<7x8xf32>
    %206 = arith.mulf %205, %204 : vector<7x8xf32>
    %207 = vector.broadcast %54 : vector<7x1xf32> to vector<7x8xf32>
    %208 = arith.mulf %207, %206 : vector<7x8xf32>
    %209 = vector.broadcast %55 : vector<7x1xf32> to vector<7x8xf32>
    %210 = arith.mulf %208, %209 : vector<7x8xf32>
    %211 = arith.addf %192, %210 : vector<7x8xf32>
    %212 = arith.addf %193, %208 : vector<7x8xf32>
    %213 = vector.extract_strided_slice %96 {offsets = [6, 0], sizes = [1, 8], strides = [1, 1]} : vector<7x8xf32> to vector<1x8xf32>
    %214 = vector.broadcast %213 : vector<1x8xf32> to vector<7x8xf32>
    %215 = vector.broadcast %60 : vector<7x1xf32> to vector<7x8xf32>
    %216 = arith.subf %214, %215 : vector<7x8xf32>
    %217 = vector.broadcast %61 : vector<7x1xf32> to vector<7x8xf32>
    %218 = arith.mulf %217, %216 : vector<7x8xf32>
    %cst_33 = arith.constant 5.000000e-01 : f32
    %219 = vector.broadcast %cst_33 : f32 to vector<7x8xf32>
    %220 = arith.mulf %219, %218 : vector<7x8xf32>
    %221 = math.tanh %220 : vector<7x8xf32>
    %cst_34 = arith.constant 1.000000e+00 : f32
    %222 = vector.broadcast %cst_34 : f32 to vector<7x8xf32>
    %223 = arith.addf %221, %222 : vector<7x8xf32>
    %cst_35 = arith.constant 5.000000e-01 : f32
    %224 = vector.broadcast %cst_35 : f32 to vector<7x8xf32>
    %225 = arith.mulf %224, %223 : vector<7x8xf32>
    %226 = vector.broadcast %58 : vector<7x1xf32> to vector<7x8xf32>
    %227 = arith.mulf %226, %225 : vector<7x8xf32>
    %228 = vector.broadcast %59 : vector<7x1xf32> to vector<7x8xf32>
    %229 = arith.mulf %227, %228 : vector<7x8xf32>
    %230 = arith.addf %211, %229 : vector<7x8xf32>
    %231 = arith.addf %212, %227 : vector<7x8xf32>
    %232 = vector.extract_strided_slice %90 {offsets = [0, 0], sizes = [1, 8], strides = [1, 1]} : vector<7x8xf32> to vector<1x8xf32>
    %233 = vector.broadcast %232 : vector<1x8xf32> to vector<7x8xf32>
    %234 = vector.broadcast %64 : vector<7x1xf32> to vector<7x8xf32>
    %235 = arith.subf %233, %234 : vector<7x8xf32>
    %236 = vector.broadcast %65 : vector<7x1xf32> to vector<7x8xf32>
    %237 = arith.mulf %236, %235 : vector<7x8xf32>
    %cst_36 = arith.constant 5.000000e-01 : f32
    %238 = vector.broadcast %cst_36 : f32 to vector<7x8xf32>
    %239 = arith.mulf %238, %237 : vector<7x8xf32>
    %240 = math.tanh %239 : vector<7x8xf32>
    %cst_37 = arith.constant 1.000000e+00 : f32
    %241 = vector.broadcast %cst_37 : f32 to vector<7x8xf32>
    %242 = arith.addf %240, %241 : vector<7x8xf32>
    %cst_38 = arith.constant 5.000000e-01 : f32
    %243 = vector.broadcast %cst_38 : f32 to vector<7x8xf32>
    %244 = arith.mulf %243, %242 : vector<7x8xf32>
    %245 = vector.broadcast %62 : vector<7x1xf32> to vector<7x8xf32>
    %246 = arith.mulf %245, %244 : vector<7x8xf32>
    %247 = vector.broadcast %63 : vector<7x1xf32> to vector<7x8xf32>
    %248 = arith.mulf %246, %247 : vector<7x8xf32>
    %249 = arith.addf %230, %248 : vector<7x8xf32>
    %250 = arith.addf %231, %246 : vector<7x8xf32>
    %251 = vector.extract_strided_slice %90 {offsets = [1, 0], sizes = [1, 8], strides = [1, 1]} : vector<7x8xf32> to vector<1x8xf32>
    %252 = vector.broadcast %251 : vector<1x8xf32> to vector<7x8xf32>
    %253 = vector.broadcast %68 : vector<7x1xf32> to vector<7x8xf32>
    %254 = arith.subf %252, %253 : vector<7x8xf32>
    %255 = vector.broadcast %69 : vector<7x1xf32> to vector<7x8xf32>
    %256 = arith.mulf %255, %254 : vector<7x8xf32>
    %cst_39 = arith.constant 5.000000e-01 : f32
    %257 = vector.broadcast %cst_39 : f32 to vector<7x8xf32>
    %258 = arith.mulf %257, %256 : vector<7x8xf32>
    %259 = math.tanh %258 : vector<7x8xf32>
    %cst_40 = arith.constant 1.000000e+00 : f32
    %260 = vector.broadcast %cst_40 : f32 to vector<7x8xf32>
    %261 = arith.addf %259, %260 : vector<7x8xf32>
    %cst_41 = arith.constant 5.000000e-01 : f32
    %262 = vector.broadcast %cst_41 : f32 to vector<7x8xf32>
    %263 = arith.mulf %262, %261 : vector<7x8xf32>
    %264 = vector.broadcast %66 : vector<7x1xf32> to vector<7x8xf32>
    %265 = arith.mulf %264, %263 : vector<7x8xf32>
    %266 = vector.broadcast %67 : vector<7x1xf32> to vector<7x8xf32>
    %267 = arith.mulf %265, %266 : vector<7x8xf32>
    %268 = arith.addf %249, %267 : vector<7x8xf32>
    %269 = arith.addf %250, %265 : vector<7x8xf32>
    %270 = vector.extract_strided_slice %90 {offsets = [2, 0], sizes = [1, 8], strides = [1, 1]} : vector<7x8xf32> to vector<1x8xf32>
    %271 = vector.broadcast %270 : vector<1x8xf32> to vector<7x8xf32>
    %272 = vector.broadcast %72 : vector<7x1xf32> to vector<7x8xf32>
    %273 = arith.subf %271, %272 : vector<7x8xf32>
    %274 = vector.broadcast %73 : vector<7x1xf32> to vector<7x8xf32>
    %275 = arith.mulf %274, %273 : vector<7x8xf32>
    %cst_42 = arith.constant 5.000000e-01 : f32
    %276 = vector.broadcast %cst_42 : f32 to vector<7x8xf32>
    %277 = arith.mulf %276, %275 : vector<7x8xf32>
    %278 = math.tanh %277 : vector<7x8xf32>
    %cst_43 = arith.constant 1.000000e+00 : f32
    %279 = vector.broadcast %cst_43 : f32 to vector<7x8xf32>
    %280 = arith.addf %278, %279 : vector<7x8xf32>
    %cst_44 = arith.constant 5.000000e-01 : f32
    %281 = vector.broadcast %cst_44 : f32 to vector<7x8xf32>
    %282 = arith.mulf %281, %280 : vector<7x8xf32>
    %283 = vector.broadcast %70 : vector<7x1xf32> to vector<7x8xf32>
    %284 = arith.mulf %283, %282 : vector<7x8xf32>
    %285 = vector.broadcast %71 : vector<7x1xf32> to vector<7x8xf32>
    %286 = arith.mulf %284, %285 : vector<7x8xf32>
    %287 = arith.addf %268, %286 : vector<7x8xf32>
    %288 = arith.addf %269, %284 : vector<7x8xf32>
    %289 = vector.extract_strided_slice %90 {offsets = [3, 0], sizes = [1, 8], strides = [1, 1]} : vector<7x8xf32> to vector<1x8xf32>
    %290 = vector.broadcast %289 : vector<1x8xf32> to vector<7x8xf32>
    %291 = vector.broadcast %76 : vector<7x1xf32> to vector<7x8xf32>
    %292 = arith.subf %290, %291 : vector<7x8xf32>
    %293 = vector.broadcast %77 : vector<7x1xf32> to vector<7x8xf32>
    %294 = arith.mulf %293, %292 : vector<7x8xf32>
    %cst_45 = arith.constant 5.000000e-01 : f32
    %295 = vector.broadcast %cst_45 : f32 to vector<7x8xf32>
    %296 = arith.mulf %295, %294 : vector<7x8xf32>
    %297 = math.tanh %296 : vector<7x8xf32>
    %cst_46 = arith.constant 1.000000e+00 : f32
    %298 = vector.broadcast %cst_46 : f32 to vector<7x8xf32>
    %299 = arith.addf %297, %298 : vector<7x8xf32>
    %cst_47 = arith.constant 5.000000e-01 : f32
    %300 = vector.broadcast %cst_47 : f32 to vector<7x8xf32>
    %301 = arith.mulf %300, %299 : vector<7x8xf32>
    %302 = vector.broadcast %74 : vector<7x1xf32> to vector<7x8xf32>
    %303 = arith.mulf %302, %301 : vector<7x8xf32>
    %304 = vector.broadcast %75 : vector<7x1xf32> to vector<7x8xf32>
    %305 = arith.mulf %303, %304 : vector<7x8xf32>
    %306 = arith.addf %287, %305 : vector<7x8xf32>
    %307 = arith.addf %288, %303 : vector<7x8xf32>
    %308 = vector.extract_strided_slice %90 {offsets = [4, 0], sizes = [1, 8], strides = [1, 1]} : vector<7x8xf32> to vector<1x8xf32>
    %309 = vector.broadcast %308 : vector<1x8xf32> to vector<7x8xf32>
    %310 = vector.broadcast %80 : vector<7x1xf32> to vector<7x8xf32>
    %311 = arith.subf %309, %310 : vector<7x8xf32>
    %312 = vector.broadcast %81 : vector<7x1xf32> to vector<7x8xf32>
    %313 = arith.mulf %312, %311 : vector<7x8xf32>
    %cst_48 = arith.constant 5.000000e-01 : f32
    %314 = vector.broadcast %cst_48 : f32 to vector<7x8xf32>
    %315 = arith.mulf %314, %313 : vector<7x8xf32>
    %316 = math.tanh %315 : vector<7x8xf32>
    %cst_49 = arith.constant 1.000000e+00 : f32
    %317 = vector.broadcast %cst_49 : f32 to vector<7x8xf32>
    %318 = arith.addf %316, %317 : vector<7x8xf32>
    %cst_50 = arith.constant 5.000000e-01 : f32
    %319 = vector.broadcast %cst_50 : f32 to vector<7x8xf32>
    %320 = arith.mulf %319, %318 : vector<7x8xf32>
    %321 = vector.broadcast %78 : vector<7x1xf32> to vector<7x8xf32>
    %322 = arith.mulf %321, %320 : vector<7x8xf32>
    %323 = vector.broadcast %79 : vector<7x1xf32> to vector<7x8xf32>
    %324 = arith.mulf %322, %323 : vector<7x8xf32>
    %325 = arith.addf %306, %324 : vector<7x8xf32>
    %326 = arith.addf %307, %322 : vector<7x8xf32>
    %327 = vector.extract_strided_slice %90 {offsets = [5, 0], sizes = [1, 8], strides = [1, 1]} : vector<7x8xf32> to vector<1x8xf32>
    %328 = vector.broadcast %327 : vector<1x8xf32> to vector<7x8xf32>
    %329 = vector.broadcast %84 : vector<7x1xf32> to vector<7x8xf32>
    %330 = arith.subf %328, %329 : vector<7x8xf32>
    %331 = vector.broadcast %85 : vector<7x1xf32> to vector<7x8xf32>
    %332 = arith.mulf %331, %330 : vector<7x8xf32>
    %cst_51 = arith.constant 5.000000e-01 : f32
    %333 = vector.broadcast %cst_51 : f32 to vector<7x8xf32>
    %334 = arith.mulf %333, %332 : vector<7x8xf32>
    %335 = math.tanh %334 : vector<7x8xf32>
    %cst_52 = arith.constant 1.000000e+00 : f32
    %336 = vector.broadcast %cst_52 : f32 to vector<7x8xf32>
    %337 = arith.addf %335, %336 : vector<7x8xf32>
    %cst_53 = arith.constant 5.000000e-01 : f32
    %338 = vector.broadcast %cst_53 : f32 to vector<7x8xf32>
    %339 = arith.mulf %338, %337 : vector<7x8xf32>
    %340 = vector.broadcast %82 : vector<7x1xf32> to vector<7x8xf32>
    %341 = arith.mulf %340, %339 : vector<7x8xf32>
    %342 = vector.broadcast %83 : vector<7x1xf32> to vector<7x8xf32>
    %343 = arith.mulf %341, %342 : vector<7x8xf32>
    %344 = arith.addf %325, %343 : vector<7x8xf32>
    %345 = arith.addf %326, %341 : vector<7x8xf32>
    %346 = vector.extract_strided_slice %90 {offsets = [6, 0], sizes = [1, 8], strides = [1, 1]} : vector<7x8xf32> to vector<1x8xf32>
    %347 = vector.broadcast %346 : vector<1x8xf32> to vector<7x8xf32>
    %348 = vector.broadcast %88 : vector<7x1xf32> to vector<7x8xf32>
    %349 = arith.subf %347, %348 : vector<7x8xf32>
    %350 = vector.broadcast %89 : vector<7x1xf32> to vector<7x8xf32>
    %351 = arith.mulf %350, %349 : vector<7x8xf32>
    %cst_54 = arith.constant 5.000000e-01 : f32
    %352 = vector.broadcast %cst_54 : f32 to vector<7x8xf32>
    %353 = arith.mulf %352, %351 : vector<7x8xf32>
    %354 = math.tanh %353 : vector<7x8xf32>
    %cst_55 = arith.constant 1.000000e+00 : f32
    %355 = vector.broadcast %cst_55 : f32 to vector<7x8xf32>
    %356 = arith.addf %354, %355 : vector<7x8xf32>
    %cst_56 = arith.constant 5.000000e-01 : f32
    %357 = vector.broadcast %cst_56 : f32 to vector<7x8xf32>
    %358 = arith.mulf %357, %356 : vector<7x8xf32>
    %359 = vector.broadcast %86 : vector<7x1xf32> to vector<7x8xf32>
    %360 = arith.mulf %359, %358 : vector<7x8xf32>
    %361 = vector.broadcast %87 : vector<7x1xf32> to vector<7x8xf32>
    %362 = arith.mulf %360, %361 : vector<7x8xf32>
    %363 = arith.addf %344, %362 : vector<7x8xf32>
    %364 = arith.addf %345, %360 : vector<7x8xf32>
    %365 = vector.broadcast %27 : vector<7x1xf32> to vector<7x8xf32>
    %366 = arith.mulf %365, %90 : vector<7x8xf32>
    %367 = vector.broadcast %32 : vector<7x1xf32> to vector<7x8xf32>
    %368 = arith.addf %366, %367 : vector<7x8xf32>
    %369 = arith.addf %368, %363 : vector<7x8xf32>
    %370 = vector.broadcast %33 : vector<7x1xf32> to vector<7x8xf32>
    %371 = arith.addf %370, %364 : vector<7x8xf32>
    %cst_57 = arith.constant 9.99999993E-9 : f32
    %372 = vector.broadcast %cst_57 : f32 to vector<7x8xf32>
    %373 = arith.addf %371, %372 : vector<7x8xf32>
    %374 = arith.divf %369, %373 : vector<7x8xf32>
    %375 = vector.extract_strided_slice %374 {offsets = [0, 0], sizes = [1, 8], strides = [1, 1]} : vector<7x8xf32> to vector<1x8xf32>
    %376 = vector.broadcast %375 : vector<1x8xf32> to vector<7x8xf32>
    %377 = vector.broadcast %64 : vector<7x1xf32> to vector<7x8xf32>
    %378 = arith.subf %376, %377 : vector<7x8xf32>
    %379 = vector.broadcast %65 : vector<7x1xf32> to vector<7x8xf32>
    %380 = arith.mulf %379, %378 : vector<7x8xf32>
    %cst_58 = arith.constant 5.000000e-01 : f32
    %381 = vector.broadcast %cst_58 : f32 to vector<7x8xf32>
    %382 = arith.mulf %381, %380 : vector<7x8xf32>
    %383 = math.tanh %382 : vector<7x8xf32>
    %cst_59 = arith.constant 1.000000e+00 : f32
    %384 = vector.broadcast %cst_59 : f32 to vector<7x8xf32>
    %385 = arith.addf %383, %384 : vector<7x8xf32>
    %cst_60 = arith.constant 5.000000e-01 : f32
    %386 = vector.broadcast %cst_60 : f32 to vector<7x8xf32>
    %387 = arith.mulf %386, %385 : vector<7x8xf32>
    %388 = vector.broadcast %62 : vector<7x1xf32> to vector<7x8xf32>
    %389 = arith.mulf %388, %387 : vector<7x8xf32>
    %390 = vector.broadcast %63 : vector<7x1xf32> to vector<7x8xf32>
    %391 = arith.mulf %389, %390 : vector<7x8xf32>
    %392 = arith.addf %230, %391 : vector<7x8xf32>
    %393 = arith.addf %231, %389 : vector<7x8xf32>
    %394 = vector.extract_strided_slice %374 {offsets = [1, 0], sizes = [1, 8], strides = [1, 1]} : vector<7x8xf32> to vector<1x8xf32>
    %395 = vector.broadcast %394 : vector<1x8xf32> to vector<7x8xf32>
    %396 = vector.broadcast %68 : vector<7x1xf32> to vector<7x8xf32>
    %397 = arith.subf %395, %396 : vector<7x8xf32>
    %398 = vector.broadcast %69 : vector<7x1xf32> to vector<7x8xf32>
    %399 = arith.mulf %398, %397 : vector<7x8xf32>
    %cst_61 = arith.constant 5.000000e-01 : f32
    %400 = vector.broadcast %cst_61 : f32 to vector<7x8xf32>
    %401 = arith.mulf %400, %399 : vector<7x8xf32>
    %402 = math.tanh %401 : vector<7x8xf32>
    %cst_62 = arith.constant 1.000000e+00 : f32
    %403 = vector.broadcast %cst_62 : f32 to vector<7x8xf32>
    %404 = arith.addf %402, %403 : vector<7x8xf32>
    %cst_63 = arith.constant 5.000000e-01 : f32
    %405 = vector.broadcast %cst_63 : f32 to vector<7x8xf32>
    %406 = arith.mulf %405, %404 : vector<7x8xf32>
    %407 = vector.broadcast %66 : vector<7x1xf32> to vector<7x8xf32>
    %408 = arith.mulf %407, %406 : vector<7x8xf32>
    %409 = vector.broadcast %67 : vector<7x1xf32> to vector<7x8xf32>
    %410 = arith.mulf %408, %409 : vector<7x8xf32>
    %411 = arith.addf %392, %410 : vector<7x8xf32>
    %412 = arith.addf %393, %408 : vector<7x8xf32>
    %413 = vector.extract_strided_slice %374 {offsets = [2, 0], sizes = [1, 8], strides = [1, 1]} : vector<7x8xf32> to vector<1x8xf32>
    %414 = vector.broadcast %413 : vector<1x8xf32> to vector<7x8xf32>
    %415 = vector.broadcast %72 : vector<7x1xf32> to vector<7x8xf32>
    %416 = arith.subf %414, %415 : vector<7x8xf32>
    %417 = vector.broadcast %73 : vector<7x1xf32> to vector<7x8xf32>
    %418 = arith.mulf %417, %416 : vector<7x8xf32>
    %cst_64 = arith.constant 5.000000e-01 : f32
    %419 = vector.broadcast %cst_64 : f32 to vector<7x8xf32>
    %420 = arith.mulf %419, %418 : vector<7x8xf32>
    %421 = math.tanh %420 : vector<7x8xf32>
    %cst_65 = arith.constant 1.000000e+00 : f32
    %422 = vector.broadcast %cst_65 : f32 to vector<7x8xf32>
    %423 = arith.addf %421, %422 : vector<7x8xf32>
    %cst_66 = arith.constant 5.000000e-01 : f32
    %424 = vector.broadcast %cst_66 : f32 to vector<7x8xf32>
    %425 = arith.mulf %424, %423 : vector<7x8xf32>
    %426 = vector.broadcast %70 : vector<7x1xf32> to vector<7x8xf32>
    %427 = arith.mulf %426, %425 : vector<7x8xf32>
    %428 = vector.broadcast %71 : vector<7x1xf32> to vector<7x8xf32>
    %429 = arith.mulf %427, %428 : vector<7x8xf32>
    %430 = arith.addf %411, %429 : vector<7x8xf32>
    %431 = arith.addf %412, %427 : vector<7x8xf32>
    %432 = vector.extract_strided_slice %374 {offsets = [3, 0], sizes = [1, 8], strides = [1, 1]} : vector<7x8xf32> to vector<1x8xf32>
    %433 = vector.broadcast %432 : vector<1x8xf32> to vector<7x8xf32>
    %434 = vector.broadcast %76 : vector<7x1xf32> to vector<7x8xf32>
    %435 = arith.subf %433, %434 : vector<7x8xf32>
    %436 = vector.broadcast %77 : vector<7x1xf32> to vector<7x8xf32>
    %437 = arith.mulf %436, %435 : vector<7x8xf32>
    %cst_67 = arith.constant 5.000000e-01 : f32
    %438 = vector.broadcast %cst_67 : f32 to vector<7x8xf32>
    %439 = arith.mulf %438, %437 : vector<7x8xf32>
    %440 = math.tanh %439 : vector<7x8xf32>
    %cst_68 = arith.constant 1.000000e+00 : f32
    %441 = vector.broadcast %cst_68 : f32 to vector<7x8xf32>
    %442 = arith.addf %440, %441 : vector<7x8xf32>
    %cst_69 = arith.constant 5.000000e-01 : f32
    %443 = vector.broadcast %cst_69 : f32 to vector<7x8xf32>
    %444 = arith.mulf %443, %442 : vector<7x8xf32>
    %445 = vector.broadcast %74 : vector<7x1xf32> to vector<7x8xf32>
    %446 = arith.mulf %445, %444 : vector<7x8xf32>
    %447 = vector.broadcast %75 : vector<7x1xf32> to vector<7x8xf32>
    %448 = arith.mulf %446, %447 : vector<7x8xf32>
    %449 = arith.addf %430, %448 : vector<7x8xf32>
    %450 = arith.addf %431, %446 : vector<7x8xf32>
    %451 = vector.extract_strided_slice %374 {offsets = [4, 0], sizes = [1, 8], strides = [1, 1]} : vector<7x8xf32> to vector<1x8xf32>
    %452 = vector.broadcast %451 : vector<1x8xf32> to vector<7x8xf32>
    %453 = vector.broadcast %80 : vector<7x1xf32> to vector<7x8xf32>
    %454 = arith.subf %452, %453 : vector<7x8xf32>
    %455 = vector.broadcast %81 : vector<7x1xf32> to vector<7x8xf32>
    %456 = arith.mulf %455, %454 : vector<7x8xf32>
    %cst_70 = arith.constant 5.000000e-01 : f32
    %457 = vector.broadcast %cst_70 : f32 to vector<7x8xf32>
    %458 = arith.mulf %457, %456 : vector<7x8xf32>
    %459 = math.tanh %458 : vector<7x8xf32>
    %cst_71 = arith.constant 1.000000e+00 : f32
    %460 = vector.broadcast %cst_71 : f32 to vector<7x8xf32>
    %461 = arith.addf %459, %460 : vector<7x8xf32>
    %cst_72 = arith.constant 5.000000e-01 : f32
    %462 = vector.broadcast %cst_72 : f32 to vector<7x8xf32>
    %463 = arith.mulf %462, %461 : vector<7x8xf32>
    %464 = vector.broadcast %78 : vector<7x1xf32> to vector<7x8xf32>
    %465 = arith.mulf %464, %463 : vector<7x8xf32>
    %466 = vector.broadcast %79 : vector<7x1xf32> to vector<7x8xf32>
    %467 = arith.mulf %465, %466 : vector<7x8xf32>
    %468 = arith.addf %449, %467 : vector<7x8xf32>
    %469 = arith.addf %450, %465 : vector<7x8xf32>
    %470 = vector.extract_strided_slice %374 {offsets = [5, 0], sizes = [1, 8], strides = [1, 1]} : vector<7x8xf32> to vector<1x8xf32>
    %471 = vector.broadcast %470 : vector<1x8xf32> to vector<7x8xf32>
    %472 = vector.broadcast %84 : vector<7x1xf32> to vector<7x8xf32>
    %473 = arith.subf %471, %472 : vector<7x8xf32>
    %474 = vector.broadcast %85 : vector<7x1xf32> to vector<7x8xf32>
    %475 = arith.mulf %474, %473 : vector<7x8xf32>
    %cst_73 = arith.constant 5.000000e-01 : f32
    %476 = vector.broadcast %cst_73 : f32 to vector<7x8xf32>
    %477 = arith.mulf %476, %475 : vector<7x8xf32>
    %478 = math.tanh %477 : vector<7x8xf32>
    %cst_74 = arith.constant 1.000000e+00 : f32
    %479 = vector.broadcast %cst_74 : f32 to vector<7x8xf32>
    %480 = arith.addf %478, %479 : vector<7x8xf32>
    %cst_75 = arith.constant 5.000000e-01 : f32
    %481 = vector.broadcast %cst_75 : f32 to vector<7x8xf32>
    %482 = arith.mulf %481, %480 : vector<7x8xf32>
    %483 = vector.broadcast %82 : vector<7x1xf32> to vector<7x8xf32>
    %484 = arith.mulf %483, %482 : vector<7x8xf32>
    %485 = vector.broadcast %83 : vector<7x1xf32> to vector<7x8xf32>
    %486 = arith.mulf %484, %485 : vector<7x8xf32>
    %487 = arith.addf %468, %486 : vector<7x8xf32>
    %488 = arith.addf %469, %484 : vector<7x8xf32>
    %489 = vector.extract_strided_slice %374 {offsets = [6, 0], sizes = [1, 8], strides = [1, 1]} : vector<7x8xf32> to vector<1x8xf32>
    %490 = vector.broadcast %489 : vector<1x8xf32> to vector<7x8xf32>
    %491 = vector.broadcast %88 : vector<7x1xf32> to vector<7x8xf32>
    %492 = arith.subf %490, %491 : vector<7x8xf32>
    %493 = vector.broadcast %89 : vector<7x1xf32> to vector<7x8xf32>
    %494 = arith.mulf %493, %492 : vector<7x8xf32>
    %cst_76 = arith.constant 5.000000e-01 : f32
    %495 = vector.broadcast %cst_76 : f32 to vector<7x8xf32>
    %496 = arith.mulf %495, %494 : vector<7x8xf32>
    %497 = math.tanh %496 : vector<7x8xf32>
    %cst_77 = arith.constant 1.000000e+00 : f32
    %498 = vector.broadcast %cst_77 : f32 to vector<7x8xf32>
    %499 = arith.addf %497, %498 : vector<7x8xf32>
    %cst_78 = arith.constant 5.000000e-01 : f32
    %500 = vector.broadcast %cst_78 : f32 to vector<7x8xf32>
    %501 = arith.mulf %500, %499 : vector<7x8xf32>
    %502 = vector.broadcast %86 : vector<7x1xf32> to vector<7x8xf32>
    %503 = arith.mulf %502, %501 : vector<7x8xf32>
    %504 = vector.broadcast %87 : vector<7x1xf32> to vector<7x8xf32>
    %505 = arith.mulf %503, %504 : vector<7x8xf32>
    %506 = arith.addf %487, %505 : vector<7x8xf32>
    %507 = arith.addf %488, %503 : vector<7x8xf32>
    %508 = vector.broadcast %27 : vector<7x1xf32> to vector<7x8xf32>
    %509 = arith.mulf %508, %374 : vector<7x8xf32>
    %510 = vector.broadcast %32 : vector<7x1xf32> to vector<7x8xf32>
    %511 = arith.addf %509, %510 : vector<7x8xf32>
    %512 = arith.addf %511, %506 : vector<7x8xf32>
    %513 = vector.broadcast %33 : vector<7x1xf32> to vector<7x8xf32>
    %514 = arith.addf %513, %507 : vector<7x8xf32>
    %cst_79 = arith.constant 9.99999993E-9 : f32
    %515 = vector.broadcast %cst_79 : f32 to vector<7x8xf32>
    %516 = arith.addf %514, %515 : vector<7x8xf32>
    %517 = arith.divf %512, %516 : vector<7x8xf32>
    %518 = vector.extract_strided_slice %517 {offsets = [0, 0], sizes = [1, 8], strides = [1, 1]} : vector<7x8xf32> to vector<1x8xf32>
    %519 = vector.broadcast %518 : vector<1x8xf32> to vector<7x8xf32>
    %520 = vector.broadcast %64 : vector<7x1xf32> to vector<7x8xf32>
    %521 = arith.subf %519, %520 : vector<7x8xf32>
    %522 = vector.broadcast %65 : vector<7x1xf32> to vector<7x8xf32>
    %523 = arith.mulf %522, %521 : vector<7x8xf32>
    %cst_80 = arith.constant 5.000000e-01 : f32
    %524 = vector.broadcast %cst_80 : f32 to vector<7x8xf32>
    %525 = arith.mulf %524, %523 : vector<7x8xf32>
    %526 = math.tanh %525 : vector<7x8xf32>
    %cst_81 = arith.constant 1.000000e+00 : f32
    %527 = vector.broadcast %cst_81 : f32 to vector<7x8xf32>
    %528 = arith.addf %526, %527 : vector<7x8xf32>
    %cst_82 = arith.constant 5.000000e-01 : f32
    %529 = vector.broadcast %cst_82 : f32 to vector<7x8xf32>
    %530 = arith.mulf %529, %528 : vector<7x8xf32>
    %531 = vector.broadcast %62 : vector<7x1xf32> to vector<7x8xf32>
    %532 = arith.mulf %531, %530 : vector<7x8xf32>
    %533 = vector.broadcast %63 : vector<7x1xf32> to vector<7x8xf32>
    %534 = arith.mulf %532, %533 : vector<7x8xf32>
    %535 = arith.addf %230, %534 : vector<7x8xf32>
    %536 = arith.addf %231, %532 : vector<7x8xf32>
    %537 = vector.extract_strided_slice %517 {offsets = [1, 0], sizes = [1, 8], strides = [1, 1]} : vector<7x8xf32> to vector<1x8xf32>
    %538 = vector.broadcast %537 : vector<1x8xf32> to vector<7x8xf32>
    %539 = vector.broadcast %68 : vector<7x1xf32> to vector<7x8xf32>
    %540 = arith.subf %538, %539 : vector<7x8xf32>
    %541 = vector.broadcast %69 : vector<7x1xf32> to vector<7x8xf32>
    %542 = arith.mulf %541, %540 : vector<7x8xf32>
    %cst_83 = arith.constant 5.000000e-01 : f32
    %543 = vector.broadcast %cst_83 : f32 to vector<7x8xf32>
    %544 = arith.mulf %543, %542 : vector<7x8xf32>
    %545 = math.tanh %544 : vector<7x8xf32>
    %cst_84 = arith.constant 1.000000e+00 : f32
    %546 = vector.broadcast %cst_84 : f32 to vector<7x8xf32>
    %547 = arith.addf %545, %546 : vector<7x8xf32>
    %cst_85 = arith.constant 5.000000e-01 : f32
    %548 = vector.broadcast %cst_85 : f32 to vector<7x8xf32>
    %549 = arith.mulf %548, %547 : vector<7x8xf32>
    %550 = vector.broadcast %66 : vector<7x1xf32> to vector<7x8xf32>
    %551 = arith.mulf %550, %549 : vector<7x8xf32>
    %552 = vector.broadcast %67 : vector<7x1xf32> to vector<7x8xf32>
    %553 = arith.mulf %551, %552 : vector<7x8xf32>
    %554 = arith.addf %535, %553 : vector<7x8xf32>
    %555 = arith.addf %536, %551 : vector<7x8xf32>
    %556 = vector.extract_strided_slice %517 {offsets = [2, 0], sizes = [1, 8], strides = [1, 1]} : vector<7x8xf32> to vector<1x8xf32>
    %557 = vector.broadcast %556 : vector<1x8xf32> to vector<7x8xf32>
    %558 = vector.broadcast %72 : vector<7x1xf32> to vector<7x8xf32>
    %559 = arith.subf %557, %558 : vector<7x8xf32>
    %560 = vector.broadcast %73 : vector<7x1xf32> to vector<7x8xf32>
    %561 = arith.mulf %560, %559 : vector<7x8xf32>
    %cst_86 = arith.constant 5.000000e-01 : f32
    %562 = vector.broadcast %cst_86 : f32 to vector<7x8xf32>
    %563 = arith.mulf %562, %561 : vector<7x8xf32>
    %564 = math.tanh %563 : vector<7x8xf32>
    %cst_87 = arith.constant 1.000000e+00 : f32
    %565 = vector.broadcast %cst_87 : f32 to vector<7x8xf32>
    %566 = arith.addf %564, %565 : vector<7x8xf32>
    %cst_88 = arith.constant 5.000000e-01 : f32
    %567 = vector.broadcast %cst_88 : f32 to vector<7x8xf32>
    %568 = arith.mulf %567, %566 : vector<7x8xf32>
    %569 = vector.broadcast %70 : vector<7x1xf32> to vector<7x8xf32>
    %570 = arith.mulf %569, %568 : vector<7x8xf32>
    %571 = vector.broadcast %71 : vector<7x1xf32> to vector<7x8xf32>
    %572 = arith.mulf %570, %571 : vector<7x8xf32>
    %573 = arith.addf %554, %572 : vector<7x8xf32>
    %574 = arith.addf %555, %570 : vector<7x8xf32>
    %575 = vector.extract_strided_slice %517 {offsets = [3, 0], sizes = [1, 8], strides = [1, 1]} : vector<7x8xf32> to vector<1x8xf32>
    %576 = vector.broadcast %575 : vector<1x8xf32> to vector<7x8xf32>
    %577 = vector.broadcast %76 : vector<7x1xf32> to vector<7x8xf32>
    %578 = arith.subf %576, %577 : vector<7x8xf32>
    %579 = vector.broadcast %77 : vector<7x1xf32> to vector<7x8xf32>
    %580 = arith.mulf %579, %578 : vector<7x8xf32>
    %cst_89 = arith.constant 5.000000e-01 : f32
    %581 = vector.broadcast %cst_89 : f32 to vector<7x8xf32>
    %582 = arith.mulf %581, %580 : vector<7x8xf32>
    %583 = math.tanh %582 : vector<7x8xf32>
    %cst_90 = arith.constant 1.000000e+00 : f32
    %584 = vector.broadcast %cst_90 : f32 to vector<7x8xf32>
    %585 = arith.addf %583, %584 : vector<7x8xf32>
    %cst_91 = arith.constant 5.000000e-01 : f32
    %586 = vector.broadcast %cst_91 : f32 to vector<7x8xf32>
    %587 = arith.mulf %586, %585 : vector<7x8xf32>
    %588 = vector.broadcast %74 : vector<7x1xf32> to vector<7x8xf32>
    %589 = arith.mulf %588, %587 : vector<7x8xf32>
    %590 = vector.broadcast %75 : vector<7x1xf32> to vector<7x8xf32>
    %591 = arith.mulf %589, %590 : vector<7x8xf32>
    %592 = arith.addf %573, %591 : vector<7x8xf32>
    %593 = arith.addf %574, %589 : vector<7x8xf32>
    %594 = vector.extract_strided_slice %517 {offsets = [4, 0], sizes = [1, 8], strides = [1, 1]} : vector<7x8xf32> to vector<1x8xf32>
    %595 = vector.broadcast %594 : vector<1x8xf32> to vector<7x8xf32>
    %596 = vector.broadcast %80 : vector<7x1xf32> to vector<7x8xf32>
    %597 = arith.subf %595, %596 : vector<7x8xf32>
    %598 = vector.broadcast %81 : vector<7x1xf32> to vector<7x8xf32>
    %599 = arith.mulf %598, %597 : vector<7x8xf32>
    %cst_92 = arith.constant 5.000000e-01 : f32
    %600 = vector.broadcast %cst_92 : f32 to vector<7x8xf32>
    %601 = arith.mulf %600, %599 : vector<7x8xf32>
    %602 = math.tanh %601 : vector<7x8xf32>
    %cst_93 = arith.constant 1.000000e+00 : f32
    %603 = vector.broadcast %cst_93 : f32 to vector<7x8xf32>
    %604 = arith.addf %602, %603 : vector<7x8xf32>
    %cst_94 = arith.constant 5.000000e-01 : f32
    %605 = vector.broadcast %cst_94 : f32 to vector<7x8xf32>
    %606 = arith.mulf %605, %604 : vector<7x8xf32>
    %607 = vector.broadcast %78 : vector<7x1xf32> to vector<7x8xf32>
    %608 = arith.mulf %607, %606 : vector<7x8xf32>
    %609 = vector.broadcast %79 : vector<7x1xf32> to vector<7x8xf32>
    %610 = arith.mulf %608, %609 : vector<7x8xf32>
    %611 = arith.addf %592, %610 : vector<7x8xf32>
    %612 = arith.addf %593, %608 : vector<7x8xf32>
    %613 = vector.extract_strided_slice %517 {offsets = [5, 0], sizes = [1, 8], strides = [1, 1]} : vector<7x8xf32> to vector<1x8xf32>
    %614 = vector.broadcast %613 : vector<1x8xf32> to vector<7x8xf32>
    %615 = vector.broadcast %84 : vector<7x1xf32> to vector<7x8xf32>
    %616 = arith.subf %614, %615 : vector<7x8xf32>
    %617 = vector.broadcast %85 : vector<7x1xf32> to vector<7x8xf32>
    %618 = arith.mulf %617, %616 : vector<7x8xf32>
    %cst_95 = arith.constant 5.000000e-01 : f32
    %619 = vector.broadcast %cst_95 : f32 to vector<7x8xf32>
    %620 = arith.mulf %619, %618 : vector<7x8xf32>
    %621 = math.tanh %620 : vector<7x8xf32>
    %cst_96 = arith.constant 1.000000e+00 : f32
    %622 = vector.broadcast %cst_96 : f32 to vector<7x8xf32>
    %623 = arith.addf %621, %622 : vector<7x8xf32>
    %cst_97 = arith.constant 5.000000e-01 : f32
    %624 = vector.broadcast %cst_97 : f32 to vector<7x8xf32>
    %625 = arith.mulf %624, %623 : vector<7x8xf32>
    %626 = vector.broadcast %82 : vector<7x1xf32> to vector<7x8xf32>
    %627 = arith.mulf %626, %625 : vector<7x8xf32>
    %628 = vector.broadcast %83 : vector<7x1xf32> to vector<7x8xf32>
    %629 = arith.mulf %627, %628 : vector<7x8xf32>
    %630 = arith.addf %611, %629 : vector<7x8xf32>
    %631 = arith.addf %612, %627 : vector<7x8xf32>
    %632 = vector.extract_strided_slice %517 {offsets = [6, 0], sizes = [1, 8], strides = [1, 1]} : vector<7x8xf32> to vector<1x8xf32>
    %633 = vector.broadcast %632 : vector<1x8xf32> to vector<7x8xf32>
    %634 = vector.broadcast %88 : vector<7x1xf32> to vector<7x8xf32>
    %635 = arith.subf %633, %634 : vector<7x8xf32>
    %636 = vector.broadcast %89 : vector<7x1xf32> to vector<7x8xf32>
    %637 = arith.mulf %636, %635 : vector<7x8xf32>
    %cst_98 = arith.constant 5.000000e-01 : f32
    %638 = vector.broadcast %cst_98 : f32 to vector<7x8xf32>
    %639 = arith.mulf %638, %637 : vector<7x8xf32>
    %640 = math.tanh %639 : vector<7x8xf32>
    %cst_99 = arith.constant 1.000000e+00 : f32
    %641 = vector.broadcast %cst_99 : f32 to vector<7x8xf32>
    %642 = arith.addf %640, %641 : vector<7x8xf32>
    %cst_100 = arith.constant 5.000000e-01 : f32
    %643 = vector.broadcast %cst_100 : f32 to vector<7x8xf32>
    %644 = arith.mulf %643, %642 : vector<7x8xf32>
    %645 = vector.broadcast %86 : vector<7x1xf32> to vector<7x8xf32>
    %646 = arith.mulf %645, %644 : vector<7x8xf32>
    %647 = vector.broadcast %87 : vector<7x1xf32> to vector<7x8xf32>
    %648 = arith.mulf %646, %647 : vector<7x8xf32>
    %649 = arith.addf %630, %648 : vector<7x8xf32>
    %650 = arith.addf %631, %646 : vector<7x8xf32>
    %651 = vector.broadcast %27 : vector<7x1xf32> to vector<7x8xf32>
    %652 = arith.mulf %651, %517 : vector<7x8xf32>
    %653 = vector.broadcast %32 : vector<7x1xf32> to vector<7x8xf32>
    %654 = arith.addf %652, %653 : vector<7x8xf32>
    %655 = arith.addf %654, %649 : vector<7x8xf32>
    %656 = vector.broadcast %33 : vector<7x1xf32> to vector<7x8xf32>
    %657 = arith.addf %656, %650 : vector<7x8xf32>
    %cst_101 = arith.constant 9.99999993E-9 : f32
    %658 = vector.broadcast %cst_101 : f32 to vector<7x8xf32>
    %659 = arith.addf %657, %658 : vector<7x8xf32>
    %660 = arith.divf %655, %659 : vector<7x8xf32>
    %661 = vector.extract_strided_slice %660 {offsets = [0, 0], sizes = [1, 8], strides = [1, 1]} : vector<7x8xf32> to vector<1x8xf32>
    %662 = vector.broadcast %661 : vector<1x8xf32> to vector<7x8xf32>
    %663 = vector.broadcast %64 : vector<7x1xf32> to vector<7x8xf32>
    %664 = arith.subf %662, %663 : vector<7x8xf32>
    %665 = vector.broadcast %65 : vector<7x1xf32> to vector<7x8xf32>
    %666 = arith.mulf %665, %664 : vector<7x8xf32>
    %cst_102 = arith.constant 5.000000e-01 : f32
    %667 = vector.broadcast %cst_102 : f32 to vector<7x8xf32>
    %668 = arith.mulf %667, %666 : vector<7x8xf32>
    %669 = math.tanh %668 : vector<7x8xf32>
    %cst_103 = arith.constant 1.000000e+00 : f32
    %670 = vector.broadcast %cst_103 : f32 to vector<7x8xf32>
    %671 = arith.addf %669, %670 : vector<7x8xf32>
    %cst_104 = arith.constant 5.000000e-01 : f32
    %672 = vector.broadcast %cst_104 : f32 to vector<7x8xf32>
    %673 = arith.mulf %672, %671 : vector<7x8xf32>
    %674 = vector.broadcast %62 : vector<7x1xf32> to vector<7x8xf32>
    %675 = arith.mulf %674, %673 : vector<7x8xf32>
    %676 = vector.broadcast %63 : vector<7x1xf32> to vector<7x8xf32>
    %677 = arith.mulf %675, %676 : vector<7x8xf32>
    %678 = arith.addf %230, %677 : vector<7x8xf32>
    %679 = arith.addf %231, %675 : vector<7x8xf32>
    %680 = vector.extract_strided_slice %660 {offsets = [1, 0], sizes = [1, 8], strides = [1, 1]} : vector<7x8xf32> to vector<1x8xf32>
    %681 = vector.broadcast %680 : vector<1x8xf32> to vector<7x8xf32>
    %682 = vector.broadcast %68 : vector<7x1xf32> to vector<7x8xf32>
    %683 = arith.subf %681, %682 : vector<7x8xf32>
    %684 = vector.broadcast %69 : vector<7x1xf32> to vector<7x8xf32>
    %685 = arith.mulf %684, %683 : vector<7x8xf32>
    %cst_105 = arith.constant 5.000000e-01 : f32
    %686 = vector.broadcast %cst_105 : f32 to vector<7x8xf32>
    %687 = arith.mulf %686, %685 : vector<7x8xf32>
    %688 = math.tanh %687 : vector<7x8xf32>
    %cst_106 = arith.constant 1.000000e+00 : f32
    %689 = vector.broadcast %cst_106 : f32 to vector<7x8xf32>
    %690 = arith.addf %688, %689 : vector<7x8xf32>
    %cst_107 = arith.constant 5.000000e-01 : f32
    %691 = vector.broadcast %cst_107 : f32 to vector<7x8xf32>
    %692 = arith.mulf %691, %690 : vector<7x8xf32>
    %693 = vector.broadcast %66 : vector<7x1xf32> to vector<7x8xf32>
    %694 = arith.mulf %693, %692 : vector<7x8xf32>
    %695 = vector.broadcast %67 : vector<7x1xf32> to vector<7x8xf32>
    %696 = arith.mulf %694, %695 : vector<7x8xf32>
    %697 = arith.addf %678, %696 : vector<7x8xf32>
    %698 = arith.addf %679, %694 : vector<7x8xf32>
    %699 = vector.extract_strided_slice %660 {offsets = [2, 0], sizes = [1, 8], strides = [1, 1]} : vector<7x8xf32> to vector<1x8xf32>
    %700 = vector.broadcast %699 : vector<1x8xf32> to vector<7x8xf32>
    %701 = vector.broadcast %72 : vector<7x1xf32> to vector<7x8xf32>
    %702 = arith.subf %700, %701 : vector<7x8xf32>
    %703 = vector.broadcast %73 : vector<7x1xf32> to vector<7x8xf32>
    %704 = arith.mulf %703, %702 : vector<7x8xf32>
    %cst_108 = arith.constant 5.000000e-01 : f32
    %705 = vector.broadcast %cst_108 : f32 to vector<7x8xf32>
    %706 = arith.mulf %705, %704 : vector<7x8xf32>
    %707 = math.tanh %706 : vector<7x8xf32>
    %cst_109 = arith.constant 1.000000e+00 : f32
    %708 = vector.broadcast %cst_109 : f32 to vector<7x8xf32>
    %709 = arith.addf %707, %708 : vector<7x8xf32>
    %cst_110 = arith.constant 5.000000e-01 : f32
    %710 = vector.broadcast %cst_110 : f32 to vector<7x8xf32>
    %711 = arith.mulf %710, %709 : vector<7x8xf32>
    %712 = vector.broadcast %70 : vector<7x1xf32> to vector<7x8xf32>
    %713 = arith.mulf %712, %711 : vector<7x8xf32>
    %714 = vector.broadcast %71 : vector<7x1xf32> to vector<7x8xf32>
    %715 = arith.mulf %713, %714 : vector<7x8xf32>
    %716 = arith.addf %697, %715 : vector<7x8xf32>
    %717 = arith.addf %698, %713 : vector<7x8xf32>
    %718 = vector.extract_strided_slice %660 {offsets = [3, 0], sizes = [1, 8], strides = [1, 1]} : vector<7x8xf32> to vector<1x8xf32>
    %719 = vector.broadcast %718 : vector<1x8xf32> to vector<7x8xf32>
    %720 = vector.broadcast %76 : vector<7x1xf32> to vector<7x8xf32>
    %721 = arith.subf %719, %720 : vector<7x8xf32>
    %722 = vector.broadcast %77 : vector<7x1xf32> to vector<7x8xf32>
    %723 = arith.mulf %722, %721 : vector<7x8xf32>
    %cst_111 = arith.constant 5.000000e-01 : f32
    %724 = vector.broadcast %cst_111 : f32 to vector<7x8xf32>
    %725 = arith.mulf %724, %723 : vector<7x8xf32>
    %726 = math.tanh %725 : vector<7x8xf32>
    %cst_112 = arith.constant 1.000000e+00 : f32
    %727 = vector.broadcast %cst_112 : f32 to vector<7x8xf32>
    %728 = arith.addf %726, %727 : vector<7x8xf32>
    %cst_113 = arith.constant 5.000000e-01 : f32
    %729 = vector.broadcast %cst_113 : f32 to vector<7x8xf32>
    %730 = arith.mulf %729, %728 : vector<7x8xf32>
    %731 = vector.broadcast %74 : vector<7x1xf32> to vector<7x8xf32>
    %732 = arith.mulf %731, %730 : vector<7x8xf32>
    %733 = vector.broadcast %75 : vector<7x1xf32> to vector<7x8xf32>
    %734 = arith.mulf %732, %733 : vector<7x8xf32>
    %735 = arith.addf %716, %734 : vector<7x8xf32>
    %736 = arith.addf %717, %732 : vector<7x8xf32>
    %737 = vector.extract_strided_slice %660 {offsets = [4, 0], sizes = [1, 8], strides = [1, 1]} : vector<7x8xf32> to vector<1x8xf32>
    %738 = vector.broadcast %737 : vector<1x8xf32> to vector<7x8xf32>
    %739 = vector.broadcast %80 : vector<7x1xf32> to vector<7x8xf32>
    %740 = arith.subf %738, %739 : vector<7x8xf32>
    %741 = vector.broadcast %81 : vector<7x1xf32> to vector<7x8xf32>
    %742 = arith.mulf %741, %740 : vector<7x8xf32>
    %cst_114 = arith.constant 5.000000e-01 : f32
    %743 = vector.broadcast %cst_114 : f32 to vector<7x8xf32>
    %744 = arith.mulf %743, %742 : vector<7x8xf32>
    %745 = math.tanh %744 : vector<7x8xf32>
    %cst_115 = arith.constant 1.000000e+00 : f32
    %746 = vector.broadcast %cst_115 : f32 to vector<7x8xf32>
    %747 = arith.addf %745, %746 : vector<7x8xf32>
    %cst_116 = arith.constant 5.000000e-01 : f32
    %748 = vector.broadcast %cst_116 : f32 to vector<7x8xf32>
    %749 = arith.mulf %748, %747 : vector<7x8xf32>
    %750 = vector.broadcast %78 : vector<7x1xf32> to vector<7x8xf32>
    %751 = arith.mulf %750, %749 : vector<7x8xf32>
    %752 = vector.broadcast %79 : vector<7x1xf32> to vector<7x8xf32>
    %753 = arith.mulf %751, %752 : vector<7x8xf32>
    %754 = arith.addf %735, %753 : vector<7x8xf32>
    %755 = arith.addf %736, %751 : vector<7x8xf32>
    %756 = vector.extract_strided_slice %660 {offsets = [5, 0], sizes = [1, 8], strides = [1, 1]} : vector<7x8xf32> to vector<1x8xf32>
    %757 = vector.broadcast %756 : vector<1x8xf32> to vector<7x8xf32>
    %758 = vector.broadcast %84 : vector<7x1xf32> to vector<7x8xf32>
    %759 = arith.subf %757, %758 : vector<7x8xf32>
    %760 = vector.broadcast %85 : vector<7x1xf32> to vector<7x8xf32>
    %761 = arith.mulf %760, %759 : vector<7x8xf32>
    %cst_117 = arith.constant 5.000000e-01 : f32
    %762 = vector.broadcast %cst_117 : f32 to vector<7x8xf32>
    %763 = arith.mulf %762, %761 : vector<7x8xf32>
    %764 = math.tanh %763 : vector<7x8xf32>
    %cst_118 = arith.constant 1.000000e+00 : f32
    %765 = vector.broadcast %cst_118 : f32 to vector<7x8xf32>
    %766 = arith.addf %764, %765 : vector<7x8xf32>
    %cst_119 = arith.constant 5.000000e-01 : f32
    %767 = vector.broadcast %cst_119 : f32 to vector<7x8xf32>
    %768 = arith.mulf %767, %766 : vector<7x8xf32>
    %769 = vector.broadcast %82 : vector<7x1xf32> to vector<7x8xf32>
    %770 = arith.mulf %769, %768 : vector<7x8xf32>
    %771 = vector.broadcast %83 : vector<7x1xf32> to vector<7x8xf32>
    %772 = arith.mulf %770, %771 : vector<7x8xf32>
    %773 = arith.addf %754, %772 : vector<7x8xf32>
    %774 = arith.addf %755, %770 : vector<7x8xf32>
    %775 = vector.extract_strided_slice %660 {offsets = [6, 0], sizes = [1, 8], strides = [1, 1]} : vector<7x8xf32> to vector<1x8xf32>
    %776 = vector.broadcast %775 : vector<1x8xf32> to vector<7x8xf32>
    %777 = vector.broadcast %88 : vector<7x1xf32> to vector<7x8xf32>
    %778 = arith.subf %776, %777 : vector<7x8xf32>
    %779 = vector.broadcast %89 : vector<7x1xf32> to vector<7x8xf32>
    %780 = arith.mulf %779, %778 : vector<7x8xf32>
    %cst_120 = arith.constant 5.000000e-01 : f32
    %781 = vector.broadcast %cst_120 : f32 to vector<7x8xf32>
    %782 = arith.mulf %781, %780 : vector<7x8xf32>
    %783 = math.tanh %782 : vector<7x8xf32>
    %cst_121 = arith.constant 1.000000e+00 : f32
    %784 = vector.broadcast %cst_121 : f32 to vector<7x8xf32>
    %785 = arith.addf %783, %784 : vector<7x8xf32>
    %cst_122 = arith.constant 5.000000e-01 : f32
    %786 = vector.broadcast %cst_122 : f32 to vector<7x8xf32>
    %787 = arith.mulf %786, %785 : vector<7x8xf32>
    %788 = vector.broadcast %86 : vector<7x1xf32> to vector<7x8xf32>
    %789 = arith.mulf %788, %787 : vector<7x8xf32>
    %790 = vector.broadcast %87 : vector<7x1xf32> to vector<7x8xf32>
    %791 = arith.mulf %789, %790 : vector<7x8xf32>
    %792 = arith.addf %773, %791 : vector<7x8xf32>
    %793 = arith.addf %774, %789 : vector<7x8xf32>
    %794 = vector.broadcast %27 : vector<7x1xf32> to vector<7x8xf32>
    %795 = arith.mulf %794, %660 : vector<7x8xf32>
    %796 = vector.broadcast %32 : vector<7x1xf32> to vector<7x8xf32>
    %797 = arith.addf %795, %796 : vector<7x8xf32>
    %798 = arith.addf %797, %792 : vector<7x8xf32>
    %799 = vector.broadcast %33 : vector<7x1xf32> to vector<7x8xf32>
    %800 = arith.addf %799, %793 : vector<7x8xf32>
    %cst_123 = arith.constant 9.99999993E-9 : f32
    %801 = vector.broadcast %cst_123 : f32 to vector<7x8xf32>
    %802 = arith.addf %800, %801 : vector<7x8xf32>
    %803 = arith.divf %798, %802 : vector<7x8xf32>
    %804 = vector.extract_strided_slice %803 {offsets = [0, 0], sizes = [1, 8], strides = [1, 1]} : vector<7x8xf32> to vector<1x8xf32>
    %805 = vector.broadcast %804 : vector<1x8xf32> to vector<7x8xf32>
    %806 = vector.broadcast %64 : vector<7x1xf32> to vector<7x8xf32>
    %807 = arith.subf %805, %806 : vector<7x8xf32>
    %808 = vector.broadcast %65 : vector<7x1xf32> to vector<7x8xf32>
    %809 = arith.mulf %808, %807 : vector<7x8xf32>
    %cst_124 = arith.constant 5.000000e-01 : f32
    %810 = vector.broadcast %cst_124 : f32 to vector<7x8xf32>
    %811 = arith.mulf %810, %809 : vector<7x8xf32>
    %812 = math.tanh %811 : vector<7x8xf32>
    %cst_125 = arith.constant 1.000000e+00 : f32
    %813 = vector.broadcast %cst_125 : f32 to vector<7x8xf32>
    %814 = arith.addf %812, %813 : vector<7x8xf32>
    %cst_126 = arith.constant 5.000000e-01 : f32
    %815 = vector.broadcast %cst_126 : f32 to vector<7x8xf32>
    %816 = arith.mulf %815, %814 : vector<7x8xf32>
    %817 = vector.broadcast %62 : vector<7x1xf32> to vector<7x8xf32>
    %818 = arith.mulf %817, %816 : vector<7x8xf32>
    %819 = vector.broadcast %63 : vector<7x1xf32> to vector<7x8xf32>
    %820 = arith.mulf %818, %819 : vector<7x8xf32>
    %821 = arith.addf %230, %820 : vector<7x8xf32>
    %822 = arith.addf %231, %818 : vector<7x8xf32>
    %823 = vector.extract_strided_slice %803 {offsets = [1, 0], sizes = [1, 8], strides = [1, 1]} : vector<7x8xf32> to vector<1x8xf32>
    %824 = vector.broadcast %823 : vector<1x8xf32> to vector<7x8xf32>
    %825 = vector.broadcast %68 : vector<7x1xf32> to vector<7x8xf32>
    %826 = arith.subf %824, %825 : vector<7x8xf32>
    %827 = vector.broadcast %69 : vector<7x1xf32> to vector<7x8xf32>
    %828 = arith.mulf %827, %826 : vector<7x8xf32>
    %cst_127 = arith.constant 5.000000e-01 : f32
    %829 = vector.broadcast %cst_127 : f32 to vector<7x8xf32>
    %830 = arith.mulf %829, %828 : vector<7x8xf32>
    %831 = math.tanh %830 : vector<7x8xf32>
    %cst_128 = arith.constant 1.000000e+00 : f32
    %832 = vector.broadcast %cst_128 : f32 to vector<7x8xf32>
    %833 = arith.addf %831, %832 : vector<7x8xf32>
    %cst_129 = arith.constant 5.000000e-01 : f32
    %834 = vector.broadcast %cst_129 : f32 to vector<7x8xf32>
    %835 = arith.mulf %834, %833 : vector<7x8xf32>
    %836 = vector.broadcast %66 : vector<7x1xf32> to vector<7x8xf32>
    %837 = arith.mulf %836, %835 : vector<7x8xf32>
    %838 = vector.broadcast %67 : vector<7x1xf32> to vector<7x8xf32>
    %839 = arith.mulf %837, %838 : vector<7x8xf32>
    %840 = arith.addf %821, %839 : vector<7x8xf32>
    %841 = arith.addf %822, %837 : vector<7x8xf32>
    %842 = vector.extract_strided_slice %803 {offsets = [2, 0], sizes = [1, 8], strides = [1, 1]} : vector<7x8xf32> to vector<1x8xf32>
    %843 = vector.broadcast %842 : vector<1x8xf32> to vector<7x8xf32>
    %844 = vector.broadcast %72 : vector<7x1xf32> to vector<7x8xf32>
    %845 = arith.subf %843, %844 : vector<7x8xf32>
    %846 = vector.broadcast %73 : vector<7x1xf32> to vector<7x8xf32>
    %847 = arith.mulf %846, %845 : vector<7x8xf32>
    %cst_130 = arith.constant 5.000000e-01 : f32
    %848 = vector.broadcast %cst_130 : f32 to vector<7x8xf32>
    %849 = arith.mulf %848, %847 : vector<7x8xf32>
    %850 = math.tanh %849 : vector<7x8xf32>
    %cst_131 = arith.constant 1.000000e+00 : f32
    %851 = vector.broadcast %cst_131 : f32 to vector<7x8xf32>
    %852 = arith.addf %850, %851 : vector<7x8xf32>
    %cst_132 = arith.constant 5.000000e-01 : f32
    %853 = vector.broadcast %cst_132 : f32 to vector<7x8xf32>
    %854 = arith.mulf %853, %852 : vector<7x8xf32>
    %855 = vector.broadcast %70 : vector<7x1xf32> to vector<7x8xf32>
    %856 = arith.mulf %855, %854 : vector<7x8xf32>
    %857 = vector.broadcast %71 : vector<7x1xf32> to vector<7x8xf32>
    %858 = arith.mulf %856, %857 : vector<7x8xf32>
    %859 = arith.addf %840, %858 : vector<7x8xf32>
    %860 = arith.addf %841, %856 : vector<7x8xf32>
    %861 = vector.extract_strided_slice %803 {offsets = [3, 0], sizes = [1, 8], strides = [1, 1]} : vector<7x8xf32> to vector<1x8xf32>
    %862 = vector.broadcast %861 : vector<1x8xf32> to vector<7x8xf32>
    %863 = vector.broadcast %76 : vector<7x1xf32> to vector<7x8xf32>
    %864 = arith.subf %862, %863 : vector<7x8xf32>
    %865 = vector.broadcast %77 : vector<7x1xf32> to vector<7x8xf32>
    %866 = arith.mulf %865, %864 : vector<7x8xf32>
    %cst_133 = arith.constant 5.000000e-01 : f32
    %867 = vector.broadcast %cst_133 : f32 to vector<7x8xf32>
    %868 = arith.mulf %867, %866 : vector<7x8xf32>
    %869 = math.tanh %868 : vector<7x8xf32>
    %cst_134 = arith.constant 1.000000e+00 : f32
    %870 = vector.broadcast %cst_134 : f32 to vector<7x8xf32>
    %871 = arith.addf %869, %870 : vector<7x8xf32>
    %cst_135 = arith.constant 5.000000e-01 : f32
    %872 = vector.broadcast %cst_135 : f32 to vector<7x8xf32>
    %873 = arith.mulf %872, %871 : vector<7x8xf32>
    %874 = vector.broadcast %74 : vector<7x1xf32> to vector<7x8xf32>
    %875 = arith.mulf %874, %873 : vector<7x8xf32>
    %876 = vector.broadcast %75 : vector<7x1xf32> to vector<7x8xf32>
    %877 = arith.mulf %875, %876 : vector<7x8xf32>
    %878 = arith.addf %859, %877 : vector<7x8xf32>
    %879 = arith.addf %860, %875 : vector<7x8xf32>
    %880 = vector.extract_strided_slice %803 {offsets = [4, 0], sizes = [1, 8], strides = [1, 1]} : vector<7x8xf32> to vector<1x8xf32>
    %881 = vector.broadcast %880 : vector<1x8xf32> to vector<7x8xf32>
    %882 = vector.broadcast %80 : vector<7x1xf32> to vector<7x8xf32>
    %883 = arith.subf %881, %882 : vector<7x8xf32>
    %884 = vector.broadcast %81 : vector<7x1xf32> to vector<7x8xf32>
    %885 = arith.mulf %884, %883 : vector<7x8xf32>
    %cst_136 = arith.constant 5.000000e-01 : f32
    %886 = vector.broadcast %cst_136 : f32 to vector<7x8xf32>
    %887 = arith.mulf %886, %885 : vector<7x8xf32>
    %888 = math.tanh %887 : vector<7x8xf32>
    %cst_137 = arith.constant 1.000000e+00 : f32
    %889 = vector.broadcast %cst_137 : f32 to vector<7x8xf32>
    %890 = arith.addf %888, %889 : vector<7x8xf32>
    %cst_138 = arith.constant 5.000000e-01 : f32
    %891 = vector.broadcast %cst_138 : f32 to vector<7x8xf32>
    %892 = arith.mulf %891, %890 : vector<7x8xf32>
    %893 = vector.broadcast %78 : vector<7x1xf32> to vector<7x8xf32>
    %894 = arith.mulf %893, %892 : vector<7x8xf32>
    %895 = vector.broadcast %79 : vector<7x1xf32> to vector<7x8xf32>
    %896 = arith.mulf %894, %895 : vector<7x8xf32>
    %897 = arith.addf %878, %896 : vector<7x8xf32>
    %898 = arith.addf %879, %894 : vector<7x8xf32>
    %899 = vector.extract_strided_slice %803 {offsets = [5, 0], sizes = [1, 8], strides = [1, 1]} : vector<7x8xf32> to vector<1x8xf32>
    %900 = vector.broadcast %899 : vector<1x8xf32> to vector<7x8xf32>
    %901 = vector.broadcast %84 : vector<7x1xf32> to vector<7x8xf32>
    %902 = arith.subf %900, %901 : vector<7x8xf32>
    %903 = vector.broadcast %85 : vector<7x1xf32> to vector<7x8xf32>
    %904 = arith.mulf %903, %902 : vector<7x8xf32>
    %cst_139 = arith.constant 5.000000e-01 : f32
    %905 = vector.broadcast %cst_139 : f32 to vector<7x8xf32>
    %906 = arith.mulf %905, %904 : vector<7x8xf32>
    %907 = math.tanh %906 : vector<7x8xf32>
    %cst_140 = arith.constant 1.000000e+00 : f32
    %908 = vector.broadcast %cst_140 : f32 to vector<7x8xf32>
    %909 = arith.addf %907, %908 : vector<7x8xf32>
    %cst_141 = arith.constant 5.000000e-01 : f32
    %910 = vector.broadcast %cst_141 : f32 to vector<7x8xf32>
    %911 = arith.mulf %910, %909 : vector<7x8xf32>
    %912 = vector.broadcast %82 : vector<7x1xf32> to vector<7x8xf32>
    %913 = arith.mulf %912, %911 : vector<7x8xf32>
    %914 = vector.broadcast %83 : vector<7x1xf32> to vector<7x8xf32>
    %915 = arith.mulf %913, %914 : vector<7x8xf32>
    %916 = arith.addf %897, %915 : vector<7x8xf32>
    %917 = arith.addf %898, %913 : vector<7x8xf32>
    %918 = vector.extract_strided_slice %803 {offsets = [6, 0], sizes = [1, 8], strides = [1, 1]} : vector<7x8xf32> to vector<1x8xf32>
    %919 = vector.broadcast %918 : vector<1x8xf32> to vector<7x8xf32>
    %920 = vector.broadcast %88 : vector<7x1xf32> to vector<7x8xf32>
    %921 = arith.subf %919, %920 : vector<7x8xf32>
    %922 = vector.broadcast %89 : vector<7x1xf32> to vector<7x8xf32>
    %923 = arith.mulf %922, %921 : vector<7x8xf32>
    %cst_142 = arith.constant 5.000000e-01 : f32
    %924 = vector.broadcast %cst_142 : f32 to vector<7x8xf32>
    %925 = arith.mulf %924, %923 : vector<7x8xf32>
    %926 = math.tanh %925 : vector<7x8xf32>
    %cst_143 = arith.constant 1.000000e+00 : f32
    %927 = vector.broadcast %cst_143 : f32 to vector<7x8xf32>
    %928 = arith.addf %926, %927 : vector<7x8xf32>
    %cst_144 = arith.constant 5.000000e-01 : f32
    %929 = vector.broadcast %cst_144 : f32 to vector<7x8xf32>
    %930 = arith.mulf %929, %928 : vector<7x8xf32>
    %931 = vector.broadcast %86 : vector<7x1xf32> to vector<7x8xf32>
    %932 = arith.mulf %931, %930 : vector<7x8xf32>
    %933 = vector.broadcast %87 : vector<7x1xf32> to vector<7x8xf32>
    %934 = arith.mulf %932, %933 : vector<7x8xf32>
    %935 = arith.addf %916, %934 : vector<7x8xf32>
    %936 = arith.addf %917, %932 : vector<7x8xf32>
    %937 = vector.broadcast %27 : vector<7x1xf32> to vector<7x8xf32>
    %938 = arith.mulf %937, %803 : vector<7x8xf32>
    %939 = vector.broadcast %32 : vector<7x1xf32> to vector<7x8xf32>
    %940 = arith.addf %938, %939 : vector<7x8xf32>
    %941 = arith.addf %940, %935 : vector<7x8xf32>
    %942 = vector.broadcast %33 : vector<7x1xf32> to vector<7x8xf32>
    %943 = arith.addf %942, %936 : vector<7x8xf32>
    %cst_145 = arith.constant 9.99999993E-9 : f32
    %944 = vector.broadcast %cst_145 : f32 to vector<7x8xf32>
    %945 = arith.addf %943, %944 : vector<7x8xf32>
    %946 = arith.divf %941, %945 : vector<7x8xf32>
    %947 = vector.extract_strided_slice %946 {offsets = [0, 0], sizes = [1, 8], strides = [1, 1]} : vector<7x8xf32> to vector<1x8xf32>
    %948 = vector.broadcast %947 : vector<1x8xf32> to vector<7x8xf32>
    %949 = vector.broadcast %64 : vector<7x1xf32> to vector<7x8xf32>
    %950 = arith.subf %948, %949 : vector<7x8xf32>
    %951 = vector.broadcast %65 : vector<7x1xf32> to vector<7x8xf32>
    %952 = arith.mulf %951, %950 : vector<7x8xf32>
    %cst_146 = arith.constant 5.000000e-01 : f32
    %953 = vector.broadcast %cst_146 : f32 to vector<7x8xf32>
    %954 = arith.mulf %953, %952 : vector<7x8xf32>
    %955 = math.tanh %954 : vector<7x8xf32>
    %cst_147 = arith.constant 1.000000e+00 : f32
    %956 = vector.broadcast %cst_147 : f32 to vector<7x8xf32>
    %957 = arith.addf %955, %956 : vector<7x8xf32>
    %cst_148 = arith.constant 5.000000e-01 : f32
    %958 = vector.broadcast %cst_148 : f32 to vector<7x8xf32>
    %959 = arith.mulf %958, %957 : vector<7x8xf32>
    %960 = vector.broadcast %62 : vector<7x1xf32> to vector<7x8xf32>
    %961 = arith.mulf %960, %959 : vector<7x8xf32>
    %962 = vector.broadcast %63 : vector<7x1xf32> to vector<7x8xf32>
    %963 = arith.mulf %961, %962 : vector<7x8xf32>
    %964 = arith.addf %230, %963 : vector<7x8xf32>
    %965 = arith.addf %231, %961 : vector<7x8xf32>
    %966 = vector.extract_strided_slice %946 {offsets = [1, 0], sizes = [1, 8], strides = [1, 1]} : vector<7x8xf32> to vector<1x8xf32>
    %967 = vector.broadcast %966 : vector<1x8xf32> to vector<7x8xf32>
    %968 = vector.broadcast %68 : vector<7x1xf32> to vector<7x8xf32>
    %969 = arith.subf %967, %968 : vector<7x8xf32>
    %970 = vector.broadcast %69 : vector<7x1xf32> to vector<7x8xf32>
    %971 = arith.mulf %970, %969 : vector<7x8xf32>
    %cst_149 = arith.constant 5.000000e-01 : f32
    %972 = vector.broadcast %cst_149 : f32 to vector<7x8xf32>
    %973 = arith.mulf %972, %971 : vector<7x8xf32>
    %974 = math.tanh %973 : vector<7x8xf32>
    %cst_150 = arith.constant 1.000000e+00 : f32
    %975 = vector.broadcast %cst_150 : f32 to vector<7x8xf32>
    %976 = arith.addf %974, %975 : vector<7x8xf32>
    %cst_151 = arith.constant 5.000000e-01 : f32
    %977 = vector.broadcast %cst_151 : f32 to vector<7x8xf32>
    %978 = arith.mulf %977, %976 : vector<7x8xf32>
    %979 = vector.broadcast %66 : vector<7x1xf32> to vector<7x8xf32>
    %980 = arith.mulf %979, %978 : vector<7x8xf32>
    %981 = vector.broadcast %67 : vector<7x1xf32> to vector<7x8xf32>
    %982 = arith.mulf %980, %981 : vector<7x8xf32>
    %983 = arith.addf %964, %982 : vector<7x8xf32>
    %984 = arith.addf %965, %980 : vector<7x8xf32>
    %985 = vector.extract_strided_slice %946 {offsets = [2, 0], sizes = [1, 8], strides = [1, 1]} : vector<7x8xf32> to vector<1x8xf32>
    %986 = vector.broadcast %985 : vector<1x8xf32> to vector<7x8xf32>
    %987 = vector.broadcast %72 : vector<7x1xf32> to vector<7x8xf32>
    %988 = arith.subf %986, %987 : vector<7x8xf32>
    %989 = vector.broadcast %73 : vector<7x1xf32> to vector<7x8xf32>
    %990 = arith.mulf %989, %988 : vector<7x8xf32>
    %cst_152 = arith.constant 5.000000e-01 : f32
    %991 = vector.broadcast %cst_152 : f32 to vector<7x8xf32>
    %992 = arith.mulf %991, %990 : vector<7x8xf32>
    %993 = math.tanh %992 : vector<7x8xf32>
    %cst_153 = arith.constant 1.000000e+00 : f32
    %994 = vector.broadcast %cst_153 : f32 to vector<7x8xf32>
    %995 = arith.addf %993, %994 : vector<7x8xf32>
    %cst_154 = arith.constant 5.000000e-01 : f32
    %996 = vector.broadcast %cst_154 : f32 to vector<7x8xf32>
    %997 = arith.mulf %996, %995 : vector<7x8xf32>
    %998 = vector.broadcast %70 : vector<7x1xf32> to vector<7x8xf32>
    %999 = arith.mulf %998, %997 : vector<7x8xf32>
    %1000 = vector.broadcast %71 : vector<7x1xf32> to vector<7x8xf32>
    %1001 = arith.mulf %999, %1000 : vector<7x8xf32>
    %1002 = arith.addf %983, %1001 : vector<7x8xf32>
    %1003 = arith.addf %984, %999 : vector<7x8xf32>
    %1004 = vector.extract_strided_slice %946 {offsets = [3, 0], sizes = [1, 8], strides = [1, 1]} : vector<7x8xf32> to vector<1x8xf32>
    %1005 = vector.broadcast %1004 : vector<1x8xf32> to vector<7x8xf32>
    %1006 = vector.broadcast %76 : vector<7x1xf32> to vector<7x8xf32>
    %1007 = arith.subf %1005, %1006 : vector<7x8xf32>
    %1008 = vector.broadcast %77 : vector<7x1xf32> to vector<7x8xf32>
    %1009 = arith.mulf %1008, %1007 : vector<7x8xf32>
    %cst_155 = arith.constant 5.000000e-01 : f32
    %1010 = vector.broadcast %cst_155 : f32 to vector<7x8xf32>
    %1011 = arith.mulf %1010, %1009 : vector<7x8xf32>
    %1012 = math.tanh %1011 : vector<7x8xf32>
    %cst_156 = arith.constant 1.000000e+00 : f32
    %1013 = vector.broadcast %cst_156 : f32 to vector<7x8xf32>
    %1014 = arith.addf %1012, %1013 : vector<7x8xf32>
    %cst_157 = arith.constant 5.000000e-01 : f32
    %1015 = vector.broadcast %cst_157 : f32 to vector<7x8xf32>
    %1016 = arith.mulf %1015, %1014 : vector<7x8xf32>
    %1017 = vector.broadcast %74 : vector<7x1xf32> to vector<7x8xf32>
    %1018 = arith.mulf %1017, %1016 : vector<7x8xf32>
    %1019 = vector.broadcast %75 : vector<7x1xf32> to vector<7x8xf32>
    %1020 = arith.mulf %1018, %1019 : vector<7x8xf32>
    %1021 = arith.addf %1002, %1020 : vector<7x8xf32>
    %1022 = arith.addf %1003, %1018 : vector<7x8xf32>
    %1023 = vector.extract_strided_slice %946 {offsets = [4, 0], sizes = [1, 8], strides = [1, 1]} : vector<7x8xf32> to vector<1x8xf32>
    %1024 = vector.broadcast %1023 : vector<1x8xf32> to vector<7x8xf32>
    %1025 = vector.broadcast %80 : vector<7x1xf32> to vector<7x8xf32>
    %1026 = arith.subf %1024, %1025 : vector<7x8xf32>
    %1027 = vector.broadcast %81 : vector<7x1xf32> to vector<7x8xf32>
    %1028 = arith.mulf %1027, %1026 : vector<7x8xf32>
    %cst_158 = arith.constant 5.000000e-01 : f32
    %1029 = vector.broadcast %cst_158 : f32 to vector<7x8xf32>
    %1030 = arith.mulf %1029, %1028 : vector<7x8xf32>
    %1031 = math.tanh %1030 : vector<7x8xf32>
    %cst_159 = arith.constant 1.000000e+00 : f32
    %1032 = vector.broadcast %cst_159 : f32 to vector<7x8xf32>
    %1033 = arith.addf %1031, %1032 : vector<7x8xf32>
    %cst_160 = arith.constant 5.000000e-01 : f32
    %1034 = vector.broadcast %cst_160 : f32 to vector<7x8xf32>
    %1035 = arith.mulf %1034, %1033 : vector<7x8xf32>
    %1036 = vector.broadcast %78 : vector<7x1xf32> to vector<7x8xf32>
    %1037 = arith.mulf %1036, %1035 : vector<7x8xf32>
    %1038 = vector.broadcast %79 : vector<7x1xf32> to vector<7x8xf32>
    %1039 = arith.mulf %1037, %1038 : vector<7x8xf32>
    %1040 = arith.addf %1021, %1039 : vector<7x8xf32>
    %1041 = arith.addf %1022, %1037 : vector<7x8xf32>
    %1042 = vector.extract_strided_slice %946 {offsets = [5, 0], sizes = [1, 8], strides = [1, 1]} : vector<7x8xf32> to vector<1x8xf32>
    %1043 = vector.broadcast %1042 : vector<1x8xf32> to vector<7x8xf32>
    %1044 = vector.broadcast %84 : vector<7x1xf32> to vector<7x8xf32>
    %1045 = arith.subf %1043, %1044 : vector<7x8xf32>
    %1046 = vector.broadcast %85 : vector<7x1xf32> to vector<7x8xf32>
    %1047 = arith.mulf %1046, %1045 : vector<7x8xf32>
    %cst_161 = arith.constant 5.000000e-01 : f32
    %1048 = vector.broadcast %cst_161 : f32 to vector<7x8xf32>
    %1049 = arith.mulf %1048, %1047 : vector<7x8xf32>
    %1050 = math.tanh %1049 : vector<7x8xf32>
    %cst_162 = arith.constant 1.000000e+00 : f32
    %1051 = vector.broadcast %cst_162 : f32 to vector<7x8xf32>
    %1052 = arith.addf %1050, %1051 : vector<7x8xf32>
    %cst_163 = arith.constant 5.000000e-01 : f32
    %1053 = vector.broadcast %cst_163 : f32 to vector<7x8xf32>
    %1054 = arith.mulf %1053, %1052 : vector<7x8xf32>
    %1055 = vector.broadcast %82 : vector<7x1xf32> to vector<7x8xf32>
    %1056 = arith.mulf %1055, %1054 : vector<7x8xf32>
    %1057 = vector.broadcast %83 : vector<7x1xf32> to vector<7x8xf32>
    %1058 = arith.mulf %1056, %1057 : vector<7x8xf32>
    %1059 = arith.addf %1040, %1058 : vector<7x8xf32>
    %1060 = arith.addf %1041, %1056 : vector<7x8xf32>
    %1061 = vector.extract_strided_slice %946 {offsets = [6, 0], sizes = [1, 8], strides = [1, 1]} : vector<7x8xf32> to vector<1x8xf32>
    %1062 = vector.broadcast %1061 : vector<1x8xf32> to vector<7x8xf32>
    %1063 = vector.broadcast %88 : vector<7x1xf32> to vector<7x8xf32>
    %1064 = arith.subf %1062, %1063 : vector<7x8xf32>
    %1065 = vector.broadcast %89 : vector<7x1xf32> to vector<7x8xf32>
    %1066 = arith.mulf %1065, %1064 : vector<7x8xf32>
    %cst_164 = arith.constant 5.000000e-01 : f32
    %1067 = vector.broadcast %cst_164 : f32 to vector<7x8xf32>
    %1068 = arith.mulf %1067, %1066 : vector<7x8xf32>
    %1069 = math.tanh %1068 : vector<7x8xf32>
    %cst_165 = arith.constant 1.000000e+00 : f32
    %1070 = vector.broadcast %cst_165 : f32 to vector<7x8xf32>
    %1071 = arith.addf %1069, %1070 : vector<7x8xf32>
    %cst_166 = arith.constant 5.000000e-01 : f32
    %1072 = vector.broadcast %cst_166 : f32 to vector<7x8xf32>
    %1073 = arith.mulf %1072, %1071 : vector<7x8xf32>
    %1074 = vector.broadcast %86 : vector<7x1xf32> to vector<7x8xf32>
    %1075 = arith.mulf %1074, %1073 : vector<7x8xf32>
    %1076 = vector.broadcast %87 : vector<7x1xf32> to vector<7x8xf32>
    %1077 = arith.mulf %1075, %1076 : vector<7x8xf32>
    %1078 = arith.addf %1059, %1077 : vector<7x8xf32>
    %1079 = arith.addf %1060, %1075 : vector<7x8xf32>
    %1080 = vector.broadcast %27 : vector<7x1xf32> to vector<7x8xf32>
    %1081 = arith.mulf %1080, %946 : vector<7x8xf32>
    %1082 = vector.broadcast %32 : vector<7x1xf32> to vector<7x8xf32>
    %1083 = arith.addf %1081, %1082 : vector<7x8xf32>
    %1084 = arith.addf %1083, %1078 : vector<7x8xf32>
    %1085 = vector.broadcast %33 : vector<7x1xf32> to vector<7x8xf32>
    %1086 = arith.addf %1085, %1079 : vector<7x8xf32>
    %cst_167 = arith.constant 9.99999993E-9 : f32
    %1087 = vector.broadcast %cst_167 : f32 to vector<7x8xf32>
    %1088 = arith.addf %1086, %1087 : vector<7x8xf32>
    %1089 = arith.divf %1084, %1088 : vector<7x8xf32>
    %1090 = tpu.transpose %1089, [1, 0] : vector<7x8xf32> -> vector<8x7xf32>
    %c0_168 = arith.constant 0 : index
    %c0_169 = arith.constant 0 : index
    %1091 = vector.load %arg6[%c0_168, %c0_169] : memref<7x32xf32, #tpu.memory_space<vmem>>, vector<7x32xf32>
    %cst_170 = arith.constant dense<0.000000e+00> : vector<8x32xf32>
    %1092 = tpu.matmul %1090, %1091, %cst_170 {dimension_numbers = #tpu.dot_dimension_numbers<[1], [0], [0], [1], [0, 0, 1, 1], [], []>} : vector<8x7xf32>, vector<7x32xf32>, vector<8x32xf32> -> vector<8x32xf32>
    %c0_171 = arith.constant 0 : index
    %c0_172 = arith.constant 0 : index
    %1093 = vector.load %arg7[%c0_171, %c0_172] : memref<1x32xf32, #tpu.memory_space<vmem>>, vector<1x32xf32>
    %1094 = vector.shape_cast %1093 : vector<1x32xf32> to vector<32xf32>
    %1095 = vector.shape_cast %1094 : vector<32xf32> to vector<1x32xf32>
    %1096 = vector.broadcast %1095 : vector<1x32xf32> to vector<8x32xf32>
    %1097 = arith.addf %1092, %1096 : vector<8x32xf32>
    %c0_173 = arith.constant 0 : index
    %c0_174 = arith.constant 0 : index
    %c0_175 = arith.constant 0 : index
    %1098 = vector.load %arg1[%c0_173, %c0_174, %c0_175] : memref<2x8x32xf32, #tpu.memory_space<vmem>>, vector<1x8x32xf32>
    %1099 = vector.shape_cast %1098 : vector<1x8x32xf32> to vector<8x32xf32>
    %1100 = arith.addf %1099, %1097 : vector<8x32xf32>
    %c0_176 = arith.constant 0 : index
    %c0_177 = arith.constant 0 : index
    %c0_178 = arith.constant 0 : index
    %1101 = vector.load %arg8[%c0_176, %c0_177, %c0_178] : memref<2x8x32xf32, #tpu.memory_space<vmem>>, vector<1x8x32xf32>
    %1102 = vector.shape_cast %1101 : vector<1x8x32xf32> to vector<8x32xf32>
    %1103 = vector.shape_cast %1100 : vector<8x32xf32> to vector<1x8x32xf32>
    tpu.vector_store %arg8[%c0_176, %c0_177, %c0_178], %1103 {strides = array<i32>} : memref<2x8x32xf32, #tpu.memory_space<vmem>>, vector<1x8x32xf32>,
    %c1 = arith.constant 1 : index
    %c0_179 = arith.constant 0 : index
    %c0_180 = arith.constant 0 : index
    %1104 = vector.load %arg2[%c1, %c0_179, %c0_180] : memref<2x7x8xf32, #tpu.memory_space<vmem>>, vector<1x7x8xf32>
    %1105 = vector.shape_cast %1104 : vector<1x7x8xf32> to vector<7x8xf32>
    %1106 = vector.broadcast %29 : vector<7x1xf32> to vector<7x8xf32>
    %1107 = arith.mulf %1105, %1106 : vector<7x8xf32>
    %1108 = vector.broadcast %31 : vector<7x1xf32> to vector<7x8xf32>
    %1109 = arith.addf %1107, %1108 : vector<7x8xf32>
    %cst_181 = arith.constant 0.000000e+00 : f32
    %1110 = vector.broadcast %cst_181 : f32 to vector<7x8xf32>
    %cst_182 = arith.constant 0.000000e+00 : f32
    %1111 = vector.broadcast %cst_182 : f32 to vector<7x8xf32>
    %1112 = vector.extract_strided_slice %1109 {offsets = [0, 0], sizes = [1, 8], strides = [1, 1]} : vector<7x8xf32> to vector<1x8xf32>
    %1113 = vector.broadcast %1112 : vector<1x8xf32> to vector<7x8xf32>
    %1114 = vector.broadcast %36 : vector<7x1xf32> to vector<7x8xf32>
    %1115 = arith.subf %1113, %1114 : vector<7x8xf32>
    %1116 = vector.broadcast %37 : vector<7x1xf32> to vector<7x8xf32>
    %1117 = arith.mulf %1116, %1115 : vector<7x8xf32>
    %cst_183 = arith.constant 5.000000e-01 : f32
    %1118 = vector.broadcast %cst_183 : f32 to vector<7x8xf32>
    %1119 = arith.mulf %1118, %1117 : vector<7x8xf32>
    %1120 = math.tanh %1119 : vector<7x8xf32>
    %cst_184 = arith.constant 1.000000e+00 : f32
    %1121 = vector.broadcast %cst_184 : f32 to vector<7x8xf32>
    %1122 = arith.addf %1120, %1121 : vector<7x8xf32>
    %cst_185 = arith.constant 5.000000e-01 : f32
    %1123 = vector.broadcast %cst_185 : f32 to vector<7x8xf32>
    %1124 = arith.mulf %1123, %1122 : vector<7x8xf32>
    %1125 = vector.broadcast %34 : vector<7x1xf32> to vector<7x8xf32>
    %1126 = arith.mulf %1125, %1124 : vector<7x8xf32>
    %1127 = vector.broadcast %35 : vector<7x1xf32> to vector<7x8xf32>
    %1128 = arith.mulf %1126, %1127 : vector<7x8xf32>
    %1129 = arith.addf %1110, %1128 : vector<7x8xf32>
    %1130 = arith.addf %1111, %1126 : vector<7x8xf32>
    %1131 = vector.extract_strided_slice %1109 {offsets = [1, 0], sizes = [1, 8], strides = [1, 1]} : vector<7x8xf32> to vector<1x8xf32>
    %1132 = vector.broadcast %1131 : vector<1x8xf32> to vector<7x8xf32>
    %1133 = vector.broadcast %40 : vector<7x1xf32> to vector<7x8xf32>
    %1134 = arith.subf %1132, %1133 : vector<7x8xf32>
    %1135 = vector.broadcast %41 : vector<7x1xf32> to vector<7x8xf32>
    %1136 = arith.mulf %1135, %1134 : vector<7x8xf32>
    %cst_186 = arith.constant 5.000000e-01 : f32
    %1137 = vector.broadcast %cst_186 : f32 to vector<7x8xf32>
    %1138 = arith.mulf %1137, %1136 : vector<7x8xf32>
    %1139 = math.tanh %1138 : vector<7x8xf32>
    %cst_187 = arith.constant 1.000000e+00 : f32
    %1140 = vector.broadcast %cst_187 : f32 to vector<7x8xf32>
    %1141 = arith.addf %1139, %1140 : vector<7x8xf32>
    %cst_188 = arith.constant 5.000000e-01 : f32
    %1142 = vector.broadcast %cst_188 : f32 to vector<7x8xf32>
    %1143 = arith.mulf %1142, %1141 : vector<7x8xf32>
    %1144 = vector.broadcast %38 : vector<7x1xf32> to vector<7x8xf32>
    %1145 = arith.mulf %1144, %1143 : vector<7x8xf32>
    %1146 = vector.broadcast %39 : vector<7x1xf32> to vector<7x8xf32>
    %1147 = arith.mulf %1145, %1146 : vector<7x8xf32>
    %1148 = arith.addf %1129, %1147 : vector<7x8xf32>
    %1149 = arith.addf %1130, %1145 : vector<7x8xf32>
    %1150 = vector.extract_strided_slice %1109 {offsets = [2, 0], sizes = [1, 8], strides = [1, 1]} : vector<7x8xf32> to vector<1x8xf32>
    %1151 = vector.broadcast %1150 : vector<1x8xf32> to vector<7x8xf32>
    %1152 = vector.broadcast %44 : vector<7x1xf32> to vector<7x8xf32>
    %1153 = arith.subf %1151, %1152 : vector<7x8xf32>
    %1154 = vector.broadcast %45 : vector<7x1xf32> to vector<7x8xf32>
    %1155 = arith.mulf %1154, %1153 : vector<7x8xf32>
    %cst_189 = arith.constant 5.000000e-01 : f32
    %1156 = vector.broadcast %cst_189 : f32 to vector<7x8xf32>
    %1157 = arith.mulf %1156, %1155 : vector<7x8xf32>
    %1158 = math.tanh %1157 : vector<7x8xf32>
    %cst_190 = arith.constant 1.000000e+00 : f32
    %1159 = vector.broadcast %cst_190 : f32 to vector<7x8xf32>
    %1160 = arith.addf %1158, %1159 : vector<7x8xf32>
    %cst_191 = arith.constant 5.000000e-01 : f32
    %1161 = vector.broadcast %cst_191 : f32 to vector<7x8xf32>
    %1162 = arith.mulf %1161, %1160 : vector<7x8xf32>
    %1163 = vector.broadcast %42 : vector<7x1xf32> to vector<7x8xf32>
    %1164 = arith.mulf %1163, %1162 : vector<7x8xf32>
    %1165 = vector.broadcast %43 : vector<7x1xf32> to vector<7x8xf32>
    %1166 = arith.mulf %1164, %1165 : vector<7x8xf32>
    %1167 = arith.addf %1148, %1166 : vector<7x8xf32>
    %1168 = arith.addf %1149, %1164 : vector<7x8xf32>
    %1169 = vector.extract_strided_slice %1109 {offsets = [3, 0], sizes = [1, 8], strides = [1, 1]} : vector<7x8xf32> to vector<1x8xf32>
    %1170 = vector.broadcast %1169 : vector<1x8xf32> to vector<7x8xf32>
    %1171 = vector.broadcast %48 : vector<7x1xf32> to vector<7x8xf32>
    %1172 = arith.subf %1170, %1171 : vector<7x8xf32>
    %1173 = vector.broadcast %49 : vector<7x1xf32> to vector<7x8xf32>
    %1174 = arith.mulf %1173, %1172 : vector<7x8xf32>
    %cst_192 = arith.constant 5.000000e-01 : f32
    %1175 = vector.broadcast %cst_192 : f32 to vector<7x8xf32>
    %1176 = arith.mulf %1175, %1174 : vector<7x8xf32>
    %1177 = math.tanh %1176 : vector<7x8xf32>
    %cst_193 = arith.constant 1.000000e+00 : f32
    %1178 = vector.broadcast %cst_193 : f32 to vector<7x8xf32>
    %1179 = arith.addf %1177, %1178 : vector<7x8xf32>
    %cst_194 = arith.constant 5.000000e-01 : f32
    %1180 = vector.broadcast %cst_194 : f32 to vector<7x8xf32>
    %1181 = arith.mulf %1180, %1179 : vector<7x8xf32>
    %1182 = vector.broadcast %46 : vector<7x1xf32> to vector<7x8xf32>
    %1183 = arith.mulf %1182, %1181 : vector<7x8xf32>
    %1184 = vector.broadcast %47 : vector<7x1xf32> to vector<7x8xf32>
    %1185 = arith.mulf %1183, %1184 : vector<7x8xf32>
    %1186 = arith.addf %1167, %1185 : vector<7x8xf32>
    %1187 = arith.addf %1168, %1183 : vector<7x8xf32>
    %1188 = vector.extract_strided_slice %1109 {offsets = [4, 0], sizes = [1, 8], strides = [1, 1]} : vector<7x8xf32> to vector<1x8xf32>
    %1189 = vector.broadcast %1188 : vector<1x8xf32> to vector<7x8xf32>
    %1190 = vector.broadcast %52 : vector<7x1xf32> to vector<7x8xf32>
    %1191 = arith.subf %1189, %1190 : vector<7x8xf32>
    %1192 = vector.broadcast %53 : vector<7x1xf32> to vector<7x8xf32>
    %1193 = arith.mulf %1192, %1191 : vector<7x8xf32>
    %cst_195 = arith.constant 5.000000e-01 : f32
    %1194 = vector.broadcast %cst_195 : f32 to vector<7x8xf32>
    %1195 = arith.mulf %1194, %1193 : vector<7x8xf32>
    %1196 = math.tanh %1195 : vector<7x8xf32>
    %cst_196 = arith.constant 1.000000e+00 : f32
    %1197 = vector.broadcast %cst_196 : f32 to vector<7x8xf32>
    %1198 = arith.addf %1196, %1197 : vector<7x8xf32>
    %cst_197 = arith.constant 5.000000e-01 : f32
    %1199 = vector.broadcast %cst_197 : f32 to vector<7x8xf32>
    %1200 = arith.mulf %1199, %1198 : vector<7x8xf32>
    %1201 = vector.broadcast %50 : vector<7x1xf32> to vector<7x8xf32>
    %1202 = arith.mulf %1201, %1200 : vector<7x8xf32>
    %1203 = vector.broadcast %51 : vector<7x1xf32> to vector<7x8xf32>
    %1204 = arith.mulf %1202, %1203 : vector<7x8xf32>
    %1205 = arith.addf %1186, %1204 : vector<7x8xf32>
    %1206 = arith.addf %1187, %1202 : vector<7x8xf32>
    %1207 = vector.extract_strided_slice %1109 {offsets = [5, 0], sizes = [1, 8], strides = [1, 1]} : vector<7x8xf32> to vector<1x8xf32>
    %1208 = vector.broadcast %1207 : vector<1x8xf32> to vector<7x8xf32>
    %1209 = vector.broadcast %56 : vector<7x1xf32> to vector<7x8xf32>
    %1210 = arith.subf %1208, %1209 : vector<7x8xf32>
    %1211 = vector.broadcast %57 : vector<7x1xf32> to vector<7x8xf32>
    %1212 = arith.mulf %1211, %1210 : vector<7x8xf32>
    %cst_198 = arith.constant 5.000000e-01 : f32
    %1213 = vector.broadcast %cst_198 : f32 to vector<7x8xf32>
    %1214 = arith.mulf %1213, %1212 : vector<7x8xf32>
    %1215 = math.tanh %1214 : vector<7x8xf32>
    %cst_199 = arith.constant 1.000000e+00 : f32
    %1216 = vector.broadcast %cst_199 : f32 to vector<7x8xf32>
    %1217 = arith.addf %1215, %1216 : vector<7x8xf32>
    %cst_200 = arith.constant 5.000000e-01 : f32
    %1218 = vector.broadcast %cst_200 : f32 to vector<7x8xf32>
    %1219 = arith.mulf %1218, %1217 : vector<7x8xf32>
    %1220 = vector.broadcast %54 : vector<7x1xf32> to vector<7x8xf32>
    %1221 = arith.mulf %1220, %1219 : vector<7x8xf32>
    %1222 = vector.broadcast %55 : vector<7x1xf32> to vector<7x8xf32>
    %1223 = arith.mulf %1221, %1222 : vector<7x8xf32>
    %1224 = arith.addf %1205, %1223 : vector<7x8xf32>
    %1225 = arith.addf %1206, %1221 : vector<7x8xf32>
    %1226 = vector.extract_strided_slice %1109 {offsets = [6, 0], sizes = [1, 8], strides = [1, 1]} : vector<7x8xf32> to vector<1x8xf32>
    %1227 = vector.broadcast %1226 : vector<1x8xf32> to vector<7x8xf32>
    %1228 = vector.broadcast %60 : vector<7x1xf32> to vector<7x8xf32>
    %1229 = arith.subf %1227, %1228 : vector<7x8xf32>
    %1230 = vector.broadcast %61 : vector<7x1xf32> to vector<7x8xf32>
    %1231 = arith.mulf %1230, %1229 : vector<7x8xf32>
    %cst_201 = arith.constant 5.000000e-01 : f32
    %1232 = vector.broadcast %cst_201 : f32 to vector<7x8xf32>
    %1233 = arith.mulf %1232, %1231 : vector<7x8xf32>
    %1234 = math.tanh %1233 : vector<7x8xf32>
    %cst_202 = arith.constant 1.000000e+00 : f32
    %1235 = vector.broadcast %cst_202 : f32 to vector<7x8xf32>
    %1236 = arith.addf %1234, %1235 : vector<7x8xf32>
    %cst_203 = arith.constant 5.000000e-01 : f32
    %1237 = vector.broadcast %cst_203 : f32 to vector<7x8xf32>
    %1238 = arith.mulf %1237, %1236 : vector<7x8xf32>
    %1239 = vector.broadcast %58 : vector<7x1xf32> to vector<7x8xf32>
    %1240 = arith.mulf %1239, %1238 : vector<7x8xf32>
    %1241 = vector.broadcast %59 : vector<7x1xf32> to vector<7x8xf32>
    %1242 = arith.mulf %1240, %1241 : vector<7x8xf32>
    %1243 = arith.addf %1224, %1242 : vector<7x8xf32>
    %1244 = arith.addf %1225, %1240 : vector<7x8xf32>
    %1245 = vector.extract_strided_slice %1089 {offsets = [0, 0], sizes = [1, 8], strides = [1, 1]} : vector<7x8xf32> to vector<1x8xf32>
    %1246 = vector.broadcast %1245 : vector<1x8xf32> to vector<7x8xf32>
    %1247 = vector.broadcast %64 : vector<7x1xf32> to vector<7x8xf32>
    %1248 = arith.subf %1246, %1247 : vector<7x8xf32>
    %1249 = vector.broadcast %65 : vector<7x1xf32> to vector<7x8xf32>
    %1250 = arith.mulf %1249, %1248 : vector<7x8xf32>
    %cst_204 = arith.constant 5.000000e-01 : f32
    %1251 = vector.broadcast %cst_204 : f32 to vector<7x8xf32>
    %1252 = arith.mulf %1251, %1250 : vector<7x8xf32>
    %1253 = math.tanh %1252 : vector<7x8xf32>
    %cst_205 = arith.constant 1.000000e+00 : f32
    %1254 = vector.broadcast %cst_205 : f32 to vector<7x8xf32>
    %1255 = arith.addf %1253, %1254 : vector<7x8xf32>
    %cst_206 = arith.constant 5.000000e-01 : f32
    %1256 = vector.broadcast %cst_206 : f32 to vector<7x8xf32>
    %1257 = arith.mulf %1256, %1255 : vector<7x8xf32>
    %1258 = vector.broadcast %62 : vector<7x1xf32> to vector<7x8xf32>
    %1259 = arith.mulf %1258, %1257 : vector<7x8xf32>
    %1260 = vector.broadcast %63 : vector<7x1xf32> to vector<7x8xf32>
    %1261 = arith.mulf %1259, %1260 : vector<7x8xf32>
    %1262 = arith.addf %1243, %1261 : vector<7x8xf32>
    %1263 = arith.addf %1244, %1259 : vector<7x8xf32>
    %1264 = vector.extract_strided_slice %1089 {offsets = [1, 0], sizes = [1, 8], strides = [1, 1]} : vector<7x8xf32> to vector<1x8xf32>
    %1265 = vector.broadcast %1264 : vector<1x8xf32> to vector<7x8xf32>
    %1266 = vector.broadcast %68 : vector<7x1xf32> to vector<7x8xf32>
    %1267 = arith.subf %1265, %1266 : vector<7x8xf32>
    %1268 = vector.broadcast %69 : vector<7x1xf32> to vector<7x8xf32>
    %1269 = arith.mulf %1268, %1267 : vector<7x8xf32>
    %cst_207 = arith.constant 5.000000e-01 : f32
    %1270 = vector.broadcast %cst_207 : f32 to vector<7x8xf32>
    %1271 = arith.mulf %1270, %1269 : vector<7x8xf32>
    %1272 = math.tanh %1271 : vector<7x8xf32>
    %cst_208 = arith.constant 1.000000e+00 : f32
    %1273 = vector.broadcast %cst_208 : f32 to vector<7x8xf32>
    %1274 = arith.addf %1272, %1273 : vector<7x8xf32>
    %cst_209 = arith.constant 5.000000e-01 : f32
    %1275 = vector.broadcast %cst_209 : f32 to vector<7x8xf32>
    %1276 = arith.mulf %1275, %1274 : vector<7x8xf32>
    %1277 = vector.broadcast %66 : vector<7x1xf32> to vector<7x8xf32>
    %1278 = arith.mulf %1277, %1276 : vector<7x8xf32>
    %1279 = vector.broadcast %67 : vector<7x1xf32> to vector<7x8xf32>
    %1280 = arith.mulf %1278, %1279 : vector<7x8xf32>
    %1281 = arith.addf %1262, %1280 : vector<7x8xf32>
    %1282 = arith.addf %1263, %1278 : vector<7x8xf32>
    %1283 = vector.extract_strided_slice %1089 {offsets = [2, 0], sizes = [1, 8], strides = [1, 1]} : vector<7x8xf32> to vector<1x8xf32>
    %1284 = vector.broadcast %1283 : vector<1x8xf32> to vector<7x8xf32>
    %1285 = vector.broadcast %72 : vector<7x1xf32> to vector<7x8xf32>
    %1286 = arith.subf %1284, %1285 : vector<7x8xf32>
    %1287 = vector.broadcast %73 : vector<7x1xf32> to vector<7x8xf32>
    %1288 = arith.mulf %1287, %1286 : vector<7x8xf32>
    %cst_210 = arith.constant 5.000000e-01 : f32
    %1289 = vector.broadcast %cst_210 : f32 to vector<7x8xf32>
    %1290 = arith.mulf %1289, %1288 : vector<7x8xf32>
    %1291 = math.tanh %1290 : vector<7x8xf32>
    %cst_211 = arith.constant 1.000000e+00 : f32
    %1292 = vector.broadcast %cst_211 : f32 to vector<7x8xf32>
    %1293 = arith.addf %1291, %1292 : vector<7x8xf32>
    %cst_212 = arith.constant 5.000000e-01 : f32
    %1294 = vector.broadcast %cst_212 : f32 to vector<7x8xf32>
    %1295 = arith.mulf %1294, %1293 : vector<7x8xf32>
    %1296 = vector.broadcast %70 : vector<7x1xf32> to vector<7x8xf32>
    %1297 = arith.mulf %1296, %1295 : vector<7x8xf32>
    %1298 = vector.broadcast %71 : vector<7x1xf32> to vector<7x8xf32>
    %1299 = arith.mulf %1297, %1298 : vector<7x8xf32>
    %1300 = arith.addf %1281, %1299 : vector<7x8xf32>
    %1301 = arith.addf %1282, %1297 : vector<7x8xf32>
    %1302 = vector.extract_strided_slice %1089 {offsets = [3, 0], sizes = [1, 8], strides = [1, 1]} : vector<7x8xf32> to vector<1x8xf32>
    %1303 = vector.broadcast %1302 : vector<1x8xf32> to vector<7x8xf32>
    %1304 = vector.broadcast %76 : vector<7x1xf32> to vector<7x8xf32>
    %1305 = arith.subf %1303, %1304 : vector<7x8xf32>
    %1306 = vector.broadcast %77 : vector<7x1xf32> to vector<7x8xf32>
    %1307 = arith.mulf %1306, %1305 : vector<7x8xf32>
    %cst_213 = arith.constant 5.000000e-01 : f32
    %1308 = vector.broadcast %cst_213 : f32 to vector<7x8xf32>
    %1309 = arith.mulf %1308, %1307 : vector<7x8xf32>
    %1310 = math.tanh %1309 : vector<7x8xf32>
    %cst_214 = arith.constant 1.000000e+00 : f32
    %1311 = vector.broadcast %cst_214 : f32 to vector<7x8xf32>
    %1312 = arith.addf %1310, %1311 : vector<7x8xf32>
    %cst_215 = arith.constant 5.000000e-01 : f32
    %1313 = vector.broadcast %cst_215 : f32 to vector<7x8xf32>
    %1314 = arith.mulf %1313, %1312 : vector<7x8xf32>
    %1315 = vector.broadcast %74 : vector<7x1xf32> to vector<7x8xf32>
    %1316 = arith.mulf %1315, %1314 : vector<7x8xf32>
    %1317 = vector.broadcast %75 : vector<7x1xf32> to vector<7x8xf32>
    %1318 = arith.mulf %1316, %1317 : vector<7x8xf32>
    %1319 = arith.addf %1300, %1318 : vector<7x8xf32>
    %1320 = arith.addf %1301, %1316 : vector<7x8xf32>
    %1321 = vector.extract_strided_slice %1089 {offsets = [4, 0], sizes = [1, 8], strides = [1, 1]} : vector<7x8xf32> to vector<1x8xf32>
    %1322 = vector.broadcast %1321 : vector<1x8xf32> to vector<7x8xf32>
    %1323 = vector.broadcast %80 : vector<7x1xf32> to vector<7x8xf32>
    %1324 = arith.subf %1322, %1323 : vector<7x8xf32>
    %1325 = vector.broadcast %81 : vector<7x1xf32> to vector<7x8xf32>
    %1326 = arith.mulf %1325, %1324 : vector<7x8xf32>
    %cst_216 = arith.constant 5.000000e-01 : f32
    %1327 = vector.broadcast %cst_216 : f32 to vector<7x8xf32>
    %1328 = arith.mulf %1327, %1326 : vector<7x8xf32>
    %1329 = math.tanh %1328 : vector<7x8xf32>
    %cst_217 = arith.constant 1.000000e+00 : f32
    %1330 = vector.broadcast %cst_217 : f32 to vector<7x8xf32>
    %1331 = arith.addf %1329, %1330 : vector<7x8xf32>
    %cst_218 = arith.constant 5.000000e-01 : f32
    %1332 = vector.broadcast %cst_218 : f32 to vector<7x8xf32>
    %1333 = arith.mulf %1332, %1331 : vector<7x8xf32>
    %1334 = vector.broadcast %78 : vector<7x1xf32> to vector<7x8xf32>
    %1335 = arith.mulf %1334, %1333 : vector<7x8xf32>
    %1336 = vector.broadcast %79 : vector<7x1xf32> to vector<7x8xf32>
    %1337 = arith.mulf %1335, %1336 : vector<7x8xf32>
    %1338 = arith.addf %1319, %1337 : vector<7x8xf32>
    %1339 = arith.addf %1320, %1335 : vector<7x8xf32>
    %1340 = vector.extract_strided_slice %1089 {offsets = [5, 0], sizes = [1, 8], strides = [1, 1]} : vector<7x8xf32> to vector<1x8xf32>
    %1341 = vector.broadcast %1340 : vector<1x8xf32> to vector<7x8xf32>
    %1342 = vector.broadcast %84 : vector<7x1xf32> to vector<7x8xf32>
    %1343 = arith.subf %1341, %1342 : vector<7x8xf32>
    %1344 = vector.broadcast %85 : vector<7x1xf32> to vector<7x8xf32>
    %1345 = arith.mulf %1344, %1343 : vector<7x8xf32>
    %cst_219 = arith.constant 5.000000e-01 : f32
    %1346 = vector.broadcast %cst_219 : f32 to vector<7x8xf32>
    %1347 = arith.mulf %1346, %1345 : vector<7x8xf32>
    %1348 = math.tanh %1347 : vector<7x8xf32>
    %cst_220 = arith.constant 1.000000e+00 : f32
    %1349 = vector.broadcast %cst_220 : f32 to vector<7x8xf32>
    %1350 = arith.addf %1348, %1349 : vector<7x8xf32>
    %cst_221 = arith.constant 5.000000e-01 : f32
    %1351 = vector.broadcast %cst_221 : f32 to vector<7x8xf32>
    %1352 = arith.mulf %1351, %1350 : vector<7x8xf32>
    %1353 = vector.broadcast %82 : vector<7x1xf32> to vector<7x8xf32>
    %1354 = arith.mulf %1353, %1352 : vector<7x8xf32>
    %1355 = vector.broadcast %83 : vector<7x1xf32> to vector<7x8xf32>
    %1356 = arith.mulf %1354, %1355 : vector<7x8xf32>
    %1357 = arith.addf %1338, %1356 : vector<7x8xf32>
    %1358 = arith.addf %1339, %1354 : vector<7x8xf32>
    %1359 = vector.extract_strided_slice %1089 {offsets = [6, 0], sizes = [1, 8], strides = [1, 1]} : vector<7x8xf32> to vector<1x8xf32>
    %1360 = vector.broadcast %1359 : vector<1x8xf32> to vector<7x8xf32>
    %1361 = vector.broadcast %88 : vector<7x1xf32> to vector<7x8xf32>
    %1362 = arith.subf %1360, %1361 : vector<7x8xf32>
    %1363 = vector.broadcast %89 : vector<7x1xf32> to vector<7x8xf32>
    %1364 = arith.mulf %1363, %1362 : vector<7x8xf32>
    %cst_222 = arith.constant 5.000000e-01 : f32
    %1365 = vector.broadcast %cst_222 : f32 to vector<7x8xf32>
    %1366 = arith.mulf %1365, %1364 : vector<7x8xf32>
    %1367 = math.tanh %1366 : vector<7x8xf32>
    %cst_223 = arith.constant 1.000000e+00 : f32
    %1368 = vector.broadcast %cst_223 : f32 to vector<7x8xf32>
    %1369 = arith.addf %1367, %1368 : vector<7x8xf32>
    %cst_224 = arith.constant 5.000000e-01 : f32
    %1370 = vector.broadcast %cst_224 : f32 to vector<7x8xf32>
    %1371 = arith.mulf %1370, %1369 : vector<7x8xf32>
    %1372 = vector.broadcast %86 : vector<7x1xf32> to vector<7x8xf32>
    %1373 = arith.mulf %1372, %1371 : vector<7x8xf32>
    %1374 = vector.broadcast %87 : vector<7x1xf32> to vector<7x8xf32>
    %1375 = arith.mulf %1373, %1374 : vector<7x8xf32>
    %1376 = arith.addf %1357, %1375 : vector<7x8xf32>
    %1377 = arith.addf %1358, %1373 : vector<7x8xf32>
    %1378 = vector.broadcast %27 : vector<7x1xf32> to vector<7x8xf32>
    %1379 = arith.mulf %1378, %1089 : vector<7x8xf32>
    %1380 = vector.broadcast %32 : vector<7x1xf32> to vector<7x8xf32>
    %1381 = arith.addf %1379, %1380 : vector<7x8xf32>
    %1382 = arith.addf %1381, %1376 : vector<7x8xf32>
    %1383 = vector.broadcast %33 : vector<7x1xf32> to vector<7x8xf32>
    %1384 = arith.addf %1383, %1377 : vector<7x8xf32>
    %cst_225 = arith.constant 9.99999993E-9 : f32
    %1385 = vector.broadcast %cst_225 : f32 to vector<7x8xf32>
    %1386 = arith.addf %1384, %1385 : vector<7x8xf32>
    %1387 = arith.divf %1382, %1386 : vector<7x8xf32>
    %1388 = vector.extract_strided_slice %1387 {offsets = [0, 0], sizes = [1, 8], strides = [1, 1]} : vector<7x8xf32> to vector<1x8xf32>
    %1389 = vector.broadcast %1388 : vector<1x8xf32> to vector<7x8xf32>
    %1390 = vector.broadcast %64 : vector<7x1xf32> to vector<7x8xf32>
    %1391 = arith.subf %1389, %1390 : vector<7x8xf32>
    %1392 = vector.broadcast %65 : vector<7x1xf32> to vector<7x8xf32>
    %1393 = arith.mulf %1392, %1391 : vector<7x8xf32>
    %cst_226 = arith.constant 5.000000e-01 : f32
    %1394 = vector.broadcast %cst_226 : f32 to vector<7x8xf32>
    %1395 = arith.mulf %1394, %1393 : vector<7x8xf32>
    %1396 = math.tanh %1395 : vector<7x8xf32>
    %cst_227 = arith.constant 1.000000e+00 : f32
    %1397 = vector.broadcast %cst_227 : f32 to vector<7x8xf32>
    %1398 = arith.addf %1396, %1397 : vector<7x8xf32>
    %cst_228 = arith.constant 5.000000e-01 : f32
    %1399 = vector.broadcast %cst_228 : f32 to vector<7x8xf32>
    %1400 = arith.mulf %1399, %1398 : vector<7x8xf32>
    %1401 = vector.broadcast %62 : vector<7x1xf32> to vector<7x8xf32>
    %1402 = arith.mulf %1401, %1400 : vector<7x8xf32>
    %1403 = vector.broadcast %63 : vector<7x1xf32> to vector<7x8xf32>
    %1404 = arith.mulf %1402, %1403 : vector<7x8xf32>
    %1405 = arith.addf %1243, %1404 : vector<7x8xf32>
    %1406 = arith.addf %1244, %1402 : vector<7x8xf32>
    %1407 = vector.extract_strided_slice %1387 {offsets = [1, 0], sizes = [1, 8], strides = [1, 1]} : vector<7x8xf32> to vector<1x8xf32>
    %1408 = vector.broadcast %1407 : vector<1x8xf32> to vector<7x8xf32>
    %1409 = vector.broadcast %68 : vector<7x1xf32> to vector<7x8xf32>
    %1410 = arith.subf %1408, %1409 : vector<7x8xf32>
    %1411 = vector.broadcast %69 : vector<7x1xf32> to vector<7x8xf32>
    %1412 = arith.mulf %1411, %1410 : vector<7x8xf32>
    %cst_229 = arith.constant 5.000000e-01 : f32
    %1413 = vector.broadcast %cst_229 : f32 to vector<7x8xf32>
    %1414 = arith.mulf %1413, %1412 : vector<7x8xf32>
    %1415 = math.tanh %1414 : vector<7x8xf32>
    %cst_230 = arith.constant 1.000000e+00 : f32
    %1416 = vector.broadcast %cst_230 : f32 to vector<7x8xf32>
    %1417 = arith.addf %1415, %1416 : vector<7x8xf32>
    %cst_231 = arith.constant 5.000000e-01 : f32
    %1418 = vector.broadcast %cst_231 : f32 to vector<7x8xf32>
    %1419 = arith.mulf %1418, %1417 : vector<7x8xf32>
    %1420 = vector.broadcast %66 : vector<7x1xf32> to vector<7x8xf32>
    %1421 = arith.mulf %1420, %1419 : vector<7x8xf32>
    %1422 = vector.broadcast %67 : vector<7x1xf32> to vector<7x8xf32>
    %1423 = arith.mulf %1421, %1422 : vector<7x8xf32>
    %1424 = arith.addf %1405, %1423 : vector<7x8xf32>
    %1425 = arith.addf %1406, %1421 : vector<7x8xf32>
    %1426 = vector.extract_strided_slice %1387 {offsets = [2, 0], sizes = [1, 8], strides = [1, 1]} : vector<7x8xf32> to vector<1x8xf32>
    %1427 = vector.broadcast %1426 : vector<1x8xf32> to vector<7x8xf32>
    %1428 = vector.broadcast %72 : vector<7x1xf32> to vector<7x8xf32>
    %1429 = arith.subf %1427, %1428 : vector<7x8xf32>
    %1430 = vector.broadcast %73 : vector<7x1xf32> to vector<7x8xf32>
    %1431 = arith.mulf %1430, %1429 : vector<7x8xf32>
    %cst_232 = arith.constant 5.000000e-01 : f32
    %1432 = vector.broadcast %cst_232 : f32 to vector<7x8xf32>
    %1433 = arith.mulf %1432, %1431 : vector<7x8xf32>
    %1434 = math.tanh %1433 : vector<7x8xf32>
    %cst_233 = arith.constant 1.000000e+00 : f32
    %1435 = vector.broadcast %cst_233 : f32 to vector<7x8xf32>
    %1436 = arith.addf %1434, %1435 : vector<7x8xf32>
    %cst_234 = arith.constant 5.000000e-01 : f32
    %1437 = vector.broadcast %cst_234 : f32 to vector<7x8xf32>
    %1438 = arith.mulf %1437, %1436 : vector<7x8xf32>
    %1439 = vector.broadcast %70 : vector<7x1xf32> to vector<7x8xf32>
    %1440 = arith.mulf %1439, %1438 : vector<7x8xf32>
    %1441 = vector.broadcast %71 : vector<7x1xf32> to vector<7x8xf32>
    %1442 = arith.mulf %1440, %1441 : vector<7x8xf32>
    %1443 = arith.addf %1424, %1442 : vector<7x8xf32>
    %1444 = arith.addf %1425, %1440 : vector<7x8xf32>
    %1445 = vector.extract_strided_slice %1387 {offsets = [3, 0], sizes = [1, 8], strides = [1, 1]} : vector<7x8xf32> to vector<1x8xf32>
    %1446 = vector.broadcast %1445 : vector<1x8xf32> to vector<7x8xf32>
    %1447 = vector.broadcast %76 : vector<7x1xf32> to vector<7x8xf32>
    %1448 = arith.subf %1446, %1447 : vector<7x8xf32>
    %1449 = vector.broadcast %77 : vector<7x1xf32> to vector<7x8xf32>
    %1450 = arith.mulf %1449, %1448 : vector<7x8xf32>
    %cst_235 = arith.constant 5.000000e-01 : f32
    %1451 = vector.broadcast %cst_235 : f32 to vector<7x8xf32>
    %1452 = arith.mulf %1451, %1450 : vector<7x8xf32>
    %1453 = math.tanh %1452 : vector<7x8xf32>
    %cst_236 = arith.constant 1.000000e+00 : f32
    %1454 = vector.broadcast %cst_236 : f32 to vector<7x8xf32>
    %1455 = arith.addf %1453, %1454 : vector<7x8xf32>
    %cst_237 = arith.constant 5.000000e-01 : f32
    %1456 = vector.broadcast %cst_237 : f32 to vector<7x8xf32>
    %1457 = arith.mulf %1456, %1455 : vector<7x8xf32>
    %1458 = vector.broadcast %74 : vector<7x1xf32> to vector<7x8xf32>
    %1459 = arith.mulf %1458, %1457 : vector<7x8xf32>
    %1460 = vector.broadcast %75 : vector<7x1xf32> to vector<7x8xf32>
    %1461 = arith.mulf %1459, %1460 : vector<7x8xf32>
    %1462 = arith.addf %1443, %1461 : vector<7x8xf32>
    %1463 = arith.addf %1444, %1459 : vector<7x8xf32>
    %1464 = vector.extract_strided_slice %1387 {offsets = [4, 0], sizes = [1, 8], strides = [1, 1]} : vector<7x8xf32> to vector<1x8xf32>
    %1465 = vector.broadcast %1464 : vector<1x8xf32> to vector<7x8xf32>
    %1466 = vector.broadcast %80 : vector<7x1xf32> to vector<7x8xf32>
    %1467 = arith.subf %1465, %1466 : vector<7x8xf32>
    %1468 = vector.broadcast %81 : vector<7x1xf32> to vector<7x8xf32>
    %1469 = arith.mulf %1468, %1467 : vector<7x8xf32>
    %cst_238 = arith.constant 5.000000e-01 : f32
    %1470 = vector.broadcast %cst_238 : f32 to vector<7x8xf32>
    %1471 = arith.mulf %1470, %1469 : vector<7x8xf32>
    %1472 = math.tanh %1471 : vector<7x8xf32>
    %cst_239 = arith.constant 1.000000e+00 : f32
    %1473 = vector.broadcast %cst_239 : f32 to vector<7x8xf32>
    %1474 = arith.addf %1472, %1473 : vector<7x8xf32>
    %cst_240 = arith.constant 5.000000e-01 : f32
    %1475 = vector.broadcast %cst_240 : f32 to vector<7x8xf32>
    %1476 = arith.mulf %1475, %1474 : vector<7x8xf32>
    %1477 = vector.broadcast %78 : vector<7x1xf32> to vector<7x8xf32>
    %1478 = arith.mulf %1477, %1476 : vector<7x8xf32>
    %1479 = vector.broadcast %79 : vector<7x1xf32> to vector<7x8xf32>
    %1480 = arith.mulf %1478, %1479 : vector<7x8xf32>
    %1481 = arith.addf %1462, %1480 : vector<7x8xf32>
    %1482 = arith.addf %1463, %1478 : vector<7x8xf32>
    %1483 = vector.extract_strided_slice %1387 {offsets = [5, 0], sizes = [1, 8], strides = [1, 1]} : vector<7x8xf32> to vector<1x8xf32>
    %1484 = vector.broadcast %1483 : vector<1x8xf32> to vector<7x8xf32>
    %1485 = vector.broadcast %84 : vector<7x1xf32> to vector<7x8xf32>
    %1486 = arith.subf %1484, %1485 : vector<7x8xf32>
    %1487 = vector.broadcast %85 : vector<7x1xf32> to vector<7x8xf32>
    %1488 = arith.mulf %1487, %1486 : vector<7x8xf32>
    %cst_241 = arith.constant 5.000000e-01 : f32
    %1489 = vector.broadcast %cst_241 : f32 to vector<7x8xf32>
    %1490 = arith.mulf %1489, %1488 : vector<7x8xf32>
    %1491 = math.tanh %1490 : vector<7x8xf32>
    %cst_242 = arith.constant 1.000000e+00 : f32
    %1492 = vector.broadcast %cst_242 : f32 to vector<7x8xf32>
    %1493 = arith.addf %1491, %1492 : vector<7x8xf32>
    %cst_243 = arith.constant 5.000000e-01 : f32
    %1494 = vector.broadcast %cst_243 : f32 to vector<7x8xf32>
    %1495 = arith.mulf %1494, %1493 : vector<7x8xf32>
    %1496 = vector.broadcast %82 : vector<7x1xf32> to vector<7x8xf32>
    %1497 = arith.mulf %1496, %1495 : vector<7x8xf32>
    %1498 = vector.broadcast %83 : vector<7x1xf32> to vector<7x8xf32>
    %1499 = arith.mulf %1497, %1498 : vector<7x8xf32>
    %1500 = arith.addf %1481, %1499 : vector<7x8xf32>
    %1501 = arith.addf %1482, %1497 : vector<7x8xf32>
    %1502 = vector.extract_strided_slice %1387 {offsets = [6, 0], sizes = [1, 8], strides = [1, 1]} : vector<7x8xf32> to vector<1x8xf32>
    %1503 = vector.broadcast %1502 : vector<1x8xf32> to vector<7x8xf32>
    %1504 = vector.broadcast %88 : vector<7x1xf32> to vector<7x8xf32>
    %1505 = arith.subf %1503, %1504 : vector<7x8xf32>
    %1506 = vector.broadcast %89 : vector<7x1xf32> to vector<7x8xf32>
    %1507 = arith.mulf %1506, %1505 : vector<7x8xf32>
    %cst_244 = arith.constant 5.000000e-01 : f32
    %1508 = vector.broadcast %cst_244 : f32 to vector<7x8xf32>
    %1509 = arith.mulf %1508, %1507 : vector<7x8xf32>
    %1510 = math.tanh %1509 : vector<7x8xf32>
    %cst_245 = arith.constant 1.000000e+00 : f32
    %1511 = vector.broadcast %cst_245 : f32 to vector<7x8xf32>
    %1512 = arith.addf %1510, %1511 : vector<7x8xf32>
    %cst_246 = arith.constant 5.000000e-01 : f32
    %1513 = vector.broadcast %cst_246 : f32 to vector<7x8xf32>
    %1514 = arith.mulf %1513, %1512 : vector<7x8xf32>
    %1515 = vector.broadcast %86 : vector<7x1xf32> to vector<7x8xf32>
    %1516 = arith.mulf %1515, %1514 : vector<7x8xf32>
    %1517 = vector.broadcast %87 : vector<7x1xf32> to vector<7x8xf32>
    %1518 = arith.mulf %1516, %1517 : vector<7x8xf32>
    %1519 = arith.addf %1500, %1518 : vector<7x8xf32>
    %1520 = arith.addf %1501, %1516 : vector<7x8xf32>
    %1521 = vector.broadcast %27 : vector<7x1xf32> to vector<7x8xf32>
    %1522 = arith.mulf %1521, %1387 : vector<7x8xf32>
    %1523 = vector.broadcast %32 : vector<7x1xf32> to vector<7x8xf32>
    %1524 = arith.addf %1522, %1523 : vector<7x8xf32>
    %1525 = arith.addf %1524, %1519 : vector<7x8xf32>
    %1526 = vector.broadcast %33 : vector<7x1xf32> to vector<7x8xf32>
    %1527 = arith.addf %1526, %1520 : vector<7x8xf32>
    %cst_247 = arith.constant 9.99999993E-9 : f32
    %1528 = vector.broadcast %cst_247 : f32 to vector<7x8xf32>
    %1529 = arith.addf %1527, %1528 : vector<7x8xf32>
    %1530 = arith.divf %1525, %1529 : vector<7x8xf32>
    %1531 = vector.extract_strided_slice %1530 {offsets = [0, 0], sizes = [1, 8], strides = [1, 1]} : vector<7x8xf32> to vector<1x8xf32>
    %1532 = vector.broadcast %1531 : vector<1x8xf32> to vector<7x8xf32>
    %1533 = vector.broadcast %64 : vector<7x1xf32> to vector<7x8xf32>
    %1534 = arith.subf %1532, %1533 : vector<7x8xf32>
    %1535 = vector.broadcast %65 : vector<7x1xf32> to vector<7x8xf32>
    %1536 = arith.mulf %1535, %1534 : vector<7x8xf32>
    %cst_248 = arith.constant 5.000000e-01 : f32
    %1537 = vector.broadcast %cst_248 : f32 to vector<7x8xf32>
    %1538 = arith.mulf %1537, %1536 : vector<7x8xf32>
    %1539 = math.tanh %1538 : vector<7x8xf32>
    %cst_249 = arith.constant 1.000000e+00 : f32
    %1540 = vector.broadcast %cst_249 : f32 to vector<7x8xf32>
    %1541 = arith.addf %1539, %1540 : vector<7x8xf32>
    %cst_250 = arith.constant 5.000000e-01 : f32
    %1542 = vector.broadcast %cst_250 : f32 to vector<7x8xf32>
    %1543 = arith.mulf %1542, %1541 : vector<7x8xf32>
    %1544 = vector.broadcast %62 : vector<7x1xf32> to vector<7x8xf32>
    %1545 = arith.mulf %1544, %1543 : vector<7x8xf32>
    %1546 = vector.broadcast %63 : vector<7x1xf32> to vector<7x8xf32>
    %1547 = arith.mulf %1545, %1546 : vector<7x8xf32>
    %1548 = arith.addf %1243, %1547 : vector<7x8xf32>
    %1549 = arith.addf %1244, %1545 : vector<7x8xf32>
    %1550 = vector.extract_strided_slice %1530 {offsets = [1, 0], sizes = [1, 8], strides = [1, 1]} : vector<7x8xf32> to vector<1x8xf32>
    %1551 = vector.broadcast %1550 : vector<1x8xf32> to vector<7x8xf32>
    %1552 = vector.broadcast %68 : vector<7x1xf32> to vector<7x8xf32>
    %1553 = arith.subf %1551, %1552 : vector<7x8xf32>
    %1554 = vector.broadcast %69 : vector<7x1xf32> to vector<7x8xf32>
    %1555 = arith.mulf %1554, %1553 : vector<7x8xf32>
    %cst_251 = arith.constant 5.000000e-01 : f32
    %1556 = vector.broadcast %cst_251 : f32 to vector<7x8xf32>
    %1557 = arith.mulf %1556, %1555 : vector<7x8xf32>
    %1558 = math.tanh %1557 : vector<7x8xf32>
    %cst_252 = arith.constant 1.000000e+00 : f32
    %1559 = vector.broadcast %cst_252 : f32 to vector<7x8xf32>
    %1560 = arith.addf %1558, %1559 : vector<7x8xf32>
    %cst_253 = arith.constant 5.000000e-01 : f32
    %1561 = vector.broadcast %cst_253 : f32 to vector<7x8xf32>
    %1562 = arith.mulf %1561, %1560 : vector<7x8xf32>
    %1563 = vector.broadcast %66 : vector<7x1xf32> to vector<7x8xf32>
    %1564 = arith.mulf %1563, %1562 : vector<7x8xf32>
    %1565 = vector.broadcast %67 : vector<7x1xf32> to vector<7x8xf32>
    %1566 = arith.mulf %1564, %1565 : vector<7x8xf32>
    %1567 = arith.addf %1548, %1566 : vector<7x8xf32>
    %1568 = arith.addf %1549, %1564 : vector<7x8xf32>
    %1569 = vector.extract_strided_slice %1530 {offsets = [2, 0], sizes = [1, 8], strides = [1, 1]} : vector<7x8xf32> to vector<1x8xf32>
    %1570 = vector.broadcast %1569 : vector<1x8xf32> to vector<7x8xf32>
    %1571 = vector.broadcast %72 : vector<7x1xf32> to vector<7x8xf32>
    %1572 = arith.subf %1570, %1571 : vector<7x8xf32>
    %1573 = vector.broadcast %73 : vector<7x1xf32> to vector<7x8xf32>
    %1574 = arith.mulf %1573, %1572 : vector<7x8xf32>
    %cst_254 = arith.constant 5.000000e-01 : f32
    %1575 = vector.broadcast %cst_254 : f32 to vector<7x8xf32>
    %1576 = arith.mulf %1575, %1574 : vector<7x8xf32>
    %1577 = math.tanh %1576 : vector<7x8xf32>
    %cst_255 = arith.constant 1.000000e+00 : f32
    %1578 = vector.broadcast %cst_255 : f32 to vector<7x8xf32>
    %1579 = arith.addf %1577, %1578 : vector<7x8xf32>
    %cst_256 = arith.constant 5.000000e-01 : f32
    %1580 = vector.broadcast %cst_256 : f32 to vector<7x8xf32>
    %1581 = arith.mulf %1580, %1579 : vector<7x8xf32>
    %1582 = vector.broadcast %70 : vector<7x1xf32> to vector<7x8xf32>
    %1583 = arith.mulf %1582, %1581 : vector<7x8xf32>
    %1584 = vector.broadcast %71 : vector<7x1xf32> to vector<7x8xf32>
    %1585 = arith.mulf %1583, %1584 : vector<7x8xf32>
    %1586 = arith.addf %1567, %1585 : vector<7x8xf32>
    %1587 = arith.addf %1568, %1583 : vector<7x8xf32>
    %1588 = vector.extract_strided_slice %1530 {offsets = [3, 0], sizes = [1, 8], strides = [1, 1]} : vector<7x8xf32> to vector<1x8xf32>
    %1589 = vector.broadcast %1588 : vector<1x8xf32> to vector<7x8xf32>
    %1590 = vector.broadcast %76 : vector<7x1xf32> to vector<7x8xf32>
    %1591 = arith.subf %1589, %1590 : vector<7x8xf32>
    %1592 = vector.broadcast %77 : vector<7x1xf32> to vector<7x8xf32>
    %1593 = arith.mulf %1592, %1591 : vector<7x8xf32>
    %cst_257 = arith.constant 5.000000e-01 : f32
    %1594 = vector.broadcast %cst_257 : f32 to vector<7x8xf32>
    %1595 = arith.mulf %1594, %1593 : vector<7x8xf32>
    %1596 = math.tanh %1595 : vector<7x8xf32>
    %cst_258 = arith.constant 1.000000e+00 : f32
    %1597 = vector.broadcast %cst_258 : f32 to vector<7x8xf32>
    %1598 = arith.addf %1596, %1597 : vector<7x8xf32>
    %cst_259 = arith.constant 5.000000e-01 : f32
    %1599 = vector.broadcast %cst_259 : f32 to vector<7x8xf32>
    %1600 = arith.mulf %1599, %1598 : vector<7x8xf32>
    %1601 = vector.broadcast %74 : vector<7x1xf32> to vector<7x8xf32>
    %1602 = arith.mulf %1601, %1600 : vector<7x8xf32>
    %1603 = vector.broadcast %75 : vector<7x1xf32> to vector<7x8xf32>
    %1604 = arith.mulf %1602, %1603 : vector<7x8xf32>
    %1605 = arith.addf %1586, %1604 : vector<7x8xf32>
    %1606 = arith.addf %1587, %1602 : vector<7x8xf32>
    %1607 = vector.extract_strided_slice %1530 {offsets = [4, 0], sizes = [1, 8], strides = [1, 1]} : vector<7x8xf32> to vector<1x8xf32>
    %1608 = vector.broadcast %1607 : vector<1x8xf32> to vector<7x8xf32>
    %1609 = vector.broadcast %80 : vector<7x1xf32> to vector<7x8xf32>
    %1610 = arith.subf %1608, %1609 : vector<7x8xf32>
    %1611 = vector.broadcast %81 : vector<7x1xf32> to vector<7x8xf32>
    %1612 = arith.mulf %1611, %1610 : vector<7x8xf32>
    %cst_260 = arith.constant 5.000000e-01 : f32
    %1613 = vector.broadcast %cst_260 : f32 to vector<7x8xf32>
    %1614 = arith.mulf %1613, %1612 : vector<7x8xf32>
    %1615 = math.tanh %1614 : vector<7x8xf32>
    %cst_261 = arith.constant 1.000000e+00 : f32
    %1616 = vector.broadcast %cst_261 : f32 to vector<7x8xf32>
    %1617 = arith.addf %1615, %1616 : vector<7x8xf32>
    %cst_262 = arith.constant 5.000000e-01 : f32
    %1618 = vector.broadcast %cst_262 : f32 to vector<7x8xf32>
    %1619 = arith.mulf %1618, %1617 : vector<7x8xf32>
    %1620 = vector.broadcast %78 : vector<7x1xf32> to vector<7x8xf32>
    %1621 = arith.mulf %1620, %1619 : vector<7x8xf32>
    %1622 = vector.broadcast %79 : vector<7x1xf32> to vector<7x8xf32>
    %1623 = arith.mulf %1621, %1622 : vector<7x8xf32>
    %1624 = arith.addf %1605, %1623 : vector<7x8xf32>
    %1625 = arith.addf %1606, %1621 : vector<7x8xf32>
    %1626 = vector.extract_strided_slice %1530 {offsets = [5, 0], sizes = [1, 8], strides = [1, 1]} : vector<7x8xf32> to vector<1x8xf32>
    %1627 = vector.broadcast %1626 : vector<1x8xf32> to vector<7x8xf32>
    %1628 = vector.broadcast %84 : vector<7x1xf32> to vector<7x8xf32>
    %1629 = arith.subf %1627, %1628 : vector<7x8xf32>
    %1630 = vector.broadcast %85 : vector<7x1xf32> to vector<7x8xf32>
    %1631 = arith.mulf %1630, %1629 : vector<7x8xf32>
    %cst_263 = arith.constant 5.000000e-01 : f32
    %1632 = vector.broadcast %cst_263 : f32 to vector<7x8xf32>
    %1633 = arith.mulf %1632, %1631 : vector<7x8xf32>
    %1634 = math.tanh %1633 : vector<7x8xf32>
    %cst_264 = arith.constant 1.000000e+00 : f32
    %1635 = vector.broadcast %cst_264 : f32 to vector<7x8xf32>
    %1636 = arith.addf %1634, %1635 : vector<7x8xf32>
    %cst_265 = arith.constant 5.000000e-01 : f32
    %1637 = vector.broadcast %cst_265 : f32 to vector<7x8xf32>
    %1638 = arith.mulf %1637, %1636 : vector<7x8xf32>
    %1639 = vector.broadcast %82 : vector<7x1xf32> to vector<7x8xf32>
    %1640 = arith.mulf %1639, %1638 : vector<7x8xf32>
    %1641 = vector.broadcast %83 : vector<7x1xf32> to vector<7x8xf32>
    %1642 = arith.mulf %1640, %1641 : vector<7x8xf32>
    %1643 = arith.addf %1624, %1642 : vector<7x8xf32>
    %1644 = arith.addf %1625, %1640 : vector<7x8xf32>
    %1645 = vector.extract_strided_slice %1530 {offsets = [6, 0], sizes = [1, 8], strides = [1, 1]} : vector<7x8xf32> to vector<1x8xf32>
    %1646 = vector.broadcast %1645 : vector<1x8xf32> to vector<7x8xf32>
    %1647 = vector.broadcast %88 : vector<7x1xf32> to vector<7x8xf32>
    %1648 = arith.subf %1646, %1647 : vector<7x8xf32>
    %1649 = vector.broadcast %89 : vector<7x1xf32> to vector<7x8xf32>
    %1650 = arith.mulf %1649, %1648 : vector<7x8xf32>
    %cst_266 = arith.constant 5.000000e-01 : f32
    %1651 = vector.broadcast %cst_266 : f32 to vector<7x8xf32>
    %1652 = arith.mulf %1651, %1650 : vector<7x8xf32>
    %1653 = math.tanh %1652 : vector<7x8xf32>
    %cst_267 = arith.constant 1.000000e+00 : f32
    %1654 = vector.broadcast %cst_267 : f32 to vector<7x8xf32>
    %1655 = arith.addf %1653, %1654 : vector<7x8xf32>
    %cst_268 = arith.constant 5.000000e-01 : f32
    %1656 = vector.broadcast %cst_268 : f32 to vector<7x8xf32>
    %1657 = arith.mulf %1656, %1655 : vector<7x8xf32>
    %1658 = vector.broadcast %86 : vector<7x1xf32> to vector<7x8xf32>
    %1659 = arith.mulf %1658, %1657 : vector<7x8xf32>
    %1660 = vector.broadcast %87 : vector<7x1xf32> to vector<7x8xf32>
    %1661 = arith.mulf %1659, %1660 : vector<7x8xf32>
    %1662 = arith.addf %1643, %1661 : vector<7x8xf32>
    %1663 = arith.addf %1644, %1659 : vector<7x8xf32>
    %1664 = vector.broadcast %27 : vector<7x1xf32> to vector<7x8xf32>
    %1665 = arith.mulf %1664, %1530 : vector<7x8xf32>
    %1666 = vector.broadcast %32 : vector<7x1xf32> to vector<7x8xf32>
    %1667 = arith.addf %1665, %1666 : vector<7x8xf32>
    %1668 = arith.addf %1667, %1662 : vector<7x8xf32>
    %1669 = vector.broadcast %33 : vector<7x1xf32> to vector<7x8xf32>
    %1670 = arith.addf %1669, %1663 : vector<7x8xf32>
    %cst_269 = arith.constant 9.99999993E-9 : f32
    %1671 = vector.broadcast %cst_269 : f32 to vector<7x8xf32>
    %1672 = arith.addf %1670, %1671 : vector<7x8xf32>
    %1673 = arith.divf %1668, %1672 : vector<7x8xf32>
    %1674 = vector.extract_strided_slice %1673 {offsets = [0, 0], sizes = [1, 8], strides = [1, 1]} : vector<7x8xf32> to vector<1x8xf32>
    %1675 = vector.broadcast %1674 : vector<1x8xf32> to vector<7x8xf32>
    %1676 = vector.broadcast %64 : vector<7x1xf32> to vector<7x8xf32>
    %1677 = arith.subf %1675, %1676 : vector<7x8xf32>
    %1678 = vector.broadcast %65 : vector<7x1xf32> to vector<7x8xf32>
    %1679 = arith.mulf %1678, %1677 : vector<7x8xf32>
    %cst_270 = arith.constant 5.000000e-01 : f32
    %1680 = vector.broadcast %cst_270 : f32 to vector<7x8xf32>
    %1681 = arith.mulf %1680, %1679 : vector<7x8xf32>
    %1682 = math.tanh %1681 : vector<7x8xf32>
    %cst_271 = arith.constant 1.000000e+00 : f32
    %1683 = vector.broadcast %cst_271 : f32 to vector<7x8xf32>
    %1684 = arith.addf %1682, %1683 : vector<7x8xf32>
    %cst_272 = arith.constant 5.000000e-01 : f32
    %1685 = vector.broadcast %cst_272 : f32 to vector<7x8xf32>
    %1686 = arith.mulf %1685, %1684 : vector<7x8xf32>
    %1687 = vector.broadcast %62 : vector<7x1xf32> to vector<7x8xf32>
    %1688 = arith.mulf %1687, %1686 : vector<7x8xf32>
    %1689 = vector.broadcast %63 : vector<7x1xf32> to vector<7x8xf32>
    %1690 = arith.mulf %1688, %1689 : vector<7x8xf32>
    %1691 = arith.addf %1243, %1690 : vector<7x8xf32>
    %1692 = arith.addf %1244, %1688 : vector<7x8xf32>
    %1693 = vector.extract_strided_slice %1673 {offsets = [1, 0], sizes = [1, 8], strides = [1, 1]} : vector<7x8xf32> to vector<1x8xf32>
    %1694 = vector.broadcast %1693 : vector<1x8xf32> to vector<7x8xf32>
    %1695 = vector.broadcast %68 : vector<7x1xf32> to vector<7x8xf32>
    %1696 = arith.subf %1694, %1695 : vector<7x8xf32>
    %1697 = vector.broadcast %69 : vector<7x1xf32> to vector<7x8xf32>
    %1698 = arith.mulf %1697, %1696 : vector<7x8xf32>
    %cst_273 = arith.constant 5.000000e-01 : f32
    %1699 = vector.broadcast %cst_273 : f32 to vector<7x8xf32>
    %1700 = arith.mulf %1699, %1698 : vector<7x8xf32>
    %1701 = math.tanh %1700 : vector<7x8xf32>
    %cst_274 = arith.constant 1.000000e+00 : f32
    %1702 = vector.broadcast %cst_274 : f32 to vector<7x8xf32>
    %1703 = arith.addf %1701, %1702 : vector<7x8xf32>
    %cst_275 = arith.constant 5.000000e-01 : f32
    %1704 = vector.broadcast %cst_275 : f32 to vector<7x8xf32>
    %1705 = arith.mulf %1704, %1703 : vector<7x8xf32>
    %1706 = vector.broadcast %66 : vector<7x1xf32> to vector<7x8xf32>
    %1707 = arith.mulf %1706, %1705 : vector<7x8xf32>
    %1708 = vector.broadcast %67 : vector<7x1xf32> to vector<7x8xf32>
    %1709 = arith.mulf %1707, %1708 : vector<7x8xf32>
    %1710 = arith.addf %1691, %1709 : vector<7x8xf32>
    %1711 = arith.addf %1692, %1707 : vector<7x8xf32>
    %1712 = vector.extract_strided_slice %1673 {offsets = [2, 0], sizes = [1, 8], strides = [1, 1]} : vector<7x8xf32> to vector<1x8xf32>
    %1713 = vector.broadcast %1712 : vector<1x8xf32> to vector<7x8xf32>
    %1714 = vector.broadcast %72 : vector<7x1xf32> to vector<7x8xf32>
    %1715 = arith.subf %1713, %1714 : vector<7x8xf32>
    %1716 = vector.broadcast %73 : vector<7x1xf32> to vector<7x8xf32>
    %1717 = arith.mulf %1716, %1715 : vector<7x8xf32>
    %cst_276 = arith.constant 5.000000e-01 : f32
    %1718 = vector.broadcast %cst_276 : f32 to vector<7x8xf32>
    %1719 = arith.mulf %1718, %1717 : vector<7x8xf32>
    %1720 = math.tanh %1719 : vector<7x8xf32>
    %cst_277 = arith.constant 1.000000e+00 : f32
    %1721 = vector.broadcast %cst_277 : f32 to vector<7x8xf32>
    %1722 = arith.addf %1720, %1721 : vector<7x8xf32>
    %cst_278 = arith.constant 5.000000e-01 : f32
    %1723 = vector.broadcast %cst_278 : f32 to vector<7x8xf32>
    %1724 = arith.mulf %1723, %1722 : vector<7x8xf32>
    %1725 = vector.broadcast %70 : vector<7x1xf32> to vector<7x8xf32>
    %1726 = arith.mulf %1725, %1724 : vector<7x8xf32>
    %1727 = vector.broadcast %71 : vector<7x1xf32> to vector<7x8xf32>
    %1728 = arith.mulf %1726, %1727 : vector<7x8xf32>
    %1729 = arith.addf %1710, %1728 : vector<7x8xf32>
    %1730 = arith.addf %1711, %1726 : vector<7x8xf32>
    %1731 = vector.extract_strided_slice %1673 {offsets = [3, 0], sizes = [1, 8], strides = [1, 1]} : vector<7x8xf32> to vector<1x8xf32>
    %1732 = vector.broadcast %1731 : vector<1x8xf32> to vector<7x8xf32>
    %1733 = vector.broadcast %76 : vector<7x1xf32> to vector<7x8xf32>
    %1734 = arith.subf %1732, %1733 : vector<7x8xf32>
    %1735 = vector.broadcast %77 : vector<7x1xf32> to vector<7x8xf32>
    %1736 = arith.mulf %1735, %1734 : vector<7x8xf32>
    %cst_279 = arith.constant 5.000000e-01 : f32
    %1737 = vector.broadcast %cst_279 : f32 to vector<7x8xf32>
    %1738 = arith.mulf %1737, %1736 : vector<7x8xf32>
    %1739 = math.tanh %1738 : vector<7x8xf32>
    %cst_280 = arith.constant 1.000000e+00 : f32
    %1740 = vector.broadcast %cst_280 : f32 to vector<7x8xf32>
    %1741 = arith.addf %1739, %1740 : vector<7x8xf32>
    %cst_281 = arith.constant 5.000000e-01 : f32
    %1742 = vector.broadcast %cst_281 : f32 to vector<7x8xf32>
    %1743 = arith.mulf %1742, %1741 : vector<7x8xf32>
    %1744 = vector.broadcast %74 : vector<7x1xf32> to vector<7x8xf32>
    %1745 = arith.mulf %1744, %1743 : vector<7x8xf32>
    %1746 = vector.broadcast %75 : vector<7x1xf32> to vector<7x8xf32>
    %1747 = arith.mulf %1745, %1746 : vector<7x8xf32>
    %1748 = arith.addf %1729, %1747 : vector<7x8xf32>
    %1749 = arith.addf %1730, %1745 : vector<7x8xf32>
    %1750 = vector.extract_strided_slice %1673 {offsets = [4, 0], sizes = [1, 8], strides = [1, 1]} : vector<7x8xf32> to vector<1x8xf32>
    %1751 = vector.broadcast %1750 : vector<1x8xf32> to vector<7x8xf32>
    %1752 = vector.broadcast %80 : vector<7x1xf32> to vector<7x8xf32>
    %1753 = arith.subf %1751, %1752 : vector<7x8xf32>
    %1754 = vector.broadcast %81 : vector<7x1xf32> to vector<7x8xf32>
    %1755 = arith.mulf %1754, %1753 : vector<7x8xf32>
    %cst_282 = arith.constant 5.000000e-01 : f32
    %1756 = vector.broadcast %cst_282 : f32 to vector<7x8xf32>
    %1757 = arith.mulf %1756, %1755 : vector<7x8xf32>
    %1758 = math.tanh %1757 : vector<7x8xf32>
    %cst_283 = arith.constant 1.000000e+00 : f32
    %1759 = vector.broadcast %cst_283 : f32 to vector<7x8xf32>
    %1760 = arith.addf %1758, %1759 : vector<7x8xf32>
    %cst_284 = arith.constant 5.000000e-01 : f32
    %1761 = vector.broadcast %cst_284 : f32 to vector<7x8xf32>
    %1762 = arith.mulf %1761, %1760 : vector<7x8xf32>
    %1763 = vector.broadcast %78 : vector<7x1xf32> to vector<7x8xf32>
    %1764 = arith.mulf %1763, %1762 : vector<7x8xf32>
    %1765 = vector.broadcast %79 : vector<7x1xf32> to vector<7x8xf32>
    %1766 = arith.mulf %1764, %1765 : vector<7x8xf32>
    %1767 = arith.addf %1748, %1766 : vector<7x8xf32>
    %1768 = arith.addf %1749, %1764 : vector<7x8xf32>
    %1769 = vector.extract_strided_slice %1673 {offsets = [5, 0], sizes = [1, 8], strides = [1, 1]} : vector<7x8xf32> to vector<1x8xf32>
    %1770 = vector.broadcast %1769 : vector<1x8xf32> to vector<7x8xf32>
    %1771 = vector.broadcast %84 : vector<7x1xf32> to vector<7x8xf32>
    %1772 = arith.subf %1770, %1771 : vector<7x8xf32>
    %1773 = vector.broadcast %85 : vector<7x1xf32> to vector<7x8xf32>
    %1774 = arith.mulf %1773, %1772 : vector<7x8xf32>
    %cst_285 = arith.constant 5.000000e-01 : f32
    %1775 = vector.broadcast %cst_285 : f32 to vector<7x8xf32>
    %1776 = arith.mulf %1775, %1774 : vector<7x8xf32>
    %1777 = math.tanh %1776 : vector<7x8xf32>
    %cst_286 = arith.constant 1.000000e+00 : f32
    %1778 = vector.broadcast %cst_286 : f32 to vector<7x8xf32>
    %1779 = arith.addf %1777, %1778 : vector<7x8xf32>
    %cst_287 = arith.constant 5.000000e-01 : f32
    %1780 = vector.broadcast %cst_287 : f32 to vector<7x8xf32>
    %1781 = arith.mulf %1780, %1779 : vector<7x8xf32>
    %1782 = vector.broadcast %82 : vector<7x1xf32> to vector<7x8xf32>
    %1783 = arith.mulf %1782, %1781 : vector<7x8xf32>
    %1784 = vector.broadcast %83 : vector<7x1xf32> to vector<7x8xf32>
    %1785 = arith.mulf %1783, %1784 : vector<7x8xf32>
    %1786 = arith.addf %1767, %1785 : vector<7x8xf32>
    %1787 = arith.addf %1768, %1783 : vector<7x8xf32>
    %1788 = vector.extract_strided_slice %1673 {offsets = [6, 0], sizes = [1, 8], strides = [1, 1]} : vector<7x8xf32> to vector<1x8xf32>
    %1789 = vector.broadcast %1788 : vector<1x8xf32> to vector<7x8xf32>
    %1790 = vector.broadcast %88 : vector<7x1xf32> to vector<7x8xf32>
    %1791 = arith.subf %1789, %1790 : vector<7x8xf32>
    %1792 = vector.broadcast %89 : vector<7x1xf32> to vector<7x8xf32>
    %1793 = arith.mulf %1792, %1791 : vector<7x8xf32>
    %cst_288 = arith.constant 5.000000e-01 : f32
    %1794 = vector.broadcast %cst_288 : f32 to vector<7x8xf32>
    %1795 = arith.mulf %1794, %1793 : vector<7x8xf32>
    %1796 = math.tanh %1795 : vector<7x8xf32>
    %cst_289 = arith.constant 1.000000e+00 : f32
    %1797 = vector.broadcast %cst_289 : f32 to vector<7x8xf32>
    %1798 = arith.addf %1796, %1797 : vector<7x8xf32>
    %cst_290 = arith.constant 5.000000e-01 : f32
    %1799 = vector.broadcast %cst_290 : f32 to vector<7x8xf32>
    %1800 = arith.mulf %1799, %1798 : vector<7x8xf32>
    %1801 = vector.broadcast %86 : vector<7x1xf32> to vector<7x8xf32>
    %1802 = arith.mulf %1801, %1800 : vector<7x8xf32>
    %1803 = vector.broadcast %87 : vector<7x1xf32> to vector<7x8xf32>
    %1804 = arith.mulf %1802, %1803 : vector<7x8xf32>
    %1805 = arith.addf %1786, %1804 : vector<7x8xf32>
    %1806 = arith.addf %1787, %1802 : vector<7x8xf32>
    %1807 = vector.broadcast %27 : vector<7x1xf32> to vector<7x8xf32>
    %1808 = arith.mulf %1807, %1673 : vector<7x8xf32>
    %1809 = vector.broadcast %32 : vector<7x1xf32> to vector<7x8xf32>
    %1810 = arith.addf %1808, %1809 : vector<7x8xf32>
    %1811 = arith.addf %1810, %1805 : vector<7x8xf32>
    %1812 = vector.broadcast %33 : vector<7x1xf32> to vector<7x8xf32>
    %1813 = arith.addf %1812, %1806 : vector<7x8xf32>
    %cst_291 = arith.constant 9.99999993E-9 : f32
    %1814 = vector.broadcast %cst_291 : f32 to vector<7x8xf32>
    %1815 = arith.addf %1813, %1814 : vector<7x8xf32>
    %1816 = arith.divf %1811, %1815 : vector<7x8xf32>
    %1817 = vector.extract_strided_slice %1816 {offsets = [0, 0], sizes = [1, 8], strides = [1, 1]} : vector<7x8xf32> to vector<1x8xf32>
    %1818 = vector.broadcast %1817 : vector<1x8xf32> to vector<7x8xf32>
    %1819 = vector.broadcast %64 : vector<7x1xf32> to vector<7x8xf32>
    %1820 = arith.subf %1818, %1819 : vector<7x8xf32>
    %1821 = vector.broadcast %65 : vector<7x1xf32> to vector<7x8xf32>
    %1822 = arith.mulf %1821, %1820 : vector<7x8xf32>
    %cst_292 = arith.constant 5.000000e-01 : f32
    %1823 = vector.broadcast %cst_292 : f32 to vector<7x8xf32>
    %1824 = arith.mulf %1823, %1822 : vector<7x8xf32>
    %1825 = math.tanh %1824 : vector<7x8xf32>
    %cst_293 = arith.constant 1.000000e+00 : f32
    %1826 = vector.broadcast %cst_293 : f32 to vector<7x8xf32>
    %1827 = arith.addf %1825, %1826 : vector<7x8xf32>
    %cst_294 = arith.constant 5.000000e-01 : f32
    %1828 = vector.broadcast %cst_294 : f32 to vector<7x8xf32>
    %1829 = arith.mulf %1828, %1827 : vector<7x8xf32>
    %1830 = vector.broadcast %62 : vector<7x1xf32> to vector<7x8xf32>
    %1831 = arith.mulf %1830, %1829 : vector<7x8xf32>
    %1832 = vector.broadcast %63 : vector<7x1xf32> to vector<7x8xf32>
    %1833 = arith.mulf %1831, %1832 : vector<7x8xf32>
    %1834 = arith.addf %1243, %1833 : vector<7x8xf32>
    %1835 = arith.addf %1244, %1831 : vector<7x8xf32>
    %1836 = vector.extract_strided_slice %1816 {offsets = [1, 0], sizes = [1, 8], strides = [1, 1]} : vector<7x8xf32> to vector<1x8xf32>
    %1837 = vector.broadcast %1836 : vector<1x8xf32> to vector<7x8xf32>
    %1838 = vector.broadcast %68 : vector<7x1xf32> to vector<7x8xf32>
    %1839 = arith.subf %1837, %1838 : vector<7x8xf32>
    %1840 = vector.broadcast %69 : vector<7x1xf32> to vector<7x8xf32>
    %1841 = arith.mulf %1840, %1839 : vector<7x8xf32>
    %cst_295 = arith.constant 5.000000e-01 : f32
    %1842 = vector.broadcast %cst_295 : f32 to vector<7x8xf32>
    %1843 = arith.mulf %1842, %1841 : vector<7x8xf32>
    %1844 = math.tanh %1843 : vector<7x8xf32>
    %cst_296 = arith.constant 1.000000e+00 : f32
    %1845 = vector.broadcast %cst_296 : f32 to vector<7x8xf32>
    %1846 = arith.addf %1844, %1845 : vector<7x8xf32>
    %cst_297 = arith.constant 5.000000e-01 : f32
    %1847 = vector.broadcast %cst_297 : f32 to vector<7x8xf32>
    %1848 = arith.mulf %1847, %1846 : vector<7x8xf32>
    %1849 = vector.broadcast %66 : vector<7x1xf32> to vector<7x8xf32>
    %1850 = arith.mulf %1849, %1848 : vector<7x8xf32>
    %1851 = vector.broadcast %67 : vector<7x1xf32> to vector<7x8xf32>
    %1852 = arith.mulf %1850, %1851 : vector<7x8xf32>
    %1853 = arith.addf %1834, %1852 : vector<7x8xf32>
    %1854 = arith.addf %1835, %1850 : vector<7x8xf32>
    %1855 = vector.extract_strided_slice %1816 {offsets = [2, 0], sizes = [1, 8], strides = [1, 1]} : vector<7x8xf32> to vector<1x8xf32>
    %1856 = vector.broadcast %1855 : vector<1x8xf32> to vector<7x8xf32>
    %1857 = vector.broadcast %72 : vector<7x1xf32> to vector<7x8xf32>
    %1858 = arith.subf %1856, %1857 : vector<7x8xf32>
    %1859 = vector.broadcast %73 : vector<7x1xf32> to vector<7x8xf32>
    %1860 = arith.mulf %1859, %1858 : vector<7x8xf32>
    %cst_298 = arith.constant 5.000000e-01 : f32
    %1861 = vector.broadcast %cst_298 : f32 to vector<7x8xf32>
    %1862 = arith.mulf %1861, %1860 : vector<7x8xf32>
    %1863 = math.tanh %1862 : vector<7x8xf32>
    %cst_299 = arith.constant 1.000000e+00 : f32
    %1864 = vector.broadcast %cst_299 : f32 to vector<7x8xf32>
    %1865 = arith.addf %1863, %1864 : vector<7x8xf32>
    %cst_300 = arith.constant 5.000000e-01 : f32
    %1866 = vector.broadcast %cst_300 : f32 to vector<7x8xf32>
    %1867 = arith.mulf %1866, %1865 : vector<7x8xf32>
    %1868 = vector.broadcast %70 : vector<7x1xf32> to vector<7x8xf32>
    %1869 = arith.mulf %1868, %1867 : vector<7x8xf32>
    %1870 = vector.broadcast %71 : vector<7x1xf32> to vector<7x8xf32>
    %1871 = arith.mulf %1869, %1870 : vector<7x8xf32>
    %1872 = arith.addf %1853, %1871 : vector<7x8xf32>
    %1873 = arith.addf %1854, %1869 : vector<7x8xf32>
    %1874 = vector.extract_strided_slice %1816 {offsets = [3, 0], sizes = [1, 8], strides = [1, 1]} : vector<7x8xf32> to vector<1x8xf32>
    %1875 = vector.broadcast %1874 : vector<1x8xf32> to vector<7x8xf32>
    %1876 = vector.broadcast %76 : vector<7x1xf32> to vector<7x8xf32>
    %1877 = arith.subf %1875, %1876 : vector<7x8xf32>
    %1878 = vector.broadcast %77 : vector<7x1xf32> to vector<7x8xf32>
    %1879 = arith.mulf %1878, %1877 : vector<7x8xf32>
    %cst_301 = arith.constant 5.000000e-01 : f32
    %1880 = vector.broadcast %cst_301 : f32 to vector<7x8xf32>
    %1881 = arith.mulf %1880, %1879 : vector<7x8xf32>
    %1882 = math.tanh %1881 : vector<7x8xf32>
    %cst_302 = arith.constant 1.000000e+00 : f32
    %1883 = vector.broadcast %cst_302 : f32 to vector<7x8xf32>
    %1884 = arith.addf %1882, %1883 : vector<7x8xf32>
    %cst_303 = arith.constant 5.000000e-01 : f32
    %1885 = vector.broadcast %cst_303 : f32 to vector<7x8xf32>
    %1886 = arith.mulf %1885, %1884 : vector<7x8xf32>
    %1887 = vector.broadcast %74 : vector<7x1xf32> to vector<7x8xf32>
    %1888 = arith.mulf %1887, %1886 : vector<7x8xf32>
    %1889 = vector.broadcast %75 : vector<7x1xf32> to vector<7x8xf32>
    %1890 = arith.mulf %1888, %1889 : vector<7x8xf32>
    %1891 = arith.addf %1872, %1890 : vector<7x8xf32>
    %1892 = arith.addf %1873, %1888 : vector<7x8xf32>
    %1893 = vector.extract_strided_slice %1816 {offsets = [4, 0], sizes = [1, 8], strides = [1, 1]} : vector<7x8xf32> to vector<1x8xf32>
    %1894 = vector.broadcast %1893 : vector<1x8xf32> to vector<7x8xf32>
    %1895 = vector.broadcast %80 : vector<7x1xf32> to vector<7x8xf32>
    %1896 = arith.subf %1894, %1895 : vector<7x8xf32>
    %1897 = vector.broadcast %81 : vector<7x1xf32> to vector<7x8xf32>
    %1898 = arith.mulf %1897, %1896 : vector<7x8xf32>
    %cst_304 = arith.constant 5.000000e-01 : f32
    %1899 = vector.broadcast %cst_304 : f32 to vector<7x8xf32>
    %1900 = arith.mulf %1899, %1898 : vector<7x8xf32>
    %1901 = math.tanh %1900 : vector<7x8xf32>
    %cst_305 = arith.constant 1.000000e+00 : f32
    %1902 = vector.broadcast %cst_305 : f32 to vector<7x8xf32>
    %1903 = arith.addf %1901, %1902 : vector<7x8xf32>
    %cst_306 = arith.constant 5.000000e-01 : f32
    %1904 = vector.broadcast %cst_306 : f32 to vector<7x8xf32>
    %1905 = arith.mulf %1904, %1903 : vector<7x8xf32>
    %1906 = vector.broadcast %78 : vector<7x1xf32> to vector<7x8xf32>
    %1907 = arith.mulf %1906, %1905 : vector<7x8xf32>
    %1908 = vector.broadcast %79 : vector<7x1xf32> to vector<7x8xf32>
    %1909 = arith.mulf %1907, %1908 : vector<7x8xf32>
    %1910 = arith.addf %1891, %1909 : vector<7x8xf32>
    %1911 = arith.addf %1892, %1907 : vector<7x8xf32>
    %1912 = vector.extract_strided_slice %1816 {offsets = [5, 0], sizes = [1, 8], strides = [1, 1]} : vector<7x8xf32> to vector<1x8xf32>
    %1913 = vector.broadcast %1912 : vector<1x8xf32> to vector<7x8xf32>
    %1914 = vector.broadcast %84 : vector<7x1xf32> to vector<7x8xf32>
    %1915 = arith.subf %1913, %1914 : vector<7x8xf32>
    %1916 = vector.broadcast %85 : vector<7x1xf32> to vector<7x8xf32>
    %1917 = arith.mulf %1916, %1915 : vector<7x8xf32>
    %cst_307 = arith.constant 5.000000e-01 : f32
    %1918 = vector.broadcast %cst_307 : f32 to vector<7x8xf32>
    %1919 = arith.mulf %1918, %1917 : vector<7x8xf32>
    %1920 = math.tanh %1919 : vector<7x8xf32>
    %cst_308 = arith.constant 1.000000e+00 : f32
    %1921 = vector.broadcast %cst_308 : f32 to vector<7x8xf32>
    %1922 = arith.addf %1920, %1921 : vector<7x8xf32>
    %cst_309 = arith.constant 5.000000e-01 : f32
    %1923 = vector.broadcast %cst_309 : f32 to vector<7x8xf32>
    %1924 = arith.mulf %1923, %1922 : vector<7x8xf32>
    %1925 = vector.broadcast %82 : vector<7x1xf32> to vector<7x8xf32>
    %1926 = arith.mulf %1925, %1924 : vector<7x8xf32>
    %1927 = vector.broadcast %83 : vector<7x1xf32> to vector<7x8xf32>
    %1928 = arith.mulf %1926, %1927 : vector<7x8xf32>
    %1929 = arith.addf %1910, %1928 : vector<7x8xf32>
    %1930 = arith.addf %1911, %1926 : vector<7x8xf32>
    %1931 = vector.extract_strided_slice %1816 {offsets = [6, 0], sizes = [1, 8], strides = [1, 1]} : vector<7x8xf32> to vector<1x8xf32>
    %1932 = vector.broadcast %1931 : vector<1x8xf32> to vector<7x8xf32>
    %1933 = vector.broadcast %88 : vector<7x1xf32> to vector<7x8xf32>
    %1934 = arith.subf %1932, %1933 : vector<7x8xf32>
    %1935 = vector.broadcast %89 : vector<7x1xf32> to vector<7x8xf32>
    %1936 = arith.mulf %1935, %1934 : vector<7x8xf32>
    %cst_310 = arith.constant 5.000000e-01 : f32
    %1937 = vector.broadcast %cst_310 : f32 to vector<7x8xf32>
    %1938 = arith.mulf %1937, %1936 : vector<7x8xf32>
    %1939 = math.tanh %1938 : vector<7x8xf32>
    %cst_311 = arith.constant 1.000000e+00 : f32
    %1940 = vector.broadcast %cst_311 : f32 to vector<7x8xf32>
    %1941 = arith.addf %1939, %1940 : vector<7x8xf32>
    %cst_312 = arith.constant 5.000000e-01 : f32
    %1942 = vector.broadcast %cst_312 : f32 to vector<7x8xf32>
    %1943 = arith.mulf %1942, %1941 : vector<7x8xf32>
    %1944 = vector.broadcast %86 : vector<7x1xf32> to vector<7x8xf32>
    %1945 = arith.mulf %1944, %1943 : vector<7x8xf32>
    %1946 = vector.broadcast %87 : vector<7x1xf32> to vector<7x8xf32>
    %1947 = arith.mulf %1945, %1946 : vector<7x8xf32>
    %1948 = arith.addf %1929, %1947 : vector<7x8xf32>
    %1949 = arith.addf %1930, %1945 : vector<7x8xf32>
    %1950 = vector.broadcast %27 : vector<7x1xf32> to vector<7x8xf32>
    %1951 = arith.mulf %1950, %1816 : vector<7x8xf32>
    %1952 = vector.broadcast %32 : vector<7x1xf32> to vector<7x8xf32>
    %1953 = arith.addf %1951, %1952 : vector<7x8xf32>
    %1954 = arith.addf %1953, %1948 : vector<7x8xf32>
    %1955 = vector.broadcast %33 : vector<7x1xf32> to vector<7x8xf32>
    %1956 = arith.addf %1955, %1949 : vector<7x8xf32>
    %cst_313 = arith.constant 9.99999993E-9 : f32
    %1957 = vector.broadcast %cst_313 : f32 to vector<7x8xf32>
    %1958 = arith.addf %1956, %1957 : vector<7x8xf32>
    %1959 = arith.divf %1954, %1958 : vector<7x8xf32>
    %1960 = vector.extract_strided_slice %1959 {offsets = [0, 0], sizes = [1, 8], strides = [1, 1]} : vector<7x8xf32> to vector<1x8xf32>
    %1961 = vector.broadcast %1960 : vector<1x8xf32> to vector<7x8xf32>
    %1962 = vector.broadcast %64 : vector<7x1xf32> to vector<7x8xf32>
    %1963 = arith.subf %1961, %1962 : vector<7x8xf32>
    %1964 = vector.broadcast %65 : vector<7x1xf32> to vector<7x8xf32>
    %1965 = arith.mulf %1964, %1963 : vector<7x8xf32>
    %cst_314 = arith.constant 5.000000e-01 : f32
    %1966 = vector.broadcast %cst_314 : f32 to vector<7x8xf32>
    %1967 = arith.mulf %1966, %1965 : vector<7x8xf32>
    %1968 = math.tanh %1967 : vector<7x8xf32>
    %cst_315 = arith.constant 1.000000e+00 : f32
    %1969 = vector.broadcast %cst_315 : f32 to vector<7x8xf32>
    %1970 = arith.addf %1968, %1969 : vector<7x8xf32>
    %cst_316 = arith.constant 5.000000e-01 : f32
    %1971 = vector.broadcast %cst_316 : f32 to vector<7x8xf32>
    %1972 = arith.mulf %1971, %1970 : vector<7x8xf32>
    %1973 = vector.broadcast %62 : vector<7x1xf32> to vector<7x8xf32>
    %1974 = arith.mulf %1973, %1972 : vector<7x8xf32>
    %1975 = vector.broadcast %63 : vector<7x1xf32> to vector<7x8xf32>
    %1976 = arith.mulf %1974, %1975 : vector<7x8xf32>
    %1977 = arith.addf %1243, %1976 : vector<7x8xf32>
    %1978 = arith.addf %1244, %1974 : vector<7x8xf32>
    %1979 = vector.extract_strided_slice %1959 {offsets = [1, 0], sizes = [1, 8], strides = [1, 1]} : vector<7x8xf32> to vector<1x8xf32>
    %1980 = vector.broadcast %1979 : vector<1x8xf32> to vector<7x8xf32>
    %1981 = vector.broadcast %68 : vector<7x1xf32> to vector<7x8xf32>
    %1982 = arith.subf %1980, %1981 : vector<7x8xf32>
    %1983 = vector.broadcast %69 : vector<7x1xf32> to vector<7x8xf32>
    %1984 = arith.mulf %1983, %1982 : vector<7x8xf32>
    %cst_317 = arith.constant 5.000000e-01 : f32
    %1985 = vector.broadcast %cst_317 : f32 to vector<7x8xf32>
    %1986 = arith.mulf %1985, %1984 : vector<7x8xf32>
    %1987 = math.tanh %1986 : vector<7x8xf32>
    %cst_318 = arith.constant 1.000000e+00 : f32
    %1988 = vector.broadcast %cst_318 : f32 to vector<7x8xf32>
    %1989 = arith.addf %1987, %1988 : vector<7x8xf32>
    %cst_319 = arith.constant 5.000000e-01 : f32
    %1990 = vector.broadcast %cst_319 : f32 to vector<7x8xf32>
    %1991 = arith.mulf %1990, %1989 : vector<7x8xf32>
    %1992 = vector.broadcast %66 : vector<7x1xf32> to vector<7x8xf32>
    %1993 = arith.mulf %1992, %1991 : vector<7x8xf32>
    %1994 = vector.broadcast %67 : vector<7x1xf32> to vector<7x8xf32>
    %1995 = arith.mulf %1993, %1994 : vector<7x8xf32>
    %1996 = arith.addf %1977, %1995 : vector<7x8xf32>
    %1997 = arith.addf %1978, %1993 : vector<7x8xf32>
    %1998 = vector.extract_strided_slice %1959 {offsets = [2, 0], sizes = [1, 8], strides = [1, 1]} : vector<7x8xf32> to vector<1x8xf32>
    %1999 = vector.broadcast %1998 : vector<1x8xf32> to vector<7x8xf32>
    %2000 = vector.broadcast %72 : vector<7x1xf32> to vector<7x8xf32>
    %2001 = arith.subf %1999, %2000 : vector<7x8xf32>
    %2002 = vector.broadcast %73 : vector<7x1xf32> to vector<7x8xf32>
    %2003 = arith.mulf %2002, %2001 : vector<7x8xf32>
    %cst_320 = arith.constant 5.000000e-01 : f32
    %2004 = vector.broadcast %cst_320 : f32 to vector<7x8xf32>
    %2005 = arith.mulf %2004, %2003 : vector<7x8xf32>
    %2006 = math.tanh %2005 : vector<7x8xf32>
    %cst_321 = arith.constant 1.000000e+00 : f32
    %2007 = vector.broadcast %cst_321 : f32 to vector<7x8xf32>
    %2008 = arith.addf %2006, %2007 : vector<7x8xf32>
    %cst_322 = arith.constant 5.000000e-01 : f32
    %2009 = vector.broadcast %cst_322 : f32 to vector<7x8xf32>
    %2010 = arith.mulf %2009, %2008 : vector<7x8xf32>
    %2011 = vector.broadcast %70 : vector<7x1xf32> to vector<7x8xf32>
    %2012 = arith.mulf %2011, %2010 : vector<7x8xf32>
    %2013 = vector.broadcast %71 : vector<7x1xf32> to vector<7x8xf32>
    %2014 = arith.mulf %2012, %2013 : vector<7x8xf32>
    %2015 = arith.addf %1996, %2014 : vector<7x8xf32>
    %2016 = arith.addf %1997, %2012 : vector<7x8xf32>
    %2017 = vector.extract_strided_slice %1959 {offsets = [3, 0], sizes = [1, 8], strides = [1, 1]} : vector<7x8xf32> to vector<1x8xf32>
    %2018 = vector.broadcast %2017 : vector<1x8xf32> to vector<7x8xf32>
    %2019 = vector.broadcast %76 : vector<7x1xf32> to vector<7x8xf32>
    %2020 = arith.subf %2018, %2019 : vector<7x8xf32>
    %2021 = vector.broadcast %77 : vector<7x1xf32> to vector<7x8xf32>
    %2022 = arith.mulf %2021, %2020 : vector<7x8xf32>
    %cst_323 = arith.constant 5.000000e-01 : f32
    %2023 = vector.broadcast %cst_323 : f32 to vector<7x8xf32>
    %2024 = arith.mulf %2023, %2022 : vector<7x8xf32>
    %2025 = math.tanh %2024 : vector<7x8xf32>
    %cst_324 = arith.constant 1.000000e+00 : f32
    %2026 = vector.broadcast %cst_324 : f32 to vector<7x8xf32>
    %2027 = arith.addf %2025, %2026 : vector<7x8xf32>
    %cst_325 = arith.constant 5.000000e-01 : f32
    %2028 = vector.broadcast %cst_325 : f32 to vector<7x8xf32>
    %2029 = arith.mulf %2028, %2027 : vector<7x8xf32>
    %2030 = vector.broadcast %74 : vector<7x1xf32> to vector<7x8xf32>
    %2031 = arith.mulf %2030, %2029 : vector<7x8xf32>
    %2032 = vector.broadcast %75 : vector<7x1xf32> to vector<7x8xf32>
    %2033 = arith.mulf %2031, %2032 : vector<7x8xf32>
    %2034 = arith.addf %2015, %2033 : vector<7x8xf32>
    %2035 = arith.addf %2016, %2031 : vector<7x8xf32>
    %2036 = vector.extract_strided_slice %1959 {offsets = [4, 0], sizes = [1, 8], strides = [1, 1]} : vector<7x8xf32> to vector<1x8xf32>
    %2037 = vector.broadcast %2036 : vector<1x8xf32> to vector<7x8xf32>
    %2038 = vector.broadcast %80 : vector<7x1xf32> to vector<7x8xf32>
    %2039 = arith.subf %2037, %2038 : vector<7x8xf32>
    %2040 = vector.broadcast %81 : vector<7x1xf32> to vector<7x8xf32>
    %2041 = arith.mulf %2040, %2039 : vector<7x8xf32>
    %cst_326 = arith.constant 5.000000e-01 : f32
    %2042 = vector.broadcast %cst_326 : f32 to vector<7x8xf32>
    %2043 = arith.mulf %2042, %2041 : vector<7x8xf32>
    %2044 = math.tanh %2043 : vector<7x8xf32>
    %cst_327 = arith.constant 1.000000e+00 : f32
    %2045 = vector.broadcast %cst_327 : f32 to vector<7x8xf32>
    %2046 = arith.addf %2044, %2045 : vector<7x8xf32>
    %cst_328 = arith.constant 5.000000e-01 : f32
    %2047 = vector.broadcast %cst_328 : f32 to vector<7x8xf32>
    %2048 = arith.mulf %2047, %2046 : vector<7x8xf32>
    %2049 = vector.broadcast %78 : vector<7x1xf32> to vector<7x8xf32>
    %2050 = arith.mulf %2049, %2048 : vector<7x8xf32>
    %2051 = vector.broadcast %79 : vector<7x1xf32> to vector<7x8xf32>
    %2052 = arith.mulf %2050, %2051 : vector<7x8xf32>
    %2053 = arith.addf %2034, %2052 : vector<7x8xf32>
    %2054 = arith.addf %2035, %2050 : vector<7x8xf32>
    %2055 = vector.extract_strided_slice %1959 {offsets = [5, 0], sizes = [1, 8], strides = [1, 1]} : vector<7x8xf32> to vector<1x8xf32>
    %2056 = vector.broadcast %2055 : vector<1x8xf32> to vector<7x8xf32>
    %2057 = vector.broadcast %84 : vector<7x1xf32> to vector<7x8xf32>
    %2058 = arith.subf %2056, %2057 : vector<7x8xf32>
    %2059 = vector.broadcast %85 : vector<7x1xf32> to vector<7x8xf32>
    %2060 = arith.mulf %2059, %2058 : vector<7x8xf32>
    %cst_329 = arith.constant 5.000000e-01 : f32
    %2061 = vector.broadcast %cst_329 : f32 to vector<7x8xf32>
    %2062 = arith.mulf %2061, %2060 : vector<7x8xf32>
    %2063 = math.tanh %2062 : vector<7x8xf32>
    %cst_330 = arith.constant 1.000000e+00 : f32
    %2064 = vector.broadcast %cst_330 : f32 to vector<7x8xf32>
    %2065 = arith.addf %2063, %2064 : vector<7x8xf32>
    %cst_331 = arith.constant 5.000000e-01 : f32
    %2066 = vector.broadcast %cst_331 : f32 to vector<7x8xf32>
    %2067 = arith.mulf %2066, %2065 : vector<7x8xf32>
    %2068 = vector.broadcast %82 : vector<7x1xf32> to vector<7x8xf32>
    %2069 = arith.mulf %2068, %2067 : vector<7x8xf32>
    %2070 = vector.broadcast %83 : vector<7x1xf32> to vector<7x8xf32>
    %2071 = arith.mulf %2069, %2070 : vector<7x8xf32>
    %2072 = arith.addf %2053, %2071 : vector<7x8xf32>
    %2073 = arith.addf %2054, %2069 : vector<7x8xf32>
    %2074 = vector.extract_strided_slice %1959 {offsets = [6, 0], sizes = [1, 8], strides = [1, 1]} : vector<7x8xf32> to vector<1x8xf32>
    %2075 = vector.broadcast %2074 : vector<1x8xf32> to vector<7x8xf32>
    %2076 = vector.broadcast %88 : vector<7x1xf32> to vector<7x8xf32>
    %2077 = arith.subf %2075, %2076 : vector<7x8xf32>
    %2078 = vector.broadcast %89 : vector<7x1xf32> to vector<7x8xf32>
    %2079 = arith.mulf %2078, %2077 : vector<7x8xf32>
    %cst_332 = arith.constant 5.000000e-01 : f32
    %2080 = vector.broadcast %cst_332 : f32 to vector<7x8xf32>
    %2081 = arith.mulf %2080, %2079 : vector<7x8xf32>
    %2082 = math.tanh %2081 : vector<7x8xf32>
    %cst_333 = arith.constant 1.000000e+00 : f32
    %2083 = vector.broadcast %cst_333 : f32 to vector<7x8xf32>
    %2084 = arith.addf %2082, %2083 : vector<7x8xf32>
    %cst_334 = arith.constant 5.000000e-01 : f32
    %2085 = vector.broadcast %cst_334 : f32 to vector<7x8xf32>
    %2086 = arith.mulf %2085, %2084 : vector<7x8xf32>
    %2087 = vector.broadcast %86 : vector<7x1xf32> to vector<7x8xf32>
    %2088 = arith.mulf %2087, %2086 : vector<7x8xf32>
    %2089 = vector.broadcast %87 : vector<7x1xf32> to vector<7x8xf32>
    %2090 = arith.mulf %2088, %2089 : vector<7x8xf32>
    %2091 = arith.addf %2072, %2090 : vector<7x8xf32>
    %2092 = arith.addf %2073, %2088 : vector<7x8xf32>
    %2093 = vector.broadcast %27 : vector<7x1xf32> to vector<7x8xf32>
    %2094 = arith.mulf %2093, %1959 : vector<7x8xf32>
    %2095 = vector.broadcast %32 : vector<7x1xf32> to vector<7x8xf32>
    %2096 = arith.addf %2094, %2095 : vector<7x8xf32>
    %2097 = arith.addf %2096, %2091 : vector<7x8xf32>
    %2098 = vector.broadcast %33 : vector<7x1xf32> to vector<7x8xf32>
    %2099 = arith.addf %2098, %2092 : vector<7x8xf32>
    %cst_335 = arith.constant 9.99999993E-9 : f32
    %2100 = vector.broadcast %cst_335 : f32 to vector<7x8xf32>
    %2101 = arith.addf %2099, %2100 : vector<7x8xf32>
    %2102 = arith.divf %2097, %2101 : vector<7x8xf32>
    %2103 = tpu.transpose %2102, [1, 0] : vector<7x8xf32> -> vector<8x7xf32>
    %c0_336 = arith.constant 0 : index
    %c0_337 = arith.constant 0 : index
    %2104 = vector.load %arg6[%c0_336, %c0_337] : memref<7x32xf32, #tpu.memory_space<vmem>>, vector<7x32xf32>
    %cst_338 = arith.constant dense<0.000000e+00> : vector<8x32xf32>
    %2105 = tpu.matmul %2103, %2104, %cst_338 {dimension_numbers = #tpu.dot_dimension_numbers<[1], [0], [0], [1], [0, 0, 1, 1], [], []>} : vector<8x7xf32>, vector<7x32xf32>, vector<8x32xf32> -> vector<8x32xf32>
    %c0_339 = arith.constant 0 : index
    %c0_340 = arith.constant 0 : index
    %2106 = vector.load %arg7[%c0_339, %c0_340] : memref<1x32xf32, #tpu.memory_space<vmem>>, vector<1x32xf32>
    %2107 = vector.shape_cast %2106 : vector<1x32xf32> to vector<32xf32>
    %2108 = vector.shape_cast %2107 : vector<32xf32> to vector<1x32xf32>
    %2109 = vector.broadcast %2108 : vector<1x32xf32> to vector<8x32xf32>
    %2110 = arith.addf %2105, %2109 : vector<8x32xf32>
    %c1_341 = arith.constant 1 : index
    %c0_342 = arith.constant 0 : index
    %c0_343 = arith.constant 0 : index
    %2111 = vector.load %arg1[%c1_341, %c0_342, %c0_343] : memref<2x8x32xf32, #tpu.memory_space<vmem>>, vector<1x8x32xf32>
    %2112 = vector.shape_cast %2111 : vector<1x8x32xf32> to vector<8x32xf32>
    %2113 = arith.addf %2112, %2110 : vector<8x32xf32>
    %c1_344 = arith.constant 1 : index
    %c0_345 = arith.constant 0 : index
    %c0_346 = arith.constant 0 : index
    %2114 = vector.load %arg8[%c1_344, %c0_345, %c0_346] : memref<2x8x32xf32, #tpu.memory_space<vmem>>, vector<1x8x32xf32>
    %2115 = vector.shape_cast %2114 : vector<1x8x32xf32> to vector<8x32xf32>
    %2116 = vector.shape_cast %2113 : vector<8x32xf32> to vector<1x8x32xf32>
    tpu.vector_store %arg8[%c1_344, %c0_345, %c0_346], %2116 {strides = array<i32>} : memref<2x8x32xf32, #tpu.memory_space<vmem>>, vector<1x8x32xf32>,
    %c0_347 = arith.constant 0 : index
    %c0_348 = arith.constant 0 : index
    %2117 = vector.load %arg9[%c0_347, %c0_348] : memref<7x8xf32, #tpu.memory_space<vmem>>, vector<7x8xf32>
    tpu.vector_store %arg9[%c0_347, %c0_348], %2102 {strides = array<i32>} : memref<7x8xf32, #tpu.memory_space<vmem>>, vector<7x8xf32>,
    return
  }
  func.func @transform_0(%arg0: i32) -> (i32, i32, i32) {
    %c0_i32 = arith.constant 0 : i32
    %c0_i32_0 = arith.constant 0 : i32
    %c0_i32_1 = arith.constant 0 : i32
    return %arg0, %c0_i32, %c0_i32_0 : i32, i32, i32
  }
  func.func @transform_1(%arg0: i32) -> (i32, i32, i32) {
    %c0_i32 = arith.constant 0 : i32
    %c0_i32_0 = arith.constant 0 : i32
    %c0_i32_1 = arith.constant 0 : i32
    return %arg0, %c0_i32, %c0_i32_0 : i32, i32, i32
  }
  func.func @transform_2(%arg0: i32) -> (i32, i32, i32) {
    %c0_i32 = arith.constant 0 : i32
    %c0_i32_0 = arith.constant 0 : i32
    %c0_i32_1 = arith.constant 0 : i32
    %c0_i32_2 = arith.constant 0 : i32
    return %c0_i32, %c0_i32_0, %c0_i32_1 : i32, i32, i32
  }
  func.func @transform_3(%arg0: i32) -> (i32, i32, i32) {
    %c0_i32 = arith.constant 0 : i32
    %c0_i32_0 = arith.constant 0 : i32
    %c0_i32_1 = arith.constant 0 : i32
    %c0_i32_2 = arith.constant 0 : i32
    return %c0_i32, %c0_i32_0, %c0_i32_1 : i32, i32, i32
  }
  func.func @transform_4(%arg0: i32) -> (i32, i32, i32) {
    %c0_i32 = arith.constant 0 : i32
    %c0_i32_0 = arith.constant 0 : i32
    %c0_i32_1 = arith.constant 0 : i32
    %c0_i32_2 = arith.constant 0 : i32
    return %c0_i32, %c0_i32_0, %c0_i32_1 : i32, i32, i32
  }
  func.func @transform_5(%arg0: i32) -> (i32, i32) {
    %c0_i32 = arith.constant 0 : i32
    %c0_i32_0 = arith.constant 0 : i32
    %c0_i32_1 = arith.constant 0 : i32
    return %c0_i32, %c0_i32_0 : i32, i32
  }
  func.func @transform_6(%arg0: i32) -> (i32, i32) {
    %c0_i32 = arith.constant 0 : i32
    %c0_i32_0 = arith.constant 0 : i32
    %c0_i32_1 = arith.constant 0 : i32
    return %c0_i32, %c0_i32_0 : i32, i32
  }
  func.func @transform_7(%arg0: i32) -> (i32, i32, i32) {
    %c0_i32 = arith.constant 0 : i32
    %c0_i32_0 = arith.constant 0 : i32
    %c0_i32_1 = arith.constant 0 : i32
    return %arg0, %c0_i32, %c0_i32_0 : i32, i32, i32
  }
}

</mosaic_0001>

<llo_original>
// kernel: gpt2_encoder_layer_with_ltc.2
$region0: #{gpt2_encoder_layer_with_ltc.2}
  #allocation0 [shape = 'u32[]', space=smem, size = 0x4, offset = 0x4, fixed_abs, tag = 'smem constant byte address 0x4 - core index']
  #allocation1 [shape = 'u32[144,128]{1,0:T(1,128)}', space=vmem, size = 0x12000, scoped, tag = 'internal scratch']
  #allocation2 [shape = 'f32[8,32]{1,0:T(8,128)}', space=vmem, size = 0x1000, scoped, tag = 'scratch operand']
  %s0 = inlined_call_operand.vmem [shape: f32[2,8,32], index: 0, kind: input, shape index: {}]
  %s1 = inlined_call_operand.vmem [shape: bf16[32,96], index: 1, kind: input, shape index: {}]
  %s2 = inlined_call_operand.vmem [shape: f32[1,96], index: 2, kind: input, shape index: {}]
  %s3 = inlined_call_operand.vmem [shape: bf16[32,32], index: 3, kind: input, shape index: {}]
  %s4 = inlined_call_operand.vmem [shape: f32[1,32], index: 4, kind: input, shape index: {}]
  %s5 = inlined_call_operand.vmem [shape: f32[1,32], index: 5, kind: input, shape index: {}]
  %s6 = inlined_call_operand.vmem [shape: f32[1,32], index: 6, kind: input, shape index: {}]
  %s7 = inlined_call_operand.vmem [shape: f32[1,32], index: 7, kind: input, shape index: {}]
  %s8 = inlined_call_operand.vmem [shape: f32[1,32], index: 8, kind: input, shape index: {}]
  %s9 = inlined_call_operand.vmem [shape: bf16[7,32], index: 9, kind: input, shape index: {}]
  %s10 = inlined_call_operand.vmem [shape: f32[7,1], index: 10, kind: input, shape index: {}]
  %s11 = inlined_call_operand.vmem [shape: f32[2,8,32], index: 11, kind: output, shape index: {0}]
  %s12 = inlined_call_operand.vmem [shape: f32[2,7,8], index: 12, kind: output, shape index: {1}]
  %13 = xla_tuple %s11, %s12
  %s14 = sld [smem:[#allocation0]]
  $region85: #{gpt2_encoder_layer_with_ltc.2} parent=0
    _
  %s16 = ssub.s32 1, %s14
  %s17 = scalar_select 0, %s16, %s14
  loop: start=0, step=1, limit=4
  $region2: #{gpt2_encoder_layer_with_ltc.2} parent=0 // loop_pre_header
    _
  $region3: #{gpt2_encoder_layer_with_ltc.2} parent=0 // loop_header
    %s19 = sphi 0, %s23
    %p20 = scmp.ge.s32.totalorder %s19, 4
    %s29 = sphi 0, %s31
    %s32 = sphi 0, %s29
    %s33 = sphi 0, %s32
    %s49 = sphi 0, %s33
    %s53 = sphi 0, %s53
    %s55 = sphi 0, %s53
    %s56 = sphi 0, %s55
    %s70 = sphi 0, %s56
    %s74 = sphi 0, %s74
    %s76 = sphi 0, %s74
    %s77 = sphi 0, %s76
    %s91 = sphi 0, %s77
    %s95 = sphi 0, %s95
    %s97 = sphi 0, %s95
    %s98 = sphi 0, %s97
    %s112 = sphi 0, %s98
    %s116 = sphi 0, %s116
    %s118 = sphi 0, %s116
    %s119 = sphi 0, %s118
    %s133 = sphi 0, %s119
    %s137 = sphi 0, %s137
    %s139 = sphi 0, %s137
    %s140 = sphi 0, %s139
    %s154 = sphi 0, %s140
    %s158 = sphi 0, %s158
    %s160 = sphi 0, %s158
    %s161 = sphi 0, %s160
    %s175 = sphi 0, %s161
    %s179 = sphi 0, %s179
    %s181 = sphi 0, %s179
    %s182 = sphi 0, %s181
    %s196 = sphi 0, %s182
    %s200 = sphi 0, %s200
    %s202 = sphi 0, %s200
    %s203 = sphi 0, %s202
    %s217 = sphi 0, %s203
    %s221 = sphi 0, %s221
    %s223 = sphi 0, %s221
    %s224 = sphi 0, %s223
    %s238 = sphi 0, %s224
    %s242 = sphi 0, %s242
    %s244 = sphi 0, %s242
    %s245 = sphi 0, %s244
    %s259 = sphi 0, %s245
    %s265 = sphi 0, %s267
    %s268 = sphi 0, %s265
    %s269 = sphi 0, %s268
    %s285 = sphi 0, %s269
    %s291 = sphi 0, %s293
    %s294 = sphi 0, %s291
    %s295 = sphi 0, %s294
    %s311 = sphi 0, %s295
  $region4: #{gpt2_encoder_layer_with_ltc.2} parent=0 // loop_header_branch
    %22 = sbr.rel (%p20) target = $region8
  $region5: #{gpt2_encoder_layer_with_ltc.2} parent=0 // loop_body
    %s24 = ssub.s32 %s19, 1
    %s25 = ssub.s32 %s19, 2
    %s26 = sadd.s32 %s19, 1
    %s27 = ssub.s32 %s19, %s26
    %p28 = scmp.eq.s32.totalorder %s27, 0
    %s30 = sadd.s32 %s29, 1
    %s31 = scalar_select %p28, %s29, %s30
    %p34 = pneg %p28
    %p35 = scmp.eq.s32.totalorder %s19, 1
    %p36 = por %p34, %p35
    %p37 = scmp.ne.s32.totalorder %s29, %s32
    %p38 = scmp.eq.s32.totalorder %s19, 0
    %p39 = por %p37, %p38
    %p40 = scmp.ne.s32.totalorder %s29, %s32
    %p41 = scmp.eq.s32.totalorder %s24, 1
    %p42 = por %p40, %p41
    %p43 = scmp.ne.s32.totalorder %s32, %s33
    %p44 = scmp.eq.s32.totalorder %s24, 0
    %p45 = por %p43, %p44
    %p46 = scmp.ne.s32.totalorder %s32, %s33
    %p47 = scmp.eq.s32.totalorder %s25, 1
    %p48 = por %p46, %p47
    %p50 = scmp.ne.s32.totalorder %s33, %s49
    %p51 = scmp.eq.s32.totalorder %s25, 0
    %p52 = por %p50, %p51
    %s54 = sadd.s32 %s53, 1
    %p57 = scmp.eq.s32.totalorder %s19, 1
    %p58 = scmp.ne.s32.totalorder %s53, %s55
    %p59 = scmp.eq.s32.totalorder %s19, 0
    %p60 = por %p58, %p59
    %p61 = scmp.ne.s32.totalorder %s53, %s55
    %p62 = scmp.eq.s32.totalorder %s24, 1
    %p63 = por %p61, %p62
    %p64 = scmp.ne.s32.totalorder %s55, %s56
    %p65 = scmp.eq.s32.totalorder %s24, 0
    %p66 = por %p64, %p65
    %p67 = scmp.ne.s32.totalorder %s55, %s56
    %p68 = scmp.eq.s32.totalorder %s25, 1
    %p69 = por %p67, %p68
    %p71 = scmp.ne.s32.totalorder %s56, %s70
    %p72 = scmp.eq.s32.totalorder %s25, 0
    %p73 = por %p71, %p72
    %s75 = sadd.s32 %s74, 1
    %p78 = scmp.eq.s32.totalorder %s19, 1
    %p79 = scmp.ne.s32.totalorder %s74, %s76
    %p80 = scmp.eq.s32.totalorder %s19, 0
    %p81 = por %p79, %p80
    %p82 = scmp.ne.s32.totalorder %s74, %s76
    %p83 = scmp.eq.s32.totalorder %s24, 1
    %p84 = por %p82, %p83
    %p85 = scmp.ne.s32.totalorder %s76, %s77
    %p86 = scmp.eq.s32.totalorder %s24, 0
    %p87 = por %p85, %p86
    %p88 = scmp.ne.s32.totalorder %s76, %s77
    %p89 = scmp.eq.s32.totalorder %s25, 1
    %p90 = por %p88, %p89
    %p92 = scmp.ne.s32.totalorder %s77, %s91
    %p93 = scmp.eq.s32.totalorder %s25, 0
    %p94 = por %p92, %p93
    %s96 = sadd.s32 %s95, 1
    %p99 = scmp.eq.s32.totalorder %s19, 1
    %p100 = scmp.ne.s32.totalorder %s95, %s97
    %p101 = scmp.eq.s32.totalorder %s19, 0
    %p102 = por %p100, %p101
    %p103 = scmp.ne.s32.totalorder %s95, %s97
    %p104 = scmp.eq.s32.totalorder %s24, 1
    %p105 = por %p103, %p104
    %p106 = scmp.ne.s32.totalorder %s97, %s98
    %p107 = scmp.eq.s32.totalorder %s24, 0
    %p108 = por %p106, %p107
    %p109 = scmp.ne.s32.totalorder %s97, %s98
    %p110 = scmp.eq.s32.totalorder %s25, 1
    %p111 = por %p109, %p110
    %p113 = scmp.ne.s32.totalorder %s98, %s112
    %p114 = scmp.eq.s32.totalorder %s25, 0
    %p115 = por %p113, %p114
    %s117 = sadd.s32 %s116, 1
    %p120 = scmp.eq.s32.totalorder %s19, 1
    %p121 = scmp.ne.s32.totalorder %s116, %s118
    %p122 = scmp.eq.s32.totalorder %s19, 0
    %p123 = por %p121, %p122
    %p124 = scmp.ne.s32.totalorder %s116, %s118
    %p125 = scmp.eq.s32.totalorder %s24, 1
    %p126 = por %p124, %p125
    %p127 = scmp.ne.s32.totalorder %s118, %s119
    %p128 = scmp.eq.s32.totalorder %s24, 0
    %p129 = por %p127, %p128
    %p130 = scmp.ne.s32.totalorder %s118, %s119
    %p131 = scmp.eq.s32.totalorder %s25, 1
    %p132 = por %p130, %p131
    %p134 = scmp.ne.s32.totalorder %s119, %s133
    %p135 = scmp.eq.s32.totalorder %s25, 0
    %p136 = por %p134, %p135
    %s138 = sadd.s32 %s137, 1
    %p141 = scmp.eq.s32.totalorder %s19, 1
    %p142 = scmp.ne.s32.totalorder %s137, %s139
    %p143 = scmp.eq.s32.totalorder %s19, 0
    %p144 = por %p142, %p143
    %p145 = scmp.ne.s32.totalorder %s137, %s139
    %p146 = scmp.eq.s32.totalorder %s24, 1
    %p147 = por %p145, %p146
    %p148 = scmp.ne.s32.totalorder %s139, %s140
    %p149 = scmp.eq.s32.totalorder %s24, 0
    %p150 = por %p148, %p149
    %p151 = scmp.ne.s32.totalorder %s139, %s140
    %p152 = scmp.eq.s32.totalorder %s25, 1
    %p153 = por %p151, %p152
    %p155 = scmp.ne.s32.totalorder %s140, %s154
    %p156 = scmp.eq.s32.totalorder %s25, 0
    %p157 = por %p155, %p156
    %s159 = sadd.s32 %s158, 1
    %p162 = scmp.eq.s32.totalorder %s19, 1
    %p163 = scmp.ne.s32.totalorder %s158, %s160
    %p164 = scmp.eq.s32.totalorder %s19, 0
    %p165 = por %p163, %p164
    %p166 = scmp.ne.s32.totalorder %s158, %s160
    %p167 = scmp.eq.s32.totalorder %s24, 1
    %p168 = por %p166, %p167
    %p169 = scmp.ne.s32.totalorder %s160, %s161
    %p170 = scmp.eq.s32.totalorder %s24, 0
    %p171 = por %p169, %p170
    %p172 = scmp.ne.s32.totalorder %s160, %s161
    %p173 = scmp.eq.s32.totalorder %s25, 1
    %p174 = por %p172, %p173
    %p176 = scmp.ne.s32.totalorder %s161, %s175
    %p177 = scmp.eq.s32.totalorder %s25, 0
    %p178 = por %p176, %p177
    %s180 = sadd.s32 %s179, 1
    %p183 = scmp.eq.s32.totalorder %s19, 1
    %p184 = scmp.ne.s32.totalorder %s179, %s181
    %p185 = scmp.eq.s32.totalorder %s19, 0
    %p186 = por %p184, %p185
    %p187 = scmp.ne.s32.totalorder %s179, %s181
    %p188 = scmp.eq.s32.totalorder %s24, 1
    %p189 = por %p187, %p188
    %p190 = scmp.ne.s32.totalorder %s181, %s182
    %p191 = scmp.eq.s32.totalorder %s24, 0
    %p192 = por %p190, %p191
    %p193 = scmp.ne.s32.totalorder %s181, %s182
    %p194 = scmp.eq.s32.totalorder %s25, 1
    %p195 = por %p193, %p194
    %p197 = scmp.ne.s32.totalorder %s182, %s196
    %p198 = scmp.eq.s32.totalorder %s25, 0
    %p199 = por %p197, %p198
    %s201 = sadd.s32 %s200, 1
    %p204 = scmp.eq.s32.totalorder %s19, 1
    %p205 = scmp.ne.s32.totalorder %s200, %s202
    %p206 = scmp.eq.s32.totalorder %s19, 0
    %p207 = por %p205, %p206
    %p208 = scmp.ne.s32.totalorder %s200, %s202
    %p209 = scmp.eq.s32.totalorder %s24, 1
    %p210 = por %p208, %p209
    %p211 = scmp.ne.s32.totalorder %s202, %s203
    %p212 = scmp.eq.s32.totalorder %s24, 0
    %p213 = por %p211, %p212
    %p214 = scmp.ne.s32.totalorder %s202, %s203
    %p215 = scmp.eq.s32.totalorder %s25, 1
    %p216 = por %p214, %p215
    %p218 = scmp.ne.s32.totalorder %s203, %s217
    %p219 = scmp.eq.s32.totalorder %s25, 0
    %p220 = por %p218, %p219
    %s222 = sadd.s32 %s221, 1
    %p225 = scmp.eq.s32.totalorder %s19, 1
    %p226 = scmp.ne.s32.totalorder %s221, %s223
    %p227 = scmp.eq.s32.totalorder %s19, 0
    %p228 = por %p226, %p227
    %p229 = scmp.ne.s32.totalorder %s221, %s223
    %p230 = scmp.eq.s32.totalorder %s24, 1
    %p231 = por %p229, %p230
    %p232 = scmp.ne.s32.totalorder %s223, %s224
    %p233 = scmp.eq.s32.totalorder %s24, 0
    %p234 = por %p232, %p233
    %p235 = scmp.ne.s32.totalorder %s223, %s224
    %p236 = scmp.eq.s32.totalorder %s25, 1
    %p237 = por %p235, %p236
    %p239 = scmp.ne.s32.totalorder %s224, %s238
    %p240 = scmp.eq.s32.totalorder %s25, 0
    %p241 = por %p239, %p240
    %s243 = sadd.s32 %s242, 1
    %p246 = scmp.eq.s32.totalorder %s19, 1
    %p247 = scmp.ne.s32.totalorder %s242, %s244
    %p248 = scmp.eq.s32.totalorder %s19, 0
    %p249 = por %p247, %p248
    %p250 = scmp.ne.s32.totalorder %s242, %s244
    %p251 = scmp.eq.s32.totalorder %s24, 1
    %p252 = por %p250, %p251
    %p253 = scmp.ne.s32.totalorder %s244, %s245
    %p254 = scmp.eq.s32.totalorder %s24, 0
    %p255 = por %p253, %p254
    %p256 = scmp.ne.s32.totalorder %s244, %s245
    %p257 = scmp.eq.s32.totalorder %s25, 1
    %p258 = por %p256, %p257
    %p260 = scmp.ne.s32.totalorder %s245, %s259
    %p261 = scmp.eq.s32.totalorder %s25, 0
    %p262 = por %p260, %p261
    %s263 = ssub.s32 %s19, %s26
    %p264 = scmp.eq.s32.totalorder %s263, 0
    %s266 = sadd.s32 %s265, 1
    %s267 = scalar_select %p264, %s265, %s266
    %p270 = pneg %p264
    %p271 = scmp.eq.s32.totalorder %s19, 1
    %p272 = por %p270, %p271
    %p273 = scmp.ne.s32.totalorder %s265, %s268
    %p274 = scmp.eq.s32.totalorder %s19, 0
    %p275 = por %p273, %p274
    %p276 = scmp.ne.s32.totalorder %s265, %s268
    %p277 = scmp.eq.s32.totalorder %s24, 1
    %p278 = por %p276, %p277
    %p279 = scmp.ne.s32.totalorder %s268, %s269
    %p280 = scmp.eq.s32.totalorder %s24, 0
    %p281 = por %p279, %p280
    %p282 = scmp.ne.s32.totalorder %s268, %s269
    %p283 = scmp.eq.s32.totalorder %s25, 1
    %p284 = por %p282, %p283
    %p286 = scmp.ne.s32.totalorder %s269, %s285
    %p287 = scmp.eq.s32.totalorder %s25, 0
    %p288 = por %p286, %p287
    %s289 = ssub.s32 %s19, %s26
    %p290 = scmp.eq.s32.totalorder %s289, 0
    %s292 = sadd.s32 %s291, 1
    %s293 = scalar_select %p290, %s291, %s292
    %p296 = pneg %p290
    %p297 = scmp.eq.s32.totalorder %s19, 1
    %p298 = por %p296, %p297
    %p299 = scmp.ne.s32.totalorder %s291, %s294
    %p300 = scmp.eq.s32.totalorder %s19, 0
    %p301 = por %p299, %p300
    %p302 = scmp.ne.s32.totalorder %s291, %s294
    %p303 = scmp.eq.s32.totalorder %s24, 1
    %p304 = por %p302, %p303
    %p305 = scmp.ne.s32.totalorder %s294, %s295
    %p306 = scmp.eq.s32.totalorder %s24, 0
    %p307 = por %p305, %p306
    %p308 = scmp.ne.s32.totalorder %s294, %s295
    %p309 = scmp.eq.s32.totalorder %s25, 1
    %p310 = por %p308, %p309
    %p312 = scmp.ne.s32.totalorder %s295, %s311
    %p313 = scmp.eq.s32.totalorder %s25, 0
    %p314 = por %p312, %p313
    %p315 = scmp.le.s32.totalorder 1, %s19
    %p316 = scmp.lt.s32.totalorder %s19, 3
    %p317 = pnand %p315, %p316
    %p318 = pneg %p317
    // Predicated region
    $region9: #{gpt2_encoder_layer_with_ltc.2} parent=5 // pred_check
      _
    $region10: #{gpt2_encoder_layer_with_ltc.2} parent=5 // pred_check_branch
      %320 = sbr.rel (%p317) target = $region12
    $region11: #{gpt2_encoder_layer_with_ltc.2} parent=5 // pred_region
      %s321 = ssub.s32 %s19, 1
      // Predicated region
      $region13: #{gpt2_encoder_layer_with_ltc.2} parent=11 // pred_check
        %p322 = pneg %p66
      $region14: #{gpt2_encoder_layer_with_ltc.2} parent=11 // pred_check_branch
        %324 = sbr.rel (%p322) target = $region16
      $region15: #{gpt2_encoder_layer_with_ltc.2} parent=11 // pred_region
        _
      $region16: #{gpt2_encoder_layer_with_ltc.2} parent=11 // pred_fallthru
        _
      // Predicated region
      $region17: #{gpt2_encoder_layer_with_ltc.2} parent=11 // pred_check
        %p325 = pneg %p87
      $region18: #{gpt2_encoder_layer_with_ltc.2} parent=11 // pred_check_branch
        %327 = sbr.rel (%p325) target = $region20
      $region19: #{gpt2_encoder_layer_with_ltc.2} parent=11 // pred_region
        _
      $region20: #{gpt2_encoder_layer_with_ltc.2} parent=11 // pred_fallthru
        _
      // Predicated region
      $region21: #{gpt2_encoder_layer_with_ltc.2} parent=11 // pred_check
        %p328 = pneg %p108
      $region22: #{gpt2_encoder_layer_with_ltc.2} parent=11 // pred_check_branch
        %330 = sbr.rel (%p328) target = $region24
      $region23: #{gpt2_encoder_layer_with_ltc.2} parent=11 // pred_region
        _
      $region24: #{gpt2_encoder_layer_with_ltc.2} parent=11 // pred_fallthru
        _
      // Predicated region
      $region25: #{gpt2_encoder_layer_with_ltc.2} parent=11 // pred_check
        %p331 = pneg %p129
      $region26: #{gpt2_encoder_layer_with_ltc.2} parent=11 // pred_check_branch
        %333 = sbr.rel (%p331) target = $region28
      $region27: #{gpt2_encoder_layer_with_ltc.2} parent=11 // pred_region
        _
      $region28: #{gpt2_encoder_layer_with_ltc.2} parent=11 // pred_fallthru
        _
      // Predicated region
      $region29: #{gpt2_encoder_layer_with_ltc.2} parent=11 // pred_check
        %p334 = pneg %p150
      $region30: #{gpt2_encoder_layer_with_ltc.2} parent=11 // pred_check_branch
        %336 = sbr.rel (%p334) target = $region32
      $region31: #{gpt2_encoder_layer_with_ltc.2} parent=11 // pred_region
        _
      $region32: #{gpt2_encoder_layer_with_ltc.2} parent=11 // pred_fallthru
        _
      // Predicated region
      $region33: #{gpt2_encoder_layer_with_ltc.2} parent=11 // pred_check
        %p337 = pneg %p171
      $region34: #{gpt2_encoder_layer_with_ltc.2} parent=11 // pred_check_branch
        %339 = sbr.rel (%p337) target = $region36
      $region35: #{gpt2_encoder_layer_with_ltc.2} parent=11 // pred_region
        _
      $region36: #{gpt2_encoder_layer_with_ltc.2} parent=11 // pred_fallthru
        _
      // Predicated region
      $region37: #{gpt2_encoder_layer_with_ltc.2} parent=11 // pred_check
        %p340 = pneg %p192
      $region38: #{gpt2_encoder_layer_with_ltc.2} parent=11 // pred_check_branch
        %342 = sbr.rel (%p340) target = $region40
      $region39: #{gpt2_encoder_layer_with_ltc.2} parent=11 // pred_region
        _
      $region40: #{gpt2_encoder_layer_with_ltc.2} parent=11 // pred_fallthru
        _
      // Predicated region
      $region41: #{gpt2_encoder_layer_with_ltc.2} parent=11 // pred_check
        %p343 = pneg %p213
      $region42: #{gpt2_encoder_layer_with_ltc.2} parent=11 // pred_check_branch
        %345 = sbr.rel (%p343) target = $region44
      $region43: #{gpt2_encoder_layer_with_ltc.2} parent=11 // pred_region
        _
      $region44: #{gpt2_encoder_layer_with_ltc.2} parent=11 // pred_fallthru
        _
      // Predicated region
      $region45: #{gpt2_encoder_layer_with_ltc.2} parent=11 // pred_check
        %p346 = pneg %p234
      $region46: #{gpt2_encoder_layer_with_ltc.2} parent=11 // pred_check_branch
        %348 = sbr.rel (%p346) target = $region48
      $region47: #{gpt2_encoder_layer_with_ltc.2} parent=11 // pred_region
        _
      $region48: #{gpt2_encoder_layer_with_ltc.2} parent=11 // pred_fallthru
        _
      // Predicated region
      $region49: #{gpt2_encoder_layer_with_ltc.2} parent=11 // pred_check
        %p349 = pneg %p255
      $region50: #{gpt2_encoder_layer_with_ltc.2} parent=11 // pred_check_branch
        %351 = sbr.rel (%p349) target = $region52
      $region51: #{gpt2_encoder_layer_with_ltc.2} parent=11 // pred_region
        _
      $region52: #{gpt2_encoder_layer_with_ltc.2} parent=11 // pred_fallthru
        _
    $region12: #{gpt2_encoder_layer_with_ltc.2} parent=5 // pred_fallthru
      _
    %p352 = scmp.lt.s32.totalorder %s19, 2
    // Predicated region
    $region53: #{gpt2_encoder_layer_with_ltc.2} parent=5 // pred_check
      %p353 = pneg %p352
    $region54: #{gpt2_encoder_layer_with_ltc.2} parent=5 // pred_check_branch
      %355 = sbr.rel (%p353) target = $region56
    $region55: #{gpt2_encoder_layer_with_ltc.2} parent=5 // pred_region
      // Predicated region
      $region57: #{gpt2_encoder_layer_with_ltc.2} parent=55 // pred_check
        %p356 = pneg %p39
      $region58: #{gpt2_encoder_layer_with_ltc.2} parent=55 // pred_check_branch
        %358 = sbr.rel (%p356) target = $region60
      $region59: #{gpt2_encoder_layer_with_ltc.2} parent=55 // pred_region
        %p359 = scmp.lt.s32.totalorder %s19, 1
        %s360 = scalar_select %p359, %s19, 1
        %s361 = smul.addr %s360, 8
        %s362 = scalar_lea.vmem %s0, %s361
      $region60: #{gpt2_encoder_layer_with_ltc.2} parent=55 // pred_fallthru
        _
    $region56: #{gpt2_encoder_layer_with_ltc.2} parent=5 // pred_fallthru
      _
    %p363 = scmp.le.s32.totalorder 1, %s19
    %p364 = scmp.lt.s32.totalorder %s19, 3
    %p365 = pnand %p363, %p364
    %p366 = pneg %p365
    // Predicated region
    $region61: #{gpt2_encoder_layer_with_ltc.2} parent=5 // pred_check
      _
    $region62: #{gpt2_encoder_layer_with_ltc.2} parent=5 // pred_check_branch
      %368 = sbr.rel (%p365) target = $region64
    $region63: #{gpt2_encoder_layer_with_ltc.2} parent=5 // pred_region
      %s369 = ssub.s32 %s19, 1
      %p370 = scmp.lt.s32.totalorder %s24, 1
      %s371 = scalar_select %p370, %s24, 1
      %s372 = smul.addr %s371, 8
      %s373 = scalar_lea.vmem %s0, %s372
      %p374 = pneg %p45
      %p375 = pneg %p42
      %p376 = pneg %p66
      %p377 = pneg %p63
      %p378 = pneg %p87
      %p379 = pneg %p84
      %p380 = pneg %p108
      %p381 = pneg %p105
      %p382 = pneg %p129
      %p383 = pneg %p126
      %p384 = pneg %p150
      %p385 = pneg %p147
      %p386 = pneg %p171
      %p387 = pneg %p168
      %p388 = pneg %p192
      %p389 = pneg %p189
      %p390 = pneg %p213
      %p391 = pneg %p210
      %p392 = pneg %p234
      %p393 = pneg %p231
      %p394 = pneg %p255
      %p395 = pneg %p252
      %p396 = pneg %p281
      %p397 = pneg %p278
      %p398 = scmp.lt.s32.totalorder %s24, 1
      %s399 = scalar_select %p398, %s24, 1
      %s400 = smul.addr %s399, 8
      %s401 = scalar_lea.vmem %s11, %s400
      %p402 = pneg %p307
      %p403 = pneg %p304
      %p404 = scmp.lt.s32.totalorder %s24, 1
      %s405 = scalar_select %p404, %s24, 1
      %s406 = smul.addr %s405, 8
      %s407 = scalar_lea.vmem %s12, %s406
      %p408 = scmp.lt.s32.totalorder %s24, 1
      %s409 = scalar_select %p408, %s24, 1
      %s410 = smul.addr %s409, 8
      %s411 = scalar_lea.vmem %s0, %s410
      %p412 = scmp.lt.s32.totalorder %s24, 1
      %s413 = scalar_select %p412, %s24, 1
      %s414 = smul.addr %s413, 8
      %s415 = scalar_lea.vmem %s11, %s414
      %p416 = scmp.lt.s32.totalorder %s24, 1
      %s417 = scalar_select %p416, %s24, 1
      %s418 = smul.addr %s417, 8
      %s419 = scalar_lea.vmem %s12, %s418
      %v421 = vld [vmem:[%s411] sm:$0xff]
      %v422 = vld [vmem:[%s5] sm:$0x1]
      %v423 = vld [vmem:[%s6] sm:$0x1]
      %vm424 = vcmask 261120
      %v425 = vsel %vm424, %v421, 0.0
      %426 = vadd.xlane.f32.xlu0 %v425
      %v427 = vpop.xlane.xlu0 %426
      %v428 = vrcp.pop 32.0
      %v429 = vmul.f32 %v427, %v428
      %v430 = vsub.f32 %v421, %v429
      %v431 = vmul.f32 %v430, %v430
      %v432 = vsel %vm424, %v431, 0.0
      %433 = vadd.xlane.f32.xlu0 %v432
      %v434 = vpop.xlane.xlu0 %433
      %v435 = vmul.f32 %v434, %v428
      %v436 = vadd.f32 %v435, 1e-05
      %v437 = vrsqrt.pop %v436
      %v438 = vmul.f32 %v430, %v437
      %v440 = vlaneseq
      %v441 = vshrl.u32 %v440, 7
      %v442 = vsub.s32 0, %v441
      %v443 = vrot.slane %v422, %v442
      %v445 = vmul.f32 %v438, %v443
      %v447 = vlaneseq
      %v448 = vshrl.u32 %v447, 7
      %v449 = vsub.s32 0, %v448
      %v450 = vrot.slane %v423, %v449
      %v452 = vadd.f32 %v445, %v450
      %v453 = vpack.c.bf16 %v452, %v452
      %v454 = vld [vmem:[%s1] sm:$0xf]
      %v455 = vld [vmem:[%s1 + $0x4] sm:$0xf]
      %v456 = vld [vmem:[%s1 + $0x8] sm:$0xf]
      %v457 = vld [vmem:[%s1 + $0xc] sm:$0xf]
      %v458 = vld [vmem:[%s2] sm:$0x1]
      %v460 = vlaneseq
      %v461 = vshrl.u32 %v460, 7
      %v462 = vsub.s32 0, %v461
      %v463 = vrot.slane %v458, %v462
      %v469 = vunpack.c.l.b16 %v454
      %v470 = vunpack.c.l.b16 %v455
      %v471 = vunpack.c.l.b16 %v456
      %v472 = vunpack.c.l.b16 %v457
      %v473 = vpack.c.b16 %v470, %v469
      %v474 = vpack.c.b16 %v472, %v471
      %v478 = vsel %vm424, %v453, 0
      %480 = vmatprep.subr.bf16.mxu0 0
      %481 = vmatpush1.bf16.msra.mxu0 0
      %482 = vmatprep.subr.bf16.mxu0 0
      %483 = vmatpush1.bf16.msra.mxu0 0
      %484 = vmatprep.subr.bf16.mxu0 0
      %485 = vmatpush1.bf16.msra.mxu0 0
      %486 = vmatprep.subr.bf16.mxu0 0
      %487 = vmatpush1.bf16.msra.mxu0 0
      %488 = vmatprep.subr.bf16.mxu0 0
      %489 = vmatpush1.bf16.msra.mxu0 0
      %490 = vmatprep.subr.bf16.mxu0 0
      %491 = vmatpush1.bf16.msra.mxu0 0
      %492 = vmatprep.subr.bf16.mxu0 0
      %493 = vmatpush1.bf16.msra.mxu0 %v474
      %494 = vmatprep.subr.bf16.mxu0 0
      %495 = vmatpush1.bf16.msra.mxu0 %v473
      %496 = vmatprep.subr.bf16.mxu0 0
      %497 = vmatpush2.bf16.msra.mxu0 0
      %498 = vmatprep.subr.bf16.mxu0 0
      %499 = vmatpush2.bf16.msra.mxu0 0
      %500 = vmatprep.subr.bf16.mxu0 0
      %501 = vmatpush2.bf16.msra.mxu0 0
      %502 = vmatprep.subr.bf16.mxu0 0
      %503 = vmatpush2.bf16.msra.mxu0 0
      %504 = vmatprep.subr.bf16.mxu0 0
      %505 = vmatpush2.bf16.msra.mxu0 0
      %506 = vmatprep.subr.bf16.mxu0 0
      %507 = vmatpush2.bf16.msra.mxu0 0
      %508 = vmatprep.subr.bf16.mxu0 0
      %509 = vmatpush2.bf16.msra.mxu0 0
      %510 = vmatprep.subr.bf16.mxu0 0
      %511 = vmatpush2.bf16.msra.mxu0 0
      %512 = vmatprep.mubr.bf16.mxu0 0
      %513 = vmatmul.mubr.bf16.gmra.mxu0 %v478
      %v514 = vpop.f32.mrf.mxu0
      %v515 = vadd.f32 %v463, %v514
      %v516 = vpop.f32.mrf.mxu0
      %v517 = vpop.f32.mrf.mxu0
      %v518 = vpop.f32.mrf.mxu0
      %519 = vdwg.mxu0
      %v520 = vlaneseq
      %v521 = vshrl.u32 %v520, 7
      %v522 = vlaneseq
      %v523 = vand.u32 %v522, 127
      %vm524 = vcmp.le.s32.totalorder %v523, %v521
      %v525 = vsel %vm524, 0.0, -1e+30
      %v526 = vpack.c.bf16 %v515, %v515
      %528 = vrot.lane.b32.xlu0 %v526, 96
      %v529 = vpop.permute.xlu0 %528
      %vm530 = vcmask 64512
      %v532 = vsel %vm530, %v526, 0
      %v535 = vsel %vm530, %v529, 0
      %537 = vmatprep.subr.bf16.mxu0 0
      %538 = vmatpush1.bf16.xpose.msra.mxu0 0
      %539 = vmatprep.subr.bf16.mxu0 0
      %540 = vmatpush1.bf16.xpose.msra.mxu0 0
      %541 = vmatprep.subr.bf16.mxu0 0
      %542 = vmatpush1.bf16.xpose.msra.mxu0 0
      %543 = vmatprep.subr.bf16.mxu0 0
      %544 = vmatpush1.bf16.xpose.msra.mxu0 0
      %545 = vmatprep.subr.bf16.mxu0 0
      %546 = vmatpush1.bf16.xpose.msra.mxu0 0
      %547 = vmatprep.subr.bf16.mxu0 0
      %548 = vmatpush1.bf16.xpose.msra.mxu0 0
      %549 = vmatprep.subr.bf16.mxu0 0
      %550 = vmatpush1.bf16.xpose.msra.mxu0 0
      %551 = vmatprep.subr.bf16.mxu0 0
      %552 = vmatpush1.bf16.xpose.msra.mxu0 %v535
      %553 = vmatprep.subr.bf16.mxu0 0
      %554 = vmatpush2.bf16.xpose.msra.mxu0 0
      %555 = vmatprep.subr.bf16.mxu0 0
      %556 = vmatpush2.bf16.xpose.msra.mxu0 0
      %557 = vmatprep.subr.bf16.mxu0 0
      %558 = vmatpush2.bf16.xpose.msra.mxu0 0
      %559 = vmatprep.subr.bf16.mxu0 0
      %560 = vmatpush2.bf16.xpose.msra.mxu0 0
      %561 = vmatprep.subr.bf16.mxu0 0
      %562 = vmatpush2.bf16.xpose.msra.mxu0 0
      %563 = vmatprep.subr.bf16.mxu0 0
      %564 = vmatpush2.bf16.xpose.msra.mxu0 0
      %565 = vmatprep.subr.bf16.mxu0 0
      %566 = vmatpush2.bf16.xpose.msra.mxu0 0
      %567 = vmatprep.subr.bf16.mxu0 0
      %568 = vmatpush2.bf16.xpose.msra.mxu0 0
      %569 = vmatprep.mubr.bf16.mxu0 0
      %570 = vmatmul.mubr.bf16.gmra.mxu0 %v532
      %v571 = vpop.f32.mrf.mxu0
      %v572 = vadd.f32 %v525, %v571
      %v573 = vpop.f32.mrf.mxu0
      %v574 = vpop.f32.mrf.mxu0
      %v575 = vpop.f32.mrf.mxu0
      %576 = vdwg.mxu0
      %v577 = vsel %vm530, %v572, -inf
      %578 = vmax.xlane.f32.xlu0 %v577
      %v579 = vpop.xlane.xlu0 %578
      %v580 = vsub.f32 %v572, %v579
      %v581 = vmul.f32 %v580, 1.442695
      %v582 = vpow.pop %v581
      %v583 = vsel %vm530, %v582, 0.0
      %584 = vadd.xlane.f32.xlu0 %v583
      %v585 = vpop.xlane.xlu0 %584
      %v586 = vrcp.pop %v585
      %v587 = vmul.f32 %v582, %v586
      %v588 = vpack.c.bf16 %v587, %v587
      %589 = vrot.lane.b32.xlu0 %v526, 64
      %v590 = vpop.permute.xlu0 %589
      %v592 = vsel %vm530, %v588, 0
      %vm594 = vcmask 1043456
      %v596 = vsel %vm594, %v590, 0
      %598 = vmatprep.subr.bf16.mxu0 0
      %599 = vmatpush1.bf16.msra.mxu0 0
      %600 = vmatprep.subr.bf16.mxu0 0
      %601 = vmatpush1.bf16.msra.mxu0 0
      %602 = vmatprep.subr.bf16.mxu0 0
      %603 = vmatpush1.bf16.msra.mxu0 0
      %604 = vmatprep.subr.bf16.mxu0 0
      %605 = vmatpush1.bf16.msra.mxu0 0
      %606 = vmatprep.subr.bf16.mxu0 0
      %607 = vmatpush1.bf16.msra.mxu0 0
      %608 = vmatprep.subr.bf16.mxu0 0
      %609 = vmatpush1.bf16.msra.mxu0 0
      %610 = vmatprep.subr.bf16.mxu0 0
      %611 = vmatpush1.bf16.msra.mxu0 0
      %612 = vmatprep.subr.bf16.mxu0 0
      %613 = vmatpush1.bf16.msra.mxu0 %v596
      %614 = vmatprep.subr.bf16.mxu0 0
      %615 = vmatpush2.bf16.msra.mxu0 0
      %616 = vmatprep.subr.bf16.mxu0 0
      %617 = vmatpush2.bf16.msra.mxu0 0
      %618 = vmatprep.subr.bf16.mxu0 0
      %619 = vmatpush2.bf16.msra.mxu0 0
      %620 = vmatprep.subr.bf16.mxu0 0
      %621 = vmatpush2.bf16.msra.mxu0 0
      %622 = vmatprep.subr.bf16.mxu0 0
      %623 = vmatpush2.bf16.msra.mxu0 0
      %624 = vmatprep.subr.bf16.mxu0 0
      %625 = vmatpush2.bf16.msra.mxu0 0
      %626 = vmatprep.subr.bf16.mxu0 0
      %627 = vmatpush2.bf16.msra.mxu0 0
      %628 = vmatprep.subr.bf16.mxu0 0
      %629 = vmatpush2.bf16.msra.mxu0 0
      %630 = vmatprep.mubr.bf16.mxu0 0
      %631 = vmatmul.mubr.bf16.gmra.mxu0 %v592
      %v632 = vpop.f32.mrf.mxu0
      %v633 = vadd.f32 0.0, %v632
      %v634 = vpop.f32.mrf.mxu0
      %v635 = vpop.f32.mrf.mxu0
      %v636 = vpop.f32.mrf.mxu0
      %637 = vdwg.mxu0
      %638 = vst.msk [vmem:[#allocation2] sm:$0xff] %vm530, %v633
      %639 = vrot.lane.b32.xlu0 %v526, 120
      %v640 = vpop.permute.xlu0 %639
      %641 = vrot.lane.b32.xlu0 %v526, 88
      %v642 = vpop.permute.xlu0 %641
      %v644 = vsel %vm530, %v640, 0
      %v647 = vsel %vm530, %v642, 0
      %649 = vmatprep.subr.bf16.mxu0 0
      %650 = vmatpush1.bf16.xpose.msra.mxu0 0
      %651 = vmatprep.subr.bf16.mxu0 0
      %652 = vmatpush1.bf16.xpose.msra.mxu0 0
      %653 = vmatprep.subr.bf16.mxu0 0
      %654 = vmatpush1.bf16.xpose.msra.mxu0 0
      %655 = vmatprep.subr.bf16.mxu0 0
      %656 = vmatpush1.bf16.xpose.msra.mxu0 0
      %657 = vmatprep.subr.bf16.mxu0 0
      %658 = vmatpush1.bf16.xpose.msra.mxu0 0
      %659 = vmatprep.subr.bf16.mxu0 0
      %660 = vmatpush1.bf16.xpose.msra.mxu0 0
      %661 = vmatprep.subr.bf16.mxu0 0
      %662 = vmatpush1.bf16.xpose.msra.mxu0 0
      %663 = vmatprep.subr.bf16.mxu0 0
      %664 = vmatpush1.bf16.xpose.msra.mxu0 %v647
      %665 = vmatprep.subr.bf16.mxu0 0
      %666 = vmatpush2.bf16.xpose.msra.mxu0 0
      %667 = vmatprep.subr.bf16.mxu0 0
      %668 = vmatpush2.bf16.xpose.msra.mxu0 0
      %669 = vmatprep.subr.bf16.mxu0 0
      %670 = vmatpush2.bf16.xpose.msra.mxu0 0
      %671 = vmatprep.subr.bf16.mxu0 0
      %672 = vmatpush2.bf16.xpose.msra.mxu0 0
      %673 = vmatprep.subr.bf16.mxu0 0
      %674 = vmatpush2.bf16.xpose.msra.mxu0 0
      %675 = vmatprep.subr.bf16.mxu0 0
      %676 = vmatpush2.bf16.xpose.msra.mxu0 0
      %677 = vmatprep.subr.bf16.mxu0 0
      %678 = vmatpush2.bf16.xpose.msra.mxu0 0
      %679 = vmatprep.subr.bf16.mxu0 0
      %680 = vmatpush2.bf16.xpose.msra.mxu0 0
      %681 = vmatprep.mubr.bf16.mxu0 0
      %682 = vmatmul.mubr.bf16.gmra.mxu0 %v644
      %v683 = vpop.f32.mrf.mxu0
      %v684 = vadd.f32 %v525, %v683
      %v685 = vpop.f32.mrf.mxu0
      %v686 = vpop.f32.mrf.mxu0
      %v687 = vpop.f32.mrf.mxu0
      %688 = vdwg.mxu0
      %v689 = vsel %vm530, %v684, -inf
      %690 = vmax.xlane.f32.xlu0 %v689
      %v691 = vpop.xlane.xlu0 %690
      %v692 = vsub.f32 %v684, %v691
      %v693 = vmul.f32 %v692, 1.442695
      %v694 = vpow.pop %v693
      %v695 = vsel %vm530, %v694, 0.0
      %696 = vadd.xlane.f32.xlu0 %v695
      %v697 = vpop.xlane.xlu0 %696
      %v698 = vrcp.pop %v697
      %v699 = vmul.f32 %v694, %v698
      %v700 = vpack.c.bf16 %v699, %v699
      %701 = vrot.lane.b32.xlu0 %v526, 56
      %v702 = vpop.permute.xlu0 %701
      %v704 = vsel %vm530, %v700, 0
      %v707 = vsel %vm594, %v702, 0
      %709 = vmatprep.subr.bf16.mxu0 0
      %710 = vmatpush1.bf16.msra.mxu0 0
      %711 = vmatprep.subr.bf16.mxu0 0
      %712 = vmatpush1.bf16.msra.mxu0 0
      %713 = vmatprep.subr.bf16.mxu0 0
      %714 = vmatpush1.bf16.msra.mxu0 0
      %715 = vmatprep.subr.bf16.mxu0 0
      %716 = vmatpush1.bf16.msra.mxu0 0
      %717 = vmatprep.subr.bf16.mxu0 0
      %718 = vmatpush1.bf16.msra.mxu0 0
      %719 = vmatprep.subr.bf16.mxu0 0
      %720 = vmatpush1.bf16.msra.mxu0 0
      %721 = vmatprep.subr.bf16.mxu0 0
      %722 = vmatpush1.bf16.msra.mxu0 0
      %723 = vmatprep.subr.bf16.mxu0 0
      %724 = vmatpush1.bf16.msra.mxu0 %v707
      %725 = vmatprep.subr.bf16.mxu0 0
      %726 = vmatpush2.bf16.msra.mxu0 0
      %727 = vmatprep.subr.bf16.mxu0 0
      %728 = vmatpush2.bf16.msra.mxu0 0
      %729 = vmatprep.subr.bf16.mxu0 0
      %730 = vmatpush2.bf16.msra.mxu0 0
      %731 = vmatprep.subr.bf16.mxu0 0
      %732 = vmatpush2.bf16.msra.mxu0 0
      %733 = vmatprep.subr.bf16.mxu0 0
      %734 = vmatpush2.bf16.msra.mxu0 0
      %735 = vmatprep.subr.bf16.mxu0 0
      %736 = vmatpush2.bf16.msra.mxu0 0
      %737 = vmatprep.subr.bf16.mxu0 0
      %738 = vmatpush2.bf16.msra.mxu0 0
      %739 = vmatprep.subr.bf16.mxu0 0
      %740 = vmatpush2.bf16.msra.mxu0 0
      %741 = vmatprep.mubr.bf16.mxu0 0
      %742 = vmatmul.mubr.bf16.gmra.mxu0 %v704
      %v743 = vpop.f32.mrf.mxu0
      %v744 = vadd.f32 0.0, %v743
      %v745 = vpop.f32.mrf.mxu0
      %v746 = vpop.f32.mrf.mxu0
      %v747 = vpop.f32.mrf.mxu0
      %748 = vdwg.mxu0
      %750 = vrot.lane.b32.xlu0 %v744, 8
      %v751 = vpop.permute.xlu0 %750
      %vm753 = vcmask 130112
      %754 = vst.msk [vmem:[#allocation2] sm:$0xff] %vm753, %v751
      %755 = vrot.lane.b32.xlu0 %v526, 112
      %v756 = vpop.permute.xlu0 %755
      %757 = vrot.lane.b32.xlu0 %v526, 80
      %v758 = vpop.permute.xlu0 %757
      %v760 = vsel %vm530, %v756, 0
      %v763 = vsel %vm530, %v758, 0
      %765 = vmatprep.subr.bf16.mxu0 0
      %766 = vmatpush1.bf16.xpose.msra.mxu0 0
      %767 = vmatprep.subr.bf16.mxu0 0
      %768 = vmatpush1.bf16.xpose.msra.mxu0 0
      %769 = vmatprep.subr.bf16.mxu0 0
      %770 = vmatpush1.bf16.xpose.msra.mxu0 0
      %771 = vmatprep.subr.bf16.mxu0 0
      %772 = vmatpush1.bf16.xpose.msra.mxu0 0
      %773 = vmatprep.subr.bf16.mxu0 0
      %774 = vmatpush1.bf16.xpose.msra.mxu0 0
      %775 = vmatprep.subr.bf16.mxu0 0
      %776 = vmatpush1.bf16.xpose.msra.mxu0 0
      %777 = vmatprep.subr.bf16.mxu0 0
      %778 = vmatpush1.bf16.xpose.msra.mxu0 0
      %779 = vmatprep.subr.bf16.mxu0 0
      %780 = vmatpush1.bf16.xpose.msra.mxu0 %v763
      %781 = vmatprep.subr.bf16.mxu0 0
      %782 = vmatpush2.bf16.xpose.msra.mxu0 0
      %783 = vmatprep.subr.bf16.mxu0 0
      %784 = vmatpush2.bf16.xpose.msra.mxu0 0
      %785 = vmatprep.subr.bf16.mxu0 0
      %786 = vmatpush2.bf16.xpose.msra.mxu0 0
      %787 = vmatprep.subr.bf16.mxu0 0
      %788 = vmatpush2.bf16.xpose.msra.mxu0 0
      %789 = vmatprep.subr.bf16.mxu0 0
      %790 = vmatpush2.bf16.xpose.msra.mxu0 0
      %791 = vmatprep.subr.bf16.mxu0 0
      %792 = vmatpush2.bf16.xpose.msra.mxu0 0
      %793 = vmatprep.subr.bf16.mxu0 0
      %794 = vmatpush2.bf16.xpose.msra.mxu0 0
      %795 = vmatprep.subr.bf16.mxu0 0
      %796 = vmatpush2.bf16.xpose.msra.mxu0 0
      %797 = vmatprep.mubr.bf16.mxu0 0
      %798 = vmatmul.mubr.bf16.gmra.mxu0 %v760
      %v799 = vpop.f32.mrf.mxu0
      %v800 = vadd.f32 %v525, %v799
      %v801 = vpop.f32.mrf.mxu0
      %v802 = vpop.f32.mrf.mxu0
      %v803 = vpop.f32.mrf.mxu0
      %804 = vdwg.mxu0
      %v805 = vsel %vm530, %v800, -inf
      %806 = vmax.xlane.f32.xlu0 %v805
      %v807 = vpop.xlane.xlu0 %806
      %v808 = vsub.f32 %v800, %v807
      %v809 = vmul.f32 %v808, 1.442695
      %v810 = vpow.pop %v809
      %v811 = vsel %vm530, %v810, 0.0
      %812 = vadd.xlane.f32.xlu0 %v811
      %v813 = vpop.xlane.xlu0 %812
      %v814 = vrcp.pop %v813
      %v815 = vmul.f32 %v810, %v814
      %v816 = vpack.c.bf16 %v815, %v815
      %817 = vrot.lane.b32.xlu0 %v526, 48
      %v818 = vpop.permute.xlu0 %817
      %v820 = vsel %vm530, %v816, 0
      %v823 = vsel %vm594, %v818, 0
      %825 = vmatprep.subr.bf16.mxu0 0
      %826 = vmatpush1.bf16.msra.mxu0 0
      %827 = vmatprep.subr.bf16.mxu0 0
      %828 = vmatpush1.bf16.msra.mxu0 0
      %829 = vmatprep.subr.bf16.mxu0 0
      %830 = vmatpush1.bf16.msra.mxu0 0
      %831 = vmatprep.subr.bf16.mxu0 0
      %832 = vmatpush1.bf16.msra.mxu0 0
      %833 = vmatprep.subr.bf16.mxu0 0
      %834 = vmatpush1.bf16.msra.mxu0 0
      %835 = vmatprep.subr.bf16.mxu0 0
      %836 = vmatpush1.bf16.msra.mxu0 0
      %837 = vmatprep.subr.bf16.mxu0 0
      %838 = vmatpush1.bf16.msra.mxu0 0
      %839 = vmatprep.subr.bf16.mxu0 0
      %840 = vmatpush1.bf16.msra.mxu0 %v823
      %841 = vmatprep.subr.bf16.mxu0 0
      %842 = vmatpush2.bf16.msra.mxu0 0
      %843 = vmatprep.subr.bf16.mxu0 0
      %844 = vmatpush2.bf16.msra.mxu0 0
      %845 = vmatprep.subr.bf16.mxu0 0
      %846 = vmatpush2.bf16.msra.mxu0 0
      %847 = vmatprep.subr.bf16.mxu0 0
      %848 = vmatpush2.bf16.msra.mxu0 0
      %849 = vmatprep.subr.bf16.mxu0 0
      %850 = vmatpush2.bf16.msra.mxu0 0
      %851 = vmatprep.subr.bf16.mxu0 0
      %852 = vmatpush2.bf16.msra.mxu0 0
      %853 = vmatprep.subr.bf16.mxu0 0
      %854 = vmatpush2.bf16.msra.mxu0 0
      %855 = vmatprep.subr.bf16.mxu0 0
      %856 = vmatpush2.bf16.msra.mxu0 0
      %857 = vmatprep.mubr.bf16.mxu0 0
      %858 = vmatmul.mubr.bf16.gmra.mxu0 %v820
      %v859 = vpop.f32.mrf.mxu0
      %v860 = vadd.f32 0.0, %v859
      %v861 = vpop.f32.mrf.mxu0
      %v862 = vpop.f32.mrf.mxu0
      %v863 = vpop.f32.mrf.mxu0
      %864 = vdwg.mxu0
      %866 = vrot.lane.b32.xlu0 %v860, 16
      %v867 = vpop.permute.xlu0 %866
      %vm869 = vcmask 195712
      %870 = vst.msk [vmem:[#allocation2] sm:$0xff] %vm869, %v867
      %871 = vrot.lane.b32.xlu0 %v526, 104
      %v872 = vpop.permute.xlu0 %871
      %873 = vrot.lane.b32.xlu0 %v526, 72
      %v874 = vpop.permute.xlu0 %873
      %v876 = vsel %vm530, %v872, 0
      %v879 = vsel %vm530, %v874, 0
      %881 = vmatprep.subr.bf16.mxu0 0
      %882 = vmatpush1.bf16.xpose.msra.mxu0 0
      %883 = vmatprep.subr.bf16.mxu0 0
      %884 = vmatpush1.bf16.xpose.msra.mxu0 0
      %885 = vmatprep.subr.bf16.mxu0 0
      %886 = vmatpush1.bf16.xpose.msra.mxu0 0
      %887 = vmatprep.subr.bf16.mxu0 0
      %888 = vmatpush1.bf16.xpose.msra.mxu0 0
      %889 = vmatprep.subr.bf16.mxu0 0
      %890 = vmatpush1.bf16.xpose.msra.mxu0 0
      %891 = vmatprep.subr.bf16.mxu0 0
      %892 = vmatpush1.bf16.xpose.msra.mxu0 0
      %893 = vmatprep.subr.bf16.mxu0 0
      %894 = vmatpush1.bf16.xpose.msra.mxu0 0
      %895 = vmatprep.subr.bf16.mxu0 0
      %896 = vmatpush1.bf16.xpose.msra.mxu0 %v879
      %897 = vmatprep.subr.bf16.mxu0 0
      %898 = vmatpush2.bf16.xpose.msra.mxu0 0
      %899 = vmatprep.subr.bf16.mxu0 0
      %900 = vmatpush2.bf16.xpose.msra.mxu0 0
      %901 = vmatprep.subr.bf16.mxu0 0
      %902 = vmatpush2.bf16.xpose.msra.mxu0 0
      %903 = vmatprep.subr.bf16.mxu0 0
      %904 = vmatpush2.bf16.xpose.msra.mxu0 0
      %905 = vmatprep.subr.bf16.mxu0 0
      %906 = vmatpush2.bf16.xpose.msra.mxu0 0
      %907 = vmatprep.subr.bf16.mxu0 0
      %908 = vmatpush2.bf16.xpose.msra.mxu0 0
      %909 = vmatprep.subr.bf16.mxu0 0
      %910 = vmatpush2.bf16.xpose.msra.mxu0 0
      %911 = vmatprep.subr.bf16.mxu0 0
      %912 = vmatpush2.bf16.xpose.msra.mxu0 0
      %913 = vmatprep.mubr.bf16.mxu0 0
      %914 = vmatmul.mubr.bf16.gmra.mxu0 %v876
      %v915 = vpop.f32.mrf.mxu0
      %v916 = vadd.f32 %v525, %v915
      %v917 = vpop.f32.mrf.mxu0
      %v918 = vpop.f32.mrf.mxu0
      %v919 = vpop.f32.mrf.mxu0
      %920 = vdwg.mxu0
      %v921 = vsel %vm530, %v916, -inf
      %922 = vmax.xlane.f32.xlu0 %v921
      %v923 = vpop.xlane.xlu0 %922
      %v924 = vsub.f32 %v916, %v923
      %v925 = vmul.f32 %v924, 1.442695
      %v926 = vpow.pop %v925
      %v927 = vsel %vm530, %v926, 0.0
      %928 = vadd.xlane.f32.xlu0 %v927
      %v929 = vpop.xlane.xlu0 %928
      %v930 = vrcp.pop %v929
      %v931 = vmul.f32 %v926, %v930
      %v932 = vpack.c.bf16 %v931, %v931
      %933 = vrot.lane.b32.xlu0 %v526, 40
      %v934 = vpop.permute.xlu0 %933
      %v936 = vsel %vm530, %v932, 0
      %v939 = vsel %vm594, %v934, 0
      %941 = vmatprep.subr.bf16.mxu0 0
      %942 = vmatpush1.bf16.msra.mxu0 0
      %943 = vmatprep.subr.bf16.mxu0 0
      %944 = vmatpush1.bf16.msra.mxu0 0
      %945 = vmatprep.subr.bf16.mxu0 0
      %946 = vmatpush1.bf16.msra.mxu0 0
      %947 = vmatprep.subr.bf16.mxu0 0
      %948 = vmatpush1.bf16.msra.mxu0 0
      %949 = vmatprep.subr.bf16.mxu0 0
      %950 = vmatpush1.bf16.msra.mxu0 0
      %951 = vmatprep.subr.bf16.mxu0 0
      %952 = vmatpush1.bf16.msra.mxu0 0
      %953 = vmatprep.subr.bf16.mxu0 0
      %954 = vmatpush1.bf16.msra.mxu0 0
      %955 = vmatprep.subr.bf16.mxu0 0
      %956 = vmatpush1.bf16.msra.mxu0 %v939
      %957 = vmatprep.subr.bf16.mxu0 0
      %958 = vmatpush2.bf16.msra.mxu0 0
      %959 = vmatprep.subr.bf16.mxu0 0
      %960 = vmatpush2.bf16.msra.mxu0 0
      %961 = vmatprep.subr.bf16.mxu0 0
      %962 = vmatpush2.bf16.msra.mxu0 0
      %963 = vmatprep.subr.bf16.mxu0 0
      %964 = vmatpush2.bf16.msra.mxu0 0
      %965 = vmatprep.subr.bf16.mxu0 0
      %966 = vmatpush2.bf16.msra.mxu0 0
      %967 = vmatprep.subr.bf16.mxu0 0
      %968 = vmatpush2.bf16.msra.mxu0 0
      %969 = vmatprep.subr.bf16.mxu0 0
      %970 = vmatpush2.bf16.msra.mxu0 0
      %971 = vmatprep.subr.bf16.mxu0 0
      %972 = vmatpush2.bf16.msra.mxu0 0
      %973 = vmatprep.mubr.bf16.mxu0 0
      %974 = vmatmul.mubr.bf16.gmra.mxu0 %v936
      %v975 = vpop.f32.mrf.mxu0
      %v976 = vadd.f32 0.0, %v975
      %v977 = vpop.f32.mrf.mxu0
      %v978 = vpop.f32.mrf.mxu0
      %v979 = vpop.f32.mrf.mxu0
      %980 = vdwg.mxu0
      %982 = vrot.lane.b32.xlu0 %v976, 24
      %v983 = vpop.permute.xlu0 %982
      %vm985 = vcmask 261312
      %986 = vst.msk [vmem:[#allocation2] sm:$0xff] %vm985, %v983
      %v987 = vld [vmem:[#allocation2] sm:$0xff]
      %v988 = vpack.c.bf16 %v987, %v987
      %v989 = vld [vmem:[%s3] sm:$0xf]
      %v990 = vld [vmem:[%s3 + $0x4] sm:$0xf]
      %v991 = vld [vmem:[%s3 + $0x8] sm:$0xf]
      %v992 = vld [vmem:[%s3 + $0xc] sm:$0xf]
      %v993 = vld [vmem:[%s4] sm:$0x1]
      %v995 = vlaneseq
      %v996 = vshrl.u32 %v995, 7
      %v997 = vsub.s32 0, %v996
      %v998 = vrot.slane %v993, %v997
      %v1004 = vunpack.c.l.b16 %v989
      %v1005 = vunpack.c.l.b16 %v990
      %v1006 = vunpack.c.l.b16 %v991
      %v1007 = vunpack.c.l.b16 %v992
      %v1008 = vpack.c.b16 %v1005, %v1004
      %v1009 = vpack.c.b16 %v1007, %v1006
      %v1013 = vsel %vm424, %v988, 0
      %1015 = vmatprep.subr.bf16.mxu0 0
      %1016 = vmatpush1.bf16.msra.mxu0 0
      %1017 = vmatprep.subr.bf16.mxu0 0
      %1018 = vmatpush1.bf16.msra.mxu0 0
      %1019 = vmatprep.subr.bf16.mxu0 0
      %1020 = vmatpush1.bf16.msra.mxu0 0
      %1021 = vmatprep.subr.bf16.mxu0 0
      %1022 = vmatpush1.bf16.msra.mxu0 0
      %1023 = vmatprep.subr.bf16.mxu0 0
      %1024 = vmatpush1.bf16.msra.mxu0 0
      %1025 = vmatprep.subr.bf16.mxu0 0
      %1026 = vmatpush1.bf16.msra.mxu0 0
      %1027 = vmatprep.subr.bf16.mxu0 0
      %1028 = vmatpush1.bf16.msra.mxu0 %v1009
      %1029 = vmatprep.subr.bf16.mxu0 0
      %1030 = vmatpush1.bf16.msra.mxu0 %v1008
      %1031 = vmatprep.subr.bf16.mxu0 0
      %1032 = vmatpush2.bf16.msra.mxu0 0
      %1033 = vmatprep.subr.bf16.mxu0 0
      %1034 = vmatpush2.bf16.msra.mxu0 0
      %1035 = vmatprep.subr.bf16.mxu0 0
      %1036 = vmatpush2.bf16.msra.mxu0 0
      %1037 = vmatprep.subr.bf16.mxu0 0
      %1038 = vmatpush2.bf16.msra.mxu0 0
      %1039 = vmatprep.subr.bf16.mxu0 0
      %1040 = vmatpush2.bf16.msra.mxu0 0
      %1041 = vmatprep.subr.bf16.mxu0 0
      %1042 = vmatpush2.bf16.msra.mxu0 0
      %1043 = vmatprep.subr.bf16.mxu0 0
      %1044 = vmatpush2.bf16.msra.mxu0 0
      %1045 = vmatprep.subr.bf16.mxu0 0
      %1046 = vmatpush2.bf16.msra.mxu0 0
      %1047 = vmatprep.mubr.bf16.mxu0 0
      %1048 = vmatmul.mubr.bf16.gmra.mxu0 %v1013
      %v1049 = vpop.f32.mrf.mxu0
      %v1050 = vadd.f32 %v998, %v1049
      %v1051 = vpop.f32.mrf.mxu0
      %v1052 = vpop.f32.mrf.mxu0
      %v1053 = vpop.f32.mrf.mxu0
      %1054 = vdwg.mxu0
      %v1055 = vadd.f32 %v452, %v1050
      %v1056 = vld [vmem:[%s7] sm:$0x1]
      %v1057 = vld [vmem:[%s8] sm:$0x1]
      %v1058 = vsel %vm424, %v1055, 0.0
      %1059 = vadd.xlane.f32.xlu0 %v1058
      %v1060 = vpop.xlane.xlu0 %1059
      %v1061 = vmul.f32 %v1060, %v428
      %v1062 = vsub.f32 %v1055, %v1061
      %v1063 = vmul.f32 %v1062, %v1062
      %v1064 = vsel %vm424, %v1063, 0.0
      %1065 = vadd.xlane.f32.xlu0 %v1064
      %v1066 = vpop.xlane.xlu0 %1065
      %v1067 = vmul.f32 %v1066, %v428
      %v1068 = vadd.f32 %v1067, 1e-05
      %v1069 = vrsqrt.pop %v1068
      %v1070 = vmul.f32 %v1062, %v1069
      %v1072 = vlaneseq
      %v1073 = vshrl.u32 %v1072, 7
      %v1074 = vsub.s32 0, %v1073
      %v1075 = vrot.slane %v1056, %v1074
      %v1077 = vmul.f32 %v1070, %v1075
      %v1079 = vlaneseq
      %v1080 = vshrl.u32 %v1079, 7
      %v1081 = vsub.s32 0, %v1080
      %v1082 = vrot.slane %v1057, %v1081
      %v1084 = vadd.f32 %v1077, %v1082
      %1085 = vst.msk [vmem:[%s415] sm:$0xff] %vm424, %v1084
      %v1086 = vpack.c.bf16 %v1084, %v1084
      %v1087 = vld [vmem:[%s9] sm:$0xf]
      %v1088 = vld [vmem:[%s10] sm:$0x7f]
      %1090 = vset.pattern.permute.xlu0 0
      %1091 = vperm.xlu0 %1090, %v1088
      %v1092 = vpop.permute.xlu0 %1091
      %v1095 = vsel %vm424, %v1087, 0
      %v1098 = vsel %vm424, %v1086, 0
      %1100 = vmatprep.subr.bf16.mxu0 0
      %1101 = vmatpush1.bf16.xpose.msra.mxu0 0
      %1102 = vmatprep.subr.bf16.mxu0 0
      %1103 = vmatpush1.bf16.xpose.msra.mxu0 0
      %1104 = vmatprep.subr.bf16.mxu0 0
      %1105 = vmatpush1.bf16.xpose.msra.mxu0 0
      %1106 = vmatprep.subr.bf16.mxu0 0
      %1107 = vmatpush1.bf16.xpose.msra.mxu0 0
      %1108 = vmatprep.subr.bf16.mxu0 0
      %1109 = vmatpush1.bf16.xpose.msra.mxu0 0
      %1110 = vmatprep.subr.bf16.mxu0 0
      %1111 = vmatpush1.bf16.xpose.msra.mxu0 0
      %1112 = vmatprep.subr.bf16.mxu0 0
      %1113 = vmatpush1.bf16.xpose.msra.mxu0 0
      %1114 = vmatprep.subr.bf16.mxu0 0
      %1115 = vmatpush1.bf16.xpose.msra.mxu0 %v1098
      %1116 = vmatprep.subr.bf16.mxu0 0
      %1117 = vmatpush2.bf16.xpose.msra.mxu0 0
      %1118 = vmatprep.subr.bf16.mxu0 0
      %1119 = vmatpush2.bf16.xpose.msra.mxu0 0
      %1120 = vmatprep.subr.bf16.mxu0 0
      %1121 = vmatpush2.bf16.xpose.msra.mxu0 0
      %1122 = vmatprep.subr.bf16.mxu0 0
      %1123 = vmatpush2.bf16.xpose.msra.mxu0 0
      %1124 = vmatprep.subr.bf16.mxu0 0
      %1125 = vmatpush2.bf16.xpose.msra.mxu0 0
      %1126 = vmatprep.subr.bf16.mxu0 0
      %1127 = vmatpush2.bf16.xpose.msra.mxu0 0
      %1128 = vmatprep.subr.bf16.mxu0 0
      %1129 = vmatpush2.bf16.xpose.msra.mxu0 0
      %1130 = vmatprep.subr.bf16.mxu0 0
      %1131 = vmatpush2.bf16.xpose.msra.mxu0 0
      %1132 = vmatprep.mubr.bf16.mxu0 0
      %1133 = vmatmul.mubr.bf16.gmra.mxu0 %v1095
      %v1134 = vpop.f32.mrf.mxu0
      %v1135 = vadd.f32 %v1092, %v1134
      %v1136 = vpop.f32.mrf.mxu0
      %v1137 = vpop.f32.mrf.mxu0
      %v1138 = vpop.f32.mrf.mxu0
      %1139 = vdwg.mxu0
      %vm1140 = vcmask 63488
      %1141 = vst.msk [vmem:[%s419] sm:$0x7f] %vm1140, %v1135
      %p1142 = scmp.lt.s32.totalorder %s24, 1
      %s1143 = scalar_select %p1142, %s24, 1
      %s1144 = smul.addr %s1143, 8
      %s1145 = scalar_lea.vmem %s11, %s1144
      %p1146 = scmp.lt.s32.totalorder %s24, 1
      %s1147 = scalar_select %p1146, %s24, 1
      %s1148 = smul.addr %s1147, 8
      %s1149 = scalar_lea.vmem %s12, %s1148
      // Predicated region
      $region65: #{gpt2_encoder_layer_with_ltc.2} parent=63 // pred_check
        %p1150 = pneg %p278
      $region66: #{gpt2_encoder_layer_with_ltc.2} parent=63 // pred_check_branch
        %1152 = sbr.rel (%p1150) target = $region68
      $region67: #{gpt2_encoder_layer_with_ltc.2} parent=63 // pred_region
        _
      $region68: #{gpt2_encoder_layer_with_ltc.2} parent=63 // pred_fallthru
        _
      // Predicated region
      $region69: #{gpt2_encoder_layer_with_ltc.2} parent=63 // pred_check
        %p1153 = pneg %p304
      $region70: #{gpt2_encoder_layer_with_ltc.2} parent=63 // pred_check_branch
        %1155 = sbr.rel (%p1153) target = $region72
      $region71: #{gpt2_encoder_layer_with_ltc.2} parent=63 // pred_region
        _
      $region72: #{gpt2_encoder_layer_with_ltc.2} parent=63 // pred_fallthru
        _
    $region64: #{gpt2_encoder_layer_with_ltc.2} parent=5 // pred_fallthru
      _
    %p1156 = scmp.le.s32.totalorder 2, %s19
    // Predicated region
    $region73: #{gpt2_encoder_layer_with_ltc.2} parent=5 // pred_check
      %p1157 = pneg %p1156
    $region74: #{gpt2_encoder_layer_with_ltc.2} parent=5 // pred_check_branch
      %1159 = sbr.rel (%p1157) target = $region76
    $region75: #{gpt2_encoder_layer_with_ltc.2} parent=5 // pred_region
      %s1160 = ssub.s32 %s19, 2
      // Predicated region
      $region77: #{gpt2_encoder_layer_with_ltc.2} parent=75 // pred_check
        %p1161 = pneg %p284
      $region78: #{gpt2_encoder_layer_with_ltc.2} parent=75 // pred_check_branch
        %1163 = sbr.rel (%p1161) target = $region80
      $region79: #{gpt2_encoder_layer_with_ltc.2} parent=75 // pred_region
        %p1164 = scmp.lt.s32.totalorder %s25, 1
        %s1165 = scalar_select %p1164, %s25, 1
        %s1166 = smul.addr %s1165, 8
        %s1167 = scalar_lea.vmem %s11, %s1166
      $region80: #{gpt2_encoder_layer_with_ltc.2} parent=75 // pred_fallthru
        _
      // Predicated region
      $region81: #{gpt2_encoder_layer_with_ltc.2} parent=75 // pred_check
        %p1168 = pneg %p310
      $region82: #{gpt2_encoder_layer_with_ltc.2} parent=75 // pred_check_branch
        %1170 = sbr.rel (%p1168) target = $region84
      $region83: #{gpt2_encoder_layer_with_ltc.2} parent=75 // pred_region
        %p1171 = scmp.lt.s32.totalorder %s25, 1
        %s1172 = scalar_select %p1171, %s25, 1
        %s1173 = smul.addr %s1172, 8
        %s1174 = scalar_lea.vmem %s12, %s1173
      $region84: #{gpt2_encoder_layer_with_ltc.2} parent=75 // pred_fallthru
        _
    $region76: #{gpt2_encoder_layer_with_ltc.2} parent=5 // pred_fallthru
      _
  $region6: #{gpt2_encoder_layer_with_ltc.2} parent=0 // loop_footer
    %s23 = sadd.s32 1, %s19
  $region7: #{gpt2_encoder_layer_with_ltc.2} parent=0 // loop_footer_branch
    %18 = sbr.rel target = $region3
  $region8: #{gpt2_encoder_layer_with_ltc.2} parent=0 // loop_exit
    _

// kernel: gpt2_encoder_layer_with_ltc.3
$region0: #{gpt2_encoder_layer_with_ltc.3}
  #allocation0 [shape = 'u32[]', space=smem, size = 0x4, offset = 0x4, fixed_abs, tag = 'smem constant byte address 0x4 - core index']
  #allocation1 [shape = 'u32[144,128]{1,0:T(1,128)}', space=vmem, size = 0x12000, scoped, tag = 'internal scratch']
  #allocation2 [shape = 'f32[7,8]{1,0:T(8,128)}', space=vmem, size = 0x1000, scoped, tag = 'scratch operand']
  %s0 = inlined_call_operand.vmem [shape: f32[2,8,32], index: 0, kind: input, shape index: {}]
  %s1 = inlined_call_operand.vmem [shape: f32[2,7,8], index: 1, kind: input, shape index: {}]
  %s2 = inlined_call_operand.vmem [shape: f32[4,7,7], index: 2, kind: input, shape index: {}]
  %s3 = inlined_call_operand.vmem [shape: f32[4,7,7], index: 3, kind: input, shape index: {}]
  %s4 = inlined_call_operand.vmem [shape: f32[5,7,1], index: 4, kind: input, shape index: {}]
  %s5 = inlined_call_operand.vmem [shape: f32[7,32], index: 5, kind: input, shape index: {}]
  %s6 = inlined_call_operand.vmem [shape: f32[1,32], index: 6, kind: input, shape index: {}]
  %s7 = inlined_call_operand.vmem [shape: f32[2,8,32], index: 7, kind: output, shape index: {}]
  %s8 = sld [smem:[#allocation0]]
  $region42: #{gpt2_encoder_layer_with_ltc.3} parent=0
    _
  %s10 = ssub.s32 1, %s8
  %s11 = scalar_select 0, %s10, %s8
  // Predicated region
  $region2: #{gpt2_encoder_layer_with_ltc.3} parent=0 // pred_check
    _
  $region3: #{gpt2_encoder_layer_with_ltc.3} parent=0 // pred_check_branch
    %13 = sbr.rel (0) target = $region5
  $region4: #{gpt2_encoder_layer_with_ltc.3} parent=0 // pred_region
    _
  $region5: #{gpt2_encoder_layer_with_ltc.3} parent=0 // pred_fallthru
    _
  // Predicated region
  $region6: #{gpt2_encoder_layer_with_ltc.3} parent=0 // pred_check
    _
  $region7: #{gpt2_encoder_layer_with_ltc.3} parent=0 // pred_check_branch
    %15 = sbr.rel (0) target = $region9
  $region8: #{gpt2_encoder_layer_with_ltc.3} parent=0 // pred_region
    _
  $region9: #{gpt2_encoder_layer_with_ltc.3} parent=0 // pred_fallthru
    _
  // Predicated region
  $region10: #{gpt2_encoder_layer_with_ltc.3} parent=0 // pred_check
    _
  $region11: #{gpt2_encoder_layer_with_ltc.3} parent=0 // pred_check_branch
    %17 = sbr.rel (0) target = $region13
  $region12: #{gpt2_encoder_layer_with_ltc.3} parent=0 // pred_region
    _
  $region13: #{gpt2_encoder_layer_with_ltc.3} parent=0 // pred_fallthru
    _
  // Predicated region
  $region14: #{gpt2_encoder_layer_with_ltc.3} parent=0 // pred_check
    _
  $region15: #{gpt2_encoder_layer_with_ltc.3} parent=0 // pred_check_branch
    %19 = sbr.rel (0) target = $region17
  $region16: #{gpt2_encoder_layer_with_ltc.3} parent=0 // pred_region
    _
  $region17: #{gpt2_encoder_layer_with_ltc.3} parent=0 // pred_fallthru
    _
  // Predicated region
  $region18: #{gpt2_encoder_layer_with_ltc.3} parent=0 // pred_check
    _
  $region19: #{gpt2_encoder_layer_with_ltc.3} parent=0 // pred_check_branch
    %21 = sbr.rel (0) target = $region21
  $region20: #{gpt2_encoder_layer_with_ltc.3} parent=0 // pred_region
    _
  $region21: #{gpt2_encoder_layer_with_ltc.3} parent=0 // pred_fallthru
    _
  // Predicated region
  $region22: #{gpt2_encoder_layer_with_ltc.3} parent=0 // pred_check
    _
  $region23: #{gpt2_encoder_layer_with_ltc.3} parent=0 // pred_check_branch
    %23 = sbr.rel (0) target = $region25
  $region24: #{gpt2_encoder_layer_with_ltc.3} parent=0 // pred_region
    _
  $region25: #{gpt2_encoder_layer_with_ltc.3} parent=0 // pred_fallthru
    _
  // Predicated region
  $region26: #{gpt2_encoder_layer_with_ltc.3} parent=0 // pred_check
    _
  $region27: #{gpt2_encoder_layer_with_ltc.3} parent=0 // pred_check_branch
    %25 = sbr.rel (0) target = $region29
  $region28: #{gpt2_encoder_layer_with_ltc.3} parent=0 // pred_region
    _
  $region29: #{gpt2_encoder_layer_with_ltc.3} parent=0 // pred_fallthru
    _
  %p26 = scmp.eq.s32.totalorder 0, 0
  // Predicated region
  $region30: #{gpt2_encoder_layer_with_ltc.3} parent=0 // pred_check
    %p27 = pneg %p26
  $region31: #{gpt2_encoder_layer_with_ltc.3} parent=0 // pred_check_branch
    %29 = sbr.rel (%p27) target = $region33
  $region32: #{gpt2_encoder_layer_with_ltc.3} parent=0 // pred_region
    %vm30 = vcmask 63488
    %31 = vst.msk [vmem:[#allocation2] sm:$0x7f] %vm30, 0.0
  $region33: #{gpt2_encoder_layer_with_ltc.3} parent=0 // pred_fallthru
    _
  %v32 = vld [vmem:[%s2] sm:$0x7f]
  %v33 = vld [vmem:[%s2 + $0x8] sm:$0x7f]
  %v34 = vld [vmem:[%s2 + $0x10] sm:$0x7f]
  %v35 = vld [vmem:[%s2 + $0x18] sm:$0x7f]
  %v36 = vld [vmem:[%s3] sm:$0x7f]
  %v37 = vld [vmem:[%s3 + $0x8] sm:$0x7f]
  %v38 = vld [vmem:[%s3 + $0x10] sm:$0x7f]
  %v39 = vld [vmem:[%s3 + $0x18] sm:$0x7f]
  %v40 = vld [vmem:[%s4] sm:$0x7f]
  %v41 = vld [vmem:[%s4 + $0x8] sm:$0x7f]
  %v42 = vld [vmem:[%s4 + $0x10] sm:$0x7f]
  %v43 = vld [vmem:[%s4 + $0x18] sm:$0x7f]
  %v44 = vld [vmem:[%s4 + $0x20] sm:$0x7f]
  %v45 = vmul.f32 %v40, %v41
  %v46 = vadd.f32 %v42, %v40
  %v47 = vld [vmem:[#allocation2] sm:$0x7f]
  %v48 = vld [vmem:[%s1] sm:$0x7f]
  %50 = vset.pattern.permute.xlu0 0
  %51 = vperm.xlu0 %50, %v43
  %v52 = vpop.permute.xlu0 %51
  %v54 = vmul.f32 %v48, %v52
  %56 = vset.pattern.permute.xlu0 0
  %57 = vperm.xlu0 %56, %v44
  %v58 = vpop.permute.xlu0 %57
  %v60 = vadd.f32 %v54, %v58
  %v61 = vlaneseq
  %v62 = vshrl.u32 %v61, 7
  %v63 = vsub.s32 0, %v62
  %v64 = vrot.slane %v60, %v63
  %66 = vset.pattern.permute.xlu0 0
  %67 = vperm.xlu0 %66, %v38
  %v68 = vpop.permute.xlu0 %67
  %v70 = vsub.f32 %v64, %v68
  %72 = vset.pattern.permute.xlu0 0
  %73 = vperm.xlu0 %72, %v39
  %v74 = vpop.permute.xlu0 %73
  %v76 = vmul.f32 %v74, %v70
  %v77 = vmul.f32 %v76, 0.5
  %v78 = vtanh.pop %v77
  %v79 = vadd.f32 %v78, 1.0
  %v80 = vmul.f32 %v79, 0.5
  %82 = vset.pattern.permute.xlu0 0
  %83 = vperm.xlu0 %82, %v36
  %v84 = vpop.permute.xlu0 %83
  %v86 = vmul.f32 %v84, %v80
  %88 = vset.pattern.permute.xlu0 0
  %89 = vperm.xlu0 %88, %v37
  %v90 = vpop.permute.xlu0 %89
  %v92 = vmul.f32 %v86, %v90
  %v93 = vadd.f32 %v92, 0.0
  %v94 = vadd.f32 %v86, 0.0
  %v95 = vlaneseq
  %v96 = vshrl.u32 %v95, 7
  %v97 = vsub.s32 1, %v96
  %v98 = vrot.slane %v60, %v97
  %99 = vset.pattern.permute.xlu0 1
  %100 = vperm.xlu0 %99, %v38
  %v101 = vpop.permute.xlu0 %100
  %v103 = vsub.f32 %v98, %v101
  %104 = vset.pattern.permute.xlu0 1
  %105 = vperm.xlu0 %104, %v39
  %v106 = vpop.permute.xlu0 %105
  %v108 = vmul.f32 %v106, %v103
  %v109 = vmul.f32 %v108, 0.5
  %v110 = vtanh.pop %v109
  %v111 = vadd.f32 %v110, 1.0
  %v112 = vmul.f32 %v111, 0.5
  %113 = vset.pattern.permute.xlu0 1
  %114 = vperm.xlu0 %113, %v36
  %v115 = vpop.permute.xlu0 %114
  %v117 = vmul.f32 %v115, %v112
  %118 = vset.pattern.permute.xlu0 1
  %119 = vperm.xlu0 %118, %v37
  %v120 = vpop.permute.xlu0 %119
  %v122 = vmul.f32 %v117, %v120
  %v123 = vadd.f32 %v93, %v122
  %v124 = vadd.f32 %v94, %v117
  %v125 = vlaneseq
  %v126 = vshrl.u32 %v125, 7
  %v127 = vsub.s32 2, %v126
  %v128 = vrot.slane %v60, %v127
  %129 = vset.pattern.permute.xlu0 2
  %130 = vperm.xlu0 %129, %v38
  %v131 = vpop.permute.xlu0 %130
  %v133 = vsub.f32 %v128, %v131
  %134 = vset.pattern.permute.xlu0 2
  %135 = vperm.xlu0 %134, %v39
  %v136 = vpop.permute.xlu0 %135
  %v138 = vmul.f32 %v136, %v133
  %v139 = vmul.f32 %v138, 0.5
  %v140 = vtanh.pop %v139
  %v141 = vadd.f32 %v140, 1.0
  %v142 = vmul.f32 %v141, 0.5
  %143 = vset.pattern.permute.xlu0 2
  %144 = vperm.xlu0 %143, %v36
  %v145 = vpop.permute.xlu0 %144
  %v147 = vmul.f32 %v145, %v142
  %148 = vset.pattern.permute.xlu0 2
  %149 = vperm.xlu0 %148, %v37
  %v150 = vpop.permute.xlu0 %149
  %v152 = vmul.f32 %v147, %v150
  %v153 = vadd.f32 %v123, %v152
  %v154 = vadd.f32 %v124, %v147
  %v155 = vlaneseq
  %v156 = vshrl.u32 %v155, 7
  %v157 = vsub.s32 3, %v156
  %v158 = vrot.slane %v60, %v157
  %159 = vset.pattern.permute.xlu0 3
  %160 = vperm.xlu0 %159, %v38
  %v161 = vpop.permute.xlu0 %160
  %v163 = vsub.f32 %v158, %v161
  %164 = vset.pattern.permute.xlu0 3
  %165 = vperm.xlu0 %164, %v39
  %v166 = vpop.permute.xlu0 %165
  %v168 = vmul.f32 %v166, %v163
  %v169 = vmul.f32 %v168, 0.5
  %v170 = vtanh.pop %v169
  %v171 = vadd.f32 %v170, 1.0
  %v172 = vmul.f32 %v171, 0.5
  %173 = vset.pattern.permute.xlu0 3
  %174 = vperm.xlu0 %173, %v36
  %v175 = vpop.permute.xlu0 %174
  %v177 = vmul.f32 %v175, %v172
  %178 = vset.pattern.permute.xlu0 3
  %179 = vperm.xlu0 %178, %v37
  %v180 = vpop.permute.xlu0 %179
  %v182 = vmul.f32 %v177, %v180
  %v183 = vadd.f32 %v153, %v182
  %v184 = vadd.f32 %v154, %v177
  %v185 = vlaneseq
  %v186 = vshrl.u32 %v185, 7
  %v187 = vsub.s32 4, %v186
  %v188 = vrot.slane %v60, %v187
  %189 = vset.pattern.permute.xlu0 4
  %190 = vperm.xlu0 %189, %v38
  %v191 = vpop.permute.xlu0 %190
  %v193 = vsub.f32 %v188, %v191
  %194 = vset.pattern.permute.xlu0 4
  %195 = vperm.xlu0 %194, %v39
  %v196 = vpop.permute.xlu0 %195
  %v198 = vmul.f32 %v196, %v193
  %v199 = vmul.f32 %v198, 0.5
  %v200 = vtanh.pop %v199
  %v201 = vadd.f32 %v200, 1.0
  %v202 = vmul.f32 %v201, 0.5
  %203 = vset.pattern.permute.xlu0 4
  %204 = vperm.xlu0 %203, %v36
  %v205 = vpop.permute.xlu0 %204
  %v207 = vmul.f32 %v205, %v202
  %208 = vset.pattern.permute.xlu0 4
  %209 = vperm.xlu0 %208, %v37
  %v210 = vpop.permute.xlu0 %209
  %v212 = vmul.f32 %v207, %v210
  %v213 = vadd.f32 %v183, %v212
  %v214 = vadd.f32 %v184, %v207
  %v215 = vlaneseq
  %v216 = vshrl.u32 %v215, 7
  %v217 = vsub.s32 5, %v216
  %v218 = vrot.slane %v60, %v217
  %219 = vset.pattern.permute.xlu0 5
  %220 = vperm.xlu0 %219, %v38
  %v221 = vpop.permute.xlu0 %220
  %v223 = vsub.f32 %v218, %v221
  %224 = vset.pattern.permute.xlu0 5
  %225 = vperm.xlu0 %224, %v39
  %v226 = vpop.permute.xlu0 %225
  %v228 = vmul.f32 %v226, %v223
  %v229 = vmul.f32 %v228, 0.5
  %v230 = vtanh.pop %v229
  %v231 = vadd.f32 %v230, 1.0
  %v232 = vmul.f32 %v231, 0.5
  %233 = vset.pattern.permute.xlu0 5
  %234 = vperm.xlu0 %233, %v36
  %v235 = vpop.permute.xlu0 %234
  %v237 = vmul.f32 %v235, %v232
  %238 = vset.pattern.permute.xlu0 5
  %239 = vperm.xlu0 %238, %v37
  %v240 = vpop.permute.xlu0 %239
  %v242 = vmul.f32 %v237, %v240
  %v243 = vadd.f32 %v213, %v242
  %v244 = vadd.f32 %v214, %v237
  %v245 = vlaneseq
  %v246 = vshrl.u32 %v245, 7
  %v247 = vsub.s32 6, %v246
  %v248 = vrot.slane %v60, %v247
  %249 = vset.pattern.permute.xlu0 6
  %250 = vperm.xlu0 %249, %v38
  %v251 = vpop.permute.xlu0 %250
  %v253 = vsub.f32 %v248, %v251
  %254 = vset.pattern.permute.xlu0 6
  %255 = vperm.xlu0 %254, %v39
  %v256 = vpop.permute.xlu0 %255
  %v258 = vmul.f32 %v256, %v253
  %v259 = vmul.f32 %v258, 0.5
  %v260 = vtanh.pop %v259
  %v261 = vadd.f32 %v260, 1.0
  %v262 = vmul.f32 %v261, 0.5
  %263 = vset.pattern.permute.xlu0 6
  %264 = vperm.xlu0 %263, %v36
  %v265 = vpop.permute.xlu0 %264
  %v267 = vmul.f32 %v265, %v262
  %268 = vset.pattern.permute.xlu0 6
  %269 = vperm.xlu0 %268, %v37
  %v270 = vpop.permute.xlu0 %269
  %v272 = vmul.f32 %v267, %v270
  %v273 = vadd.f32 %v243, %v272
  %v274 = vadd.f32 %v244, %v267
  %v275 = vlaneseq
  %v276 = vshrl.u32 %v275, 7
  %v277 = vsub.s32 0, %v276
  %v278 = vrot.slane %v47, %v277
  %280 = vset.pattern.permute.xlu0 0
  %281 = vperm.xlu0 %280, %v34
  %v282 = vpop.permute.xlu0 %281
  %v284 = vsub.f32 %v278, %v282
  %286 = vset.pattern.permute.xlu0 0
  %287 = vperm.xlu0 %286, %v35
  %v288 = vpop.permute.xlu0 %287
  %v290 = vmul.f32 %v288, %v284
  %v291 = vmul.f32 %v290, 0.5
  %v292 = vtanh.pop %v291
  %v293 = vadd.f32 %v292, 1.0
  %v294 = vmul.f32 %v293, 0.5
  %296 = vset.pattern.permute.xlu0 0
  %297 = vperm.xlu0 %296, %v32
  %v298 = vpop.permute.xlu0 %297
  %v300 = vmul.f32 %v298, %v294
  %302 = vset.pattern.permute.xlu0 0
  %303 = vperm.xlu0 %302, %v33
  %v304 = vpop.permute.xlu0 %303
  %v306 = vmul.f32 %v300, %v304
  %v307 = vadd.f32 %v273, %v306
  %v308 = vadd.f32 %v274, %v300
  %v309 = vlaneseq
  %v310 = vshrl.u32 %v309, 7
  %v311 = vsub.s32 1, %v310
  %v312 = vrot.slane %v47, %v311
  %313 = vset.pattern.permute.xlu0 1
  %314 = vperm.xlu0 %313, %v34
  %v315 = vpop.permute.xlu0 %314
  %v317 = vsub.f32 %v312, %v315
  %318 = vset.pattern.permute.xlu0 1
  %319 = vperm.xlu0 %318, %v35
  %v320 = vpop.permute.xlu0 %319
  %v322 = vmul.f32 %v320, %v317
  %v323 = vmul.f32 %v322, 0.5
  %v324 = vtanh.pop %v323
  %v325 = vadd.f32 %v324, 1.0
  %v326 = vmul.f32 %v325, 0.5
  %327 = vset.pattern.permute.xlu0 1
  %328 = vperm.xlu0 %327, %v32
  %v329 = vpop.permute.xlu0 %328
  %v331 = vmul.f32 %v329, %v326
  %332 = vset.pattern.permute.xlu0 1
  %333 = vperm.xlu0 %332, %v33
  %v334 = vpop.permute.xlu0 %333
  %v336 = vmul.f32 %v331, %v334
  %v337 = vadd.f32 %v307, %v336
  %v338 = vadd.f32 %v308, %v331
  %v339 = vlaneseq
  %v340 = vshrl.u32 %v339, 7
  %v341 = vsub.s32 2, %v340
  %v342 = vrot.slane %v47, %v341
  %343 = vset.pattern.permute.xlu0 2
  %344 = vperm.xlu0 %343, %v34
  %v345 = vpop.permute.xlu0 %344
  %v347 = vsub.f32 %v342, %v345
  %348 = vset.pattern.permute.xlu0 2
  %349 = vperm.xlu0 %348, %v35
  %v350 = vpop.permute.xlu0 %349
  %v352 = vmul.f32 %v350, %v347
  %v353 = vmul.f32 %v352, 0.5
  %v354 = vtanh.pop %v353
  %v355 = vadd.f32 %v354, 1.0
  %v356 = vmul.f32 %v355, 0.5
  %357 = vset.pattern.permute.xlu0 2
  %358 = vperm.xlu0 %357, %v32
  %v359 = vpop.permute.xlu0 %358
  %v361 = vmul.f32 %v359, %v356
  %362 = vset.pattern.permute.xlu0 2
  %363 = vperm.xlu0 %362, %v33
  %v364 = vpop.permute.xlu0 %363
  %v366 = vmul.f32 %v361, %v364
  %v367 = vadd.f32 %v337, %v366
  %v368 = vadd.f32 %v338, %v361
  %v369 = vlaneseq
  %v370 = vshrl.u32 %v369, 7
  %v371 = vsub.s32 3, %v370
  %v372 = vrot.slane %v47, %v371
  %373 = vset.pattern.permute.xlu0 3
  %374 = vperm.xlu0 %373, %v34
  %v375 = vpop.permute.xlu0 %374
  %v377 = vsub.f32 %v372, %v375
  %378 = vset.pattern.permute.xlu0 3
  %379 = vperm.xlu0 %378, %v35
  %v380 = vpop.permute.xlu0 %379
  %v382 = vmul.f32 %v380, %v377
  %v383 = vmul.f32 %v382, 0.5
  %v384 = vtanh.pop %v383
  %v385 = vadd.f32 %v384, 1.0
  %v386 = vmul.f32 %v385, 0.5
  %387 = vset.pattern.permute.xlu0 3
  %388 = vperm.xlu0 %387, %v32
  %v389 = vpop.permute.xlu0 %388
  %v391 = vmul.f32 %v389, %v386
  %392 = vset.pattern.permute.xlu0 3
  %393 = vperm.xlu0 %392, %v33
  %v394 = vpop.permute.xlu0 %393
  %v396 = vmul.f32 %v391, %v394
  %v397 = vadd.f32 %v367, %v396
  %v398 = vadd.f32 %v368, %v391
  %v399 = vlaneseq
  %v400 = vshrl.u32 %v399, 7
  %v401 = vsub.s32 4, %v400
  %v402 = vrot.slane %v47, %v401
  %403 = vset.pattern.permute.xlu0 4
  %404 = vperm.xlu0 %403, %v34
  %v405 = vpop.permute.xlu0 %404
  %v407 = vsub.f32 %v402, %v405
  %408 = vset.pattern.permute.xlu0 4
  %409 = vperm.xlu0 %408, %v35
  %v410 = vpop.permute.xlu0 %409
  %v412 = vmul.f32 %v410, %v407
  %v413 = vmul.f32 %v412, 0.5
  %v414 = vtanh.pop %v413
  %v415 = vadd.f32 %v414, 1.0
  %v416 = vmul.f32 %v415, 0.5
  %417 = vset.pattern.permute.xlu0 4
  %418 = vperm.xlu0 %417, %v32
  %v419 = vpop.permute.xlu0 %418
  %v421 = vmul.f32 %v419, %v416
  %422 = vset.pattern.permute.xlu0 4
  %423 = vperm.xlu0 %422, %v33
  %v424 = vpop.permute.xlu0 %423
  %v426 = vmul.f32 %v421, %v424
  %v427 = vadd.f32 %v397, %v426
  %v428 = vadd.f32 %v398, %v421
  %v429 = vlaneseq
  %v430 = vshrl.u32 %v429, 7
  %v431 = vsub.s32 5, %v430
  %v432 = vrot.slane %v47, %v431
  %433 = vset.pattern.permute.xlu0 5
  %434 = vperm.xlu0 %433, %v34
  %v435 = vpop.permute.xlu0 %434
  %v437 = vsub.f32 %v432, %v435
  %438 = vset.pattern.permute.xlu0 5
  %439 = vperm.xlu0 %438, %v35
  %v440 = vpop.permute.xlu0 %439
  %v442 = vmul.f32 %v440, %v437
  %v443 = vmul.f32 %v442, 0.5
  %v444 = vtanh.pop %v443
  %v445 = vadd.f32 %v444, 1.0
  %v446 = vmul.f32 %v445, 0.5
  %447 = vset.pattern.permute.xlu0 5
  %448 = vperm.xlu0 %447, %v32
  %v449 = vpop.permute.xlu0 %448
  %v451 = vmul.f32 %v449, %v446
  %452 = vset.pattern.permute.xlu0 5
  %453 = vperm.xlu0 %452, %v33
  %v454 = vpop.permute.xlu0 %453
  %v456 = vmul.f32 %v451, %v454
  %v457 = vadd.f32 %v427, %v456
  %v458 = vadd.f32 %v428, %v451
  %v459 = vlaneseq
  %v460 = vshrl.u32 %v459, 7
  %v461 = vsub.s32 6, %v460
  %v462 = vrot.slane %v47, %v461
  %463 = vset.pattern.permute.xlu0 6
  %464 = vperm.xlu0 %463, %v34
  %v465 = vpop.permute.xlu0 %464
  %v467 = vsub.f32 %v462, %v465
  %468 = vset.pattern.permute.xlu0 6
  %469 = vperm.xlu0 %468, %v35
  %v470 = vpop.permute.xlu0 %469
  %v472 = vmul.f32 %v470, %v467
  %v473 = vmul.f32 %v472, 0.5
  %v474 = vtanh.pop %v473
  %v475 = vadd.f32 %v474, 1.0
  %v476 = vmul.f32 %v475, 0.5
  %477 = vset.pattern.permute.xlu0 6
  %478 = vperm.xlu0 %477, %v32
  %v479 = vpop.permute.xlu0 %478
  %v481 = vmul.f32 %v479, %v476
  %482 = vset.pattern.permute.xlu0 6
  %483 = vperm.xlu0 %482, %v33
  %v484 = vpop.permute.xlu0 %483
  %v486 = vmul.f32 %v481, %v484
  %v487 = vadd.f32 %v457, %v486
  %v488 = vadd.f32 %v458, %v481
  %490 = vset.pattern.permute.xlu0 0
  %491 = vperm.xlu0 %490, %v42
  %v492 = vpop.permute.xlu0 %491
  %v494 = vmul.f32 %v492, %v47
  %496 = vset.pattern.permute.xlu0 0
  %497 = vperm.xlu0 %496, %v45
  %v498 = vpop.permute.xlu0 %497
  %v500 = vadd.f32 %v494, %v498
  %v501 = vadd.f32 %v500, %v487
  %503 = vset.pattern.permute.xlu0 0
  %504 = vperm.xlu0 %503, %v46
  %v505 = vpop.permute.xlu0 %504
  %v507 = vadd.f32 %v505, %v488
  %v508 = vadd.f32 %v507, 1e-08
  %v509 = vrcp.pop %v508
  %v510 = vmul.f32 %v501, %v509
  %v511 = vlaneseq
  %v512 = vshrl.u32 %v511, 7
  %v513 = vsub.s32 0, %v512
  %v514 = vrot.slane %v510, %v513
  %v515 = vsub.f32 %v514, %v282
  %v516 = vmul.f32 %v288, %v515
  %v517 = vmul.f32 %v516, 0.5
  %v518 = vtanh.pop %v517
  %v519 = vadd.f32 %v518, 1.0
  %v520 = vmul.f32 %v519, 0.5
  %v521 = vmul.f32 %v298, %v520
  %v522 = vmul.f32 %v521, %v304
  %v523 = vadd.f32 %v273, %v522
  %v524 = vadd.f32 %v274, %v521
  %v525 = vlaneseq
  %v526 = vshrl.u32 %v525, 7
  %v527 = vsub.s32 1, %v526
  %v528 = vrot.slane %v510, %v527
  %v529 = vsub.f32 %v528, %v315
  %v530 = vmul.f32 %v320, %v529
  %v531 = vmul.f32 %v530, 0.5
  %v532 = vtanh.pop %v531
  %v533 = vadd.f32 %v532, 1.0
  %v534 = vmul.f32 %v533, 0.5
  %v535 = vmul.f32 %v329, %v534
  %v536 = vmul.f32 %v535, %v334
  %v537 = vadd.f32 %v523, %v536
  %v538 = vadd.f32 %v524, %v535
  %v539 = vlaneseq
  %v540 = vshrl.u32 %v539, 7
  %v541 = vsub.s32 2, %v540
  %v542 = vrot.slane %v510, %v541
  %v543 = vsub.f32 %v542, %v345
  %v544 = vmul.f32 %v350, %v543
  %v545 = vmul.f32 %v544, 0.5
  %v546 = vtanh.pop %v545
  %v547 = vadd.f32 %v546, 1.0
  %v548 = vmul.f32 %v547, 0.5
  %v549 = vmul.f32 %v359, %v548
  %v550 = vmul.f32 %v549, %v364
  %v551 = vadd.f32 %v537, %v550
  %v552 = vadd.f32 %v538, %v549
  %v553 = vlaneseq
  %v554 = vshrl.u32 %v553, 7
  %v555 = vsub.s32 3, %v554
  %v556 = vrot.slane %v510, %v555
  %v557 = vsub.f32 %v556, %v375
  %v558 = vmul.f32 %v380, %v557
  %v559 = vmul.f32 %v558, 0.5
  %v560 = vtanh.pop %v559
  %v561 = vadd.f32 %v560, 1.0
  %v562 = vmul.f32 %v561, 0.5
  %v563 = vmul.f32 %v389, %v562
  %v564 = vmul.f32 %v563, %v394
  %v565 = vadd.f32 %v551, %v564
  %v566 = vadd.f32 %v552, %v563
  %v567 = vlaneseq
  %v568 = vshrl.u32 %v567, 7
  %v569 = vsub.s32 4, %v568
  %v570 = vrot.slane %v510, %v569
  %v571 = vsub.f32 %v570, %v405
  %v572 = vmul.f32 %v410, %v571
  %v573 = vmul.f32 %v572, 0.5
  %v574 = vtanh.pop %v573
  %v575 = vadd.f32 %v574, 1.0
  %v576 = vmul.f32 %v575, 0.5
  %v577 = vmul.f32 %v419, %v576
  %v578 = vmul.f32 %v577, %v424
  %v579 = vadd.f32 %v565, %v578
  %v580 = vadd.f32 %v566, %v577
  %v581 = vlaneseq
  %v582 = vshrl.u32 %v581, 7
  %v583 = vsub.s32 5, %v582
  %v584 = vrot.slane %v510, %v583
  %v585 = vsub.f32 %v584, %v435
  %v586 = vmul.f32 %v440, %v585
  %v587 = vmul.f32 %v586, 0.5
  %v588 = vtanh.pop %v587
  %v589 = vadd.f32 %v588, 1.0
  %v590 = vmul.f32 %v589, 0.5
  %v591 = vmul.f32 %v449, %v590
  %v592 = vmul.f32 %v591, %v454
  %v593 = vadd.f32 %v579, %v592
  %v594 = vadd.f32 %v580, %v591
  %v595 = vlaneseq
  %v596 = vshrl.u32 %v595, 7
  %v597 = vsub.s32 6, %v596
  %v598 = vrot.slane %v510, %v597
  %v599 = vsub.f32 %v598, %v465
  %v600 = vmul.f32 %v470, %v599
  %v601 = vmul.f32 %v600, 0.5
  %v602 = vtanh.pop %v601
  %v603 = vadd.f32 %v602, 1.0
  %v604 = vmul.f32 %v603, 0.5
  %v605 = vmul.f32 %v479, %v604
  %v606 = vmul.f32 %v605, %v484
  %v607 = vadd.f32 %v593, %v606
  %v608 = vadd.f32 %v594, %v605
  %v609 = vmul.f32 %v492, %v510
  %v610 = vadd.f32 %v609, %v498
  %v611 = vadd.f32 %v610, %v607
  %v612 = vadd.f32 %v505, %v608
  %v613 = vadd.f32 %v612, 1e-08
  %v614 = vrcp.pop %v613
  %v615 = vmul.f32 %v611, %v614
  %v616 = vlaneseq
  %v617 = vshrl.u32 %v616, 7
  %v618 = vsub.s32 0, %v617
  %v619 = vrot.slane %v615, %v618
  %v620 = vsub.f32 %v619, %v282
  %v621 = vmul.f32 %v288, %v620
  %v622 = vmul.f32 %v621, 0.5
  %v623 = vtanh.pop %v622
  %v624 = vadd.f32 %v623, 1.0
  %v625 = vmul.f32 %v624, 0.5
  %v626 = vmul.f32 %v298, %v625
  %v627 = vmul.f32 %v626, %v304
  %v628 = vadd.f32 %v273, %v627
  %v629 = vadd.f32 %v274, %v626
  %v630 = vlaneseq
  %v631 = vshrl.u32 %v630, 7
  %v632 = vsub.s32 1, %v631
  %v633 = vrot.slane %v615, %v632
  %v634 = vsub.f32 %v633, %v315
  %v635 = vmul.f32 %v320, %v634
  %v636 = vmul.f32 %v635, 0.5
  %v637 = vtanh.pop %v636
  %v638 = vadd.f32 %v637, 1.0
  %v639 = vmul.f32 %v638, 0.5
  %v640 = vmul.f32 %v329, %v639
  %v641 = vmul.f32 %v640, %v334
  %v642 = vadd.f32 %v628, %v641
  %v643 = vadd.f32 %v629, %v640
  %v644 = vlaneseq
  %v645 = vshrl.u32 %v644, 7
  %v646 = vsub.s32 2, %v645
  %v647 = vrot.slane %v615, %v646
  %v648 = vsub.f32 %v647, %v345
  %v649 = vmul.f32 %v350, %v648
  %v650 = vmul.f32 %v649, 0.5
  %v651 = vtanh.pop %v650
  %v652 = vadd.f32 %v651, 1.0
  %v653 = vmul.f32 %v652, 0.5
  %v654 = vmul.f32 %v359, %v653
  %v655 = vmul.f32 %v654, %v364
  %v656 = vadd.f32 %v642, %v655
  %v657 = vadd.f32 %v643, %v654
  %v658 = vlaneseq
  %v659 = vshrl.u32 %v658, 7
  %v660 = vsub.s32 3, %v659
  %v661 = vrot.slane %v615, %v660
  %v662 = vsub.f32 %v661, %v375
  %v663 = vmul.f32 %v380, %v662
  %v664 = vmul.f32 %v663, 0.5
  %v665 = vtanh.pop %v664
  %v666 = vadd.f32 %v665, 1.0
  %v667 = vmul.f32 %v666, 0.5
  %v668 = vmul.f32 %v389, %v667
  %v669 = vmul.f32 %v668, %v394
  %v670 = vadd.f32 %v656, %v669
  %v671 = vadd.f32 %v657, %v668
  %v672 = vlaneseq
  %v673 = vshrl.u32 %v672, 7
  %v674 = vsub.s32 4, %v673
  %v675 = vrot.slane %v615, %v674
  %v676 = vsub.f32 %v675, %v405
  %v677 = vmul.f32 %v410, %v676
  %v678 = vmul.f32 %v677, 0.5
  %v679 = vtanh.pop %v678
  %v680 = vadd.f32 %v679, 1.0
  %v681 = vmul.f32 %v680, 0.5
  %v682 = vmul.f32 %v419, %v681
  %v683 = vmul.f32 %v682, %v424
  %v684 = vadd.f32 %v670, %v683
  %v685 = vadd.f32 %v671, %v682
  %v686 = vlaneseq
  %v687 = vshrl.u32 %v686, 7
  %v688 = vsub.s32 5, %v687
  %v689 = vrot.slane %v615, %v688
  %v690 = vsub.f32 %v689, %v435
  %v691 = vmul.f32 %v440, %v690
  %v692 = vmul.f32 %v691, 0.5
  %v693 = vtanh.pop %v692
  %v694 = vadd.f32 %v693, 1.0
  %v695 = vmul.f32 %v694, 0.5
  %v696 = vmul.f32 %v449, %v695
  %v697 = vmul.f32 %v696, %v454
  %v698 = vadd.f32 %v684, %v697
  %v699 = vadd.f32 %v685, %v696
  %v700 = vlaneseq
  %v701 = vshrl.u32 %v700, 7
  %v702 = vsub.s32 6, %v701
  %v703 = vrot.slane %v615, %v702
  %v704 = vsub.f32 %v703, %v465
  %v705 = vmul.f32 %v470, %v704
  %v706 = vmul.f32 %v705, 0.5
  %v707 = vtanh.pop %v706
  %v708 = vadd.f32 %v707, 1.0
  %v709 = vmul.f32 %v708, 0.5
  %v710 = vmul.f32 %v479, %v709
  %v711 = vmul.f32 %v710, %v484
  %v712 = vadd.f32 %v698, %v711
  %v713 = vadd.f32 %v699, %v710
  %v714 = vmul.f32 %v492, %v615
  %v715 = vadd.f32 %v714, %v498
  %v716 = vadd.f32 %v715, %v712
  %v717 = vadd.f32 %v505, %v713
  %v718 = vadd.f32 %v717, 1e-08
  %v719 = vrcp.pop %v718
  %v720 = vmul.f32 %v716, %v719
  %v721 = vlaneseq
  %v722 = vshrl.u32 %v721, 7
  %v723 = vsub.s32 0, %v722
  %v724 = vrot.slane %v720, %v723
  %v725 = vsub.f32 %v724, %v282
  %v726 = vmul.f32 %v288, %v725
  %v727 = vmul.f32 %v726, 0.5
  %v728 = vtanh.pop %v727
  %v729 = vadd.f32 %v728, 1.0
  %v730 = vmul.f32 %v729, 0.5
  %v731 = vmul.f32 %v298, %v730
  %v732 = vmul.f32 %v731, %v304
  %v733 = vadd.f32 %v273, %v732
  %v734 = vadd.f32 %v274, %v731
  %v735 = vlaneseq
  %v736 = vshrl.u32 %v735, 7
  %v737 = vsub.s32 1, %v736
  %v738 = vrot.slane %v720, %v737
  %v739 = vsub.f32 %v738, %v315
  %v740 = vmul.f32 %v320, %v739
  %v741 = vmul.f32 %v740, 0.5
  %v742 = vtanh.pop %v741
  %v743 = vadd.f32 %v742, 1.0
  %v744 = vmul.f32 %v743, 0.5
  %v745 = vmul.f32 %v329, %v744
  %v746 = vmul.f32 %v745, %v334
  %v747 = vadd.f32 %v733, %v746
  %v748 = vadd.f32 %v734, %v745
  %v749 = vlaneseq
  %v750 = vshrl.u32 %v749, 7
  %v751 = vsub.s32 2, %v750
  %v752 = vrot.slane %v720, %v751
  %v753 = vsub.f32 %v752, %v345
  %v754 = vmul.f32 %v350, %v753
  %v755 = vmul.f32 %v754, 0.5
  %v756 = vtanh.pop %v755
  %v757 = vadd.f32 %v756, 1.0
  %v758 = vmul.f32 %v757, 0.5
  %v759 = vmul.f32 %v359, %v758
  %v760 = vmul.f32 %v759, %v364
  %v761 = vadd.f32 %v747, %v760
  %v762 = vadd.f32 %v748, %v759
  %v763 = vlaneseq
  %v764 = vshrl.u32 %v763, 7
  %v765 = vsub.s32 3, %v764
  %v766 = vrot.slane %v720, %v765
  %v767 = vsub.f32 %v766, %v375
  %v768 = vmul.f32 %v380, %v767
  %v769 = vmul.f32 %v768, 0.5
  %v770 = vtanh.pop %v769
  %v771 = vadd.f32 %v770, 1.0
  %v772 = vmul.f32 %v771, 0.5
  %v773 = vmul.f32 %v389, %v772
  %v774 = vmul.f32 %v773, %v394
  %v775 = vadd.f32 %v761, %v774
  %v776 = vadd.f32 %v762, %v773
  %v777 = vlaneseq
  %v778 = vshrl.u32 %v777, 7
  %v779 = vsub.s32 4, %v778
  %v780 = vrot.slane %v720, %v779
  %v781 = vsub.f32 %v780, %v405
  %v782 = vmul.f32 %v410, %v781
  %v783 = vmul.f32 %v782, 0.5
  %v784 = vtanh.pop %v783
  %v785 = vadd.f32 %v784, 1.0
  %v786 = vmul.f32 %v785, 0.5
  %v787 = vmul.f32 %v419, %v786
  %v788 = vmul.f32 %v787, %v424
  %v789 = vadd.f32 %v775, %v788
  %v790 = vadd.f32 %v776, %v787
  %v791 = vlaneseq
  %v792 = vshrl.u32 %v791, 7
  %v793 = vsub.s32 5, %v792
  %v794 = vrot.slane %v720, %v793
  %v795 = vsub.f32 %v794, %v435
  %v796 = vmul.f32 %v440, %v795
  %v797 = vmul.f32 %v796, 0.5
  %v798 = vtanh.pop %v797
  %v799 = vadd.f32 %v798, 1.0
  %v800 = vmul.f32 %v799, 0.5
  %v801 = vmul.f32 %v449, %v800
  %v802 = vmul.f32 %v801, %v454
  %v803 = vadd.f32 %v789, %v802
  %v804 = vadd.f32 %v790, %v801
  %v805 = vlaneseq
  %v806 = vshrl.u32 %v805, 7
  %v807 = vsub.s32 6, %v806
  %v808 = vrot.slane %v720, %v807
  %v809 = vsub.f32 %v808, %v465
  %v810 = vmul.f32 %v470, %v809
  %v811 = vmul.f32 %v810, 0.5
  %v812 = vtanh.pop %v811
  %v813 = vadd.f32 %v812, 1.0
  %v814 = vmul.f32 %v813, 0.5
  %v815 = vmul.f32 %v479, %v814
  %v816 = vmul.f32 %v815, %v484
  %v817 = vadd.f32 %v803, %v816
  %v818 = vadd.f32 %v804, %v815
  %v819 = vmul.f32 %v492, %v720
  %v820 = vadd.f32 %v819, %v498
  %v821 = vadd.f32 %v820, %v817
  %v822 = vadd.f32 %v505, %v818
  %v823 = vadd.f32 %v822, 1e-08
  %v824 = vrcp.pop %v823
  %v825 = vmul.f32 %v821, %v824
  %v826 = vlaneseq
  %v827 = vshrl.u32 %v826, 7
  %v828 = vsub.s32 0, %v827
  %v829 = vrot.slane %v825, %v828
  %v830 = vsub.f32 %v829, %v282
  %v831 = vmul.f32 %v288, %v830
  %v832 = vmul.f32 %v831, 0.5
  %v833 = vtanh.pop %v832
  %v834 = vadd.f32 %v833, 1.0
  %v835 = vmul.f32 %v834, 0.5
  %v836 = vmul.f32 %v298, %v835
  %v837 = vmul.f32 %v836, %v304
  %v838 = vadd.f32 %v273, %v837
  %v839 = vadd.f32 %v274, %v836
  %v840 = vlaneseq
  %v841 = vshrl.u32 %v840, 7
  %v842 = vsub.s32 1, %v841
  %v843 = vrot.slane %v825, %v842
  %v844 = vsub.f32 %v843, %v315
  %v845 = vmul.f32 %v320, %v844
  %v846 = vmul.f32 %v845, 0.5
  %v847 = vtanh.pop %v846
  %v848 = vadd.f32 %v847, 1.0
  %v849 = vmul.f32 %v848, 0.5
  %v850 = vmul.f32 %v329, %v849
  %v851 = vmul.f32 %v850, %v334
  %v852 = vadd.f32 %v838, %v851
  %v853 = vadd.f32 %v839, %v850
  %v854 = vlaneseq
  %v855 = vshrl.u32 %v854, 7
  %v856 = vsub.s32 2, %v855
  %v857 = vrot.slane %v825, %v856
  %v858 = vsub.f32 %v857, %v345
  %v859 = vmul.f32 %v350, %v858
  %v860 = vmul.f32 %v859, 0.5
  %v861 = vtanh.pop %v860
  %v862 = vadd.f32 %v861, 1.0
  %v863 = vmul.f32 %v862, 0.5
  %v864 = vmul.f32 %v359, %v863
  %v865 = vmul.f32 %v864, %v364
  %v866 = vadd.f32 %v852, %v865
  %v867 = vadd.f32 %v853, %v864
  %v868 = vlaneseq
  %v869 = vshrl.u32 %v868, 7
  %v870 = vsub.s32 3, %v869
  %v871 = vrot.slane %v825, %v870
  %v872 = vsub.f32 %v871, %v375
  %v873 = vmul.f32 %v380, %v872
  %v874 = vmul.f32 %v873, 0.5
  %v875 = vtanh.pop %v874
  %v876 = vadd.f32 %v875, 1.0
  %v877 = vmul.f32 %v876, 0.5
  %v878 = vmul.f32 %v389, %v877
  %v879 = vmul.f32 %v878, %v394
  %v880 = vadd.f32 %v866, %v879
  %v881 = vadd.f32 %v867, %v878
  %v882 = vlaneseq
  %v883 = vshrl.u32 %v882, 7
  %v884 = vsub.s32 4, %v883
  %v885 = vrot.slane %v825, %v884
  %v886 = vsub.f32 %v885, %v405
  %v887 = vmul.f32 %v410, %v886
  %v888 = vmul.f32 %v887, 0.5
  %v889 = vtanh.pop %v888
  %v890 = vadd.f32 %v889, 1.0
  %v891 = vmul.f32 %v890, 0.5
  %v892 = vmul.f32 %v419, %v891
  %v893 = vmul.f32 %v892, %v424
  %v894 = vadd.f32 %v880, %v893
  %v895 = vadd.f32 %v881, %v892
  %v896 = vlaneseq
  %v897 = vshrl.u32 %v896, 7
  %v898 = vsub.s32 5, %v897
  %v899 = vrot.slane %v825, %v898
  %v900 = vsub.f32 %v899, %v435
  %v901 = vmul.f32 %v440, %v900
  %v902 = vmul.f32 %v901, 0.5
  %v903 = vtanh.pop %v902
  %v904 = vadd.f32 %v903, 1.0
  %v905 = vmul.f32 %v904, 0.5
  %v906 = vmul.f32 %v449, %v905
  %v907 = vmul.f32 %v906, %v454
  %v908 = vadd.f32 %v894, %v907
  %v909 = vadd.f32 %v895, %v906
  %v910 = vlaneseq
  %v911 = vshrl.u32 %v910, 7
  %v912 = vsub.s32 6, %v911
  %v913 = vrot.slane %v825, %v912
  %v914 = vsub.f32 %v913, %v465
  %v915 = vmul.f32 %v470, %v914
  %v916 = vmul.f32 %v915, 0.5
  %v917 = vtanh.pop %v916
  %v918 = vadd.f32 %v917, 1.0
  %v919 = vmul.f32 %v918, 0.5
  %v920 = vmul.f32 %v479, %v919
  %v921 = vmul.f32 %v920, %v484
  %v922 = vadd.f32 %v908, %v921
  %v923 = vadd.f32 %v909, %v920
  %v924 = vmul.f32 %v492, %v825
  %v925 = vadd.f32 %v924, %v498
  %v926 = vadd.f32 %v925, %v922
  %v927 = vadd.f32 %v505, %v923
  %v928 = vadd.f32 %v927, 1e-08
  %v929 = vrcp.pop %v928
  %v930 = vmul.f32 %v926, %v929
  %v931 = vlaneseq
  %v932 = vshrl.u32 %v931, 7
  %v933 = vsub.s32 0, %v932
  %v934 = vrot.slane %v930, %v933
  %v935 = vsub.f32 %v934, %v282
  %v936 = vmul.f32 %v288, %v935
  %v937 = vmul.f32 %v936, 0.5
  %v938 = vtanh.pop %v937
  %v939 = vadd.f32 %v938, 1.0
  %v940 = vmul.f32 %v939, 0.5
  %v941 = vmul.f32 %v298, %v940
  %v942 = vmul.f32 %v941, %v304
  %v943 = vadd.f32 %v273, %v942
  %v944 = vadd.f32 %v274, %v941
  %v945 = vlaneseq
  %v946 = vshrl.u32 %v945, 7
  %v947 = vsub.s32 1, %v946
  %v948 = vrot.slane %v930, %v947
  %v949 = vsub.f32 %v948, %v315
  %v950 = vmul.f32 %v320, %v949
  %v951 = vmul.f32 %v950, 0.5
  %v952 = vtanh.pop %v951
  %v953 = vadd.f32 %v952, 1.0
  %v954 = vmul.f32 %v953, 0.5
  %v955 = vmul.f32 %v329, %v954
  %v956 = vmul.f32 %v955, %v334
  %v957 = vadd.f32 %v943, %v956
  %v958 = vadd.f32 %v944, %v955
  %v959 = vlaneseq
  %v960 = vshrl.u32 %v959, 7
  %v961 = vsub.s32 2, %v960
  %v962 = vrot.slane %v930, %v961
  %v963 = vsub.f32 %v962, %v345
  %v964 = vmul.f32 %v350, %v963
  %v965 = vmul.f32 %v964, 0.5
  %v966 = vtanh.pop %v965
  %v967 = vadd.f32 %v966, 1.0
  %v968 = vmul.f32 %v967, 0.5
  %v969 = vmul.f32 %v359, %v968
  %v970 = vmul.f32 %v969, %v364
  %v971 = vadd.f32 %v957, %v970
  %v972 = vadd.f32 %v958, %v969
  %v973 = vlaneseq
  %v974 = vshrl.u32 %v973, 7
  %v975 = vsub.s32 3, %v974
  %v976 = vrot.slane %v930, %v975
  %v977 = vsub.f32 %v976, %v375
  %v978 = vmul.f32 %v380, %v977
  %v979 = vmul.f32 %v978, 0.5
  %v980 = vtanh.pop %v979
  %v981 = vadd.f32 %v980, 1.0
  %v982 = vmul.f32 %v981, 0.5
  %v983 = vmul.f32 %v389, %v982
  %v984 = vmul.f32 %v983, %v394
  %v985 = vadd.f32 %v971, %v984
  %v986 = vadd.f32 %v972, %v983
  %v987 = vlaneseq
  %v988 = vshrl.u32 %v987, 7
  %v989 = vsub.s32 4, %v988
  %v990 = vrot.slane %v930, %v989
  %v991 = vsub.f32 %v990, %v405
  %v992 = vmul.f32 %v410, %v991
  %v993 = vmul.f32 %v992, 0.5
  %v994 = vtanh.pop %v993
  %v995 = vadd.f32 %v994, 1.0
  %v996 = vmul.f32 %v995, 0.5
  %v997 = vmul.f32 %v419, %v996
  %v998 = vmul.f32 %v997, %v424
  %v999 = vadd.f32 %v985, %v998
  %v1000 = vadd.f32 %v986, %v997
  %v1001 = vlaneseq
  %v1002 = vshrl.u32 %v1001, 7
  %v1003 = vsub.s32 5, %v1002
  %v1004 = vrot.slane %v930, %v1003
  %v1005 = vsub.f32 %v1004, %v435
  %v1006 = vmul.f32 %v440, %v1005
  %v1007 = vmul.f32 %v1006, 0.5
  %v1008 = vtanh.pop %v1007
  %v1009 = vadd.f32 %v1008, 1.0
  %v1010 = vmul.f32 %v1009, 0.5
  %v1011 = vmul.f32 %v449, %v1010
  %v1012 = vmul.f32 %v1011, %v454
  %v1013 = vadd.f32 %v999, %v1012
  %v1014 = vadd.f32 %v1000, %v1011
  %v1015 = vlaneseq
  %v1016 = vshrl.u32 %v1015, 7
  %v1017 = vsub.s32 6, %v1016
  %v1018 = vrot.slane %v930, %v1017
  %v1019 = vsub.f32 %v1018, %v465
  %v1020 = vmul.f32 %v470, %v1019
  %v1021 = vmul.f32 %v1020, 0.5
  %v1022 = vtanh.pop %v1021
  %v1023 = vadd.f32 %v1022, 1.0
  %v1024 = vmul.f32 %v1023, 0.5
  %v1025 = vmul.f32 %v479, %v1024
  %v1026 = vmul.f32 %v1025, %v484
  %v1027 = vadd.f32 %v1013, %v1026
  %v1028 = vadd.f32 %v1014, %v1025
  %v1029 = vmul.f32 %v492, %v930
  %v1030 = vadd.f32 %v1029, %v498
  %v1031 = vadd.f32 %v1030, %v1027
  %v1032 = vadd.f32 %v505, %v1028
  %v1033 = vadd.f32 %v1032, 1e-08
  %v1034 = vrcp.pop %v1033
  %v1035 = vmul.f32 %v1031, %v1034
  %1036 = vxpose.xlu0.b32.start [1/16] %v1035, 128
  %1037 = vxpose.xlu0.b32.cont [2/16] 0.0, 128
  %1038 = vxpose.xlu0.b32.cont [3/16] 0.0, 128
  %1039 = vxpose.xlu0.b32.cont [4/16] 0.0, 128
  %1040 = vxpose.xlu0.b32.cont [5/16] 0.0, 128
  %1041 = vxpose.xlu0.b32.cont [6/16] 0.0, 128
  %1042 = vxpose.xlu0.b32.cont [7/16] 0.0, 128
  %1043 = vxpose.xlu0.b32.cont [8/16] 0.0, 128
  %1044 = vxpose.xlu0.b32.cont [9/16] 0.0, 128
  %1045 = vxpose.xlu0.b32.cont [10/16] 0.0, 128
  %1046 = vxpose.xlu0.b32.cont [11/16] 0.0, 128
  %1047 = vxpose.xlu0.b32.cont [12/16] 0.0, 128
  %1048 = vxpose.xlu0.b32.cont [13/16] 0.0, 128
  %1049 = vxpose.xlu0.b32.cont [14/16] 0.0, 128
  %1050 = vxpose.xlu0.b32.cont [15/16] 0.0, 128
  %1051 = vxpose.xlu0.b32.end [16/16] 0.0, 128
  %v1052 = vpop.trf.xlu0
  %v1053 = vpop.trf.xlu0
  %v1054 = vpop.trf.xlu0
  %v1055 = vpop.trf.xlu0
  %v1056 = vpop.trf.xlu0
  %v1057 = vpop.trf.xlu0
  %v1058 = vpop.trf.xlu0
  %v1059 = vpop.trf.xlu0
  %v1060 = vpop.trf.xlu0
  %v1061 = vpop.trf.xlu0
  %v1062 = vpop.trf.xlu0
  %v1063 = vpop.trf.xlu0
  %v1064 = vpop.trf.xlu0
  %v1065 = vpop.trf.xlu0
  %v1066 = vpop.trf.xlu0
  %v1067 = vpop.trf.xlu0
  %v1068 = vld [vmem:[%s5] sm:$0x7f]
  %v1069 = vld [vmem:[%s6] sm:$0x1]
  %v1071 = vlaneseq
  %v1072 = vshrl.u32 %v1071, 7
  %v1073 = vsub.s32 0, %v1072
  %v1074 = vrot.slane %v1069, %v1073
  %vm1076 = vcmask 56320
  %v1078 = vsel %vm1076, %v1052, 0
  %vm1080 = vcmask 1046528
  %v1082 = vsel %vm1080, %v1068, 0
  %1084 = vmatprep.subr.mxu0 0.0
  %1085 = vmatpush1.msra.mxu0 0.0
  %1086 = vmatprep.subr.mxu0 0.0
  %1087 = vmatpush1.msra.mxu0 0.0
  %1088 = vmatprep.subr.mxu0 0.0
  %1089 = vmatpush1.msra.mxu0 0.0
  %1090 = vmatprep.subr.mxu0 0.0
  %1091 = vmatpush1.msra.mxu0 0.0
  %1092 = vmatprep.subr.mxu0 0.0
  %1093 = vmatpush1.msra.mxu0 0.0
  %1094 = vmatprep.subr.mxu0 0.0
  %1095 = vmatpush1.msra.mxu0 0.0
  %1096 = vmatprep.subr.mxu0 0.0
  %1097 = vmatpush1.msra.mxu0 0.0
  %1098 = vmatprep.subr.mxu0 0.0
  %1099 = vmatpush1.msra.mxu0 0.0
  %1100 = vmatprep.subr.mxu0 0.0
  %1101 = vmatpush1.msra.mxu0 0.0
  %1102 = vmatprep.subr.mxu0 0.0
  %1103 = vmatpush1.msra.mxu0 0.0
  %1104 = vmatprep.subr.mxu0 0.0
  %1105 = vmatpush1.msra.mxu0 0.0
  %1106 = vmatprep.subr.mxu0 0.0
  %1107 = vmatpush1.msra.mxu0 0.0
  %1108 = vmatprep.subr.mxu0 0.0
  %1109 = vmatpush1.msra.mxu0 0.0
  %1110 = vmatprep.subr.mxu0 0.0
  %1111 = vmatpush1.msra.mxu0 0.0
  %1112 = vmatprep.subr.mxu0 0.0
  %1113 = vmatpush1.msra.mxu0 0.0
  %1114 = vmatprep.subr.mxu0 0.0
  %1115 = vmatpush1.msra.mxu0 %v1082
  %1116 = vmatprep.subr.mxu0 0.0
  %1117 = vmatpush2.msra.mxu0 0.0
  %1118 = vmatprep.subr.mxu0 0.0
  %1119 = vmatpush2.msra.mxu0 0.0
  %1120 = vmatprep.subr.mxu0 0.0
  %1121 = vmatpush2.msra.mxu0 0.0
  %1122 = vmatprep.subr.mxu0 0.0
  %1123 = vmatpush2.msra.mxu0 0.0
  %1124 = vmatprep.subr.mxu0 0.0
  %1125 = vmatpush2.msra.mxu0 0.0
  %1126 = vmatprep.subr.mxu0 0.0
  %1127 = vmatpush2.msra.mxu0 0.0
  %1128 = vmatprep.subr.mxu0 0.0
  %1129 = vmatpush2.msra.mxu0 0.0
  %1130 = vmatprep.subr.mxu0 0.0
  %1131 = vmatpush2.msra.mxu0 0.0
  %1132 = vmatprep.subr.mxu0 0.0
  %1133 = vmatpush2.msra.mxu0 0.0
  %1134 = vmatprep.subr.mxu0 0.0
  %1135 = vmatpush2.msra.mxu0 0.0
  %1136 = vmatprep.subr.mxu0 0.0
  %1137 = vmatpush2.msra.mxu0 0.0
  %1138 = vmatprep.subr.mxu0 0.0
  %1139 = vmatpush2.msra.mxu0 0.0
  %1140 = vmatprep.subr.mxu0 0.0
  %1141 = vmatpush2.msra.mxu0 0.0
  %1142 = vmatprep.subr.mxu0 0.0
  %1143 = vmatpush2.msra.mxu0 0.0
  %1144 = vmatprep.subr.mxu0 0.0
  %1145 = vmatpush2.msra.mxu0 0.0
  %1146 = vmatprep.subr.mxu0 0.0
  %1147 = vmatpush2.msra.mxu0 0.0
  %1148 = vmatprep.mubr.f32.mxu0 0.0
  %1149 = vmatmul.mubr.f32.gmra.mxu0 %v1078
  %v1150 = vpop.f32.mrf.mxu0
  %v1151 = vadd.f32 %v1074, %v1150
  %v1152 = vpop.f32.mrf.mxu0
  %1153 = vdwg.mxu0
  %v1154 = vld [vmem:[%s0] sm:$0xff]
  %v1155 = vadd.f32 %v1154, %v1151
  %vm1156 = vcmask 261120
  %1157 = vst.msk [vmem:[%s7] sm:$0xff] %vm1156, %v1155
  %s1158 = scalar_lea.vmem %s1, 8
  %v1159 = vld [vmem:[%s1158] sm:$0x7f]
  %v1160 = vmul.f32 %v1159, %v52
  %v1161 = vadd.f32 %v1160, %v58
  %v1162 = vlaneseq
  %v1163 = vshrl.u32 %v1162, 7
  %v1164 = vsub.s32 0, %v1163
  %v1165 = vrot.slane %v1161, %v1164
  %v1166 = vsub.f32 %v1165, %v68
  %v1167 = vmul.f32 %v74, %v1166
  %v1168 = vmul.f32 %v1167, 0.5
  %v1169 = vtanh.pop %v1168
  %v1170 = vadd.f32 %v1169, 1.0
  %v1171 = vmul.f32 %v1170, 0.5
  %v1172 = vmul.f32 %v84, %v1171
  %v1173 = vmul.f32 %v1172, %v90
  %v1174 = vadd.f32 %v1173, 0.0
  %v1175 = vadd.f32 %v1172, 0.0
  %v1176 = vlaneseq
  %v1177 = vshrl.u32 %v1176, 7
  %v1178 = vsub.s32 1, %v1177
  %v1179 = vrot.slane %v1161, %v1178
  %v1180 = vsub.f32 %v1179, %v101
  %v1181 = vmul.f32 %v106, %v1180
  %v1182 = vmul.f32 %v1181, 0.5
  %v1183 = vtanh.pop %v1182
  %v1184 = vadd.f32 %v1183, 1.0
  %v1185 = vmul.f32 %v1184, 0.5
  %v1186 = vmul.f32 %v115, %v1185
  %v1187 = vmul.f32 %v1186, %v120
  %v1188 = vadd.f32 %v1174, %v1187
  %v1189 = vadd.f32 %v1175, %v1186
  %v1190 = vlaneseq
  %v1191 = vshrl.u32 %v1190, 7
  %v1192 = vsub.s32 2, %v1191
  %v1193 = vrot.slane %v1161, %v1192
  %v1194 = vsub.f32 %v1193, %v131
  %v1195 = vmul.f32 %v136, %v1194
  %v1196 = vmul.f32 %v1195, 0.5
  %v1197 = vtanh.pop %v1196
  %v1198 = vadd.f32 %v1197, 1.0
  %v1199 = vmul.f32 %v1198, 0.5
  %v1200 = vmul.f32 %v145, %v1199
  %v1201 = vmul.f32 %v1200, %v150
  %v1202 = vadd.f32 %v1188, %v1201
  %v1203 = vadd.f32 %v1189, %v1200
  %v1204 = vlaneseq
  %v1205 = vshrl.u32 %v1204, 7
  %v1206 = vsub.s32 3, %v1205
  %v1207 = vrot.slane %v1161, %v1206
  %v1208 = vsub.f32 %v1207, %v161
  %v1209 = vmul.f32 %v166, %v1208
  %v1210 = vmul.f32 %v1209, 0.5
  %v1211 = vtanh.pop %v1210
  %v1212 = vadd.f32 %v1211, 1.0
  %v1213 = vmul.f32 %v1212, 0.5
  %v1214 = vmul.f32 %v175, %v1213
  %v1215 = vmul.f32 %v1214, %v180
  %v1216 = vadd.f32 %v1202, %v1215
  %v1217 = vadd.f32 %v1203, %v1214
  %v1218 = vlaneseq
  %v1219 = vshrl.u32 %v1218, 7
  %v1220 = vsub.s32 4, %v1219
  %v1221 = vrot.slane %v1161, %v1220
  %v1222 = vsub.f32 %v1221, %v191
  %v1223 = vmul.f32 %v196, %v1222
  %v1224 = vmul.f32 %v1223, 0.5
  %v1225 = vtanh.pop %v1224
  %v1226 = vadd.f32 %v1225, 1.0
  %v1227 = vmul.f32 %v1226, 0.5
  %v1228 = vmul.f32 %v205, %v1227
  %v1229 = vmul.f32 %v1228, %v210
  %v1230 = vadd.f32 %v1216, %v1229
  %v1231 = vadd.f32 %v1217, %v1228
  %v1232 = vlaneseq
  %v1233 = vshrl.u32 %v1232, 7
  %v1234 = vsub.s32 5, %v1233
  %v1235 = vrot.slane %v1161, %v1234
  %v1236 = vsub.f32 %v1235, %v221
  %v1237 = vmul.f32 %v226, %v1236
  %v1238 = vmul.f32 %v1237, 0.5
  %v1239 = vtanh.pop %v1238
  %v1240 = vadd.f32 %v1239, 1.0
  %v1241 = vmul.f32 %v1240, 0.5
  %v1242 = vmul.f32 %v235, %v1241
  %v1243 = vmul.f32 %v1242, %v240
  %v1244 = vadd.f32 %v1230, %v1243
  %v1245 = vadd.f32 %v1231, %v1242
  %v1246 = vlaneseq
  %v1247 = vshrl.u32 %v1246, 7
  %v1248 = vsub.s32 6, %v1247
  %v1249 = vrot.slane %v1161, %v1248
  %v1250 = vsub.f32 %v1249, %v251
  %v1251 = vmul.f32 %v256, %v1250
  %v1252 = vmul.f32 %v1251, 0.5
  %v1253 = vtanh.pop %v1252
  %v1254 = vadd.f32 %v1253, 1.0
  %v1255 = vmul.f32 %v1254, 0.5
  %v1256 = vmul.f32 %v265, %v1255
  %v1257 = vmul.f32 %v1256, %v270
  %v1258 = vadd.f32 %v1244, %v1257
  %v1259 = vadd.f32 %v1245, %v1256
  %v1260 = vlaneseq
  %v1261 = vshrl.u32 %v1260, 7
  %v1262 = vsub.s32 0, %v1261
  %v1263 = vrot.slane %v1035, %v1262
  %v1264 = vsub.f32 %v1263, %v282
  %v1265 = vmul.f32 %v288, %v1264
  %v1266 = vmul.f32 %v1265, 0.5
  %v1267 = vtanh.pop %v1266
  %v1268 = vadd.f32 %v1267, 1.0
  %v1269 = vmul.f32 %v1268, 0.5
  %v1270 = vmul.f32 %v298, %v1269
  %v1271 = vmul.f32 %v1270, %v304
  %v1272 = vadd.f32 %v1258, %v1271
  %v1273 = vadd.f32 %v1259, %v1270
  %v1274 = vlaneseq
  %v1275 = vshrl.u32 %v1274, 7
  %v1276 = vsub.s32 1, %v1275
  %v1277 = vrot.slane %v1035, %v1276
  %v1278 = vsub.f32 %v1277, %v315
  %v1279 = vmul.f32 %v320, %v1278
  %v1280 = vmul.f32 %v1279, 0.5
  %v1281 = vtanh.pop %v1280
  %v1282 = vadd.f32 %v1281, 1.0
  %v1283 = vmul.f32 %v1282, 0.5
  %v1284 = vmul.f32 %v329, %v1283
  %v1285 = vmul.f32 %v1284, %v334
  %v1286 = vadd.f32 %v1272, %v1285
  %v1287 = vadd.f32 %v1273, %v1284
  %v1288 = vlaneseq
  %v1289 = vshrl.u32 %v1288, 7
  %v1290 = vsub.s32 2, %v1289
  %v1291 = vrot.slane %v1035, %v1290
  %v1292 = vsub.f32 %v1291, %v345
  %v1293 = vmul.f32 %v350, %v1292
  %v1294 = vmul.f32 %v1293, 0.5
  %v1295 = vtanh.pop %v1294
  %v1296 = vadd.f32 %v1295, 1.0
  %v1297 = vmul.f32 %v1296, 0.5
  %v1298 = vmul.f32 %v359, %v1297
  %v1299 = vmul.f32 %v1298, %v364
  %v1300 = vadd.f32 %v1286, %v1299
  %v1301 = vadd.f32 %v1287, %v1298
  %v1302 = vlaneseq
  %v1303 = vshrl.u32 %v1302, 7
  %v1304 = vsub.s32 3, %v1303
  %v1305 = vrot.slane %v1035, %v1304
  %v1306 = vsub.f32 %v1305, %v375
  %v1307 = vmul.f32 %v380, %v1306
  %v1308 = vmul.f32 %v1307, 0.5
  %v1309 = vtanh.pop %v1308
  %v1310 = vadd.f32 %v1309, 1.0
  %v1311 = vmul.f32 %v1310, 0.5
  %v1312 = vmul.f32 %v389, %v1311
  %v1313 = vmul.f32 %v1312, %v394
  %v1314 = vadd.f32 %v1300, %v1313
  %v1315 = vadd.f32 %v1301, %v1312
  %v1316 = vlaneseq
  %v1317 = vshrl.u32 %v1316, 7
  %v1318 = vsub.s32 4, %v1317
  %v1319 = vrot.slane %v1035, %v1318
  %v1320 = vsub.f32 %v1319, %v405
  %v1321 = vmul.f32 %v410, %v1320
  %v1322 = vmul.f32 %v1321, 0.5
  %v1323 = vtanh.pop %v1322
  %v1324 = vadd.f32 %v1323, 1.0
  %v1325 = vmul.f32 %v1324, 0.5
  %v1326 = vmul.f32 %v419, %v1325
  %v1327 = vmul.f32 %v1326, %v424
  %v1328 = vadd.f32 %v1314, %v1327
  %v1329 = vadd.f32 %v1315, %v1326
  %v1330 = vlaneseq
  %v1331 = vshrl.u32 %v1330, 7
  %v1332 = vsub.s32 5, %v1331
  %v1333 = vrot.slane %v1035, %v1332
  %v1334 = vsub.f32 %v1333, %v435
  %v1335 = vmul.f32 %v440, %v1334
  %v1336 = vmul.f32 %v1335, 0.5
  %v1337 = vtanh.pop %v1336
  %v1338 = vadd.f32 %v1337, 1.0
  %v1339 = vmul.f32 %v1338, 0.5
  %v1340 = vmul.f32 %v449, %v1339
  %v1341 = vmul.f32 %v1340, %v454
  %v1342 = vadd.f32 %v1328, %v1341
  %v1343 = vadd.f32 %v1329, %v1340
  %v1344 = vlaneseq
  %v1345 = vshrl.u32 %v1344, 7
  %v1346 = vsub.s32 6, %v1345
  %v1347 = vrot.slane %v1035, %v1346
  %v1348 = vsub.f32 %v1347, %v465
  %v1349 = vmul.f32 %v470, %v1348
  %v1350 = vmul.f32 %v1349, 0.5
  %v1351 = vtanh.pop %v1350
  %v1352 = vadd.f32 %v1351, 1.0
  %v1353 = vmul.f32 %v1352, 0.5
  %v1354 = vmul.f32 %v479, %v1353
  %v1355 = vmul.f32 %v1354, %v484
  %v1356 = vadd.f32 %v1342, %v1355
  %v1357 = vadd.f32 %v1343, %v1354
  %v1358 = vmul.f32 %v492, %v1035
  %v1359 = vadd.f32 %v1358, %v498
  %v1360 = vadd.f32 %v1359, %v1356
  %v1361 = vadd.f32 %v505, %v1357
  %v1362 = vadd.f32 %v1361, 1e-08
  %v1363 = vrcp.pop %v1362
  %v1364 = vmul.f32 %v1360, %v1363
  %v1365 = vlaneseq
  %v1366 = vshrl.u32 %v1365, 7
  %v1367 = vsub.s32 0, %v1366
  %v1368 = vrot.slane %v1364, %v1367
  %v1369 = vsub.f32 %v1368, %v282
  %v1370 = vmul.f32 %v288, %v1369
  %v1371 = vmul.f32 %v1370, 0.5
  %v1372 = vtanh.pop %v1371
  %v1373 = vadd.f32 %v1372, 1.0
  %v1374 = vmul.f32 %v1373, 0.5
  %v1375 = vmul.f32 %v298, %v1374
  %v1376 = vmul.f32 %v1375, %v304
  %v1377 = vadd.f32 %v1258, %v1376
  %v1378 = vadd.f32 %v1259, %v1375
  %v1379 = vlaneseq
  %v1380 = vshrl.u32 %v1379, 7
  %v1381 = vsub.s32 1, %v1380
  %v1382 = vrot.slane %v1364, %v1381
  %v1383 = vsub.f32 %v1382, %v315
  %v1384 = vmul.f32 %v320, %v1383
  %v1385 = vmul.f32 %v1384, 0.5
  %v1386 = vtanh.pop %v1385
  %v1387 = vadd.f32 %v1386, 1.0
  %v1388 = vmul.f32 %v1387, 0.5
  %v1389 = vmul.f32 %v329, %v1388
  %v1390 = vmul.f32 %v1389, %v334
  %v1391 = vadd.f32 %v1377, %v1390
  %v1392 = vadd.f32 %v1378, %v1389
  %v1393 = vlaneseq
  %v1394 = vshrl.u32 %v1393, 7
  %v1395 = vsub.s32 2, %v1394
  %v1396 = vrot.slane %v1364, %v1395
  %v1397 = vsub.f32 %v1396, %v345
  %v1398 = vmul.f32 %v350, %v1397
  %v1399 = vmul.f32 %v1398, 0.5
  %v1400 = vtanh.pop %v1399
  %v1401 = vadd.f32 %v1400, 1.0
  %v1402 = vmul.f32 %v1401, 0.5
  %v1403 = vmul.f32 %v359, %v1402
  %v1404 = vmul.f32 %v1403, %v364
  %v1405 = vadd.f32 %v1391, %v1404
  %v1406 = vadd.f32 %v1392, %v1403
  %v1407 = vlaneseq
  %v1408 = vshrl.u32 %v1407, 7
  %v1409 = vsub.s32 3, %v1408
  %v1410 = vrot.slane %v1364, %v1409
  %v1411 = vsub.f32 %v1410, %v375
  %v1412 = vmul.f32 %v380, %v1411
  %v1413 = vmul.f32 %v1412, 0.5
  %v1414 = vtanh.pop %v1413
  %v1415 = vadd.f32 %v1414, 1.0
  %v1416 = vmul.f32 %v1415, 0.5
  %v1417 = vmul.f32 %v389, %v1416
  %v1418 = vmul.f32 %v1417, %v394
  %v1419 = vadd.f32 %v1405, %v1418
  %v1420 = vadd.f32 %v1406, %v1417
  %v1421 = vlaneseq
  %v1422 = vshrl.u32 %v1421, 7
  %v1423 = vsub.s32 4, %v1422
  %v1424 = vrot.slane %v1364, %v1423
  %v1425 = vsub.f32 %v1424, %v405
  %v1426 = vmul.f32 %v410, %v1425
  %v1427 = vmul.f32 %v1426, 0.5
  %v1428 = vtanh.pop %v1427
  %v1429 = vadd.f32 %v1428, 1.0
  %v1430 = vmul.f32 %v1429, 0.5
  %v1431 = vmul.f32 %v419, %v1430
  %v1432 = vmul.f32 %v1431, %v424
  %v1433 = vadd.f32 %v1419, %v1432
  %v1434 = vadd.f32 %v1420, %v1431
  %v1435 = vlaneseq
  %v1436 = vshrl.u32 %v1435, 7
  %v1437 = vsub.s32 5, %v1436
  %v1438 = vrot.slane %v1364, %v1437
  %v1439 = vsub.f32 %v1438, %v435
  %v1440 = vmul.f32 %v440, %v1439
  %v1441 = vmul.f32 %v1440, 0.5
  %v1442 = vtanh.pop %v1441
  %v1443 = vadd.f32 %v1442, 1.0
  %v1444 = vmul.f32 %v1443, 0.5
  %v1445 = vmul.f32 %v449, %v1444
  %v1446 = vmul.f32 %v1445, %v454
  %v1447 = vadd.f32 %v1433, %v1446
  %v1448 = vadd.f32 %v1434, %v1445
  %v1449 = vlaneseq
  %v1450 = vshrl.u32 %v1449, 7
  %v1451 = vsub.s32 6, %v1450
  %v1452 = vrot.slane %v1364, %v1451
  %v1453 = vsub.f32 %v1452, %v465
  %v1454 = vmul.f32 %v470, %v1453
  %v1455 = vmul.f32 %v1454, 0.5
  %v1456 = vtanh.pop %v1455
  %v1457 = vadd.f32 %v1456, 1.0
  %v1458 = vmul.f32 %v1457, 0.5
  %v1459 = vmul.f32 %v479, %v1458
  %v1460 = vmul.f32 %v1459, %v484
  %v1461 = vadd.f32 %v1447, %v1460
  %v1462 = vadd.f32 %v1448, %v1459
  %v1463 = vmul.f32 %v492, %v1364
  %v1464 = vadd.f32 %v1463, %v498
  %v1465 = vadd.f32 %v1464, %v1461
  %v1466 = vadd.f32 %v505, %v1462
  %v1467 = vadd.f32 %v1466, 1e-08
  %v1468 = vrcp.pop %v1467
  %v1469 = vmul.f32 %v1465, %v1468
  %v1470 = vlaneseq
  %v1471 = vshrl.u32 %v1470, 7
  %v1472 = vsub.s32 0, %v1471
  %v1473 = vrot.slane %v1469, %v1472
  %v1474 = vsub.f32 %v1473, %v282
  %v1475 = vmul.f32 %v288, %v1474
  %v1476 = vmul.f32 %v1475, 0.5
  %v1477 = vtanh.pop %v1476
  %v1478 = vadd.f32 %v1477, 1.0
  %v1479 = vmul.f32 %v1478, 0.5
  %v1480 = vmul.f32 %v298, %v1479
  %v1481 = vmul.f32 %v1480, %v304
  %v1482 = vadd.f32 %v1258, %v1481
  %v1483 = vadd.f32 %v1259, %v1480
  %v1484 = vlaneseq
  %v1485 = vshrl.u32 %v1484, 7
  %v1486 = vsub.s32 1, %v1485
  %v1487 = vrot.slane %v1469, %v1486
  %v1488 = vsub.f32 %v1487, %v315
  %v1489 = vmul.f32 %v320, %v1488
  %v1490 = vmul.f32 %v1489, 0.5
  %v1491 = vtanh.pop %v1490
  %v1492 = vadd.f32 %v1491, 1.0
  %v1493 = vmul.f32 %v1492, 0.5
  %v1494 = vmul.f32 %v329, %v1493
  %v1495 = vmul.f32 %v1494, %v334
  %v1496 = vadd.f32 %v1482, %v1495
  %v1497 = vadd.f32 %v1483, %v1494
  %v1498 = vlaneseq
  %v1499 = vshrl.u32 %v1498, 7
  %v1500 = vsub.s32 2, %v1499
  %v1501 = vrot.slane %v1469, %v1500
  %v1502 = vsub.f32 %v1501, %v345
  %v1503 = vmul.f32 %v350, %v1502
  %v1504 = vmul.f32 %v1503, 0.5
  %v1505 = vtanh.pop %v1504
  %v1506 = vadd.f32 %v1505, 1.0
  %v1507 = vmul.f32 %v1506, 0.5
  %v1508 = vmul.f32 %v359, %v1507
  %v1509 = vmul.f32 %v1508, %v364
  %v1510 = vadd.f32 %v1496, %v1509
  %v1511 = vadd.f32 %v1497, %v1508
  %v1512 = vlaneseq
  %v1513 = vshrl.u32 %v1512, 7
  %v1514 = vsub.s32 3, %v1513
  %v1515 = vrot.slane %v1469, %v1514
  %v1516 = vsub.f32 %v1515, %v375
  %v1517 = vmul.f32 %v380, %v1516
  %v1518 = vmul.f32 %v1517, 0.5
  %v1519 = vtanh.pop %v1518
  %v1520 = vadd.f32 %v1519, 1.0
  %v1521 = vmul.f32 %v1520, 0.5
  %v1522 = vmul.f32 %v389, %v1521
  %v1523 = vmul.f32 %v1522, %v394
  %v1524 = vadd.f32 %v1510, %v1523
  %v1525 = vadd.f32 %v1511, %v1522
  %v1526 = vlaneseq
  %v1527 = vshrl.u32 %v1526, 7
  %v1528 = vsub.s32 4, %v1527
  %v1529 = vrot.slane %v1469, %v1528
  %v1530 = vsub.f32 %v1529, %v405
  %v1531 = vmul.f32 %v410, %v1530
  %v1532 = vmul.f32 %v1531, 0.5
  %v1533 = vtanh.pop %v1532
  %v1534 = vadd.f32 %v1533, 1.0
  %v1535 = vmul.f32 %v1534, 0.5
  %v1536 = vmul.f32 %v419, %v1535
  %v1537 = vmul.f32 %v1536, %v424
  %v1538 = vadd.f32 %v1524, %v1537
  %v1539 = vadd.f32 %v1525, %v1536
  %v1540 = vlaneseq
  %v1541 = vshrl.u32 %v1540, 7
  %v1542 = vsub.s32 5, %v1541
  %v1543 = vrot.slane %v1469, %v1542
  %v1544 = vsub.f32 %v1543, %v435
  %v1545 = vmul.f32 %v440, %v1544
  %v1546 = vmul.f32 %v1545, 0.5
  %v1547 = vtanh.pop %v1546
  %v1548 = vadd.f32 %v1547, 1.0
  %v1549 = vmul.f32 %v1548, 0.5
  %v1550 = vmul.f32 %v449, %v1549
  %v1551 = vmul.f32 %v1550, %v454
  %v1552 = vadd.f32 %v1538, %v1551
  %v1553 = vadd.f32 %v1539, %v1550
  %v1554 = vlaneseq
  %v1555 = vshrl.u32 %v1554, 7
  %v1556 = vsub.s32 6, %v1555
  %v1557 = vrot.slane %v1469, %v1556
  %v1558 = vsub.f32 %v1557, %v465
  %v1559 = vmul.f32 %v470, %v1558
  %v1560 = vmul.f32 %v1559, 0.5
  %v1561 = vtanh.pop %v1560
  %v1562 = vadd.f32 %v1561, 1.0
  %v1563 = vmul.f32 %v1562, 0.5
  %v1564 = vmul.f32 %v479, %v1563
  %v1565 = vmul.f32 %v1564, %v484
  %v1566 = vadd.f32 %v1552, %v1565
  %v1567 = vadd.f32 %v1553, %v1564
  %v1568 = vmul.f32 %v492, %v1469
  %v1569 = vadd.f32 %v1568, %v498
  %v1570 = vadd.f32 %v1569, %v1566
  %v1571 = vadd.f32 %v505, %v1567
  %v1572 = vadd.f32 %v1571, 1e-08
  %v1573 = vrcp.pop %v1572
  %v1574 = vmul.f32 %v1570, %v1573
  %v1575 = vlaneseq
  %v1576 = vshrl.u32 %v1575, 7
  %v1577 = vsub.s32 0, %v1576
  %v1578 = vrot.slane %v1574, %v1577
  %v1579 = vsub.f32 %v1578, %v282
  %v1580 = vmul.f32 %v288, %v1579
  %v1581 = vmul.f32 %v1580, 0.5
  %v1582 = vtanh.pop %v1581
  %v1583 = vadd.f32 %v1582, 1.0
  %v1584 = vmul.f32 %v1583, 0.5
  %v1585 = vmul.f32 %v298, %v1584
  %v1586 = vmul.f32 %v1585, %v304
  %v1587 = vadd.f32 %v1258, %v1586
  %v1588 = vadd.f32 %v1259, %v1585
  %v1589 = vlaneseq
  %v1590 = vshrl.u32 %v1589, 7
  %v1591 = vsub.s32 1, %v1590
  %v1592 = vrot.slane %v1574, %v1591
  %v1593 = vsub.f32 %v1592, %v315
  %v1594 = vmul.f32 %v320, %v1593
  %v1595 = vmul.f32 %v1594, 0.5
  %v1596 = vtanh.pop %v1595
  %v1597 = vadd.f32 %v1596, 1.0
  %v1598 = vmul.f32 %v1597, 0.5
  %v1599 = vmul.f32 %v329, %v1598
  %v1600 = vmul.f32 %v1599, %v334
  %v1601 = vadd.f32 %v1587, %v1600
  %v1602 = vadd.f32 %v1588, %v1599
  %v1603 = vlaneseq
  %v1604 = vshrl.u32 %v1603, 7
  %v1605 = vsub.s32 2, %v1604
  %v1606 = vrot.slane %v1574, %v1605
  %v1607 = vsub.f32 %v1606, %v345
  %v1608 = vmul.f32 %v350, %v1607
  %v1609 = vmul.f32 %v1608, 0.5
  %v1610 = vtanh.pop %v1609
  %v1611 = vadd.f32 %v1610, 1.0
  %v1612 = vmul.f32 %v1611, 0.5
  %v1613 = vmul.f32 %v359, %v1612
  %v1614 = vmul.f32 %v1613, %v364
  %v1615 = vadd.f32 %v1601, %v1614
  %v1616 = vadd.f32 %v1602, %v1613
  %v1617 = vlaneseq
  %v1618 = vshrl.u32 %v1617, 7
  %v1619 = vsub.s32 3, %v1618
  %v1620 = vrot.slane %v1574, %v1619
  %v1621 = vsub.f32 %v1620, %v375
  %v1622 = vmul.f32 %v380, %v1621
  %v1623 = vmul.f32 %v1622, 0.5
  %v1624 = vtanh.pop %v1623
  %v1625 = vadd.f32 %v1624, 1.0
  %v1626 = vmul.f32 %v1625, 0.5
  %v1627 = vmul.f32 %v389, %v1626
  %v1628 = vmul.f32 %v1627, %v394
  %v1629 = vadd.f32 %v1615, %v1628
  %v1630 = vadd.f32 %v1616, %v1627
  %v1631 = vlaneseq
  %v1632 = vshrl.u32 %v1631, 7
  %v1633 = vsub.s32 4, %v1632
  %v1634 = vrot.slane %v1574, %v1633
  %v1635 = vsub.f32 %v1634, %v405
  %v1636 = vmul.f32 %v410, %v1635
  %v1637 = vmul.f32 %v1636, 0.5
  %v1638 = vtanh.pop %v1637
  %v1639 = vadd.f32 %v1638, 1.0
  %v1640 = vmul.f32 %v1639, 0.5
  %v1641 = vmul.f32 %v419, %v1640
  %v1642 = vmul.f32 %v1641, %v424
  %v1643 = vadd.f32 %v1629, %v1642
  %v1644 = vadd.f32 %v1630, %v1641
  %v1645 = vlaneseq
  %v1646 = vshrl.u32 %v1645, 7
  %v1647 = vsub.s32 5, %v1646
  %v1648 = vrot.slane %v1574, %v1647
  %v1649 = vsub.f32 %v1648, %v435
  %v1650 = vmul.f32 %v440, %v1649
  %v1651 = vmul.f32 %v1650, 0.5
  %v1652 = vtanh.pop %v1651
  %v1653 = vadd.f32 %v1652, 1.0
  %v1654 = vmul.f32 %v1653, 0.5
  %v1655 = vmul.f32 %v449, %v1654
  %v1656 = vmul.f32 %v1655, %v454
  %v1657 = vadd.f32 %v1643, %v1656
  %v1658 = vadd.f32 %v1644, %v1655
  %v1659 = vlaneseq
  %v1660 = vshrl.u32 %v1659, 7
  %v1661 = vsub.s32 6, %v1660
  %v1662 = vrot.slane %v1574, %v1661
  %v1663 = vsub.f32 %v1662, %v465
  %v1664 = vmul.f32 %v470, %v1663
  %v1665 = vmul.f32 %v1664, 0.5
  %v1666 = vtanh.pop %v1665
  %v1667 = vadd.f32 %v1666, 1.0
  %v1668 = vmul.f32 %v1667, 0.5
  %v1669 = vmul.f32 %v479, %v1668
  %v1670 = vmul.f32 %v1669, %v484
  %v1671 = vadd.f32 %v1657, %v1670
  %v1672 = vadd.f32 %v1658, %v1669
  %v1673 = vmul.f32 %v492, %v1574
  %v1674 = vadd.f32 %v1673, %v498
  %v1675 = vadd.f32 %v1674, %v1671
  %v1676 = vadd.f32 %v505, %v1672
  %v1677 = vadd.f32 %v1676, 1e-08
  %v1678 = vrcp.pop %v1677
  %v1679 = vmul.f32 %v1675, %v1678
  %v1680 = vlaneseq
  %v1681 = vshrl.u32 %v1680, 7
  %v1682 = vsub.s32 0, %v1681
  %v1683 = vrot.slane %v1679, %v1682
  %v1684 = vsub.f32 %v1683, %v282
  %v1685 = vmul.f32 %v288, %v1684
  %v1686 = vmul.f32 %v1685, 0.5
  %v1687 = vtanh.pop %v1686
  %v1688 = vadd.f32 %v1687, 1.0
  %v1689 = vmul.f32 %v1688, 0.5
  %v1690 = vmul.f32 %v298, %v1689
  %v1691 = vmul.f32 %v1690, %v304
  %v1692 = vadd.f32 %v1258, %v1691
  %v1693 = vadd.f32 %v1259, %v1690
  %v1694 = vlaneseq
  %v1695 = vshrl.u32 %v1694, 7
  %v1696 = vsub.s32 1, %v1695
  %v1697 = vrot.slane %v1679, %v1696
  %v1698 = vsub.f32 %v1697, %v315
  %v1699 = vmul.f32 %v320, %v1698
  %v1700 = vmul.f32 %v1699, 0.5
  %v1701 = vtanh.pop %v1700
  %v1702 = vadd.f32 %v1701, 1.0
  %v1703 = vmul.f32 %v1702, 0.5
  %v1704 = vmul.f32 %v329, %v1703
  %v1705 = vmul.f32 %v1704, %v334
  %v1706 = vadd.f32 %v1692, %v1705
  %v1707 = vadd.f32 %v1693, %v1704
  %v1708 = vlaneseq
  %v1709 = vshrl.u32 %v1708, 7
  %v1710 = vsub.s32 2, %v1709
  %v1711 = vrot.slane %v1679, %v1710
  %v1712 = vsub.f32 %v1711, %v345
  %v1713 = vmul.f32 %v350, %v1712
  %v1714 = vmul.f32 %v1713, 0.5
  %v1715 = vtanh.pop %v1714
  %v1716 = vadd.f32 %v1715, 1.0
  %v1717 = vmul.f32 %v1716, 0.5
  %v1718 = vmul.f32 %v359, %v1717
  %v1719 = vmul.f32 %v1718, %v364
  %v1720 = vadd.f32 %v1706, %v1719
  %v1721 = vadd.f32 %v1707, %v1718
  %v1722 = vlaneseq
  %v1723 = vshrl.u32 %v1722, 7
  %v1724 = vsub.s32 3, %v1723
  %v1725 = vrot.slane %v1679, %v1724
  %v1726 = vsub.f32 %v1725, %v375
  %v1727 = vmul.f32 %v380, %v1726
  %v1728 = vmul.f32 %v1727, 0.5
  %v1729 = vtanh.pop %v1728
  %v1730 = vadd.f32 %v1729, 1.0
  %v1731 = vmul.f32 %v1730, 0.5
  %v1732 = vmul.f32 %v389, %v1731
  %v1733 = vmul.f32 %v1732, %v394
  %v1734 = vadd.f32 %v1720, %v1733
  %v1735 = vadd.f32 %v1721, %v1732
  %v1736 = vlaneseq
  %v1737 = vshrl.u32 %v1736, 7
  %v1738 = vsub.s32 4, %v1737
  %v1739 = vrot.slane %v1679, %v1738
  %v1740 = vsub.f32 %v1739, %v405
  %v1741 = vmul.f32 %v410, %v1740
  %v1742 = vmul.f32 %v1741, 0.5
  %v1743 = vtanh.pop %v1742
  %v1744 = vadd.f32 %v1743, 1.0
  %v1745 = vmul.f32 %v1744, 0.5
  %v1746 = vmul.f32 %v419, %v1745
  %v1747 = vmul.f32 %v1746, %v424
  %v1748 = vadd.f32 %v1734, %v1747
  %v1749 = vadd.f32 %v1735, %v1746
  %v1750 = vlaneseq
  %v1751 = vshrl.u32 %v1750, 7
  %v1752 = vsub.s32 5, %v1751
  %v1753 = vrot.slane %v1679, %v1752
  %v1754 = vsub.f32 %v1753, %v435
  %v1755 = vmul.f32 %v440, %v1754
  %v1756 = vmul.f32 %v1755, 0.5
  %v1757 = vtanh.pop %v1756
  %v1758 = vadd.f32 %v1757, 1.0
  %v1759 = vmul.f32 %v1758, 0.5
  %v1760 = vmul.f32 %v449, %v1759
  %v1761 = vmul.f32 %v1760, %v454
  %v1762 = vadd.f32 %v1748, %v1761
  %v1763 = vadd.f32 %v1749, %v1760
  %v1764 = vlaneseq
  %v1765 = vshrl.u32 %v1764, 7
  %v1766 = vsub.s32 6, %v1765
  %v1767 = vrot.slane %v1679, %v1766
  %v1768 = vsub.f32 %v1767, %v465
  %v1769 = vmul.f32 %v470, %v1768
  %v1770 = vmul.f32 %v1769, 0.5
  %v1771 = vtanh.pop %v1770
  %v1772 = vadd.f32 %v1771, 1.0
  %v1773 = vmul.f32 %v1772, 0.5
  %v1774 = vmul.f32 %v479, %v1773
  %v1775 = vmul.f32 %v1774, %v484
  %v1776 = vadd.f32 %v1762, %v1775
  %v1777 = vadd.f32 %v1763, %v1774
  %v1778 = vmul.f32 %v492, %v1679
  %v1779 = vadd.f32 %v1778, %v498
  %v1780 = vadd.f32 %v1779, %v1776
  %v1781 = vadd.f32 %v505, %v1777
  %v1782 = vadd.f32 %v1781, 1e-08
  %v1783 = vrcp.pop %v1782
  %v1784 = vmul.f32 %v1780, %v1783
  %v1785 = vlaneseq
  %v1786 = vshrl.u32 %v1785, 7
  %v1787 = vsub.s32 0, %v1786
  %v1788 = vrot.slane %v1784, %v1787
  %v1789 = vsub.f32 %v1788, %v282
  %v1790 = vmul.f32 %v288, %v1789
  %v1791 = vmul.f32 %v1790, 0.5
  %v1792 = vtanh.pop %v1791
  %v1793 = vadd.f32 %v1792, 1.0
  %v1794 = vmul.f32 %v1793, 0.5
  %v1795 = vmul.f32 %v298, %v1794
  %v1796 = vmul.f32 %v1795, %v304
  %v1797 = vadd.f32 %v1258, %v1796
  %v1798 = vadd.f32 %v1259, %v1795
  %v1799 = vlaneseq
  %v1800 = vshrl.u32 %v1799, 7
  %v1801 = vsub.s32 1, %v1800
  %v1802 = vrot.slane %v1784, %v1801
  %v1803 = vsub.f32 %v1802, %v315
  %v1804 = vmul.f32 %v320, %v1803
  %v1805 = vmul.f32 %v1804, 0.5
  %v1806 = vtanh.pop %v1805
  %v1807 = vadd.f32 %v1806, 1.0
  %v1808 = vmul.f32 %v1807, 0.5
  %v1809 = vmul.f32 %v329, %v1808
  %v1810 = vmul.f32 %v1809, %v334
  %v1811 = vadd.f32 %v1797, %v1810
  %v1812 = vadd.f32 %v1798, %v1809
  %v1813 = vlaneseq
  %v1814 = vshrl.u32 %v1813, 7
  %v1815 = vsub.s32 2, %v1814
  %v1816 = vrot.slane %v1784, %v1815
  %v1817 = vsub.f32 %v1816, %v345
  %v1818 = vmul.f32 %v350, %v1817
  %v1819 = vmul.f32 %v1818, 0.5
  %v1820 = vtanh.pop %v1819
  %v1821 = vadd.f32 %v1820, 1.0
  %v1822 = vmul.f32 %v1821, 0.5
  %v1823 = vmul.f32 %v359, %v1822
  %v1824 = vmul.f32 %v1823, %v364
  %v1825 = vadd.f32 %v1811, %v1824
  %v1826 = vadd.f32 %v1812, %v1823
  %v1827 = vlaneseq
  %v1828 = vshrl.u32 %v1827, 7
  %v1829 = vsub.s32 3, %v1828
  %v1830 = vrot.slane %v1784, %v1829
  %v1831 = vsub.f32 %v1830, %v375
  %v1832 = vmul.f32 %v380, %v1831
  %v1833 = vmul.f32 %v1832, 0.5
  %v1834 = vtanh.pop %v1833
  %v1835 = vadd.f32 %v1834, 1.0
  %v1836 = vmul.f32 %v1835, 0.5
  %v1837 = vmul.f32 %v389, %v1836
  %v1838 = vmul.f32 %v1837, %v394
  %v1839 = vadd.f32 %v1825, %v1838
  %v1840 = vadd.f32 %v1826, %v1837
  %v1841 = vlaneseq
  %v1842 = vshrl.u32 %v1841, 7
  %v1843 = vsub.s32 4, %v1842
  %v1844 = vrot.slane %v1784, %v1843
  %v1845 = vsub.f32 %v1844, %v405
  %v1846 = vmul.f32 %v410, %v1845
  %v1847 = vmul.f32 %v1846, 0.5
  %v1848 = vtanh.pop %v1847
  %v1849 = vadd.f32 %v1848, 1.0
  %v1850 = vmul.f32 %v1849, 0.5
  %v1851 = vmul.f32 %v419, %v1850
  %v1852 = vmul.f32 %v1851, %v424
  %v1853 = vadd.f32 %v1839, %v1852
  %v1854 = vadd.f32 %v1840, %v1851
  %v1855 = vlaneseq
  %v1856 = vshrl.u32 %v1855, 7
  %v1857 = vsub.s32 5, %v1856
  %v1858 = vrot.slane %v1784, %v1857
  %v1859 = vsub.f32 %v1858, %v435
  %v1860 = vmul.f32 %v440, %v1859
  %v1861 = vmul.f32 %v1860, 0.5
  %v1862 = vtanh.pop %v1861
  %v1863 = vadd.f32 %v1862, 1.0
  %v1864 = vmul.f32 %v1863, 0.5
  %v1865 = vmul.f32 %v449, %v1864
  %v1866 = vmul.f32 %v1865, %v454
  %v1867 = vadd.f32 %v1853, %v1866
  %v1868 = vadd.f32 %v1854, %v1865
  %v1869 = vlaneseq
  %v1870 = vshrl.u32 %v1869, 7
  %v1871 = vsub.s32 6, %v1870
  %v1872 = vrot.slane %v1784, %v1871
  %v1873 = vsub.f32 %v1872, %v465
  %v1874 = vmul.f32 %v470, %v1873
  %v1875 = vmul.f32 %v1874, 0.5
  %v1876 = vtanh.pop %v1875
  %v1877 = vadd.f32 %v1876, 1.0
  %v1878 = vmul.f32 %v1877, 0.5
  %v1879 = vmul.f32 %v479, %v1878
  %v1880 = vmul.f32 %v1879, %v484
  %v1881 = vadd.f32 %v1867, %v1880
  %v1882 = vadd.f32 %v1868, %v1879
  %v1883 = vmul.f32 %v492, %v1784
  %v1884 = vadd.f32 %v1883, %v498
  %v1885 = vadd.f32 %v1884, %v1881
  %v1886 = vadd.f32 %v505, %v1882
  %v1887 = vadd.f32 %v1886, 1e-08
  %v1888 = vrcp.pop %v1887
  %v1889 = vmul.f32 %v1885, %v1888
  %1890 = vxpose.xlu0.b32.start [1/16] %v1889, 128
  %1891 = vxpose.xlu0.b32.cont [2/16] 0.0, 128
  %1892 = vxpose.xlu0.b32.cont [3/16] 0.0, 128
  %1893 = vxpose.xlu0.b32.cont [4/16] 0.0, 128
  %1894 = vxpose.xlu0.b32.cont [5/16] 0.0, 128
  %1895 = vxpose.xlu0.b32.cont [6/16] 0.0, 128
  %1896 = vxpose.xlu0.b32.cont [7/16] 0.0, 128
  %1897 = vxpose.xlu0.b32.cont [8/16] 0.0, 128
  %1898 = vxpose.xlu0.b32.cont [9/16] 0.0, 128
  %1899 = vxpose.xlu0.b32.cont [10/16] 0.0, 128
  %1900 = vxpose.xlu0.b32.cont [11/16] 0.0, 128
  %1901 = vxpose.xlu0.b32.cont [12/16] 0.0, 128
  %1902 = vxpose.xlu0.b32.cont [13/16] 0.0, 128
  %1903 = vxpose.xlu0.b32.cont [14/16] 0.0, 128
  %1904 = vxpose.xlu0.b32.cont [15/16] 0.0, 128
  %1905 = vxpose.xlu0.b32.end [16/16] 0.0, 128
  %v1906 = vpop.trf.xlu0
  %v1907 = vpop.trf.xlu0
  %v1908 = vpop.trf.xlu0
  %v1909 = vpop.trf.xlu0
  %v1910 = vpop.trf.xlu0
  %v1911 = vpop.trf.xlu0
  %v1912 = vpop.trf.xlu0
  %v1913 = vpop.trf.xlu0
  %v1914 = vpop.trf.xlu0
  %v1915 = vpop.trf.xlu0
  %v1916 = vpop.trf.xlu0
  %v1917 = vpop.trf.xlu0
  %v1918 = vpop.trf.xlu0
  %v1919 = vpop.trf.xlu0
  %v1920 = vpop.trf.xlu0
  %v1921 = vpop.trf.xlu0
  %v1922 = vld [vmem:[%s5] sm:$0x7f]
  %v1923 = vld [vmem:[%s6] sm:$0x1]
  %v1925 = vlaneseq
  %v1926 = vshrl.u32 %v1925, 7
  %v1927 = vsub.s32 0, %v1926
  %v1928 = vrot.slane %v1923, %v1927
  %v1931 = vsel %vm1076, %v1906, 0
  %v1934 = vsel %vm1080, %v1922, 0
  %1936 = vmatprep.subr.mxu0 0.0
  %1937 = vmatpush1.msra.mxu0 0.0
  %1938 = vmatprep.subr.mxu0 0.0
  %1939 = vmatpush1.msra.mxu0 0.0
  %1940 = vmatprep.subr.mxu0 0.0
  %1941 = vmatpush1.msra.mxu0 0.0
  %1942 = vmatprep.subr.mxu0 0.0
  %1943 = vmatpush1.msra.mxu0 0.0
  %1944 = vmatprep.subr.mxu0 0.0
  %1945 = vmatpush1.msra.mxu0 0.0
  %1946 = vmatprep.subr.mxu0 0.0
  %1947 = vmatpush1.msra.mxu0 0.0
  %1948 = vmatprep.subr.mxu0 0.0
  %1949 = vmatpush1.msra.mxu0 0.0
  %1950 = vmatprep.subr.mxu0 0.0
  %1951 = vmatpush1.msra.mxu0 0.0
  %1952 = vmatprep.subr.mxu0 0.0
  %1953 = vmatpush1.msra.mxu0 0.0
  %1954 = vmatprep.subr.mxu0 0.0
  %1955 = vmatpush1.msra.mxu0 0.0
  %1956 = vmatprep.subr.mxu0 0.0
  %1957 = vmatpush1.msra.mxu0 0.0
  %1958 = vmatprep.subr.mxu0 0.0
  %1959 = vmatpush1.msra.mxu0 0.0
  %1960 = vmatprep.subr.mxu0 0.0
  %1961 = vmatpush1.msra.mxu0 0.0
  %1962 = vmatprep.subr.mxu0 0.0
  %1963 = vmatpush1.msra.mxu0 0.0
  %1964 = vmatprep.subr.mxu0 0.0
  %1965 = vmatpush1.msra.mxu0 0.0
  %1966 = vmatprep.subr.mxu0 0.0
  %1967 = vmatpush1.msra.mxu0 %v1934
  %1968 = vmatprep.subr.mxu0 0.0
  %1969 = vmatpush2.msra.mxu0 0.0
  %1970 = vmatprep.subr.mxu0 0.0
  %1971 = vmatpush2.msra.mxu0 0.0
  %1972 = vmatprep.subr.mxu0 0.0
  %1973 = vmatpush2.msra.mxu0 0.0
  %1974 = vmatprep.subr.mxu0 0.0
  %1975 = vmatpush2.msra.mxu0 0.0
  %1976 = vmatprep.subr.mxu0 0.0
  %1977 = vmatpush2.msra.mxu0 0.0
  %1978 = vmatprep.subr.mxu0 0.0
  %1979 = vmatpush2.msra.mxu0 0.0
  %1980 = vmatprep.subr.mxu0 0.0
  %1981 = vmatpush2.msra.mxu0 0.0
  %1982 = vmatprep.subr.mxu0 0.0
  %1983 = vmatpush2.msra.mxu0 0.0
  %1984 = vmatprep.subr.mxu0 0.0
  %1985 = vmatpush2.msra.mxu0 0.0
  %1986 = vmatprep.subr.mxu0 0.0
  %1987 = vmatpush2.msra.mxu0 0.0
  %1988 = vmatprep.subr.mxu0 0.0
  %1989 = vmatpush2.msra.mxu0 0.0
  %1990 = vmatprep.subr.mxu0 0.0
  %1991 = vmatpush2.msra.mxu0 0.0
  %1992 = vmatprep.subr.mxu0 0.0
  %1993 = vmatpush2.msra.mxu0 0.0
  %1994 = vmatprep.subr.mxu0 0.0
  %1995 = vmatpush2.msra.mxu0 0.0
  %1996 = vmatprep.subr.mxu0 0.0
  %1997 = vmatpush2.msra.mxu0 0.0
  %1998 = vmatprep.subr.mxu0 0.0
  %1999 = vmatpush2.msra.mxu0 0.0
  %2000 = vmatprep.mubr.f32.mxu0 0.0
  %2001 = vmatmul.mubr.f32.gmra.mxu0 %v1931
  %v2002 = vpop.f32.mrf.mxu0
  %v2003 = vadd.f32 %v1928, %v2002
  %v2004 = vpop.f32.mrf.mxu0
  %2005 = vdwg.mxu0
  %s2006 = scalar_lea.vmem %s0, 8
  %v2007 = vld [vmem:[%s2006] sm:$0xff]
  %v2008 = vadd.f32 %v2007, %v2003
  %s2009 = scalar_lea.vmem %s7, 8
  %2010 = vst.msk [vmem:[%s2009] sm:$0xff] %vm1156, %v2008
  %vm2011 = vcmask 63488
  %2012 = vst.msk [vmem:[#allocation2] sm:$0x7f] %vm2011, %v1889
  // Predicated region
  $region34: #{gpt2_encoder_layer_with_ltc.3} parent=0 // pred_check
    _
  $region35: #{gpt2_encoder_layer_with_ltc.3} parent=0 // pred_check_branch
    %2014 = sbr.rel (0) target = $region37
  $region36: #{gpt2_encoder_layer_with_ltc.3} parent=0 // pred_region
    _
  $region37: #{gpt2_encoder_layer_with_ltc.3} parent=0 // pred_fallthru
    _
  // Predicated region
  $region38: #{gpt2_encoder_layer_with_ltc.3} parent=0 // pred_check
    _
  $region39: #{gpt2_encoder_layer_with_ltc.3} parent=0 // pred_check_branch
    %2016 = sbr.rel (0) target = $region41
  $region40: #{gpt2_encoder_layer_with_ltc.3} parent=0 // pred_region
    _
  $region41: #{gpt2_encoder_layer_with_ltc.3} parent=0 // pred_fallthru
    _

</llo_original>
